<compile_context>
chip_gen: v7x
topology: tpu7x:2x2x1
jax: 0.10.0
libtpu: 0.0.40
codegen_flags: <defaults>
</compile_context>

<pallas_src>
import numpy as np
import jax
import jax.numpy as jnp
from jax.experimental import pallas as pl
from jax.experimental.pallas import tpu as pltpu


def _round_up(x, m):
    return (x + m - 1) // m * m


def make_decoder_kernel(num_layers, S, B_blk, E, Hp, Vp):
    """Multi-layer LSTM + final Linear over one batch block.

    Kernel refs:
      x_ref   [S, B_blk, E]
      per layer: wihT [in_p, 4*Hp], whhT [Hp, 4*Hp], b [1, 4*Hp]
      wlinT   [Hp, Vp], blin [1, Vp]
      out_ref [S, B_blk, Vp]
      scratch: seq_scr [S*B_blk, Hp]   (previous layer / last layer h sequence)
               gx_scr  [S*B_blk, 4*Hp] (hoisted input projection + bias)
    Gate g occupies lanes [g*Hp, g*Hp + H); padded lanes carry exact zeros.
    """
    G = 4 * Hp

    def kernel(*refs):
        x_ref = refs[0]
        layer_params = []
        idx = 1
        for _ in range(num_layers):
            layer_params.append((refs[idx], refs[idx + 1], refs[idx + 2]))
            idx += 3
        wlin_ref = refs[idx]
        blin_ref = refs[idx + 1]
        out_ref = refs[idx + 2]
        seq_scr = refs[idx + 3]
        gx_scr = refs[idx + 4]

        for l in range(num_layers):
            wihT_ref, whhT_ref, b_ref = layer_params[l]

            # ---- hoisted input projection: one big matmul per layer ----
            if l == 0:
                x_flat = x_ref[...].reshape(S * B_blk, E)       # [S*B, E]
            else:
                x_flat = seq_scr[...]                           # [S*B, Hp]
            gx_scr[...] = (
                jnp.dot(x_flat, wihT_ref[...],
                        preferred_element_type=jnp.float32)
                + b_ref[...]                                    # [S*B, 4Hp]
            )

            # ---- serial recurrence (fully unrolled, S is small & static) ----
            h = jnp.zeros((B_blk, Hp), jnp.float32)
            c = jnp.zeros((B_blk, Hp), jnp.float32)
            for t in range(S):
                r0, r1 = t * B_blk, (t + 1) * B_blk
                gates = gx_scr[r0:r1, :] + jnp.dot(
                    h, whhT_ref[...], preferred_element_type=jnp.float32)
                # gate slices are 128-lane aligned (one full vreg each)
                i_g = jax.nn.sigmoid(gates[:, 0 * Hp:1 * Hp])
                f_g = jax.nn.sigmoid(gates[:, 1 * Hp:2 * Hp])
                g_g = jnp.tanh(gates[:, 2 * Hp:3 * Hp])
                o_g = jax.nn.sigmoid(gates[:, 3 * Hp:4 * Hp])
                c = f_g * c + i_g * g_g
                h = o_g * jnp.tanh(c)
                seq_scr[r0:r1, :] = h

        # ---- vocab projection: one matmul, one lane-dense contiguous store ----
        logits = (
            jnp.dot(seq_scr[...], wlin_ref[...],
                    preferred_element_type=jnp.float32)
            + blin_ref[...]                                     # [S*B, Vp]
        )
        out_ref[...] = logits.reshape(S, B_blk, Vp)

    return kernel


def prepare_decoder_params(params):
    """One-time weight prep: transpose, fuse biases, pad gates/H/V to 128."""
    embed = jnp.asarray(params["embed"], jnp.float32)        # [V, E]
    lstm = params["lstm"]
    lin_w = np.asarray(params["lin_w"], np.float32)          # [V, H]
    lin_b = np.asarray(params["lin_b"], np.float32)          # [V]
    V, E = embed.shape
    H = int(lstm[0][1].shape[1])
    Hp = _round_up(H, 128)
    Vp = _round_up(V, 128)

    def pad_gate_cols(w_t, in_p):
        # w_t: [in, 4H] -> [in_p, 4*Hp], gate g placed at cols [g*Hp, g*Hp+H)
        in_dim = w_t.shape[0]
        out = np.zeros((in_p, 4 * Hp), np.float32)
        for g in range(4):
            out[:in_dim, g * Hp:g * Hp + H] = w_t[:, g * H:(g + 1) * H]
        return jnp.asarray(out)

    layers = []
    for l, (w_ih, w_hh, b_ih, b_hh) in enumerate(lstm):
        w_ih = np.asarray(w_ih, np.float32)                  # [4H, in]
        w_hh = np.asarray(w_hh, np.float32)                  # [4H, H]
        in_dim = w_ih.shape[1]
        in_p = in_dim if l == 0 else Hp
        wihT = pad_gate_cols(w_ih.T, in_p)                   # [in_p, 4Hp]
        whhT = pad_gate_cols(w_hh.T, Hp)                     # [Hp,   4Hp]
        b = np.asarray(b_ih, np.float32) + np.asarray(b_hh, np.float32)
        bp = np.zeros((1, 4 * Hp), np.float32)
        for g in range(4):
            bp[0, g * Hp:g * Hp + H] = b[g * H:(g + 1) * H]
        layers.append((wihT, whhT, jnp.asarray(bp)))

    wlinT = np.zeros((Hp, Vp), np.float32)
    wlinT[:H, :V] = lin_w.T
    blin = np.zeros((1, Vp), np.float32)
    blin[0, :V] = lin_b

    return {
        "embed": embed,
        "layers": layers,
        "wlinT": jnp.asarray(wlinT),
        "blin": jnp.asarray(blin),
        "dims": dict(E=int(E), H=H, Hp=Hp, V=int(V), Vp=Vp,
                     num_layers=len(lstm)),
    }


def decoder_forward(features, captions, lengths, prep):
    """JAX wrapper reproducing DecoderRNN.forward (lengths sorted descending)."""
    d = prep["dims"]
    E, Hp, V, Vp = d["E"], d["Hp"], d["V"], d["Vp"]
    num_layers = d["num_layers"]
    B, T = captions.shape
    S = T + 1
    G = 4 * Hp

    # ---- glue (plain JAX): embedding gather, concat, time-major transpose ----
    emb = prep["embed"][captions]                                  # [B, T, E]
    seq = jnp.concatenate(
        [features[:, None, :].astype(jnp.float32), emb], axis=1)   # [B, S, E]
    x = jnp.transpose(seq, (1, 0, 2)).astype(jnp.float32)          # [S, B, E]

    # pad batch to a full sublane group (8 for f32); padded rows are garbage
    # but never feed real rows (LSTM is row-independent) and are dropped below
    B_BLK = 8
    Bp = _round_up(max(B, B_BLK), B_BLK)
    if Bp != B:
        x = jnp.pad(x, ((0, 0), (0, Bp - B), (0, 0)))

    args = [x]
    in_specs = [pl.BlockSpec((S, B_BLK, E), lambda i: (0, i, 0))]
    for (wihT, whhT, b) in prep["layers"]:
        args += [wihT, whhT, b]
        in_specs += [
            pl.BlockSpec(wihT.shape, lambda i: (0, 0)),
            pl.BlockSpec(whhT.shape, lambda i: (0, 0)),
            pl.BlockSpec(b.shape, lambda i: (0, 0)),
        ]
    args += [prep["wlinT"], prep["blin"]]
    in_specs += [
        pl.BlockSpec(prep["wlinT"].shape, lambda i: (0, 0)),
        pl.BlockSpec(prep["blin"].shape, lambda i: (0, 0)),
    ]

    kernel = make_decoder_kernel(num_layers, S, B_BLK, E, Hp, Vp)
    logits_sbv = pl.pallas_call(
        kernel,
        out_shape=jax.ShapeDtypeStruct((S, Bp, Vp), jnp.float32),
        grid_spec=pltpu.PrefetchScalarGridSpec(
            num_scalar_prefetch=0,
            grid=(Bp // B_BLK,),
            in_specs=in_specs,
            out_specs=pl.BlockSpec((S, B_BLK, Vp), lambda i: (0, i, 0)),
            scratch_shapes=[
                pltpu.VMEM((S * B_BLK, Hp), jnp.float32),   # h sequence buffer
                pltpu.VMEM((S * B_BLK, G), jnp.float32),    # hoisted input proj
            ],
        ),
        compiler_params=pltpu.CompilerParams(
            dimension_semantics=("parallel",),   # batch blocks -> 2 TCs on v7x
        ),
    )(*args)                                                   # [S, Bp, Vp]

    # ---- glue: gather packed (time-major) order, matching pack_padded_sequence ----
    lengths = list(lengths)
    t_idx, b_idx = [], []
    for t in range(S):
        for b in range(B):
            if t < lengths[b]:
                t_idx.append(t)
                b_idx.append(b)
    t_idx = jnp.asarray(t_idx, jnp.int32)
    b_idx = jnp.asarray(b_idx, jnp.int32)
    return logits_sbv[t_idx, b_idx][:, :V]                     # [sum(lengths), V]


def _reference_forward(features, captions, lengths, params):
    """Pure-JAX reference for correctness checking."""
    embed_table = params["embed"]
    emb = embed_table[captions]
    seq = jnp.concatenate([features[:, None, :], emb], axis=1)
    x = jnp.transpose(seq, (1, 0, 2))                          # [S, B, E]
    S, B, _ = x.shape
    h_seq = x
    for (w_ih, w_hh, b_ih, b_hh) in params["lstm"]:
        Hh = w_hh.shape[1]
        h = jnp.zeros((B, Hh), jnp.float32)
        c = jnp.zeros((B, Hh), jnp.float32)
        outs = []
        for t in range(S):
            gates = h_seq[t] @ w_ih.T + h @ w_hh.T + b_ih + b_hh
            i_g, f_g, g_g, o_g = jnp.split(gates, 4, axis=-1)
            i_g = jax.nn.sigmoid(i_g)
            f_g = jax.nn.sigmoid(f_g)
            g_g = jnp.tanh(g_g)
            o_g = jax.nn.sigmoid(o_g)
            c = f_g * c + i_g * g_g
            h = o_g * jnp.tanh(c)
            outs.append(h)
        h_seq = jnp.stack(outs, 0)
    logits = h_seq @ params["lin_w"].T + params["lin_b"]
    t_idx, b_idx = [], []
    for t in range(S):
        for b in range(B):
            if t < lengths[b]:
                t_idx.append(t)
                b_idx.append(b)
    return logits[jnp.asarray(t_idx), jnp.asarray(b_idx), :]


if __name__ == "__main__":
    # small shapes consistent with the module
    embed_size = 32      # E
    hidden_size = 32     # H
    vocab_size = 64      # V
    num_layers = 2
    B = 4                # batch
    T = 8                # caption length -> sequence length S = T + 1 = 9

    key = jax.random.PRNGKey(0)
    ks = list(jax.random.split(key, 4 * num_layers + 5))

    def init(k, shape, scale=0.1):
        return jax.random.normal(k, shape, jnp.float32) * scale

    params = {
        "embed": init(ks[0], (vocab_size, embed_size)),
        "lstm": [],
        "lin_w": init(ks[1], (vocab_size, hidden_size)),
        "lin_b": init(ks[2], (vocab_size,)),
    }
    kidx = 3
    for l in range(num_layers):
        in_dim = embed_size if l == 0 else hidden_size
        params["lstm"].append((
            init(ks[kidx + 0], (4 * hidden_size, in_dim)),        # weight_ih_l{l}
            init(ks[kidx + 1], (4 * hidden_size, hidden_size)),   # weight_hh_l{l}
            init(ks[kidx + 2], (4 * hidden_size,)),               # bias_ih_l{l}
            init(ks[kidx + 3], (4 * hidden_size,)),               # bias_hh_l{l}
        ))
        kidx += 4

    features = init(ks[-2], (B, embed_size), scale=1.0)
    captions = jax.random.randint(ks[-1], (B, T), 0, vocab_size)
    lengths = [9, 7, 6, 4]   # sorted descending, as pack_padded_sequence requires

    prep = prepare_decoder_params(params)   # one-time weight transpose/fuse/pad

    out = decoder_forward(features, captions, lengths, prep)
    out = jax.block_until_ready(out)

    ref = _reference_forward(features, captions, lengths, params)
    assert out.shape == (sum(lengths), vocab_size), out.shape
    np.testing.assert_allclose(np.asarray(out), np.asarray(ref),
                               rtol=1e-3, atol=1e-3)

    print("KERNEL_OK")
</pallas_src>

<mosaic_0001>
module attributes {stable_mosaic.version = 11 : i64} {
  func.func @kernel(%arg0: i32, %arg1: memref<9x8x32xf32, #tpu.memory_space<vmem>>, %arg2: memref<32x512xf32, #tpu.memory_space<vmem>>, %arg3: memref<128x512xf32, #tpu.memory_space<vmem>>, %arg4: memref<1x512xf32, #tpu.memory_space<vmem>>, %arg5: memref<128x512xf32, #tpu.memory_space<vmem>>, %arg6: memref<128x512xf32, #tpu.memory_space<vmem>>, %arg7: memref<1x512xf32, #tpu.memory_space<vmem>>, %arg8: memref<128x128xf32, #tpu.memory_space<vmem>>, %arg9: memref<1x128xf32, #tpu.memory_space<vmem>>, %arg10: memref<9x8x128xf32, #tpu.memory_space<vmem>>, %arg11: memref<72x128xf32, #tpu.memory_space<vmem>>, %arg12: memref<72x512xf32, #tpu.memory_space<vmem>>) attributes {dimension_semantics = [#tpu.dimension_semantics<parallel>], iteration_bounds = array<i64: 1>, scalar_prefetch = 0 : i64, scratch_operands = 2 : i64, tpu.core_type = #tpu.core_type<tc>, window_params = [{transform_indices = @transform_0, window_bounds = array<i64: 9, 8, 32>}, {pipeline_mode = #tpu.pipeline_mode<synchronous>, transform_indices = @transform_1, window_bounds = array<i64: 32, 512>}, {pipeline_mode = #tpu.pipeline_mode<synchronous>, transform_indices = @transform_2, window_bounds = array<i64: 128, 512>}, {pipeline_mode = #tpu.pipeline_mode<synchronous>, transform_indices = @transform_3, window_bounds = array<i64: 1, 512>}, {pipeline_mode = #tpu.pipeline_mode<synchronous>, transform_indices = @transform_4, window_bounds = array<i64: 128, 512>}, {pipeline_mode = #tpu.pipeline_mode<synchronous>, transform_indices = @transform_5, window_bounds = array<i64: 128, 512>}, {pipeline_mode = #tpu.pipeline_mode<synchronous>, transform_indices = @transform_6, window_bounds = array<i64: 1, 512>}, {pipeline_mode = #tpu.pipeline_mode<synchronous>, transform_indices = @transform_7, window_bounds = array<i64: 128, 128>}, {pipeline_mode = #tpu.pipeline_mode<synchronous>, transform_indices = @transform_8, window_bounds = array<i64: 1, 128>}, {transform_indices = @transform_9, window_bounds = array<i64: 9, 8, 128>}]} {
    %c0 = arith.constant 0 : index
    %c0_0 = arith.constant 0 : index
    %c0_1 = arith.constant 0 : index
    %0 = vector.load %arg1[%c0, %c0_0, %c0_1] : memref<9x8x32xf32, #tpu.memory_space<vmem>>, vector<9x8x32xf32>
    %1 = vector.shape_cast %0 : vector<9x8x32xf32> to vector<72x32xf32>
    %c0_2 = arith.constant 0 : index
    %c0_3 = arith.constant 0 : index
    %2 = vector.load %arg2[%c0_2, %c0_3] : memref<32x512xf32, #tpu.memory_space<vmem>>, vector<32x512xf32>
    %cst = arith.constant dense<0.000000e+00> : vector<72x512xf32>
    %3 = tpu.matmul %1, %2, %cst {dimension_numbers = #tpu.dot_dimension_numbers<[1], [0], [0], [1], [0, 0, 1, 1], [], []>} : vector<72x32xf32>, vector<32x512xf32>, vector<72x512xf32> -> vector<72x512xf32>
    %c0_4 = arith.constant 0 : index
    %c0_5 = arith.constant 0 : index
    %4 = vector.load %arg4[%c0_4, %c0_5] : memref<1x512xf32, #tpu.memory_space<vmem>>, vector<1x512xf32>
    %5 = vector.broadcast %4 : vector<1x512xf32> to vector<72x512xf32>
    %6 = arith.addf %3, %5 : vector<72x512xf32>
    %c0_6 = arith.constant 0 : index
    %c0_7 = arith.constant 0 : index
    %7 = vector.load %arg12[%c0_6, %c0_7] : memref<72x512xf32, #tpu.memory_space<vmem>>, vector<72x512xf32>
    tpu.vector_store %arg12[%c0_6, %c0_7], %6 {strides = array<i32>} : memref<72x512xf32, #tpu.memory_space<vmem>>, vector<72x512xf32>,
    %cst_8 = arith.constant 0.000000e+00 : f32
    %8 = vector.broadcast %cst_8 : f32 to vector<8x128xf32>
    %cst_9 = arith.constant 0.000000e+00 : f32
    %9 = vector.broadcast %cst_9 : f32 to vector<8x128xf32>
    %c0_10 = arith.constant 0 : index
    %c0_11 = arith.constant 0 : index
    %10 = vector.load %arg12[%c0_10, %c0_11] : memref<72x512xf32, #tpu.memory_space<vmem>>, vector<8x512xf32>
    %c0_12 = arith.constant 0 : index
    %c0_13 = arith.constant 0 : index
    %11 = vector.load %arg3[%c0_12, %c0_13] : memref<128x512xf32, #tpu.memory_space<vmem>>, vector<128x512xf32>
    %cst_14 = arith.constant dense<0.000000e+00> : vector<8x512xf32>
    %12 = tpu.matmul %8, %11, %cst_14 {dimension_numbers = #tpu.dot_dimension_numbers<[1], [0], [0], [1], [0, 0, 1, 1], [], []>} : vector<8x128xf32>, vector<128x512xf32>, vector<8x512xf32> -> vector<8x512xf32>
    %13 = arith.addf %10, %12 : vector<8x512xf32>
    %14 = vector.extract_strided_slice %13 {offsets = [0, 0], sizes = [8, 128], strides = [1, 1]} : vector<8x512xf32> to vector<8x128xf32>
    %15 = arith.negf %14 : vector<8x128xf32>
    %16 = math.exp %15 : vector<8x128xf32>
    %cst_15 = arith.constant 1.000000e+00 : f32
    %17 = vector.broadcast %cst_15 : f32 to vector<8x128xf32>
    %18 = arith.addf %17, %16 : vector<8x128xf32>
    %19 = arith.divf %17, %18 : vector<8x128xf32>
    %20 = vector.extract_strided_slice %13 {offsets = [0, 128], sizes = [8, 128], strides = [1, 1]} : vector<8x512xf32> to vector<8x128xf32>
    %21 = arith.negf %20 : vector<8x128xf32>
    %22 = math.exp %21 : vector<8x128xf32>
    %cst_16 = arith.constant 1.000000e+00 : f32
    %23 = vector.broadcast %cst_16 : f32 to vector<8x128xf32>
    %24 = arith.addf %23, %22 : vector<8x128xf32>
    %25 = arith.divf %23, %24 : vector<8x128xf32>
    %26 = vector.extract_strided_slice %13 {offsets = [0, 256], sizes = [8, 128], strides = [1, 1]} : vector<8x512xf32> to vector<8x128xf32>
    %27 = math.tanh %26 : vector<8x128xf32>
    %28 = vector.extract_strided_slice %13 {offsets = [0, 384], sizes = [8, 128], strides = [1, 1]} : vector<8x512xf32> to vector<8x128xf32>
    %29 = arith.negf %28 : vector<8x128xf32>
    %30 = math.exp %29 : vector<8x128xf32>
    %cst_17 = arith.constant 1.000000e+00 : f32
    %31 = vector.broadcast %cst_17 : f32 to vector<8x128xf32>
    %32 = arith.addf %31, %30 : vector<8x128xf32>
    %33 = arith.divf %31, %32 : vector<8x128xf32>
    %34 = arith.mulf %25, %9 : vector<8x128xf32>
    %35 = arith.mulf %19, %27 : vector<8x128xf32>
    %36 = arith.addf %34, %35 : vector<8x128xf32>
    %37 = math.tanh %36 : vector<8x128xf32>
    %38 = arith.mulf %33, %37 : vector<8x128xf32>
    %c0_18 = arith.constant 0 : index
    %c0_19 = arith.constant 0 : index
    %39 = vector.load %arg11[%c0_18, %c0_19] : memref<72x128xf32, #tpu.memory_space<vmem>>, vector<8x128xf32>
    tpu.vector_store %arg11[%c0_18, %c0_19], %38 {strides = array<i32>} : memref<72x128xf32, #tpu.memory_space<vmem>>, vector<8x128xf32>,
    %c8 = arith.constant 8 : index
    %c0_20 = arith.constant 0 : index
    %40 = vector.load %arg12[%c8, %c0_20] : memref<72x512xf32, #tpu.memory_space<vmem>>, vector<8x512xf32>
    %c0_21 = arith.constant 0 : index
    %c0_22 = arith.constant 0 : index
    %41 = vector.load %arg3[%c0_21, %c0_22] : memref<128x512xf32, #tpu.memory_space<vmem>>, vector<128x512xf32>
    %cst_23 = arith.constant dense<0.000000e+00> : vector<8x512xf32>
    %42 = tpu.matmul %38, %41, %cst_23 {dimension_numbers = #tpu.dot_dimension_numbers<[1], [0], [0], [1], [0, 0, 1, 1], [], []>} : vector<8x128xf32>, vector<128x512xf32>, vector<8x512xf32> -> vector<8x512xf32>
    %43 = arith.addf %40, %42 : vector<8x512xf32>
    %44 = vector.extract_strided_slice %43 {offsets = [0, 0], sizes = [8, 128], strides = [1, 1]} : vector<8x512xf32> to vector<8x128xf32>
    %45 = arith.negf %44 : vector<8x128xf32>
    %46 = math.exp %45 : vector<8x128xf32>
    %cst_24 = arith.constant 1.000000e+00 : f32
    %47 = vector.broadcast %cst_24 : f32 to vector<8x128xf32>
    %48 = arith.addf %47, %46 : vector<8x128xf32>
    %49 = arith.divf %47, %48 : vector<8x128xf32>
    %50 = vector.extract_strided_slice %43 {offsets = [0, 128], sizes = [8, 128], strides = [1, 1]} : vector<8x512xf32> to vector<8x128xf32>
    %51 = arith.negf %50 : vector<8x128xf32>
    %52 = math.exp %51 : vector<8x128xf32>
    %cst_25 = arith.constant 1.000000e+00 : f32
    %53 = vector.broadcast %cst_25 : f32 to vector<8x128xf32>
    %54 = arith.addf %53, %52 : vector<8x128xf32>
    %55 = arith.divf %53, %54 : vector<8x128xf32>
    %56 = vector.extract_strided_slice %43 {offsets = [0, 256], sizes = [8, 128], strides = [1, 1]} : vector<8x512xf32> to vector<8x128xf32>
    %57 = math.tanh %56 : vector<8x128xf32>
    %58 = vector.extract_strided_slice %43 {offsets = [0, 384], sizes = [8, 128], strides = [1, 1]} : vector<8x512xf32> to vector<8x128xf32>
    %59 = arith.negf %58 : vector<8x128xf32>
    %60 = math.exp %59 : vector<8x128xf32>
    %cst_26 = arith.constant 1.000000e+00 : f32
    %61 = vector.broadcast %cst_26 : f32 to vector<8x128xf32>
    %62 = arith.addf %61, %60 : vector<8x128xf32>
    %63 = arith.divf %61, %62 : vector<8x128xf32>
    %64 = arith.mulf %55, %36 : vector<8x128xf32>
    %65 = arith.mulf %49, %57 : vector<8x128xf32>
    %66 = arith.addf %64, %65 : vector<8x128xf32>
    %67 = math.tanh %66 : vector<8x128xf32>
    %68 = arith.mulf %63, %67 : vector<8x128xf32>
    %c8_27 = arith.constant 8 : index
    %c0_28 = arith.constant 0 : index
    %69 = vector.load %arg11[%c8_27, %c0_28] : memref<72x128xf32, #tpu.memory_space<vmem>>, vector<8x128xf32>
    tpu.vector_store %arg11[%c8_27, %c0_28], %68 {strides = array<i32>} : memref<72x128xf32, #tpu.memory_space<vmem>>, vector<8x128xf32>,
    %c16 = arith.constant 16 : index
    %c0_29 = arith.constant 0 : index
    %70 = vector.load %arg12[%c16, %c0_29] : memref<72x512xf32, #tpu.memory_space<vmem>>, vector<8x512xf32>
    %c0_30 = arith.constant 0 : index
    %c0_31 = arith.constant 0 : index
    %71 = vector.load %arg3[%c0_30, %c0_31] : memref<128x512xf32, #tpu.memory_space<vmem>>, vector<128x512xf32>
    %cst_32 = arith.constant dense<0.000000e+00> : vector<8x512xf32>
    %72 = tpu.matmul %68, %71, %cst_32 {dimension_numbers = #tpu.dot_dimension_numbers<[1], [0], [0], [1], [0, 0, 1, 1], [], []>} : vector<8x128xf32>, vector<128x512xf32>, vector<8x512xf32> -> vector<8x512xf32>
    %73 = arith.addf %70, %72 : vector<8x512xf32>
    %74 = vector.extract_strided_slice %73 {offsets = [0, 0], sizes = [8, 128], strides = [1, 1]} : vector<8x512xf32> to vector<8x128xf32>
    %75 = arith.negf %74 : vector<8x128xf32>
    %76 = math.exp %75 : vector<8x128xf32>
    %cst_33 = arith.constant 1.000000e+00 : f32
    %77 = vector.broadcast %cst_33 : f32 to vector<8x128xf32>
    %78 = arith.addf %77, %76 : vector<8x128xf32>
    %79 = arith.divf %77, %78 : vector<8x128xf32>
    %80 = vector.extract_strided_slice %73 {offsets = [0, 128], sizes = [8, 128], strides = [1, 1]} : vector<8x512xf32> to vector<8x128xf32>
    %81 = arith.negf %80 : vector<8x128xf32>
    %82 = math.exp %81 : vector<8x128xf32>
    %cst_34 = arith.constant 1.000000e+00 : f32
    %83 = vector.broadcast %cst_34 : f32 to vector<8x128xf32>
    %84 = arith.addf %83, %82 : vector<8x128xf32>
    %85 = arith.divf %83, %84 : vector<8x128xf32>
    %86 = vector.extract_strided_slice %73 {offsets = [0, 256], sizes = [8, 128], strides = [1, 1]} : vector<8x512xf32> to vector<8x128xf32>
    %87 = math.tanh %86 : vector<8x128xf32>
    %88 = vector.extract_strided_slice %73 {offsets = [0, 384], sizes = [8, 128], strides = [1, 1]} : vector<8x512xf32> to vector<8x128xf32>
    %89 = arith.negf %88 : vector<8x128xf32>
    %90 = math.exp %89 : vector<8x128xf32>
    %cst_35 = arith.constant 1.000000e+00 : f32
    %91 = vector.broadcast %cst_35 : f32 to vector<8x128xf32>
    %92 = arith.addf %91, %90 : vector<8x128xf32>
    %93 = arith.divf %91, %92 : vector<8x128xf32>
    %94 = arith.mulf %85, %66 : vector<8x128xf32>
    %95 = arith.mulf %79, %87 : vector<8x128xf32>
    %96 = arith.addf %94, %95 : vector<8x128xf32>
    %97 = math.tanh %96 : vector<8x128xf32>
    %98 = arith.mulf %93, %97 : vector<8x128xf32>
    %c16_36 = arith.constant 16 : index
    %c0_37 = arith.constant 0 : index
    %99 = vector.load %arg11[%c16_36, %c0_37] : memref<72x128xf32, #tpu.memory_space<vmem>>, vector<8x128xf32>
    tpu.vector_store %arg11[%c16_36, %c0_37], %98 {strides = array<i32>} : memref<72x128xf32, #tpu.memory_space<vmem>>, vector<8x128xf32>,
    %c24 = arith.constant 24 : index
    %c0_38 = arith.constant 0 : index
    %100 = vector.load %arg12[%c24, %c0_38] : memref<72x512xf32, #tpu.memory_space<vmem>>, vector<8x512xf32>
    %c0_39 = arith.constant 0 : index
    %c0_40 = arith.constant 0 : index
    %101 = vector.load %arg3[%c0_39, %c0_40] : memref<128x512xf32, #tpu.memory_space<vmem>>, vector<128x512xf32>
    %cst_41 = arith.constant dense<0.000000e+00> : vector<8x512xf32>
    %102 = tpu.matmul %98, %101, %cst_41 {dimension_numbers = #tpu.dot_dimension_numbers<[1], [0], [0], [1], [0, 0, 1, 1], [], []>} : vector<8x128xf32>, vector<128x512xf32>, vector<8x512xf32> -> vector<8x512xf32>
    %103 = arith.addf %100, %102 : vector<8x512xf32>
    %104 = vector.extract_strided_slice %103 {offsets = [0, 0], sizes = [8, 128], strides = [1, 1]} : vector<8x512xf32> to vector<8x128xf32>
    %105 = arith.negf %104 : vector<8x128xf32>
    %106 = math.exp %105 : vector<8x128xf32>
    %cst_42 = arith.constant 1.000000e+00 : f32
    %107 = vector.broadcast %cst_42 : f32 to vector<8x128xf32>
    %108 = arith.addf %107, %106 : vector<8x128xf32>
    %109 = arith.divf %107, %108 : vector<8x128xf32>
    %110 = vector.extract_strided_slice %103 {offsets = [0, 128], sizes = [8, 128], strides = [1, 1]} : vector<8x512xf32> to vector<8x128xf32>
    %111 = arith.negf %110 : vector<8x128xf32>
    %112 = math.exp %111 : vector<8x128xf32>
    %cst_43 = arith.constant 1.000000e+00 : f32
    %113 = vector.broadcast %cst_43 : f32 to vector<8x128xf32>
    %114 = arith.addf %113, %112 : vector<8x128xf32>
    %115 = arith.divf %113, %114 : vector<8x128xf32>
    %116 = vector.extract_strided_slice %103 {offsets = [0, 256], sizes = [8, 128], strides = [1, 1]} : vector<8x512xf32> to vector<8x128xf32>
    %117 = math.tanh %116 : vector<8x128xf32>
    %118 = vector.extract_strided_slice %103 {offsets = [0, 384], sizes = [8, 128], strides = [1, 1]} : vector<8x512xf32> to vector<8x128xf32>
    %119 = arith.negf %118 : vector<8x128xf32>
    %120 = math.exp %119 : vector<8x128xf32>
    %cst_44 = arith.constant 1.000000e+00 : f32
    %121 = vector.broadcast %cst_44 : f32 to vector<8x128xf32>
    %122 = arith.addf %121, %120 : vector<8x128xf32>
    %123 = arith.divf %121, %122 : vector<8x128xf32>
    %124 = arith.mulf %115, %96 : vector<8x128xf32>
    %125 = arith.mulf %109, %117 : vector<8x128xf32>
    %126 = arith.addf %124, %125 : vector<8x128xf32>
    %127 = math.tanh %126 : vector<8x128xf32>
    %128 = arith.mulf %123, %127 : vector<8x128xf32>
    %c24_45 = arith.constant 24 : index
    %c0_46 = arith.constant 0 : index
    %129 = vector.load %arg11[%c24_45, %c0_46] : memref<72x128xf32, #tpu.memory_space<vmem>>, vector<8x128xf32>
    tpu.vector_store %arg11[%c24_45, %c0_46], %128 {strides = array<i32>} : memref<72x128xf32, #tpu.memory_space<vmem>>, vector<8x128xf32>,
    %c32 = arith.constant 32 : index
    %c0_47 = arith.constant 0 : index
    %130 = vector.load %arg12[%c32, %c0_47] : memref<72x512xf32, #tpu.memory_space<vmem>>, vector<8x512xf32>
    %c0_48 = arith.constant 0 : index
    %c0_49 = arith.constant 0 : index
    %131 = vector.load %arg3[%c0_48, %c0_49] : memref<128x512xf32, #tpu.memory_space<vmem>>, vector<128x512xf32>
    %cst_50 = arith.constant dense<0.000000e+00> : vector<8x512xf32>
    %132 = tpu.matmul %128, %131, %cst_50 {dimension_numbers = #tpu.dot_dimension_numbers<[1], [0], [0], [1], [0, 0, 1, 1], [], []>} : vector<8x128xf32>, vector<128x512xf32>, vector<8x512xf32> -> vector<8x512xf32>
    %133 = arith.addf %130, %132 : vector<8x512xf32>
    %134 = vector.extract_strided_slice %133 {offsets = [0, 0], sizes = [8, 128], strides = [1, 1]} : vector<8x512xf32> to vector<8x128xf32>
    %135 = arith.negf %134 : vector<8x128xf32>
    %136 = math.exp %135 : vector<8x128xf32>
    %cst_51 = arith.constant 1.000000e+00 : f32
    %137 = vector.broadcast %cst_51 : f32 to vector<8x128xf32>
    %138 = arith.addf %137, %136 : vector<8x128xf32>
    %139 = arith.divf %137, %138 : vector<8x128xf32>
    %140 = vector.extract_strided_slice %133 {offsets = [0, 128], sizes = [8, 128], strides = [1, 1]} : vector<8x512xf32> to vector<8x128xf32>
    %141 = arith.negf %140 : vector<8x128xf32>
    %142 = math.exp %141 : vector<8x128xf32>
    %cst_52 = arith.constant 1.000000e+00 : f32
    %143 = vector.broadcast %cst_52 : f32 to vector<8x128xf32>
    %144 = arith.addf %143, %142 : vector<8x128xf32>
    %145 = arith.divf %143, %144 : vector<8x128xf32>
    %146 = vector.extract_strided_slice %133 {offsets = [0, 256], sizes = [8, 128], strides = [1, 1]} : vector<8x512xf32> to vector<8x128xf32>
    %147 = math.tanh %146 : vector<8x128xf32>
    %148 = vector.extract_strided_slice %133 {offsets = [0, 384], sizes = [8, 128], strides = [1, 1]} : vector<8x512xf32> to vector<8x128xf32>
    %149 = arith.negf %148 : vector<8x128xf32>
    %150 = math.exp %149 : vector<8x128xf32>
    %cst_53 = arith.constant 1.000000e+00 : f32
    %151 = vector.broadcast %cst_53 : f32 to vector<8x128xf32>
    %152 = arith.addf %151, %150 : vector<8x128xf32>
    %153 = arith.divf %151, %152 : vector<8x128xf32>
    %154 = arith.mulf %145, %126 : vector<8x128xf32>
    %155 = arith.mulf %139, %147 : vector<8x128xf32>
    %156 = arith.addf %154, %155 : vector<8x128xf32>
    %157 = math.tanh %156 : vector<8x128xf32>
    %158 = arith.mulf %153, %157 : vector<8x128xf32>
    %c32_54 = arith.constant 32 : index
    %c0_55 = arith.constant 0 : index
    %159 = vector.load %arg11[%c32_54, %c0_55] : memref<72x128xf32, #tpu.memory_space<vmem>>, vector<8x128xf32>
    tpu.vector_store %arg11[%c32_54, %c0_55], %158 {strides = array<i32>} : memref<72x128xf32, #tpu.memory_space<vmem>>, vector<8x128xf32>,
    %c40 = arith.constant 40 : index
    %c0_56 = arith.constant 0 : index
    %160 = vector.load %arg12[%c40, %c0_56] : memref<72x512xf32, #tpu.memory_space<vmem>>, vector<8x512xf32>
    %c0_57 = arith.constant 0 : index
    %c0_58 = arith.constant 0 : index
    %161 = vector.load %arg3[%c0_57, %c0_58] : memref<128x512xf32, #tpu.memory_space<vmem>>, vector<128x512xf32>
    %cst_59 = arith.constant dense<0.000000e+00> : vector<8x512xf32>
    %162 = tpu.matmul %158, %161, %cst_59 {dimension_numbers = #tpu.dot_dimension_numbers<[1], [0], [0], [1], [0, 0, 1, 1], [], []>} : vector<8x128xf32>, vector<128x512xf32>, vector<8x512xf32> -> vector<8x512xf32>
    %163 = arith.addf %160, %162 : vector<8x512xf32>
    %164 = vector.extract_strided_slice %163 {offsets = [0, 0], sizes = [8, 128], strides = [1, 1]} : vector<8x512xf32> to vector<8x128xf32>
    %165 = arith.negf %164 : vector<8x128xf32>
    %166 = math.exp %165 : vector<8x128xf32>
    %cst_60 = arith.constant 1.000000e+00 : f32
    %167 = vector.broadcast %cst_60 : f32 to vector<8x128xf32>
    %168 = arith.addf %167, %166 : vector<8x128xf32>
    %169 = arith.divf %167, %168 : vector<8x128xf32>
    %170 = vector.extract_strided_slice %163 {offsets = [0, 128], sizes = [8, 128], strides = [1, 1]} : vector<8x512xf32> to vector<8x128xf32>
    %171 = arith.negf %170 : vector<8x128xf32>
    %172 = math.exp %171 : vector<8x128xf32>
    %cst_61 = arith.constant 1.000000e+00 : f32
    %173 = vector.broadcast %cst_61 : f32 to vector<8x128xf32>
    %174 = arith.addf %173, %172 : vector<8x128xf32>
    %175 = arith.divf %173, %174 : vector<8x128xf32>
    %176 = vector.extract_strided_slice %163 {offsets = [0, 256], sizes = [8, 128], strides = [1, 1]} : vector<8x512xf32> to vector<8x128xf32>
    %177 = math.tanh %176 : vector<8x128xf32>
    %178 = vector.extract_strided_slice %163 {offsets = [0, 384], sizes = [8, 128], strides = [1, 1]} : vector<8x512xf32> to vector<8x128xf32>
    %179 = arith.negf %178 : vector<8x128xf32>
    %180 = math.exp %179 : vector<8x128xf32>
    %cst_62 = arith.constant 1.000000e+00 : f32
    %181 = vector.broadcast %cst_62 : f32 to vector<8x128xf32>
    %182 = arith.addf %181, %180 : vector<8x128xf32>
    %183 = arith.divf %181, %182 : vector<8x128xf32>
    %184 = arith.mulf %175, %156 : vector<8x128xf32>
    %185 = arith.mulf %169, %177 : vector<8x128xf32>
    %186 = arith.addf %184, %185 : vector<8x128xf32>
    %187 = math.tanh %186 : vector<8x128xf32>
    %188 = arith.mulf %183, %187 : vector<8x128xf32>
    %c40_63 = arith.constant 40 : index
    %c0_64 = arith.constant 0 : index
    %189 = vector.load %arg11[%c40_63, %c0_64] : memref<72x128xf32, #tpu.memory_space<vmem>>, vector<8x128xf32>
    tpu.vector_store %arg11[%c40_63, %c0_64], %188 {strides = array<i32>} : memref<72x128xf32, #tpu.memory_space<vmem>>, vector<8x128xf32>,
    %c48 = arith.constant 48 : index
    %c0_65 = arith.constant 0 : index
    %190 = vector.load %arg12[%c48, %c0_65] : memref<72x512xf32, #tpu.memory_space<vmem>>, vector<8x512xf32>
    %c0_66 = arith.constant 0 : index
    %c0_67 = arith.constant 0 : index
    %191 = vector.load %arg3[%c0_66, %c0_67] : memref<128x512xf32, #tpu.memory_space<vmem>>, vector<128x512xf32>
    %cst_68 = arith.constant dense<0.000000e+00> : vector<8x512xf32>
    %192 = tpu.matmul %188, %191, %cst_68 {dimension_numbers = #tpu.dot_dimension_numbers<[1], [0], [0], [1], [0, 0, 1, 1], [], []>} : vector<8x128xf32>, vector<128x512xf32>, vector<8x512xf32> -> vector<8x512xf32>
    %193 = arith.addf %190, %192 : vector<8x512xf32>
    %194 = vector.extract_strided_slice %193 {offsets = [0, 0], sizes = [8, 128], strides = [1, 1]} : vector<8x512xf32> to vector<8x128xf32>
    %195 = arith.negf %194 : vector<8x128xf32>
    %196 = math.exp %195 : vector<8x128xf32>
    %cst_69 = arith.constant 1.000000e+00 : f32
    %197 = vector.broadcast %cst_69 : f32 to vector<8x128xf32>
    %198 = arith.addf %197, %196 : vector<8x128xf32>
    %199 = arith.divf %197, %198 : vector<8x128xf32>
    %200 = vector.extract_strided_slice %193 {offsets = [0, 128], sizes = [8, 128], strides = [1, 1]} : vector<8x512xf32> to vector<8x128xf32>
    %201 = arith.negf %200 : vector<8x128xf32>
    %202 = math.exp %201 : vector<8x128xf32>
    %cst_70 = arith.constant 1.000000e+00 : f32
    %203 = vector.broadcast %cst_70 : f32 to vector<8x128xf32>
    %204 = arith.addf %203, %202 : vector<8x128xf32>
    %205 = arith.divf %203, %204 : vector<8x128xf32>
    %206 = vector.extract_strided_slice %193 {offsets = [0, 256], sizes = [8, 128], strides = [1, 1]} : vector<8x512xf32> to vector<8x128xf32>
    %207 = math.tanh %206 : vector<8x128xf32>
    %208 = vector.extract_strided_slice %193 {offsets = [0, 384], sizes = [8, 128], strides = [1, 1]} : vector<8x512xf32> to vector<8x128xf32>
    %209 = arith.negf %208 : vector<8x128xf32>
    %210 = math.exp %209 : vector<8x128xf32>
    %cst_71 = arith.constant 1.000000e+00 : f32
    %211 = vector.broadcast %cst_71 : f32 to vector<8x128xf32>
    %212 = arith.addf %211, %210 : vector<8x128xf32>
    %213 = arith.divf %211, %212 : vector<8x128xf32>
    %214 = arith.mulf %205, %186 : vector<8x128xf32>
    %215 = arith.mulf %199, %207 : vector<8x128xf32>
    %216 = arith.addf %214, %215 : vector<8x128xf32>
    %217 = math.tanh %216 : vector<8x128xf32>
    %218 = arith.mulf %213, %217 : vector<8x128xf32>
    %c48_72 = arith.constant 48 : index
    %c0_73 = arith.constant 0 : index
    %219 = vector.load %arg11[%c48_72, %c0_73] : memref<72x128xf32, #tpu.memory_space<vmem>>, vector<8x128xf32>
    tpu.vector_store %arg11[%c48_72, %c0_73], %218 {strides = array<i32>} : memref<72x128xf32, #tpu.memory_space<vmem>>, vector<8x128xf32>,
    %c56 = arith.constant 56 : index
    %c0_74 = arith.constant 0 : index
    %220 = vector.load %arg12[%c56, %c0_74] : memref<72x512xf32, #tpu.memory_space<vmem>>, vector<8x512xf32>
    %c0_75 = arith.constant 0 : index
    %c0_76 = arith.constant 0 : index
    %221 = vector.load %arg3[%c0_75, %c0_76] : memref<128x512xf32, #tpu.memory_space<vmem>>, vector<128x512xf32>
    %cst_77 = arith.constant dense<0.000000e+00> : vector<8x512xf32>
    %222 = tpu.matmul %218, %221, %cst_77 {dimension_numbers = #tpu.dot_dimension_numbers<[1], [0], [0], [1], [0, 0, 1, 1], [], []>} : vector<8x128xf32>, vector<128x512xf32>, vector<8x512xf32> -> vector<8x512xf32>
    %223 = arith.addf %220, %222 : vector<8x512xf32>
    %224 = vector.extract_strided_slice %223 {offsets = [0, 0], sizes = [8, 128], strides = [1, 1]} : vector<8x512xf32> to vector<8x128xf32>
    %225 = arith.negf %224 : vector<8x128xf32>
    %226 = math.exp %225 : vector<8x128xf32>
    %cst_78 = arith.constant 1.000000e+00 : f32
    %227 = vector.broadcast %cst_78 : f32 to vector<8x128xf32>
    %228 = arith.addf %227, %226 : vector<8x128xf32>
    %229 = arith.divf %227, %228 : vector<8x128xf32>
    %230 = vector.extract_strided_slice %223 {offsets = [0, 128], sizes = [8, 128], strides = [1, 1]} : vector<8x512xf32> to vector<8x128xf32>
    %231 = arith.negf %230 : vector<8x128xf32>
    %232 = math.exp %231 : vector<8x128xf32>
    %cst_79 = arith.constant 1.000000e+00 : f32
    %233 = vector.broadcast %cst_79 : f32 to vector<8x128xf32>
    %234 = arith.addf %233, %232 : vector<8x128xf32>
    %235 = arith.divf %233, %234 : vector<8x128xf32>
    %236 = vector.extract_strided_slice %223 {offsets = [0, 256], sizes = [8, 128], strides = [1, 1]} : vector<8x512xf32> to vector<8x128xf32>
    %237 = math.tanh %236 : vector<8x128xf32>
    %238 = vector.extract_strided_slice %223 {offsets = [0, 384], sizes = [8, 128], strides = [1, 1]} : vector<8x512xf32> to vector<8x128xf32>
    %239 = arith.negf %238 : vector<8x128xf32>
    %240 = math.exp %239 : vector<8x128xf32>
    %cst_80 = arith.constant 1.000000e+00 : f32
    %241 = vector.broadcast %cst_80 : f32 to vector<8x128xf32>
    %242 = arith.addf %241, %240 : vector<8x128xf32>
    %243 = arith.divf %241, %242 : vector<8x128xf32>
    %244 = arith.mulf %235, %216 : vector<8x128xf32>
    %245 = arith.mulf %229, %237 : vector<8x128xf32>
    %246 = arith.addf %244, %245 : vector<8x128xf32>
    %247 = math.tanh %246 : vector<8x128xf32>
    %248 = arith.mulf %243, %247 : vector<8x128xf32>
    %c56_81 = arith.constant 56 : index
    %c0_82 = arith.constant 0 : index
    %249 = vector.load %arg11[%c56_81, %c0_82] : memref<72x128xf32, #tpu.memory_space<vmem>>, vector<8x128xf32>
    tpu.vector_store %arg11[%c56_81, %c0_82], %248 {strides = array<i32>} : memref<72x128xf32, #tpu.memory_space<vmem>>, vector<8x128xf32>,
    %c64 = arith.constant 64 : index
    %c0_83 = arith.constant 0 : index
    %250 = vector.load %arg12[%c64, %c0_83] : memref<72x512xf32, #tpu.memory_space<vmem>>, vector<8x512xf32>
    %c0_84 = arith.constant 0 : index
    %c0_85 = arith.constant 0 : index
    %251 = vector.load %arg3[%c0_84, %c0_85] : memref<128x512xf32, #tpu.memory_space<vmem>>, vector<128x512xf32>
    %cst_86 = arith.constant dense<0.000000e+00> : vector<8x512xf32>
    %252 = tpu.matmul %248, %251, %cst_86 {dimension_numbers = #tpu.dot_dimension_numbers<[1], [0], [0], [1], [0, 0, 1, 1], [], []>} : vector<8x128xf32>, vector<128x512xf32>, vector<8x512xf32> -> vector<8x512xf32>
    %253 = arith.addf %250, %252 : vector<8x512xf32>
    %254 = vector.extract_strided_slice %253 {offsets = [0, 0], sizes = [8, 128], strides = [1, 1]} : vector<8x512xf32> to vector<8x128xf32>
    %255 = arith.negf %254 : vector<8x128xf32>
    %256 = math.exp %255 : vector<8x128xf32>
    %cst_87 = arith.constant 1.000000e+00 : f32
    %257 = vector.broadcast %cst_87 : f32 to vector<8x128xf32>
    %258 = arith.addf %257, %256 : vector<8x128xf32>
    %259 = arith.divf %257, %258 : vector<8x128xf32>
    %260 = vector.extract_strided_slice %253 {offsets = [0, 128], sizes = [8, 128], strides = [1, 1]} : vector<8x512xf32> to vector<8x128xf32>
    %261 = arith.negf %260 : vector<8x128xf32>
    %262 = math.exp %261 : vector<8x128xf32>
    %cst_88 = arith.constant 1.000000e+00 : f32
    %263 = vector.broadcast %cst_88 : f32 to vector<8x128xf32>
    %264 = arith.addf %263, %262 : vector<8x128xf32>
    %265 = arith.divf %263, %264 : vector<8x128xf32>
    %266 = vector.extract_strided_slice %253 {offsets = [0, 256], sizes = [8, 128], strides = [1, 1]} : vector<8x512xf32> to vector<8x128xf32>
    %267 = math.tanh %266 : vector<8x128xf32>
    %268 = vector.extract_strided_slice %253 {offsets = [0, 384], sizes = [8, 128], strides = [1, 1]} : vector<8x512xf32> to vector<8x128xf32>
    %269 = arith.negf %268 : vector<8x128xf32>
    %270 = math.exp %269 : vector<8x128xf32>
    %cst_89 = arith.constant 1.000000e+00 : f32
    %271 = vector.broadcast %cst_89 : f32 to vector<8x128xf32>
    %272 = arith.addf %271, %270 : vector<8x128xf32>
    %273 = arith.divf %271, %272 : vector<8x128xf32>
    %274 = arith.mulf %265, %246 : vector<8x128xf32>
    %275 = arith.mulf %259, %267 : vector<8x128xf32>
    %276 = arith.addf %274, %275 : vector<8x128xf32>
    %277 = math.tanh %276 : vector<8x128xf32>
    %278 = arith.mulf %273, %277 : vector<8x128xf32>
    %c64_90 = arith.constant 64 : index
    %c0_91 = arith.constant 0 : index
    %279 = vector.load %arg11[%c64_90, %c0_91] : memref<72x128xf32, #tpu.memory_space<vmem>>, vector<8x128xf32>
    tpu.vector_store %arg11[%c64_90, %c0_91], %278 {strides = array<i32>} : memref<72x128xf32, #tpu.memory_space<vmem>>, vector<8x128xf32>,
    %c0_92 = arith.constant 0 : index
    %c0_93 = arith.constant 0 : index
    %280 = vector.load %arg11[%c0_92, %c0_93] : memref<72x128xf32, #tpu.memory_space<vmem>>, vector<72x128xf32>
    %c0_94 = arith.constant 0 : index
    %c0_95 = arith.constant 0 : index
    %281 = vector.load %arg5[%c0_94, %c0_95] : memref<128x512xf32, #tpu.memory_space<vmem>>, vector<128x512xf32>
    %cst_96 = arith.constant dense<0.000000e+00> : vector<72x512xf32>
    %282 = tpu.matmul %280, %281, %cst_96 {dimension_numbers = #tpu.dot_dimension_numbers<[1], [0], [0], [1], [0, 0, 1, 1], [], []>} : vector<72x128xf32>, vector<128x512xf32>, vector<72x512xf32> -> vector<72x512xf32>
    %c0_97 = arith.constant 0 : index
    %c0_98 = arith.constant 0 : index
    %283 = vector.load %arg7[%c0_97, %c0_98] : memref<1x512xf32, #tpu.memory_space<vmem>>, vector<1x512xf32>
    %284 = vector.broadcast %283 : vector<1x512xf32> to vector<72x512xf32>
    %285 = arith.addf %282, %284 : vector<72x512xf32>
    %c0_99 = arith.constant 0 : index
    %c0_100 = arith.constant 0 : index
    %286 = vector.load %arg12[%c0_99, %c0_100] : memref<72x512xf32, #tpu.memory_space<vmem>>, vector<72x512xf32>
    tpu.vector_store %arg12[%c0_99, %c0_100], %285 {strides = array<i32>} : memref<72x512xf32, #tpu.memory_space<vmem>>, vector<72x512xf32>,
    %cst_101 = arith.constant 0.000000e+00 : f32
    %287 = vector.broadcast %cst_101 : f32 to vector<8x128xf32>
    %cst_102 = arith.constant 0.000000e+00 : f32
    %288 = vector.broadcast %cst_102 : f32 to vector<8x128xf32>
    %c0_103 = arith.constant 0 : index
    %c0_104 = arith.constant 0 : index
    %289 = vector.load %arg12[%c0_103, %c0_104] : memref<72x512xf32, #tpu.memory_space<vmem>>, vector<8x512xf32>
    %c0_105 = arith.constant 0 : index
    %c0_106 = arith.constant 0 : index
    %290 = vector.load %arg6[%c0_105, %c0_106] : memref<128x512xf32, #tpu.memory_space<vmem>>, vector<128x512xf32>
    %cst_107 = arith.constant dense<0.000000e+00> : vector<8x512xf32>
    %291 = tpu.matmul %287, %290, %cst_107 {dimension_numbers = #tpu.dot_dimension_numbers<[1], [0], [0], [1], [0, 0, 1, 1], [], []>} : vector<8x128xf32>, vector<128x512xf32>, vector<8x512xf32> -> vector<8x512xf32>
    %292 = arith.addf %289, %291 : vector<8x512xf32>
    %293 = vector.extract_strided_slice %292 {offsets = [0, 0], sizes = [8, 128], strides = [1, 1]} : vector<8x512xf32> to vector<8x128xf32>
    %294 = arith.negf %293 : vector<8x128xf32>
    %295 = math.exp %294 : vector<8x128xf32>
    %cst_108 = arith.constant 1.000000e+00 : f32
    %296 = vector.broadcast %cst_108 : f32 to vector<8x128xf32>
    %297 = arith.addf %296, %295 : vector<8x128xf32>
    %298 = arith.divf %296, %297 : vector<8x128xf32>
    %299 = vector.extract_strided_slice %292 {offsets = [0, 128], sizes = [8, 128], strides = [1, 1]} : vector<8x512xf32> to vector<8x128xf32>
    %300 = arith.negf %299 : vector<8x128xf32>
    %301 = math.exp %300 : vector<8x128xf32>
    %cst_109 = arith.constant 1.000000e+00 : f32
    %302 = vector.broadcast %cst_109 : f32 to vector<8x128xf32>
    %303 = arith.addf %302, %301 : vector<8x128xf32>
    %304 = arith.divf %302, %303 : vector<8x128xf32>
    %305 = vector.extract_strided_slice %292 {offsets = [0, 256], sizes = [8, 128], strides = [1, 1]} : vector<8x512xf32> to vector<8x128xf32>
    %306 = math.tanh %305 : vector<8x128xf32>
    %307 = vector.extract_strided_slice %292 {offsets = [0, 384], sizes = [8, 128], strides = [1, 1]} : vector<8x512xf32> to vector<8x128xf32>
    %308 = arith.negf %307 : vector<8x128xf32>
    %309 = math.exp %308 : vector<8x128xf32>
    %cst_110 = arith.constant 1.000000e+00 : f32
    %310 = vector.broadcast %cst_110 : f32 to vector<8x128xf32>
    %311 = arith.addf %310, %309 : vector<8x128xf32>
    %312 = arith.divf %310, %311 : vector<8x128xf32>
    %313 = arith.mulf %304, %288 : vector<8x128xf32>
    %314 = arith.mulf %298, %306 : vector<8x128xf32>
    %315 = arith.addf %313, %314 : vector<8x128xf32>
    %316 = math.tanh %315 : vector<8x128xf32>
    %317 = arith.mulf %312, %316 : vector<8x128xf32>
    %c0_111 = arith.constant 0 : index
    %c0_112 = arith.constant 0 : index
    %318 = vector.load %arg11[%c0_111, %c0_112] : memref<72x128xf32, #tpu.memory_space<vmem>>, vector<8x128xf32>
    tpu.vector_store %arg11[%c0_111, %c0_112], %317 {strides = array<i32>} : memref<72x128xf32, #tpu.memory_space<vmem>>, vector<8x128xf32>,
    %c8_113 = arith.constant 8 : index
    %c0_114 = arith.constant 0 : index
    %319 = vector.load %arg12[%c8_113, %c0_114] : memref<72x512xf32, #tpu.memory_space<vmem>>, vector<8x512xf32>
    %c0_115 = arith.constant 0 : index
    %c0_116 = arith.constant 0 : index
    %320 = vector.load %arg6[%c0_115, %c0_116] : memref<128x512xf32, #tpu.memory_space<vmem>>, vector<128x512xf32>
    %cst_117 = arith.constant dense<0.000000e+00> : vector<8x512xf32>
    %321 = tpu.matmul %317, %320, %cst_117 {dimension_numbers = #tpu.dot_dimension_numbers<[1], [0], [0], [1], [0, 0, 1, 1], [], []>} : vector<8x128xf32>, vector<128x512xf32>, vector<8x512xf32> -> vector<8x512xf32>
    %322 = arith.addf %319, %321 : vector<8x512xf32>
    %323 = vector.extract_strided_slice %322 {offsets = [0, 0], sizes = [8, 128], strides = [1, 1]} : vector<8x512xf32> to vector<8x128xf32>
    %324 = arith.negf %323 : vector<8x128xf32>
    %325 = math.exp %324 : vector<8x128xf32>
    %cst_118 = arith.constant 1.000000e+00 : f32
    %326 = vector.broadcast %cst_118 : f32 to vector<8x128xf32>
    %327 = arith.addf %326, %325 : vector<8x128xf32>
    %328 = arith.divf %326, %327 : vector<8x128xf32>
    %329 = vector.extract_strided_slice %322 {offsets = [0, 128], sizes = [8, 128], strides = [1, 1]} : vector<8x512xf32> to vector<8x128xf32>
    %330 = arith.negf %329 : vector<8x128xf32>
    %331 = math.exp %330 : vector<8x128xf32>
    %cst_119 = arith.constant 1.000000e+00 : f32
    %332 = vector.broadcast %cst_119 : f32 to vector<8x128xf32>
    %333 = arith.addf %332, %331 : vector<8x128xf32>
    %334 = arith.divf %332, %333 : vector<8x128xf32>
    %335 = vector.extract_strided_slice %322 {offsets = [0, 256], sizes = [8, 128], strides = [1, 1]} : vector<8x512xf32> to vector<8x128xf32>
    %336 = math.tanh %335 : vector<8x128xf32>
    %337 = vector.extract_strided_slice %322 {offsets = [0, 384], sizes = [8, 128], strides = [1, 1]} : vector<8x512xf32> to vector<8x128xf32>
    %338 = arith.negf %337 : vector<8x128xf32>
    %339 = math.exp %338 : vector<8x128xf32>
    %cst_120 = arith.constant 1.000000e+00 : f32
    %340 = vector.broadcast %cst_120 : f32 to vector<8x128xf32>
    %341 = arith.addf %340, %339 : vector<8x128xf32>
    %342 = arith.divf %340, %341 : vector<8x128xf32>
    %343 = arith.mulf %334, %315 : vector<8x128xf32>
    %344 = arith.mulf %328, %336 : vector<8x128xf32>
    %345 = arith.addf %343, %344 : vector<8x128xf32>
    %346 = math.tanh %345 : vector<8x128xf32>
    %347 = arith.mulf %342, %346 : vector<8x128xf32>
    %c8_121 = arith.constant 8 : index
    %c0_122 = arith.constant 0 : index
    %348 = vector.load %arg11[%c8_121, %c0_122] : memref<72x128xf32, #tpu.memory_space<vmem>>, vector<8x128xf32>
    tpu.vector_store %arg11[%c8_121, %c0_122], %347 {strides = array<i32>} : memref<72x128xf32, #tpu.memory_space<vmem>>, vector<8x128xf32>,
    %c16_123 = arith.constant 16 : index
    %c0_124 = arith.constant 0 : index
    %349 = vector.load %arg12[%c16_123, %c0_124] : memref<72x512xf32, #tpu.memory_space<vmem>>, vector<8x512xf32>
    %c0_125 = arith.constant 0 : index
    %c0_126 = arith.constant 0 : index
    %350 = vector.load %arg6[%c0_125, %c0_126] : memref<128x512xf32, #tpu.memory_space<vmem>>, vector<128x512xf32>
    %cst_127 = arith.constant dense<0.000000e+00> : vector<8x512xf32>
    %351 = tpu.matmul %347, %350, %cst_127 {dimension_numbers = #tpu.dot_dimension_numbers<[1], [0], [0], [1], [0, 0, 1, 1], [], []>} : vector<8x128xf32>, vector<128x512xf32>, vector<8x512xf32> -> vector<8x512xf32>
    %352 = arith.addf %349, %351 : vector<8x512xf32>
    %353 = vector.extract_strided_slice %352 {offsets = [0, 0], sizes = [8, 128], strides = [1, 1]} : vector<8x512xf32> to vector<8x128xf32>
    %354 = arith.negf %353 : vector<8x128xf32>
    %355 = math.exp %354 : vector<8x128xf32>
    %cst_128 = arith.constant 1.000000e+00 : f32
    %356 = vector.broadcast %cst_128 : f32 to vector<8x128xf32>
    %357 = arith.addf %356, %355 : vector<8x128xf32>
    %358 = arith.divf %356, %357 : vector<8x128xf32>
    %359 = vector.extract_strided_slice %352 {offsets = [0, 128], sizes = [8, 128], strides = [1, 1]} : vector<8x512xf32> to vector<8x128xf32>
    %360 = arith.negf %359 : vector<8x128xf32>
    %361 = math.exp %360 : vector<8x128xf32>
    %cst_129 = arith.constant 1.000000e+00 : f32
    %362 = vector.broadcast %cst_129 : f32 to vector<8x128xf32>
    %363 = arith.addf %362, %361 : vector<8x128xf32>
    %364 = arith.divf %362, %363 : vector<8x128xf32>
    %365 = vector.extract_strided_slice %352 {offsets = [0, 256], sizes = [8, 128], strides = [1, 1]} : vector<8x512xf32> to vector<8x128xf32>
    %366 = math.tanh %365 : vector<8x128xf32>
    %367 = vector.extract_strided_slice %352 {offsets = [0, 384], sizes = [8, 128], strides = [1, 1]} : vector<8x512xf32> to vector<8x128xf32>
    %368 = arith.negf %367 : vector<8x128xf32>
    %369 = math.exp %368 : vector<8x128xf32>
    %cst_130 = arith.constant 1.000000e+00 : f32
    %370 = vector.broadcast %cst_130 : f32 to vector<8x128xf32>
    %371 = arith.addf %370, %369 : vector<8x128xf32>
    %372 = arith.divf %370, %371 : vector<8x128xf32>
    %373 = arith.mulf %364, %345 : vector<8x128xf32>
    %374 = arith.mulf %358, %366 : vector<8x128xf32>
    %375 = arith.addf %373, %374 : vector<8x128xf32>
    %376 = math.tanh %375 : vector<8x128xf32>
    %377 = arith.mulf %372, %376 : vector<8x128xf32>
    %c16_131 = arith.constant 16 : index
    %c0_132 = arith.constant 0 : index
    %378 = vector.load %arg11[%c16_131, %c0_132] : memref<72x128xf32, #tpu.memory_space<vmem>>, vector<8x128xf32>
    tpu.vector_store %arg11[%c16_131, %c0_132], %377 {strides = array<i32>} : memref<72x128xf32, #tpu.memory_space<vmem>>, vector<8x128xf32>,
    %c24_133 = arith.constant 24 : index
    %c0_134 = arith.constant 0 : index
    %379 = vector.load %arg12[%c24_133, %c0_134] : memref<72x512xf32, #tpu.memory_space<vmem>>, vector<8x512xf32>
    %c0_135 = arith.constant 0 : index
    %c0_136 = arith.constant 0 : index
    %380 = vector.load %arg6[%c0_135, %c0_136] : memref<128x512xf32, #tpu.memory_space<vmem>>, vector<128x512xf32>
    %cst_137 = arith.constant dense<0.000000e+00> : vector<8x512xf32>
    %381 = tpu.matmul %377, %380, %cst_137 {dimension_numbers = #tpu.dot_dimension_numbers<[1], [0], [0], [1], [0, 0, 1, 1], [], []>} : vector<8x128xf32>, vector<128x512xf32>, vector<8x512xf32> -> vector<8x512xf32>
    %382 = arith.addf %379, %381 : vector<8x512xf32>
    %383 = vector.extract_strided_slice %382 {offsets = [0, 0], sizes = [8, 128], strides = [1, 1]} : vector<8x512xf32> to vector<8x128xf32>
    %384 = arith.negf %383 : vector<8x128xf32>
    %385 = math.exp %384 : vector<8x128xf32>
    %cst_138 = arith.constant 1.000000e+00 : f32
    %386 = vector.broadcast %cst_138 : f32 to vector<8x128xf32>
    %387 = arith.addf %386, %385 : vector<8x128xf32>
    %388 = arith.divf %386, %387 : vector<8x128xf32>
    %389 = vector.extract_strided_slice %382 {offsets = [0, 128], sizes = [8, 128], strides = [1, 1]} : vector<8x512xf32> to vector<8x128xf32>
    %390 = arith.negf %389 : vector<8x128xf32>
    %391 = math.exp %390 : vector<8x128xf32>
    %cst_139 = arith.constant 1.000000e+00 : f32
    %392 = vector.broadcast %cst_139 : f32 to vector<8x128xf32>
    %393 = arith.addf %392, %391 : vector<8x128xf32>
    %394 = arith.divf %392, %393 : vector<8x128xf32>
    %395 = vector.extract_strided_slice %382 {offsets = [0, 256], sizes = [8, 128], strides = [1, 1]} : vector<8x512xf32> to vector<8x128xf32>
    %396 = math.tanh %395 : vector<8x128xf32>
    %397 = vector.extract_strided_slice %382 {offsets = [0, 384], sizes = [8, 128], strides = [1, 1]} : vector<8x512xf32> to vector<8x128xf32>
    %398 = arith.negf %397 : vector<8x128xf32>
    %399 = math.exp %398 : vector<8x128xf32>
    %cst_140 = arith.constant 1.000000e+00 : f32
    %400 = vector.broadcast %cst_140 : f32 to vector<8x128xf32>
    %401 = arith.addf %400, %399 : vector<8x128xf32>
    %402 = arith.divf %400, %401 : vector<8x128xf32>
    %403 = arith.mulf %394, %375 : vector<8x128xf32>
    %404 = arith.mulf %388, %396 : vector<8x128xf32>
    %405 = arith.addf %403, %404 : vector<8x128xf32>
    %406 = math.tanh %405 : vector<8x128xf32>
    %407 = arith.mulf %402, %406 : vector<8x128xf32>
    %c24_141 = arith.constant 24 : index
    %c0_142 = arith.constant 0 : index
    %408 = vector.load %arg11[%c24_141, %c0_142] : memref<72x128xf32, #tpu.memory_space<vmem>>, vector<8x128xf32>
    tpu.vector_store %arg11[%c24_141, %c0_142], %407 {strides = array<i32>} : memref<72x128xf32, #tpu.memory_space<vmem>>, vector<8x128xf32>,
    %c32_143 = arith.constant 32 : index
    %c0_144 = arith.constant 0 : index
    %409 = vector.load %arg12[%c32_143, %c0_144] : memref<72x512xf32, #tpu.memory_space<vmem>>, vector<8x512xf32>
    %c0_145 = arith.constant 0 : index
    %c0_146 = arith.constant 0 : index
    %410 = vector.load %arg6[%c0_145, %c0_146] : memref<128x512xf32, #tpu.memory_space<vmem>>, vector<128x512xf32>
    %cst_147 = arith.constant dense<0.000000e+00> : vector<8x512xf32>
    %411 = tpu.matmul %407, %410, %cst_147 {dimension_numbers = #tpu.dot_dimension_numbers<[1], [0], [0], [1], [0, 0, 1, 1], [], []>} : vector<8x128xf32>, vector<128x512xf32>, vector<8x512xf32> -> vector<8x512xf32>
    %412 = arith.addf %409, %411 : vector<8x512xf32>
    %413 = vector.extract_strided_slice %412 {offsets = [0, 0], sizes = [8, 128], strides = [1, 1]} : vector<8x512xf32> to vector<8x128xf32>
    %414 = arith.negf %413 : vector<8x128xf32>
    %415 = math.exp %414 : vector<8x128xf32>
    %cst_148 = arith.constant 1.000000e+00 : f32
    %416 = vector.broadcast %cst_148 : f32 to vector<8x128xf32>
    %417 = arith.addf %416, %415 : vector<8x128xf32>
    %418 = arith.divf %416, %417 : vector<8x128xf32>
    %419 = vector.extract_strided_slice %412 {offsets = [0, 128], sizes = [8, 128], strides = [1, 1]} : vector<8x512xf32> to vector<8x128xf32>
    %420 = arith.negf %419 : vector<8x128xf32>
    %421 = math.exp %420 : vector<8x128xf32>
    %cst_149 = arith.constant 1.000000e+00 : f32
    %422 = vector.broadcast %cst_149 : f32 to vector<8x128xf32>
    %423 = arith.addf %422, %421 : vector<8x128xf32>
    %424 = arith.divf %422, %423 : vector<8x128xf32>
    %425 = vector.extract_strided_slice %412 {offsets = [0, 256], sizes = [8, 128], strides = [1, 1]} : vector<8x512xf32> to vector<8x128xf32>
    %426 = math.tanh %425 : vector<8x128xf32>
    %427 = vector.extract_strided_slice %412 {offsets = [0, 384], sizes = [8, 128], strides = [1, 1]} : vector<8x512xf32> to vector<8x128xf32>
    %428 = arith.negf %427 : vector<8x128xf32>
    %429 = math.exp %428 : vector<8x128xf32>
    %cst_150 = arith.constant 1.000000e+00 : f32
    %430 = vector.broadcast %cst_150 : f32 to vector<8x128xf32>
    %431 = arith.addf %430, %429 : vector<8x128xf32>
    %432 = arith.divf %430, %431 : vector<8x128xf32>
    %433 = arith.mulf %424, %405 : vector<8x128xf32>
    %434 = arith.mulf %418, %426 : vector<8x128xf32>
    %435 = arith.addf %433, %434 : vector<8x128xf32>
    %436 = math.tanh %435 : vector<8x128xf32>
    %437 = arith.mulf %432, %436 : vector<8x128xf32>
    %c32_151 = arith.constant 32 : index
    %c0_152 = arith.constant 0 : index
    %438 = vector.load %arg11[%c32_151, %c0_152] : memref<72x128xf32, #tpu.memory_space<vmem>>, vector<8x128xf32>
    tpu.vector_store %arg11[%c32_151, %c0_152], %437 {strides = array<i32>} : memref<72x128xf32, #tpu.memory_space<vmem>>, vector<8x128xf32>,
    %c40_153 = arith.constant 40 : index
    %c0_154 = arith.constant 0 : index
    %439 = vector.load %arg12[%c40_153, %c0_154] : memref<72x512xf32, #tpu.memory_space<vmem>>, vector<8x512xf32>
    %c0_155 = arith.constant 0 : index
    %c0_156 = arith.constant 0 : index
    %440 = vector.load %arg6[%c0_155, %c0_156] : memref<128x512xf32, #tpu.memory_space<vmem>>, vector<128x512xf32>
    %cst_157 = arith.constant dense<0.000000e+00> : vector<8x512xf32>
    %441 = tpu.matmul %437, %440, %cst_157 {dimension_numbers = #tpu.dot_dimension_numbers<[1], [0], [0], [1], [0, 0, 1, 1], [], []>} : vector<8x128xf32>, vector<128x512xf32>, vector<8x512xf32> -> vector<8x512xf32>
    %442 = arith.addf %439, %441 : vector<8x512xf32>
    %443 = vector.extract_strided_slice %442 {offsets = [0, 0], sizes = [8, 128], strides = [1, 1]} : vector<8x512xf32> to vector<8x128xf32>
    %444 = arith.negf %443 : vector<8x128xf32>
    %445 = math.exp %444 : vector<8x128xf32>
    %cst_158 = arith.constant 1.000000e+00 : f32
    %446 = vector.broadcast %cst_158 : f32 to vector<8x128xf32>
    %447 = arith.addf %446, %445 : vector<8x128xf32>
    %448 = arith.divf %446, %447 : vector<8x128xf32>
    %449 = vector.extract_strided_slice %442 {offsets = [0, 128], sizes = [8, 128], strides = [1, 1]} : vector<8x512xf32> to vector<8x128xf32>
    %450 = arith.negf %449 : vector<8x128xf32>
    %451 = math.exp %450 : vector<8x128xf32>
    %cst_159 = arith.constant 1.000000e+00 : f32
    %452 = vector.broadcast %cst_159 : f32 to vector<8x128xf32>
    %453 = arith.addf %452, %451 : vector<8x128xf32>
    %454 = arith.divf %452, %453 : vector<8x128xf32>
    %455 = vector.extract_strided_slice %442 {offsets = [0, 256], sizes = [8, 128], strides = [1, 1]} : vector<8x512xf32> to vector<8x128xf32>
    %456 = math.tanh %455 : vector<8x128xf32>
    %457 = vector.extract_strided_slice %442 {offsets = [0, 384], sizes = [8, 128], strides = [1, 1]} : vector<8x512xf32> to vector<8x128xf32>
    %458 = arith.negf %457 : vector<8x128xf32>
    %459 = math.exp %458 : vector<8x128xf32>
    %cst_160 = arith.constant 1.000000e+00 : f32
    %460 = vector.broadcast %cst_160 : f32 to vector<8x128xf32>
    %461 = arith.addf %460, %459 : vector<8x128xf32>
    %462 = arith.divf %460, %461 : vector<8x128xf32>
    %463 = arith.mulf %454, %435 : vector<8x128xf32>
    %464 = arith.mulf %448, %456 : vector<8x128xf32>
    %465 = arith.addf %463, %464 : vector<8x128xf32>
    %466 = math.tanh %465 : vector<8x128xf32>
    %467 = arith.mulf %462, %466 : vector<8x128xf32>
    %c40_161 = arith.constant 40 : index
    %c0_162 = arith.constant 0 : index
    %468 = vector.load %arg11[%c40_161, %c0_162] : memref<72x128xf32, #tpu.memory_space<vmem>>, vector<8x128xf32>
    tpu.vector_store %arg11[%c40_161, %c0_162], %467 {strides = array<i32>} : memref<72x128xf32, #tpu.memory_space<vmem>>, vector<8x128xf32>,
    %c48_163 = arith.constant 48 : index
    %c0_164 = arith.constant 0 : index
    %469 = vector.load %arg12[%c48_163, %c0_164] : memref<72x512xf32, #tpu.memory_space<vmem>>, vector<8x512xf32>
    %c0_165 = arith.constant 0 : index
    %c0_166 = arith.constant 0 : index
    %470 = vector.load %arg6[%c0_165, %c0_166] : memref<128x512xf32, #tpu.memory_space<vmem>>, vector<128x512xf32>
    %cst_167 = arith.constant dense<0.000000e+00> : vector<8x512xf32>
    %471 = tpu.matmul %467, %470, %cst_167 {dimension_numbers = #tpu.dot_dimension_numbers<[1], [0], [0], [1], [0, 0, 1, 1], [], []>} : vector<8x128xf32>, vector<128x512xf32>, vector<8x512xf32> -> vector<8x512xf32>
    %472 = arith.addf %469, %471 : vector<8x512xf32>
    %473 = vector.extract_strided_slice %472 {offsets = [0, 0], sizes = [8, 128], strides = [1, 1]} : vector<8x512xf32> to vector<8x128xf32>
    %474 = arith.negf %473 : vector<8x128xf32>
    %475 = math.exp %474 : vector<8x128xf32>
    %cst_168 = arith.constant 1.000000e+00 : f32
    %476 = vector.broadcast %cst_168 : f32 to vector<8x128xf32>
    %477 = arith.addf %476, %475 : vector<8x128xf32>
    %478 = arith.divf %476, %477 : vector<8x128xf32>
    %479 = vector.extract_strided_slice %472 {offsets = [0, 128], sizes = [8, 128], strides = [1, 1]} : vector<8x512xf32> to vector<8x128xf32>
    %480 = arith.negf %479 : vector<8x128xf32>
    %481 = math.exp %480 : vector<8x128xf32>
    %cst_169 = arith.constant 1.000000e+00 : f32
    %482 = vector.broadcast %cst_169 : f32 to vector<8x128xf32>
    %483 = arith.addf %482, %481 : vector<8x128xf32>
    %484 = arith.divf %482, %483 : vector<8x128xf32>
    %485 = vector.extract_strided_slice %472 {offsets = [0, 256], sizes = [8, 128], strides = [1, 1]} : vector<8x512xf32> to vector<8x128xf32>
    %486 = math.tanh %485 : vector<8x128xf32>
    %487 = vector.extract_strided_slice %472 {offsets = [0, 384], sizes = [8, 128], strides = [1, 1]} : vector<8x512xf32> to vector<8x128xf32>
    %488 = arith.negf %487 : vector<8x128xf32>
    %489 = math.exp %488 : vector<8x128xf32>
    %cst_170 = arith.constant 1.000000e+00 : f32
    %490 = vector.broadcast %cst_170 : f32 to vector<8x128xf32>
    %491 = arith.addf %490, %489 : vector<8x128xf32>
    %492 = arith.divf %490, %491 : vector<8x128xf32>
    %493 = arith.mulf %484, %465 : vector<8x128xf32>
    %494 = arith.mulf %478, %486 : vector<8x128xf32>
    %495 = arith.addf %493, %494 : vector<8x128xf32>
    %496 = math.tanh %495 : vector<8x128xf32>
    %497 = arith.mulf %492, %496 : vector<8x128xf32>
    %c48_171 = arith.constant 48 : index
    %c0_172 = arith.constant 0 : index
    %498 = vector.load %arg11[%c48_171, %c0_172] : memref<72x128xf32, #tpu.memory_space<vmem>>, vector<8x128xf32>
    tpu.vector_store %arg11[%c48_171, %c0_172], %497 {strides = array<i32>} : memref<72x128xf32, #tpu.memory_space<vmem>>, vector<8x128xf32>,
    %c56_173 = arith.constant 56 : index
    %c0_174 = arith.constant 0 : index
    %499 = vector.load %arg12[%c56_173, %c0_174] : memref<72x512xf32, #tpu.memory_space<vmem>>, vector<8x512xf32>
    %c0_175 = arith.constant 0 : index
    %c0_176 = arith.constant 0 : index
    %500 = vector.load %arg6[%c0_175, %c0_176] : memref<128x512xf32, #tpu.memory_space<vmem>>, vector<128x512xf32>
    %cst_177 = arith.constant dense<0.000000e+00> : vector<8x512xf32>
    %501 = tpu.matmul %497, %500, %cst_177 {dimension_numbers = #tpu.dot_dimension_numbers<[1], [0], [0], [1], [0, 0, 1, 1], [], []>} : vector<8x128xf32>, vector<128x512xf32>, vector<8x512xf32> -> vector<8x512xf32>
    %502 = arith.addf %499, %501 : vector<8x512xf32>
    %503 = vector.extract_strided_slice %502 {offsets = [0, 0], sizes = [8, 128], strides = [1, 1]} : vector<8x512xf32> to vector<8x128xf32>
    %504 = arith.negf %503 : vector<8x128xf32>
    %505 = math.exp %504 : vector<8x128xf32>
    %cst_178 = arith.constant 1.000000e+00 : f32
    %506 = vector.broadcast %cst_178 : f32 to vector<8x128xf32>
    %507 = arith.addf %506, %505 : vector<8x128xf32>
    %508 = arith.divf %506, %507 : vector<8x128xf32>
    %509 = vector.extract_strided_slice %502 {offsets = [0, 128], sizes = [8, 128], strides = [1, 1]} : vector<8x512xf32> to vector<8x128xf32>
    %510 = arith.negf %509 : vector<8x128xf32>
    %511 = math.exp %510 : vector<8x128xf32>
    %cst_179 = arith.constant 1.000000e+00 : f32
    %512 = vector.broadcast %cst_179 : f32 to vector<8x128xf32>
    %513 = arith.addf %512, %511 : vector<8x128xf32>
    %514 = arith.divf %512, %513 : vector<8x128xf32>
    %515 = vector.extract_strided_slice %502 {offsets = [0, 256], sizes = [8, 128], strides = [1, 1]} : vector<8x512xf32> to vector<8x128xf32>
    %516 = math.tanh %515 : vector<8x128xf32>
    %517 = vector.extract_strided_slice %502 {offsets = [0, 384], sizes = [8, 128], strides = [1, 1]} : vector<8x512xf32> to vector<8x128xf32>
    %518 = arith.negf %517 : vector<8x128xf32>
    %519 = math.exp %518 : vector<8x128xf32>
    %cst_180 = arith.constant 1.000000e+00 : f32
    %520 = vector.broadcast %cst_180 : f32 to vector<8x128xf32>
    %521 = arith.addf %520, %519 : vector<8x128xf32>
    %522 = arith.divf %520, %521 : vector<8x128xf32>
    %523 = arith.mulf %514, %495 : vector<8x128xf32>
    %524 = arith.mulf %508, %516 : vector<8x128xf32>
    %525 = arith.addf %523, %524 : vector<8x128xf32>
    %526 = math.tanh %525 : vector<8x128xf32>
    %527 = arith.mulf %522, %526 : vector<8x128xf32>
    %c56_181 = arith.constant 56 : index
    %c0_182 = arith.constant 0 : index
    %528 = vector.load %arg11[%c56_181, %c0_182] : memref<72x128xf32, #tpu.memory_space<vmem>>, vector<8x128xf32>
    tpu.vector_store %arg11[%c56_181, %c0_182], %527 {strides = array<i32>} : memref<72x128xf32, #tpu.memory_space<vmem>>, vector<8x128xf32>,
    %c64_183 = arith.constant 64 : index
    %c0_184 = arith.constant 0 : index
    %529 = vector.load %arg12[%c64_183, %c0_184] : memref<72x512xf32, #tpu.memory_space<vmem>>, vector<8x512xf32>
    %c0_185 = arith.constant 0 : index
    %c0_186 = arith.constant 0 : index
    %530 = vector.load %arg6[%c0_185, %c0_186] : memref<128x512xf32, #tpu.memory_space<vmem>>, vector<128x512xf32>
    %cst_187 = arith.constant dense<0.000000e+00> : vector<8x512xf32>
    %531 = tpu.matmul %527, %530, %cst_187 {dimension_numbers = #tpu.dot_dimension_numbers<[1], [0], [0], [1], [0, 0, 1, 1], [], []>} : vector<8x128xf32>, vector<128x512xf32>, vector<8x512xf32> -> vector<8x512xf32>
    %532 = arith.addf %529, %531 : vector<8x512xf32>
    %533 = vector.extract_strided_slice %532 {offsets = [0, 0], sizes = [8, 128], strides = [1, 1]} : vector<8x512xf32> to vector<8x128xf32>
    %534 = arith.negf %533 : vector<8x128xf32>
    %535 = math.exp %534 : vector<8x128xf32>
    %cst_188 = arith.constant 1.000000e+00 : f32
    %536 = vector.broadcast %cst_188 : f32 to vector<8x128xf32>
    %537 = arith.addf %536, %535 : vector<8x128xf32>
    %538 = arith.divf %536, %537 : vector<8x128xf32>
    %539 = vector.extract_strided_slice %532 {offsets = [0, 128], sizes = [8, 128], strides = [1, 1]} : vector<8x512xf32> to vector<8x128xf32>
    %540 = arith.negf %539 : vector<8x128xf32>
    %541 = math.exp %540 : vector<8x128xf32>
    %cst_189 = arith.constant 1.000000e+00 : f32
    %542 = vector.broadcast %cst_189 : f32 to vector<8x128xf32>
    %543 = arith.addf %542, %541 : vector<8x128xf32>
    %544 = arith.divf %542, %543 : vector<8x128xf32>
    %545 = vector.extract_strided_slice %532 {offsets = [0, 256], sizes = [8, 128], strides = [1, 1]} : vector<8x512xf32> to vector<8x128xf32>
    %546 = math.tanh %545 : vector<8x128xf32>
    %547 = vector.extract_strided_slice %532 {offsets = [0, 384], sizes = [8, 128], strides = [1, 1]} : vector<8x512xf32> to vector<8x128xf32>
    %548 = arith.negf %547 : vector<8x128xf32>
    %549 = math.exp %548 : vector<8x128xf32>
    %cst_190 = arith.constant 1.000000e+00 : f32
    %550 = vector.broadcast %cst_190 : f32 to vector<8x128xf32>
    %551 = arith.addf %550, %549 : vector<8x128xf32>
    %552 = arith.divf %550, %551 : vector<8x128xf32>
    %553 = arith.mulf %544, %525 : vector<8x128xf32>
    %554 = arith.mulf %538, %546 : vector<8x128xf32>
    %555 = arith.addf %553, %554 : vector<8x128xf32>
    %556 = math.tanh %555 : vector<8x128xf32>
    %557 = arith.mulf %552, %556 : vector<8x128xf32>
    %c64_191 = arith.constant 64 : index
    %c0_192 = arith.constant 0 : index
    %558 = vector.load %arg11[%c64_191, %c0_192] : memref<72x128xf32, #tpu.memory_space<vmem>>, vector<8x128xf32>
    tpu.vector_store %arg11[%c64_191, %c0_192], %557 {strides = array<i32>} : memref<72x128xf32, #tpu.memory_space<vmem>>, vector<8x128xf32>,
    %c0_193 = arith.constant 0 : index
    %c0_194 = arith.constant 0 : index
    %559 = vector.load %arg11[%c0_193, %c0_194] : memref<72x128xf32, #tpu.memory_space<vmem>>, vector<72x128xf32>
    %c0_195 = arith.constant 0 : index
    %c0_196 = arith.constant 0 : index
    %560 = vector.load %arg8[%c0_195, %c0_196] : memref<128x128xf32, #tpu.memory_space<vmem>>, vector<128x128xf32>
    %cst_197 = arith.constant dense<0.000000e+00> : vector<72x128xf32>
    %561 = tpu.matmul %559, %560, %cst_197 {dimension_numbers = #tpu.dot_dimension_numbers<[1], [0], [0], [1], [0, 0, 1, 1], [], []>} : vector<72x128xf32>, vector<128x128xf32>, vector<72x128xf32> -> vector<72x128xf32>
    %c0_198 = arith.constant 0 : index
    %c0_199 = arith.constant 0 : index
    %562 = vector.load %arg9[%c0_198, %c0_199] : memref<1x128xf32, #tpu.memory_space<vmem>>, vector<1x128xf32>
    %563 = vector.broadcast %562 : vector<1x128xf32> to vector<72x128xf32>
    %564 = arith.addf %561, %563 : vector<72x128xf32>
    %565 = vector.shape_cast %564 : vector<72x128xf32> to vector<9x8x128xf32>
    %c0_200 = arith.constant 0 : index
    %c0_201 = arith.constant 0 : index
    %c0_202 = arith.constant 0 : index
    %566 = vector.load %arg10[%c0_200, %c0_201, %c0_202] : memref<9x8x128xf32, #tpu.memory_space<vmem>>, vector<9x8x128xf32>
    tpu.vector_store %arg10[%c0_200, %c0_201, %c0_202], %565 {strides = array<i32>} : memref<9x8x128xf32, #tpu.memory_space<vmem>>, vector<9x8x128xf32>,
    return
  }
  func.func @transform_0(%arg0: i32) -> (i32, i32, i32) {
    %c0_i32 = arith.constant 0 : i32
    %c0_i32_0 = arith.constant 0 : i32
    %c0_i32_1 = arith.constant 0 : i32
    return %c0_i32, %arg0, %c0_i32_0 : i32, i32, i32
  }
  func.func @transform_1(%arg0: i32) -> (i32, i32) {
    %c0_i32 = arith.constant 0 : i32
    %c0_i32_0 = arith.constant 0 : i32
    %c0_i32_1 = arith.constant 0 : i32
    return %c0_i32, %c0_i32_0 : i32, i32
  }
  func.func @transform_2(%arg0: i32) -> (i32, i32) {
    %c0_i32 = arith.constant 0 : i32
    %c0_i32_0 = arith.constant 0 : i32
    %c0_i32_1 = arith.constant 0 : i32
    return %c0_i32, %c0_i32_0 : i32, i32
  }
  func.func @transform_3(%arg0: i32) -> (i32, i32) {
    %c0_i32 = arith.constant 0 : i32
    %c0_i32_0 = arith.constant 0 : i32
    %c0_i32_1 = arith.constant 0 : i32
    return %c0_i32, %c0_i32_0 : i32, i32
  }
  func.func @transform_4(%arg0: i32) -> (i32, i32) {
    %c0_i32 = arith.constant 0 : i32
    %c0_i32_0 = arith.constant 0 : i32
    %c0_i32_1 = arith.constant 0 : i32
    return %c0_i32, %c0_i32_0 : i32, i32
  }
  func.func @transform_5(%arg0: i32) -> (i32, i32) {
    %c0_i32 = arith.constant 0 : i32
    %c0_i32_0 = arith.constant 0 : i32
    %c0_i32_1 = arith.constant 0 : i32
    return %c0_i32, %c0_i32_0 : i32, i32
  }
  func.func @transform_6(%arg0: i32) -> (i32, i32) {
    %c0_i32 = arith.constant 0 : i32
    %c0_i32_0 = arith.constant 0 : i32
    %c0_i32_1 = arith.constant 0 : i32
    return %c0_i32, %c0_i32_0 : i32, i32
  }
  func.func @transform_7(%arg0: i32) -> (i32, i32) {
    %c0_i32 = arith.constant 0 : i32
    %c0_i32_0 = arith.constant 0 : i32
    %c0_i32_1 = arith.constant 0 : i32
    return %c0_i32, %c0_i32_0 : i32, i32
  }
  func.func @transform_8(%arg0: i32) -> (i32, i32) {
    %c0_i32 = arith.constant 0 : i32
    %c0_i32_0 = arith.constant 0 : i32
    %c0_i32_1 = arith.constant 0 : i32
    return %c0_i32, %c0_i32_0 : i32, i32
  }
  func.func @transform_9(%arg0: i32) -> (i32, i32, i32) {
    %c0_i32 = arith.constant 0 : i32
    %c0_i32_0 = arith.constant 0 : i32
    %c0_i32_1 = arith.constant 0 : i32
    return %c0_i32, %arg0, %c0_i32_0 : i32, i32, i32
  }
}

</mosaic_0001>

<llo_original>
// kernel: tpu_custom_call.1
$region0: #{tpu_custom_call.1}
  #allocation0 [shape = 'u32[]', space=smem, size = 0x4, offset = 0x4, fixed_abs, tag = 'smem constant byte address 0x4 - core index']
  #allocation1 [shape = 'u32[144,128]{1,0:T(1,128)}', space=vmem, size = 0x12000, scoped, tag = 'internal scratch']
  #allocation2 [shape = 'f32[72,128]{1,0:T(8,128)}', space=vmem, size = 0x9000, scoped, tag = 'scratch operand']
  #allocation3 [shape = 'f32[72,512]{1,0:T(8,128)}', space=vmem, size = 0x24000, scoped, tag = 'scratch operand']
  %s0 = inlined_call_operand.hbm [shape: f32[9,8,32], index: 0, kind: input, shape index: {}]
  %s1 = inlined_call_operand.hbm [shape: f32[32,512], index: 1, kind: input, shape index: {}]
  %s2 = inlined_call_operand.hbm [shape: f32[128,512], index: 2, kind: input, shape index: {}]
  %s3 = inlined_call_operand.vmem [shape: f32[1,512], index: 3, kind: input, shape index: {}]
  %s4 = inlined_call_operand.hbm [shape: f32[128,512], index: 4, kind: input, shape index: {}]
  %s5 = inlined_call_operand.hbm [shape: f32[128,512], index: 5, kind: input, shape index: {}]
  %s6 = inlined_call_operand.vmem [shape: f32[1,512], index: 6, kind: input, shape index: {}]
  %s7 = inlined_call_operand.hbm [shape: f32[128,128], index: 7, kind: input, shape index: {}]
  %s8 = inlined_call_operand.vmem [shape: f32[1,128], index: 8, kind: input, shape index: {}]
  %s9 = inlined_call_operand.hbm [shape: f32[9,8,128], index: 9, kind: output, shape index: {}]
  %s10 = sld [smem:[#allocation0]]
  $region70: #{tpu_custom_call.1} parent=0
    _
  %s12 = ssub.s32 1, %s10
  %s13 = scalar_select 0, %s12, %s10
  $region1: #{tpu_custom_call.1} parent=0
    #allocation4 [shape = 'u8[36864]{0}', space=vmem, size = 0x9000, scoped, tag = 'input window, operand 0, single buffered']
    #allocation5 [shape = 's32[1]{0}', space=sflag, size = 0x4, scoped, tag = 'scoped memory for tpu_custom_call.1']
    #allocation6 [shape = 's32[1]{0}', space=sflag, size = 0x4, scoped, tag = 'scoped memory for tpu_custom_call.1']
    #allocation7 [shape = 'u8[65536]{0}', space=vmem, size = 0x10000, scoped, tag = 'input window, operand 1, single buffered']
    #allocation8 [shape = 's32[1]{0}', space=sflag, size = 0x4, scoped, tag = 'scoped memory for tpu_custom_call.1']
    #allocation9 [shape = 'u8[262144]{0}', space=vmem, size = 0x40000, scoped, tag = 'input window, operand 2, single buffered']
    #allocation10 [shape = 'u8[262144]{0}', space=vmem, size = 0x40000, scoped, tag = 'input window, operand 4, single buffered']
    #allocation11 [shape = 's32[1]{0}', space=sflag, size = 0x4, scoped, tag = 'scoped memory for tpu_custom_call.1']
    #allocation12 [shape = 'u8[262144]{0}', space=vmem, size = 0x40000, scoped, tag = 'input window, operand 5, single buffered']
    #allocation13 [shape = 'u8[65536]{0}', space=vmem, size = 0x10000, scoped, tag = 'input window, operand 7, single buffered']
    #allocation14 [shape = 's32[1]{0}', space=sflag, size = 0x4, scoped, tag = 'scoped memory for tpu_custom_call.1']
    #allocation15 [shape = 'u8[36864]{0}', space=vmem, size = 0x9000, scoped, tag = 'output window, operand 0, single buffered']
    %14 = vsyncpa [#allocation5], 0
    %15 = vsyncpa [#allocation8], 0
    %16 = vsyncpa [#allocation11], 0
    %17 = vsyncpa [#allocation14], 0
    %18 = vsyncpa [#allocation6], 0
    // Predicated region
    $region2: #{tpu_custom_call.1} parent=1 // pred_check
      _
    $region3: #{tpu_custom_call.1} parent=1 // pred_check_branch
      %20 = sbr.rel (0) target = $region5
    $region4: #{tpu_custom_call.1} parent=1 // pred_region
      %s22 = ssub.s32 1152, 1152
      %23 = vsyncadd [#allocation5], %s22
      %s24 = sshll.u32 [#allocation4], 4
      %s25 = int_to_ptr.vmem [resolvable:$true] %s24
      %30 = dma.hbm_to_vmem [thread:$0]  %s0, 1152, %s25, [#allocation5], 128, 128, 8
    $region5: #{tpu_custom_call.1} parent=1 // pred_fallthru
      _
    // Predicated region
    $region6: #{tpu_custom_call.1} parent=1 // pred_check
      _
    $region7: #{tpu_custom_call.1} parent=1 // pred_check_branch
      %32 = sbr.rel (0) target = $region9
    $region8: #{tpu_custom_call.1} parent=1 // pred_region
      %s34 = ssub.s32 2048, 2048
      %35 = vsyncadd [#allocation8], %s34
      %s36 = sshll.u32 [#allocation7], 4
      %s37 = int_to_ptr.vmem [resolvable:$true] %s36
      %42 = dma.hbm_to_vmem [thread:$0]  %s1, 2048, %s37, [#allocation8], 512, 512, 32
    $region9: #{tpu_custom_call.1} parent=1 // pred_fallthru
      _
    // Predicated region
    $region10: #{tpu_custom_call.1} parent=1 // pred_check
      _
    $region11: #{tpu_custom_call.1} parent=1 // pred_check_branch
      %44 = sbr.rel (0) target = $region13
    $region12: #{tpu_custom_call.1} parent=1 // pred_region
      %s46 = ssub.s32 8192, 8192
      %47 = vsyncadd [#allocation8], %s46
      %s48 = sshll.u32 [#allocation9], 4
      %s49 = int_to_ptr.vmem [resolvable:$true] %s48
      %54 = dma.hbm_to_vmem [thread:$0]  %s2, 8192, %s49, [#allocation8], 512, 512, 32
    $region13: #{tpu_custom_call.1} parent=1 // pred_fallthru
      _
    // Predicated region
    $region14: #{tpu_custom_call.1} parent=1 // pred_check
      _
    $region15: #{tpu_custom_call.1} parent=1 // pred_check_branch
      %56 = sbr.rel (0) target = $region17
    $region16: #{tpu_custom_call.1} parent=1 // pred_region
      _
    $region17: #{tpu_custom_call.1} parent=1 // pred_fallthru
      _
    // Predicated region
    $region18: #{tpu_custom_call.1} parent=1 // pred_check
      _
    $region19: #{tpu_custom_call.1} parent=1 // pred_check_branch
      %58 = sbr.rel (0) target = $region21
    $region20: #{tpu_custom_call.1} parent=1 // pred_region
      %s60 = ssub.s32 8192, 8192
      %61 = vsyncadd [#allocation11], %s60
      %s62 = sshll.u32 [#allocation10], 4
      %s63 = int_to_ptr.vmem [resolvable:$true] %s62
      %68 = dma.hbm_to_vmem [thread:$0]  %s4, 8192, %s63, [#allocation11], 512, 512, 32
    $region21: #{tpu_custom_call.1} parent=1 // pred_fallthru
      _
    // Predicated region
    $region22: #{tpu_custom_call.1} parent=1 // pred_check
      _
    $region23: #{tpu_custom_call.1} parent=1 // pred_check_branch
      %70 = sbr.rel (0) target = $region25
    $region24: #{tpu_custom_call.1} parent=1 // pred_region
      %s72 = ssub.s32 8192, 8192
      %73 = vsyncadd [#allocation11], %s72
      %s74 = sshll.u32 [#allocation12], 4
      %s75 = int_to_ptr.vmem [resolvable:$true] %s74
      %80 = dma.hbm_to_vmem [thread:$0]  %s5, 8192, %s75, [#allocation11], 512, 512, 32
    $region25: #{tpu_custom_call.1} parent=1 // pred_fallthru
      _
    // Predicated region
    $region26: #{tpu_custom_call.1} parent=1 // pred_check
      _
    $region27: #{tpu_custom_call.1} parent=1 // pred_check_branch
      %82 = sbr.rel (0) target = $region29
    $region28: #{tpu_custom_call.1} parent=1 // pred_region
      _
    $region29: #{tpu_custom_call.1} parent=1 // pred_fallthru
      _
    // Predicated region
    $region30: #{tpu_custom_call.1} parent=1 // pred_check
      _
    $region31: #{tpu_custom_call.1} parent=1 // pred_check_branch
      %84 = sbr.rel (0) target = $region33
    $region32: #{tpu_custom_call.1} parent=1 // pred_region
      %s86 = ssub.s32 2048, 2048
      %87 = vsyncadd [#allocation14], %s86
      %s88 = sshll.u32 [#allocation13], 4
      %s89 = int_to_ptr.vmem [resolvable:$true] %s88
      %94 = dma.hbm_to_vmem [thread:$0]  %s7, 2048, %s89, [#allocation14], 128, 128, 8
    $region33: #{tpu_custom_call.1} parent=1 // pred_fallthru
      _
    // Predicated region
    $region34: #{tpu_custom_call.1} parent=1 // pred_check
      _
    $region35: #{tpu_custom_call.1} parent=1 // pred_check_branch
      %96 = sbr.rel (0) target = $region37
    $region36: #{tpu_custom_call.1} parent=1 // pred_region
      _
    $region37: #{tpu_custom_call.1} parent=1 // pred_fallthru
      _
    // Predicated region
    $region38: #{tpu_custom_call.1} parent=1 // pred_check
      _
    $region39: #{tpu_custom_call.1} parent=1 // pred_check_branch
      %98 = sbr.rel (0) target = $region41
    $region40: #{tpu_custom_call.1} parent=1 // pred_region
      %99 = dma.done [#allocation5], 1152
    $region41: #{tpu_custom_call.1} parent=1 // pred_fallthru
      _
    // Predicated region
    $region42: #{tpu_custom_call.1} parent=1 // pred_check
      _
    $region43: #{tpu_custom_call.1} parent=1 // pred_check_branch
      %101 = sbr.rel (0) target = $region45
    $region44: #{tpu_custom_call.1} parent=1 // pred_region
      %102 = dma.done [#allocation8], 2048
    $region45: #{tpu_custom_call.1} parent=1 // pred_fallthru
      _
    // Predicated region
    $region46: #{tpu_custom_call.1} parent=1 // pred_check
      _
    $region47: #{tpu_custom_call.1} parent=1 // pred_check_branch
      %104 = sbr.rel (0) target = $region49
    $region48: #{tpu_custom_call.1} parent=1 // pred_region
      %105 = dma.done [#allocation8], 8192
    $region49: #{tpu_custom_call.1} parent=1 // pred_fallthru
      _
    // Predicated region
    $region50: #{tpu_custom_call.1} parent=1 // pred_check
      _
    $region51: #{tpu_custom_call.1} parent=1 // pred_check_branch
      %107 = sbr.rel (0) target = $region53
    $region52: #{tpu_custom_call.1} parent=1 // pred_region
      %108 = dma.done [#allocation11], 8192
    $region53: #{tpu_custom_call.1} parent=1 // pred_fallthru
      _
    // Predicated region
    $region54: #{tpu_custom_call.1} parent=1 // pred_check
      _
    $region55: #{tpu_custom_call.1} parent=1 // pred_check_branch
      %110 = sbr.rel (0) target = $region57
    $region56: #{tpu_custom_call.1} parent=1 // pred_region
      %111 = dma.done [#allocation11], 8192
    $region57: #{tpu_custom_call.1} parent=1 // pred_fallthru
      _
    // Predicated region
    $region58: #{tpu_custom_call.1} parent=1 // pred_check
      _
    $region59: #{tpu_custom_call.1} parent=1 // pred_check_branch
      %113 = sbr.rel (0) target = $region61
    $region60: #{tpu_custom_call.1} parent=1 // pred_region
      %114 = dma.done [#allocation14], 2048
    $region61: #{tpu_custom_call.1} parent=1 // pred_fallthru
      _
    %v115 = vld [vmem:[#allocation4] sm:$0xff]
    %v116 = vld [vmem:[#allocation4 + $0x8] sm:$0xff]
    %v117 = vld [vmem:[#allocation4 + $0x10] sm:$0xff]
    %v118 = vld [vmem:[#allocation4 + $0x18] sm:$0xff]
    %v119 = vld [vmem:[#allocation4 + $0x20] sm:$0xff]
    %v120 = vld [vmem:[#allocation4 + $0x28] sm:$0xff]
    %v121 = vld [vmem:[#allocation4 + $0x30] sm:$0xff]
    %v122 = vld [vmem:[#allocation4 + $0x38] sm:$0xff]
    %v123 = vld [vmem:[#allocation4 + $0x40] sm:$0xff]
    %v124 = vld [vmem:[#allocation7] sm:$0xff]
    %v125 = vld [vmem:[#allocation7 + $0x8] sm:$0xff]
    %v126 = vld [vmem:[#allocation7 + $0x10] sm:$0xff]
    %v127 = vld [vmem:[#allocation7 + $0x18] sm:$0xff]
    %v128 = vld [vmem:[#allocation7 + $0x20] sm:$0xff]
    %v129 = vld [vmem:[#allocation7 + $0x28] sm:$0xff]
    %v130 = vld [vmem:[#allocation7 + $0x30] sm:$0xff]
    %v131 = vld [vmem:[#allocation7 + $0x38] sm:$0xff]
    %v132 = vld [vmem:[#allocation7 + $0x40] sm:$0xff]
    %v133 = vld [vmem:[#allocation7 + $0x48] sm:$0xff]
    %v134 = vld [vmem:[#allocation7 + $0x50] sm:$0xff]
    %v135 = vld [vmem:[#allocation7 + $0x58] sm:$0xff]
    %v136 = vld [vmem:[#allocation7 + $0x60] sm:$0xff]
    %v137 = vld [vmem:[#allocation7 + $0x68] sm:$0xff]
    %v138 = vld [vmem:[#allocation7 + $0x70] sm:$0xff]
    %v139 = vld [vmem:[#allocation7 + $0x78] sm:$0xff]
    %v140 = vld [vmem:[%s3] sm:$0xf]
    %v142 = vlaneseq
    %v143 = vshrl.u32 %v142, 7
    %v144 = vsub.s32 0, %v143
    %v145 = vrot.slane %v140, %v144
    %v146 = vlaneseq
    %v147 = vshrl.u32 %v146, 7
    %v148 = vsub.s32 1, %v147
    %v149 = vrot.slane %v140, %v148
    %v150 = vlaneseq
    %v151 = vshrl.u32 %v150, 7
    %v152 = vsub.s32 2, %v151
    %v153 = vrot.slane %v140, %v152
    %v154 = vlaneseq
    %v155 = vshrl.u32 %v154, 7
    %v156 = vsub.s32 3, %v155
    %v157 = vrot.slane %v140, %v156
    %vm162 = vcmask 261120
    %v164 = vsel %vm162, %v115, 0
    %v167 = vsel %vm162, %v116, 0
    %v170 = vsel %vm162, %v117, 0
    %v173 = vsel %vm162, %v118, 0
    %v176 = vsel %vm162, %v119, 0
    %v179 = vsel %vm162, %v120, 0
    %v182 = vsel %vm162, %v121, 0
    %v185 = vsel %vm162, %v122, 0
    %v188 = vsel %vm162, %v123, 0
    %190 = vmatprep.subr.mxu0 %v125
    %191 = vmatpush1.msra.mxu0 %v124
    %192 = vmatprep.subr.mxu0 %v129
    %193 = vmatpush1.msra.mxu0 %v128
    %194 = vmatprep.subr.mxu0 %v133
    %195 = vmatpush1.msra.mxu0 %v132
    %196 = vmatprep.subr.mxu0 %v137
    %197 = vmatpush1.msra.mxu0 %v136
    %198 = vmatprep.subr.mxu0 0.0
    %199 = vmatpush1.msra.mxu0 0.0
    %200 = vmatprep.subr.mxu0 0.0
    %201 = vmatpush1.msra.mxu0 0.0
    %202 = vmatprep.subr.mxu0 0.0
    %203 = vmatpush1.msra.mxu0 0.0
    %204 = vmatprep.subr.mxu0 0.0
    %205 = vmatpush1.msra.mxu0 0.0
    %206 = vmatprep.subr.mxu0 0.0
    %207 = vmatpush1.msra.mxu0 0.0
    %208 = vmatprep.subr.mxu0 0.0
    %209 = vmatpush1.msra.mxu0 0.0
    %210 = vmatprep.subr.mxu0 0.0
    %211 = vmatpush1.msra.mxu0 0.0
    %212 = vmatprep.subr.mxu0 0.0
    %213 = vmatpush1.msra.mxu0 0.0
    %214 = vmatprep.subr.mxu0 0.0
    %215 = vmatpush1.msra.mxu0 0.0
    %216 = vmatprep.subr.mxu0 0.0
    %217 = vmatpush1.msra.mxu0 0.0
    %218 = vmatprep.subr.mxu0 0.0
    %219 = vmatpush1.msra.mxu0 0.0
    %220 = vmatprep.subr.mxu0 0.0
    %221 = vmatpush1.msra.mxu0 0.0
    %222 = vmatprep.subr.mxu0 0.0
    %223 = vmatpush1.msra.mxu0 0.0
    %224 = vmatprep.subr.mxu0 0.0
    %225 = vmatpush1.msra.mxu0 0.0
    %226 = vmatprep.subr.mxu0 0.0
    %227 = vmatpush1.msra.mxu0 0.0
    %228 = vmatprep.subr.mxu0 0.0
    %229 = vmatpush1.msra.mxu0 0.0
    %230 = vmatprep.subr.mxu0 0.0
    %231 = vmatpush1.msra.mxu0 0.0
    %232 = vmatprep.subr.mxu0 0.0
    %233 = vmatpush1.msra.mxu0 0.0
    %234 = vmatprep.subr.mxu0 0.0
    %235 = vmatpush1.msra.mxu0 0.0
    %236 = vmatprep.subr.mxu0 0.0
    %237 = vmatpush1.msra.mxu0 0.0
    %238 = vmatprep.subr.mxu0 0.0
    %239 = vmatpush1.msra.mxu0 0.0
    %240 = vmatprep.subr.mxu0 0.0
    %241 = vmatpush1.msra.mxu0 0.0
    %242 = vmatprep.subr.mxu0 0.0
    %243 = vmatpush1.msra.mxu0 0.0
    %244 = vmatprep.subr.mxu0 0.0
    %245 = vmatpush1.msra.mxu0 0.0
    %246 = vmatprep.subr.mxu0 0.0
    %247 = vmatpush1.msra.mxu0 0.0
    %248 = vmatprep.subr.mxu0 0.0
    %249 = vmatpush1.msra.mxu0 0.0
    %250 = vmatprep.subr.mxu0 0.0
    %251 = vmatpush1.msra.mxu0 0.0
    %252 = vmatprep.subr.mxu0 0.0
    %253 = vmatpush1.msra.mxu0 0.0
    %254 = vmatprep.mubr.f32.mxu0 0.0
    %255 = vmatmul.mubr.f32.gmra.mrb[0].mxu0 %v164
    %v256 = vpop.f32.mrb[0].mxu0
    %v257 = vadd.f32 %v145, %v256
    %v258 = vpop.f32.mrb[0].mxu0
    %v259 = vadd.f32 %v149, %v258
    %260 = vmatprep.mubr.f32.mxu0 0.0
    %261 = vmatmul.mubr.f32.gmra.mrb[0].mxu0 %v167
    %v262 = vpop.f32.mrb[0].mxu0
    %v263 = vadd.f32 %v145, %v262
    %v264 = vpop.f32.mrb[0].mxu0
    %v265 = vadd.f32 %v149, %v264
    %266 = vmatprep.mubr.f32.mxu0 0.0
    %267 = vmatmul.mubr.f32.gmra.mrb[0].mxu0 %v170
    %v268 = vpop.f32.mrb[0].mxu0
    %v269 = vadd.f32 %v145, %v268
    %v270 = vpop.f32.mrb[0].mxu0
    %v271 = vadd.f32 %v149, %v270
    %272 = vmatprep.mubr.f32.mxu0 0.0
    %273 = vmatmul.mubr.f32.gmra.mrb[0].mxu0 %v173
    %v274 = vpop.f32.mrb[0].mxu0
    %v275 = vadd.f32 %v145, %v274
    %v276 = vpop.f32.mrb[0].mxu0
    %v277 = vadd.f32 %v149, %v276
    %278 = vmatprep.mubr.f32.mxu0 0.0
    %279 = vmatmul.mubr.f32.gmra.mrb[0].mxu0 %v176
    %v280 = vpop.f32.mrb[0].mxu0
    %v281 = vadd.f32 %v145, %v280
    %v282 = vpop.f32.mrb[0].mxu0
    %v283 = vadd.f32 %v149, %v282
    %284 = vmatprep.mubr.f32.mxu0 0.0
    %285 = vmatmul.mubr.f32.gmra.mrb[0].mxu0 %v179
    %v286 = vpop.f32.mrb[0].mxu0
    %v287 = vadd.f32 %v145, %v286
    %v288 = vpop.f32.mrb[0].mxu0
    %v289 = vadd.f32 %v149, %v288
    %290 = vmatprep.mubr.f32.mxu0 0.0
    %291 = vmatmul.mubr.f32.gmra.mrb[0].mxu0 %v182
    %v292 = vpop.f32.mrb[0].mxu0
    %v293 = vadd.f32 %v145, %v292
    %v294 = vpop.f32.mrb[0].mxu0
    %v295 = vadd.f32 %v149, %v294
    %296 = vmatprep.mubr.f32.mxu0 0.0
    %297 = vmatmul.mubr.f32.gmra.mrb[0].mxu0 %v185
    %v298 = vpop.f32.mrb[0].mxu0
    %v299 = vadd.f32 %v145, %v298
    %v300 = vpop.f32.mrb[0].mxu0
    %v301 = vadd.f32 %v149, %v300
    %302 = vmatprep.mubr.f32.mxu0 0.0
    %303 = vmatmul.mubr.f32.gmra.mrb[0].mxu0 %v188
    %v304 = vpop.f32.mrb[0].mxu0
    %v305 = vadd.f32 %v145, %v304
    %v306 = vpop.f32.mrb[0].mxu0
    %v307 = vadd.f32 %v149, %v306
    %308 = vdwg.mxu0
    %309 = vmatprep.subr.mxu0 %v127
    %310 = vmatpush1.msra.mxu0 %v126
    %311 = vmatprep.subr.mxu0 %v131
    %312 = vmatpush1.msra.mxu0 %v130
    %313 = vmatprep.subr.mxu0 %v135
    %314 = vmatpush1.msra.mxu0 %v134
    %315 = vmatprep.subr.mxu0 %v139
    %316 = vmatpush1.msra.mxu0 %v138
    %317 = vmatprep.subr.mxu0 0.0
    %318 = vmatpush1.msra.mxu0 0.0
    %319 = vmatprep.subr.mxu0 0.0
    %320 = vmatpush1.msra.mxu0 0.0
    %321 = vmatprep.subr.mxu0 0.0
    %322 = vmatpush1.msra.mxu0 0.0
    %323 = vmatprep.subr.mxu0 0.0
    %324 = vmatpush1.msra.mxu0 0.0
    %325 = vmatprep.subr.mxu0 0.0
    %326 = vmatpush1.msra.mxu0 0.0
    %327 = vmatprep.subr.mxu0 0.0
    %328 = vmatpush1.msra.mxu0 0.0
    %329 = vmatprep.subr.mxu0 0.0
    %330 = vmatpush1.msra.mxu0 0.0
    %331 = vmatprep.subr.mxu0 0.0
    %332 = vmatpush1.msra.mxu0 0.0
    %333 = vmatprep.subr.mxu0 0.0
    %334 = vmatpush1.msra.mxu0 0.0
    %335 = vmatprep.subr.mxu0 0.0
    %336 = vmatpush1.msra.mxu0 0.0
    %337 = vmatprep.subr.mxu0 0.0
    %338 = vmatpush1.msra.mxu0 0.0
    %339 = vmatprep.subr.mxu0 0.0
    %340 = vmatpush1.msra.mxu0 0.0
    %341 = vmatprep.subr.mxu0 0.0
    %342 = vmatpush1.msra.mxu0 0.0
    %343 = vmatprep.subr.mxu0 0.0
    %344 = vmatpush1.msra.mxu0 0.0
    %345 = vmatprep.subr.mxu0 0.0
    %346 = vmatpush1.msra.mxu0 0.0
    %347 = vmatprep.subr.mxu0 0.0
    %348 = vmatpush1.msra.mxu0 0.0
    %349 = vmatprep.subr.mxu0 0.0
    %350 = vmatpush1.msra.mxu0 0.0
    %351 = vmatprep.subr.mxu0 0.0
    %352 = vmatpush1.msra.mxu0 0.0
    %353 = vmatprep.subr.mxu0 0.0
    %354 = vmatpush1.msra.mxu0 0.0
    %355 = vmatprep.subr.mxu0 0.0
    %356 = vmatpush1.msra.mxu0 0.0
    %357 = vmatprep.subr.mxu0 0.0
    %358 = vmatpush1.msra.mxu0 0.0
    %359 = vmatprep.subr.mxu0 0.0
    %360 = vmatpush1.msra.mxu0 0.0
    %361 = vmatprep.subr.mxu0 0.0
    %362 = vmatpush1.msra.mxu0 0.0
    %363 = vmatprep.subr.mxu0 0.0
    %364 = vmatpush1.msra.mxu0 0.0
    %365 = vmatprep.subr.mxu0 0.0
    %366 = vmatpush1.msra.mxu0 0.0
    %367 = vmatprep.subr.mxu0 0.0
    %368 = vmatpush1.msra.mxu0 0.0
    %369 = vmatprep.subr.mxu0 0.0
    %370 = vmatpush1.msra.mxu0 0.0
    %371 = vmatprep.subr.mxu0 0.0
    %372 = vmatpush1.msra.mxu0 0.0
    %373 = vmatprep.mubr.f32.mxu0 0.0
    %374 = vmatmul.mubr.f32.gmra.mrb[0].mxu0 %v164
    %v375 = vpop.f32.mrb[0].mxu0
    %v376 = vadd.f32 %v153, %v375
    %v377 = vpop.f32.mrb[0].mxu0
    %v378 = vadd.f32 %v157, %v377
    %379 = vmatprep.mubr.f32.mxu0 0.0
    %380 = vmatmul.mubr.f32.gmra.mrb[0].mxu0 %v167
    %v381 = vpop.f32.mrb[0].mxu0
    %v382 = vadd.f32 %v153, %v381
    %v383 = vpop.f32.mrb[0].mxu0
    %v384 = vadd.f32 %v157, %v383
    %385 = vmatprep.mubr.f32.mxu0 0.0
    %386 = vmatmul.mubr.f32.gmra.mrb[0].mxu0 %v170
    %v387 = vpop.f32.mrb[0].mxu0
    %v388 = vadd.f32 %v153, %v387
    %v389 = vpop.f32.mrb[0].mxu0
    %v390 = vadd.f32 %v157, %v389
    %391 = vmatprep.mubr.f32.mxu0 0.0
    %392 = vmatmul.mubr.f32.gmra.mrb[0].mxu0 %v173
    %v393 = vpop.f32.mrb[0].mxu0
    %v394 = vadd.f32 %v153, %v393
    %v395 = vpop.f32.mrb[0].mxu0
    %v396 = vadd.f32 %v157, %v395
    %397 = vmatprep.mubr.f32.mxu0 0.0
    %398 = vmatmul.mubr.f32.gmra.mrb[0].mxu0 %v176
    %v399 = vpop.f32.mrb[0].mxu0
    %v400 = vadd.f32 %v153, %v399
    %v401 = vpop.f32.mrb[0].mxu0
    %v402 = vadd.f32 %v157, %v401
    %403 = vmatprep.mubr.f32.mxu0 0.0
    %404 = vmatmul.mubr.f32.gmra.mrb[0].mxu0 %v179
    %v405 = vpop.f32.mrb[0].mxu0
    %v406 = vadd.f32 %v153, %v405
    %v407 = vpop.f32.mrb[0].mxu0
    %v408 = vadd.f32 %v157, %v407
    %409 = vmatprep.mubr.f32.mxu0 0.0
    %410 = vmatmul.mubr.f32.gmra.mrb[0].mxu0 %v182
    %v411 = vpop.f32.mrb[0].mxu0
    %v412 = vadd.f32 %v153, %v411
    %v413 = vpop.f32.mrb[0].mxu0
    %v414 = vadd.f32 %v157, %v413
    %415 = vmatprep.mubr.f32.mxu0 0.0
    %416 = vmatmul.mubr.f32.gmra.mrb[0].mxu0 %v185
    %v417 = vpop.f32.mrb[0].mxu0
    %v418 = vadd.f32 %v153, %v417
    %v419 = vpop.f32.mrb[0].mxu0
    %v420 = vadd.f32 %v157, %v419
    %421 = vmatprep.mubr.f32.mxu0 0.0
    %422 = vmatmul.mubr.f32.gmra.mrb[0].mxu0 %v188
    %v423 = vpop.f32.mrb[0].mxu0
    %v424 = vadd.f32 %v153, %v423
    %v425 = vpop.f32.mrb[0].mxu0
    %v426 = vadd.f32 %v157, %v425
    %427 = vdwg.mxu0
    %428 = vst [vmem:[#allocation3] sm:$0xff] %v257
    %429 = vst [vmem:[#allocation3 + $0x8] sm:$0xff] %v259
    %430 = vst [vmem:[#allocation3 + $0x10] sm:$0xff] %v376
    %431 = vst [vmem:[#allocation3 + $0x18] sm:$0xff] %v378
    %432 = vst [vmem:[#allocation3 + $0x20] sm:$0xff] %v263
    %433 = vst [vmem:[#allocation3 + $0x28] sm:$0xff] %v265
    %434 = vst [vmem:[#allocation3 + $0x30] sm:$0xff] %v382
    %435 = vst [vmem:[#allocation3 + $0x38] sm:$0xff] %v384
    %436 = vst [vmem:[#allocation3 + $0x40] sm:$0xff] %v269
    %437 = vst [vmem:[#allocation3 + $0x48] sm:$0xff] %v271
    %438 = vst [vmem:[#allocation3 + $0x50] sm:$0xff] %v388
    %439 = vst [vmem:[#allocation3 + $0x58] sm:$0xff] %v390
    %440 = vst [vmem:[#allocation3 + $0x60] sm:$0xff] %v275
    %441 = vst [vmem:[#allocation3 + $0x68] sm:$0xff] %v277
    %442 = vst [vmem:[#allocation3 + $0x70] sm:$0xff] %v394
    %443 = vst [vmem:[#allocation3 + $0x78] sm:$0xff] %v396
    %444 = vst [vmem:[#allocation3 + $0x80] sm:$0xff] %v281
    %445 = vst [vmem:[#allocation3 + $0x88] sm:$0xff] %v283
    %446 = vst [vmem:[#allocation3 + $0x90] sm:$0xff] %v400
    %447 = vst [vmem:[#allocation3 + $0x98] sm:$0xff] %v402
    %448 = vst [vmem:[#allocation3 + $0xa0] sm:$0xff] %v287
    %449 = vst [vmem:[#allocation3 + $0xa8] sm:$0xff] %v289
    %450 = vst [vmem:[#allocation3 + $0xb0] sm:$0xff] %v406
    %451 = vst [vmem:[#allocation3 + $0xb8] sm:$0xff] %v408
    %452 = vst [vmem:[#allocation3 + $0xc0] sm:$0xff] %v293
    %453 = vst [vmem:[#allocation3 + $0xc8] sm:$0xff] %v295
    %454 = vst [vmem:[#allocation3 + $0xd0] sm:$0xff] %v412
    %455 = vst [vmem:[#allocation3 + $0xd8] sm:$0xff] %v414
    %456 = vst [vmem:[#allocation3 + $0xe0] sm:$0xff] %v299
    %457 = vst [vmem:[#allocation3 + $0xe8] sm:$0xff] %v301
    %458 = vst [vmem:[#allocation3 + $0xf0] sm:$0xff] %v418
    %459 = vst [vmem:[#allocation3 + $0xf8] sm:$0xff] %v420
    %460 = vst [vmem:[#allocation3 + $0x100] sm:$0xff] %v305
    %461 = vst [vmem:[#allocation3 + $0x108] sm:$0xff] %v307
    %462 = vst [vmem:[#allocation3 + $0x110] sm:$0xff] %v424
    %463 = vst [vmem:[#allocation3 + $0x118] sm:$0xff] %v426
    %v464 = vld [vmem:[#allocation3] sm:$0xff]
    %v465 = vld [vmem:[#allocation3 + $0x8] sm:$0xff]
    %v466 = vld [vmem:[#allocation3 + $0x10] sm:$0xff]
    %v467 = vld [vmem:[#allocation3 + $0x18] sm:$0xff]
    %v468 = vld [vmem:[#allocation9] sm:$0xff]
    %v469 = vld [vmem:[#allocation9 + $0x8] sm:$0xff]
    %v470 = vld [vmem:[#allocation9 + $0x10] sm:$0xff]
    %v471 = vld [vmem:[#allocation9 + $0x18] sm:$0xff]
    %v472 = vld [vmem:[#allocation9 + $0x20] sm:$0xff]
    %v473 = vld [vmem:[#allocation9 + $0x28] sm:$0xff]
    %v474 = vld [vmem:[#allocation9 + $0x30] sm:$0xff]
    %v475 = vld [vmem:[#allocation9 + $0x38] sm:$0xff]
    %v476 = vld [vmem:[#allocation9 + $0x40] sm:$0xff]
    %v477 = vld [vmem:[#allocation9 + $0x48] sm:$0xff]
    %v478 = vld [vmem:[#allocation9 + $0x50] sm:$0xff]
    %v479 = vld [vmem:[#allocation9 + $0x58] sm:$0xff]
    %v480 = vld [vmem:[#allocation9 + $0x60] sm:$0xff]
    %v481 = vld [vmem:[#allocation9 + $0x68] sm:$0xff]
    %v482 = vld [vmem:[#allocation9 + $0x70] sm:$0xff]
    %v483 = vld [vmem:[#allocation9 + $0x78] sm:$0xff]
    %v484 = vld [vmem:[#allocation9 + $0x80] sm:$0xff]
    %v485 = vld [vmem:[#allocation9 + $0x88] sm:$0xff]
    %v486 = vld [vmem:[#allocation9 + $0x90] sm:$0xff]
    %v487 = vld [vmem:[#allocation9 + $0x98] sm:$0xff]
    %v488 = vld [vmem:[#allocation9 + $0xa0] sm:$0xff]
    %v489 = vld [vmem:[#allocation9 + $0xa8] sm:$0xff]
    %v490 = vld [vmem:[#allocation9 + $0xb0] sm:$0xff]
    %v491 = vld [vmem:[#allocation9 + $0xb8] sm:$0xff]
    %v492 = vld [vmem:[#allocation9 + $0xc0] sm:$0xff]
    %v493 = vld [vmem:[#allocation9 + $0xc8] sm:$0xff]
    %v494 = vld [vmem:[#allocation9 + $0xd0] sm:$0xff]
    %v495 = vld [vmem:[#allocation9 + $0xd8] sm:$0xff]
    %v496 = vld [vmem:[#allocation9 + $0xe0] sm:$0xff]
    %v497 = vld [vmem:[#allocation9 + $0xe8] sm:$0xff]
    %v498 = vld [vmem:[#allocation9 + $0xf0] sm:$0xff]
    %v499 = vld [vmem:[#allocation9 + $0xf8] sm:$0xff]
    %v500 = vld [vmem:[#allocation9 + $0x100] sm:$0xff]
    %v501 = vld [vmem:[#allocation9 + $0x108] sm:$0xff]
    %v502 = vld [vmem:[#allocation9 + $0x110] sm:$0xff]
    %v503 = vld [vmem:[#allocation9 + $0x118] sm:$0xff]
    %v504 = vld [vmem:[#allocation9 + $0x120] sm:$0xff]
    %v505 = vld [vmem:[#allocation9 + $0x128] sm:$0xff]
    %v506 = vld [vmem:[#allocation9 + $0x130] sm:$0xff]
    %v507 = vld [vmem:[#allocation9 + $0x138] sm:$0xff]
    %v508 = vld [vmem:[#allocation9 + $0x140] sm:$0xff]
    %v509 = vld [vmem:[#allocation9 + $0x148] sm:$0xff]
    %v510 = vld [vmem:[#allocation9 + $0x150] sm:$0xff]
    %v511 = vld [vmem:[#allocation9 + $0x158] sm:$0xff]
    %v512 = vld [vmem:[#allocation9 + $0x160] sm:$0xff]
    %v513 = vld [vmem:[#allocation9 + $0x168] sm:$0xff]
    %v514 = vld [vmem:[#allocation9 + $0x170] sm:$0xff]
    %v515 = vld [vmem:[#allocation9 + $0x178] sm:$0xff]
    %v516 = vld [vmem:[#allocation9 + $0x180] sm:$0xff]
    %v517 = vld [vmem:[#allocation9 + $0x188] sm:$0xff]
    %v518 = vld [vmem:[#allocation9 + $0x190] sm:$0xff]
    %v519 = vld [vmem:[#allocation9 + $0x198] sm:$0xff]
    %v520 = vld [vmem:[#allocation9 + $0x1a0] sm:$0xff]
    %v521 = vld [vmem:[#allocation9 + $0x1a8] sm:$0xff]
    %v522 = vld [vmem:[#allocation9 + $0x1b0] sm:$0xff]
    %v523 = vld [vmem:[#allocation9 + $0x1b8] sm:$0xff]
    %v524 = vld [vmem:[#allocation9 + $0x1c0] sm:$0xff]
    %v525 = vld [vmem:[#allocation9 + $0x1c8] sm:$0xff]
    %v526 = vld [vmem:[#allocation9 + $0x1d0] sm:$0xff]
    %v527 = vld [vmem:[#allocation9 + $0x1d8] sm:$0xff]
    %v528 = vld [vmem:[#allocation9 + $0x1e0] sm:$0xff]
    %v529 = vld [vmem:[#allocation9 + $0x1e8] sm:$0xff]
    %v530 = vld [vmem:[#allocation9 + $0x1f0] sm:$0xff]
    %v531 = vld [vmem:[#allocation9 + $0x1f8] sm:$0xff]
    %532 = vmatprep.subr.mxu0 %v469
    %533 = vmatpush1.msra.mxu0 %v468
    %534 = vmatprep.subr.mxu0 %v473
    %535 = vmatpush1.msra.mxu0 %v472
    %536 = vmatprep.subr.mxu0 %v477
    %537 = vmatpush1.msra.mxu0 %v476
    %538 = vmatprep.subr.mxu0 %v481
    %539 = vmatpush1.msra.mxu0 %v480
    %540 = vmatprep.subr.mxu0 %v485
    %541 = vmatpush1.msra.mxu0 %v484
    %542 = vmatprep.subr.mxu0 %v489
    %543 = vmatpush1.msra.mxu0 %v488
    %544 = vmatprep.subr.mxu0 %v493
    %545 = vmatpush1.msra.mxu0 %v492
    %546 = vmatprep.subr.mxu0 %v497
    %547 = vmatpush1.msra.mxu0 %v496
    %548 = vmatprep.subr.mxu0 %v501
    %549 = vmatpush1.msra.mxu0 %v500
    %550 = vmatprep.subr.mxu0 %v505
    %551 = vmatpush1.msra.mxu0 %v504
    %552 = vmatprep.subr.mxu0 %v509
    %553 = vmatpush1.msra.mxu0 %v508
    %554 = vmatprep.subr.mxu0 %v513
    %555 = vmatpush1.msra.mxu0 %v512
    %556 = vmatprep.subr.mxu0 %v517
    %557 = vmatpush1.msra.mxu0 %v516
    %558 = vmatprep.subr.mxu0 %v521
    %559 = vmatpush1.msra.mxu0 %v520
    %560 = vmatprep.subr.mxu0 %v525
    %561 = vmatpush1.msra.mxu0 %v524
    %562 = vmatprep.subr.mxu0 %v529
    %563 = vmatpush1.msra.mxu0 %v528
    %564 = vmatprep.subr.mxu0 0.0
    %565 = vmatpush1.msra.mxu0 0.0
    %566 = vmatprep.subr.mxu0 0.0
    %567 = vmatpush1.msra.mxu0 0.0
    %568 = vmatprep.subr.mxu0 0.0
    %569 = vmatpush1.msra.mxu0 0.0
    %570 = vmatprep.subr.mxu0 0.0
    %571 = vmatpush1.msra.mxu0 0.0
    %572 = vmatprep.subr.mxu0 0.0
    %573 = vmatpush1.msra.mxu0 0.0
    %574 = vmatprep.subr.mxu0 0.0
    %575 = vmatpush1.msra.mxu0 0.0
    %576 = vmatprep.subr.mxu0 0.0
    %577 = vmatpush1.msra.mxu0 0.0
    %578 = vmatprep.subr.mxu0 0.0
    %579 = vmatpush1.msra.mxu0 0.0
    %580 = vmatprep.subr.mxu0 0.0
    %581 = vmatpush1.msra.mxu0 0.0
    %582 = vmatprep.subr.mxu0 0.0
    %583 = vmatpush1.msra.mxu0 0.0
    %584 = vmatprep.subr.mxu0 0.0
    %585 = vmatpush1.msra.mxu0 0.0
    %586 = vmatprep.subr.mxu0 0.0
    %587 = vmatpush1.msra.mxu0 0.0
    %588 = vmatprep.subr.mxu0 0.0
    %589 = vmatpush1.msra.mxu0 0.0
    %590 = vmatprep.subr.mxu0 0.0
    %591 = vmatpush1.msra.mxu0 0.0
    %592 = vmatprep.subr.mxu0 0.0
    %593 = vmatpush1.msra.mxu0 0.0
    %594 = vmatprep.subr.mxu0 0.0
    %595 = vmatpush1.msra.mxu0 0.0
    %596 = vmatprep.mubr.f32.mxu0 0.0
    %597 = vmatmul.mubr.f32.gmra.mrb[0].mxu0 0.0
    %v598 = vpop.f32.mrb[0].mxu0
    %v599 = vadd.f32 0.0, %v598
    %v600 = vpop.f32.mrb[0].mxu0
    %v601 = vadd.f32 0.0, %v600
    %602 = vdwg.mxu0
    %603 = vmatprep.subr.mxu0 %v471
    %604 = vmatpush1.msra.mxu0 %v470
    %605 = vmatprep.subr.mxu0 %v475
    %606 = vmatpush1.msra.mxu0 %v474
    %607 = vmatprep.subr.mxu0 %v479
    %608 = vmatpush1.msra.mxu0 %v478
    %609 = vmatprep.subr.mxu0 %v483
    %610 = vmatpush1.msra.mxu0 %v482
    %611 = vmatprep.subr.mxu0 %v487
    %612 = vmatpush1.msra.mxu0 %v486
    %613 = vmatprep.subr.mxu0 %v491
    %614 = vmatpush1.msra.mxu0 %v490
    %615 = vmatprep.subr.mxu0 %v495
    %616 = vmatpush1.msra.mxu0 %v494
    %617 = vmatprep.subr.mxu0 %v499
    %618 = vmatpush1.msra.mxu0 %v498
    %619 = vmatprep.subr.mxu0 %v503
    %620 = vmatpush1.msra.mxu0 %v502
    %621 = vmatprep.subr.mxu0 %v507
    %622 = vmatpush1.msra.mxu0 %v506
    %623 = vmatprep.subr.mxu0 %v511
    %624 = vmatpush1.msra.mxu0 %v510
    %625 = vmatprep.subr.mxu0 %v515
    %626 = vmatpush1.msra.mxu0 %v514
    %627 = vmatprep.subr.mxu0 %v519
    %628 = vmatpush1.msra.mxu0 %v518
    %629 = vmatprep.subr.mxu0 %v523
    %630 = vmatpush1.msra.mxu0 %v522
    %631 = vmatprep.subr.mxu0 %v527
    %632 = vmatpush1.msra.mxu0 %v526
    %633 = vmatprep.subr.mxu0 %v531
    %634 = vmatpush1.msra.mxu0 %v530
    %635 = vmatprep.subr.mxu0 0.0
    %636 = vmatpush1.msra.mxu0 0.0
    %637 = vmatprep.subr.mxu0 0.0
    %638 = vmatpush1.msra.mxu0 0.0
    %639 = vmatprep.subr.mxu0 0.0
    %640 = vmatpush1.msra.mxu0 0.0
    %641 = vmatprep.subr.mxu0 0.0
    %642 = vmatpush1.msra.mxu0 0.0
    %643 = vmatprep.subr.mxu0 0.0
    %644 = vmatpush1.msra.mxu0 0.0
    %645 = vmatprep.subr.mxu0 0.0
    %646 = vmatpush1.msra.mxu0 0.0
    %647 = vmatprep.subr.mxu0 0.0
    %648 = vmatpush1.msra.mxu0 0.0
    %649 = vmatprep.subr.mxu0 0.0
    %650 = vmatpush1.msra.mxu0 0.0
    %651 = vmatprep.subr.mxu0 0.0
    %652 = vmatpush1.msra.mxu0 0.0
    %653 = vmatprep.subr.mxu0 0.0
    %654 = vmatpush1.msra.mxu0 0.0
    %655 = vmatprep.subr.mxu0 0.0
    %656 = vmatpush1.msra.mxu0 0.0
    %657 = vmatprep.subr.mxu0 0.0
    %658 = vmatpush1.msra.mxu0 0.0
    %659 = vmatprep.subr.mxu0 0.0
    %660 = vmatpush1.msra.mxu0 0.0
    %661 = vmatprep.subr.mxu0 0.0
    %662 = vmatpush1.msra.mxu0 0.0
    %663 = vmatprep.subr.mxu0 0.0
    %664 = vmatpush1.msra.mxu0 0.0
    %665 = vmatprep.subr.mxu0 0.0
    %666 = vmatpush1.msra.mxu0 0.0
    %667 = vmatprep.mubr.f32.mxu0 0.0
    %668 = vmatmul.mubr.f32.gmra.mrb[0].mxu0 0.0
    %v669 = vpop.f32.mrb[0].mxu0
    %v670 = vadd.f32 0.0, %v669
    %v671 = vpop.f32.mrb[0].mxu0
    %v672 = vadd.f32 0.0, %v671
    %673 = vdwg.mxu0
    %v674 = vadd.f32 %v464, %v599
    %v675 = vadd.f32 %v465, %v601
    %v676 = vadd.f32 %v466, %v670
    %v677 = vadd.f32 %v467, %v672
    %v678 = vxor.u32 %v674, 2147483648
    %v679 = vmul.f32 %v678, 1.442695
    %v680 = vpow.pop %v679
    %v681 = vadd.f32 %v680, 1.0
    %v682 = vrcp.pop %v681
    %v683 = vmul.f32 1.0, %v682
    %v684 = vxor.u32 %v675, 2147483648
    %v685 = vmul.f32 %v684, 1.442695
    %v686 = vpow.pop %v685
    %v687 = vadd.f32 %v686, 1.0
    %v688 = vrcp.pop %v687
    %v689 = vmul.f32 1.0, %v688
    %v690 = vtanh.pop %v676
    %v691 = vxor.u32 %v677, 2147483648
    %v692 = vmul.f32 %v691, 1.442695
    %v693 = vpow.pop %v692
    %v694 = vadd.f32 %v693, 1.0
    %v695 = vrcp.pop %v694
    %v696 = vmul.f32 1.0, %v695
    %v697 = vmul.f32 %v689, 0.0
    %v698 = vmul.f32 %v683, %v690
    %v699 = vadd.f32 %v697, %v698
    %v700 = vtanh.pop %v699
    %v701 = vmul.f32 %v696, %v700
    %702 = vst [vmem:[#allocation2] sm:$0xff] %v701
    %v703 = vld [vmem:[#allocation3 + $0x20] sm:$0xff]
    %v704 = vld [vmem:[#allocation3 + $0x28] sm:$0xff]
    %v705 = vld [vmem:[#allocation3 + $0x30] sm:$0xff]
    %v706 = vld [vmem:[#allocation3 + $0x38] sm:$0xff]
    %v707 = vld [vmem:[#allocation9] sm:$0xff]
    %v708 = vld [vmem:[#allocation9 + $0x8] sm:$0xff]
    %v709 = vld [vmem:[#allocation9 + $0x10] sm:$0xff]
    %v710 = vld [vmem:[#allocation9 + $0x18] sm:$0xff]
    %v711 = vld [vmem:[#allocation9 + $0x20] sm:$0xff]
    %v712 = vld [vmem:[#allocation9 + $0x28] sm:$0xff]
    %v713 = vld [vmem:[#allocation9 + $0x30] sm:$0xff]
    %v714 = vld [vmem:[#allocation9 + $0x38] sm:$0xff]
    %v715 = vld [vmem:[#allocation9 + $0x40] sm:$0xff]
    %v716 = vld [vmem:[#allocation9 + $0x48] sm:$0xff]
    %v717 = vld [vmem:[#allocation9 + $0x50] sm:$0xff]
    %v718 = vld [vmem:[#allocation9 + $0x58] sm:$0xff]
    %v719 = vld [vmem:[#allocation9 + $0x60] sm:$0xff]
    %v720 = vld [vmem:[#allocation9 + $0x68] sm:$0xff]
    %v721 = vld [vmem:[#allocation9 + $0x70] sm:$0xff]
    %v722 = vld [vmem:[#allocation9 + $0x78] sm:$0xff]
    %v723 = vld [vmem:[#allocation9 + $0x80] sm:$0xff]
    %v724 = vld [vmem:[#allocation9 + $0x88] sm:$0xff]
    %v725 = vld [vmem:[#allocation9 + $0x90] sm:$0xff]
    %v726 = vld [vmem:[#allocation9 + $0x98] sm:$0xff]
    %v727 = vld [vmem:[#allocation9 + $0xa0] sm:$0xff]
    %v728 = vld [vmem:[#allocation9 + $0xa8] sm:$0xff]
    %v729 = vld [vmem:[#allocation9 + $0xb0] sm:$0xff]
    %v730 = vld [vmem:[#allocation9 + $0xb8] sm:$0xff]
    %v731 = vld [vmem:[#allocation9 + $0xc0] sm:$0xff]
    %v732 = vld [vmem:[#allocation9 + $0xc8] sm:$0xff]
    %v733 = vld [vmem:[#allocation9 + $0xd0] sm:$0xff]
    %v734 = vld [vmem:[#allocation9 + $0xd8] sm:$0xff]
    %v735 = vld [vmem:[#allocation9 + $0xe0] sm:$0xff]
    %v736 = vld [vmem:[#allocation9 + $0xe8] sm:$0xff]
    %v737 = vld [vmem:[#allocation9 + $0xf0] sm:$0xff]
    %v738 = vld [vmem:[#allocation9 + $0xf8] sm:$0xff]
    %v739 = vld [vmem:[#allocation9 + $0x100] sm:$0xff]
    %v740 = vld [vmem:[#allocation9 + $0x108] sm:$0xff]
    %v741 = vld [vmem:[#allocation9 + $0x110] sm:$0xff]
    %v742 = vld [vmem:[#allocation9 + $0x118] sm:$0xff]
    %v743 = vld [vmem:[#allocation9 + $0x120] sm:$0xff]
    %v744 = vld [vmem:[#allocation9 + $0x128] sm:$0xff]
    %v745 = vld [vmem:[#allocation9 + $0x130] sm:$0xff]
    %v746 = vld [vmem:[#allocation9 + $0x138] sm:$0xff]
    %v747 = vld [vmem:[#allocation9 + $0x140] sm:$0xff]
    %v748 = vld [vmem:[#allocation9 + $0x148] sm:$0xff]
    %v749 = vld [vmem:[#allocation9 + $0x150] sm:$0xff]
    %v750 = vld [vmem:[#allocation9 + $0x158] sm:$0xff]
    %v751 = vld [vmem:[#allocation9 + $0x160] sm:$0xff]
    %v752 = vld [vmem:[#allocation9 + $0x168] sm:$0xff]
    %v753 = vld [vmem:[#allocation9 + $0x170] sm:$0xff]
    %v754 = vld [vmem:[#allocation9 + $0x178] sm:$0xff]
    %v755 = vld [vmem:[#allocation9 + $0x180] sm:$0xff]
    %v756 = vld [vmem:[#allocation9 + $0x188] sm:$0xff]
    %v757 = vld [vmem:[#allocation9 + $0x190] sm:$0xff]
    %v758 = vld [vmem:[#allocation9 + $0x198] sm:$0xff]
    %v759 = vld [vmem:[#allocation9 + $0x1a0] sm:$0xff]
    %v760 = vld [vmem:[#allocation9 + $0x1a8] sm:$0xff]
    %v761 = vld [vmem:[#allocation9 + $0x1b0] sm:$0xff]
    %v762 = vld [vmem:[#allocation9 + $0x1b8] sm:$0xff]
    %v763 = vld [vmem:[#allocation9 + $0x1c0] sm:$0xff]
    %v764 = vld [vmem:[#allocation9 + $0x1c8] sm:$0xff]
    %v765 = vld [vmem:[#allocation9 + $0x1d0] sm:$0xff]
    %v766 = vld [vmem:[#allocation9 + $0x1d8] sm:$0xff]
    %v767 = vld [vmem:[#allocation9 + $0x1e0] sm:$0xff]
    %v768 = vld [vmem:[#allocation9 + $0x1e8] sm:$0xff]
    %v769 = vld [vmem:[#allocation9 + $0x1f0] sm:$0xff]
    %v770 = vld [vmem:[#allocation9 + $0x1f8] sm:$0xff]
    %771 = vmatprep.subr.mxu0 %v708
    %772 = vmatpush1.msra.mxu0 %v707
    %773 = vmatprep.subr.mxu0 %v712
    %774 = vmatpush1.msra.mxu0 %v711
    %775 = vmatprep.subr.mxu0 %v716
    %776 = vmatpush1.msra.mxu0 %v715
    %777 = vmatprep.subr.mxu0 %v720
    %778 = vmatpush1.msra.mxu0 %v719
    %779 = vmatprep.subr.mxu0 %v724
    %780 = vmatpush1.msra.mxu0 %v723
    %781 = vmatprep.subr.mxu0 %v728
    %782 = vmatpush1.msra.mxu0 %v727
    %783 = vmatprep.subr.mxu0 %v732
    %784 = vmatpush1.msra.mxu0 %v731
    %785 = vmatprep.subr.mxu0 %v736
    %786 = vmatpush1.msra.mxu0 %v735
    %787 = vmatprep.subr.mxu0 %v740
    %788 = vmatpush1.msra.mxu0 %v739
    %789 = vmatprep.subr.mxu0 %v744
    %790 = vmatpush1.msra.mxu0 %v743
    %791 = vmatprep.subr.mxu0 %v748
    %792 = vmatpush1.msra.mxu0 %v747
    %793 = vmatprep.subr.mxu0 %v752
    %794 = vmatpush1.msra.mxu0 %v751
    %795 = vmatprep.subr.mxu0 %v756
    %796 = vmatpush1.msra.mxu0 %v755
    %797 = vmatprep.subr.mxu0 %v760
    %798 = vmatpush1.msra.mxu0 %v759
    %799 = vmatprep.subr.mxu0 %v764
    %800 = vmatpush1.msra.mxu0 %v763
    %801 = vmatprep.subr.mxu0 %v768
    %802 = vmatpush1.msra.mxu0 %v767
    %803 = vmatprep.subr.mxu0 0.0
    %804 = vmatpush1.msra.mxu0 0.0
    %805 = vmatprep.subr.mxu0 0.0
    %806 = vmatpush1.msra.mxu0 0.0
    %807 = vmatprep.subr.mxu0 0.0
    %808 = vmatpush1.msra.mxu0 0.0
    %809 = vmatprep.subr.mxu0 0.0
    %810 = vmatpush1.msra.mxu0 0.0
    %811 = vmatprep.subr.mxu0 0.0
    %812 = vmatpush1.msra.mxu0 0.0
    %813 = vmatprep.subr.mxu0 0.0
    %814 = vmatpush1.msra.mxu0 0.0
    %815 = vmatprep.subr.mxu0 0.0
    %816 = vmatpush1.msra.mxu0 0.0
    %817 = vmatprep.subr.mxu0 0.0
    %818 = vmatpush1.msra.mxu0 0.0
    %819 = vmatprep.subr.mxu0 0.0
    %820 = vmatpush1.msra.mxu0 0.0
    %821 = vmatprep.subr.mxu0 0.0
    %822 = vmatpush1.msra.mxu0 0.0
    %823 = vmatprep.subr.mxu0 0.0
    %824 = vmatpush1.msra.mxu0 0.0
    %825 = vmatprep.subr.mxu0 0.0
    %826 = vmatpush1.msra.mxu0 0.0
    %827 = vmatprep.subr.mxu0 0.0
    %828 = vmatpush1.msra.mxu0 0.0
    %829 = vmatprep.subr.mxu0 0.0
    %830 = vmatpush1.msra.mxu0 0.0
    %831 = vmatprep.subr.mxu0 0.0
    %832 = vmatpush1.msra.mxu0 0.0
    %833 = vmatprep.subr.mxu0 0.0
    %834 = vmatpush1.msra.mxu0 0.0
    %835 = vmatprep.mubr.f32.mxu0 0.0
    %836 = vmatmul.mubr.f32.gmra.mrb[0].mxu0 %v701
    %v837 = vpop.f32.mrb[0].mxu0
    %v838 = vadd.f32 0.0, %v837
    %v839 = vpop.f32.mrb[0].mxu0
    %v840 = vadd.f32 0.0, %v839
    %841 = vdwg.mxu0
    %842 = vmatprep.subr.mxu0 %v710
    %843 = vmatpush1.msra.mxu0 %v709
    %844 = vmatprep.subr.mxu0 %v714
    %845 = vmatpush1.msra.mxu0 %v713
    %846 = vmatprep.subr.mxu0 %v718
    %847 = vmatpush1.msra.mxu0 %v717
    %848 = vmatprep.subr.mxu0 %v722
    %849 = vmatpush1.msra.mxu0 %v721
    %850 = vmatprep.subr.mxu0 %v726
    %851 = vmatpush1.msra.mxu0 %v725
    %852 = vmatprep.subr.mxu0 %v730
    %853 = vmatpush1.msra.mxu0 %v729
    %854 = vmatprep.subr.mxu0 %v734
    %855 = vmatpush1.msra.mxu0 %v733
    %856 = vmatprep.subr.mxu0 %v738
    %857 = vmatpush1.msra.mxu0 %v737
    %858 = vmatprep.subr.mxu0 %v742
    %859 = vmatpush1.msra.mxu0 %v741
    %860 = vmatprep.subr.mxu0 %v746
    %861 = vmatpush1.msra.mxu0 %v745
    %862 = vmatprep.subr.mxu0 %v750
    %863 = vmatpush1.msra.mxu0 %v749
    %864 = vmatprep.subr.mxu0 %v754
    %865 = vmatpush1.msra.mxu0 %v753
    %866 = vmatprep.subr.mxu0 %v758
    %867 = vmatpush1.msra.mxu0 %v757
    %868 = vmatprep.subr.mxu0 %v762
    %869 = vmatpush1.msra.mxu0 %v761
    %870 = vmatprep.subr.mxu0 %v766
    %871 = vmatpush1.msra.mxu0 %v765
    %872 = vmatprep.subr.mxu0 %v770
    %873 = vmatpush1.msra.mxu0 %v769
    %874 = vmatprep.subr.mxu0 0.0
    %875 = vmatpush1.msra.mxu0 0.0
    %876 = vmatprep.subr.mxu0 0.0
    %877 = vmatpush1.msra.mxu0 0.0
    %878 = vmatprep.subr.mxu0 0.0
    %879 = vmatpush1.msra.mxu0 0.0
    %880 = vmatprep.subr.mxu0 0.0
    %881 = vmatpush1.msra.mxu0 0.0
    %882 = vmatprep.subr.mxu0 0.0
    %883 = vmatpush1.msra.mxu0 0.0
    %884 = vmatprep.subr.mxu0 0.0
    %885 = vmatpush1.msra.mxu0 0.0
    %886 = vmatprep.subr.mxu0 0.0
    %887 = vmatpush1.msra.mxu0 0.0
    %888 = vmatprep.subr.mxu0 0.0
    %889 = vmatpush1.msra.mxu0 0.0
    %890 = vmatprep.subr.mxu0 0.0
    %891 = vmatpush1.msra.mxu0 0.0
    %892 = vmatprep.subr.mxu0 0.0
    %893 = vmatpush1.msra.mxu0 0.0
    %894 = vmatprep.subr.mxu0 0.0
    %895 = vmatpush1.msra.mxu0 0.0
    %896 = vmatprep.subr.mxu0 0.0
    %897 = vmatpush1.msra.mxu0 0.0
    %898 = vmatprep.subr.mxu0 0.0
    %899 = vmatpush1.msra.mxu0 0.0
    %900 = vmatprep.subr.mxu0 0.0
    %901 = vmatpush1.msra.mxu0 0.0
    %902 = vmatprep.subr.mxu0 0.0
    %903 = vmatpush1.msra.mxu0 0.0
    %904 = vmatprep.subr.mxu0 0.0
    %905 = vmatpush1.msra.mxu0 0.0
    %906 = vmatprep.mubr.f32.mxu0 0.0
    %907 = vmatmul.mubr.f32.gmra.mrb[0].mxu0 %v701
    %v908 = vpop.f32.mrb[0].mxu0
    %v909 = vadd.f32 0.0, %v908
    %v910 = vpop.f32.mrb[0].mxu0
    %v911 = vadd.f32 0.0, %v910
    %912 = vdwg.mxu0
    %v913 = vadd.f32 %v703, %v838
    %v914 = vadd.f32 %v704, %v840
    %v915 = vadd.f32 %v705, %v909
    %v916 = vadd.f32 %v706, %v911
    %v917 = vxor.u32 %v913, 2147483648
    %v918 = vmul.f32 %v917, 1.442695
    %v919 = vpow.pop %v918
    %v920 = vadd.f32 %v919, 1.0
    %v921 = vrcp.pop %v920
    %v922 = vmul.f32 1.0, %v921
    %v923 = vxor.u32 %v914, 2147483648
    %v924 = vmul.f32 %v923, 1.442695
    %v925 = vpow.pop %v924
    %v926 = vadd.f32 %v925, 1.0
    %v927 = vrcp.pop %v926
    %v928 = vmul.f32 1.0, %v927
    %v929 = vtanh.pop %v915
    %v930 = vxor.u32 %v916, 2147483648
    %v931 = vmul.f32 %v930, 1.442695
    %v932 = vpow.pop %v931
    %v933 = vadd.f32 %v932, 1.0
    %v934 = vrcp.pop %v933
    %v935 = vmul.f32 1.0, %v934
    %v936 = vmul.f32 %v928, %v699
    %v937 = vmul.f32 %v922, %v929
    %v938 = vadd.f32 %v936, %v937
    %v939 = vtanh.pop %v938
    %v940 = vmul.f32 %v935, %v939
    %941 = vst [vmem:[#allocation2 + $0x8] sm:$0xff] %v940
    %v942 = vld [vmem:[#allocation3 + $0x40] sm:$0xff]
    %v943 = vld [vmem:[#allocation3 + $0x48] sm:$0xff]
    %v944 = vld [vmem:[#allocation3 + $0x50] sm:$0xff]
    %v945 = vld [vmem:[#allocation3 + $0x58] sm:$0xff]
    %v946 = vld [vmem:[#allocation9] sm:$0xff]
    %v947 = vld [vmem:[#allocation9 + $0x8] sm:$0xff]
    %v948 = vld [vmem:[#allocation9 + $0x10] sm:$0xff]
    %v949 = vld [vmem:[#allocation9 + $0x18] sm:$0xff]
    %v950 = vld [vmem:[#allocation9 + $0x20] sm:$0xff]
    %v951 = vld [vmem:[#allocation9 + $0x28] sm:$0xff]
    %v952 = vld [vmem:[#allocation9 + $0x30] sm:$0xff]
    %v953 = vld [vmem:[#allocation9 + $0x38] sm:$0xff]
    %v954 = vld [vmem:[#allocation9 + $0x40] sm:$0xff]
    %v955 = vld [vmem:[#allocation9 + $0x48] sm:$0xff]
    %v956 = vld [vmem:[#allocation9 + $0x50] sm:$0xff]
    %v957 = vld [vmem:[#allocation9 + $0x58] sm:$0xff]
    %v958 = vld [vmem:[#allocation9 + $0x60] sm:$0xff]
    %v959 = vld [vmem:[#allocation9 + $0x68] sm:$0xff]
    %v960 = vld [vmem:[#allocation9 + $0x70] sm:$0xff]
    %v961 = vld [vmem:[#allocation9 + $0x78] sm:$0xff]
    %v962 = vld [vmem:[#allocation9 + $0x80] sm:$0xff]
    %v963 = vld [vmem:[#allocation9 + $0x88] sm:$0xff]
    %v964 = vld [vmem:[#allocation9 + $0x90] sm:$0xff]
    %v965 = vld [vmem:[#allocation9 + $0x98] sm:$0xff]
    %v966 = vld [vmem:[#allocation9 + $0xa0] sm:$0xff]
    %v967 = vld [vmem:[#allocation9 + $0xa8] sm:$0xff]
    %v968 = vld [vmem:[#allocation9 + $0xb0] sm:$0xff]
    %v969 = vld [vmem:[#allocation9 + $0xb8] sm:$0xff]
    %v970 = vld [vmem:[#allocation9 + $0xc0] sm:$0xff]
    %v971 = vld [vmem:[#allocation9 + $0xc8] sm:$0xff]
    %v972 = vld [vmem:[#allocation9 + $0xd0] sm:$0xff]
    %v973 = vld [vmem:[#allocation9 + $0xd8] sm:$0xff]
    %v974 = vld [vmem:[#allocation9 + $0xe0] sm:$0xff]
    %v975 = vld [vmem:[#allocation9 + $0xe8] sm:$0xff]
    %v976 = vld [vmem:[#allocation9 + $0xf0] sm:$0xff]
    %v977 = vld [vmem:[#allocation9 + $0xf8] sm:$0xff]
    %v978 = vld [vmem:[#allocation9 + $0x100] sm:$0xff]
    %v979 = vld [vmem:[#allocation9 + $0x108] sm:$0xff]
    %v980 = vld [vmem:[#allocation9 + $0x110] sm:$0xff]
    %v981 = vld [vmem:[#allocation9 + $0x118] sm:$0xff]
    %v982 = vld [vmem:[#allocation9 + $0x120] sm:$0xff]
    %v983 = vld [vmem:[#allocation9 + $0x128] sm:$0xff]
    %v984 = vld [vmem:[#allocation9 + $0x130] sm:$0xff]
    %v985 = vld [vmem:[#allocation9 + $0x138] sm:$0xff]
    %v986 = vld [vmem:[#allocation9 + $0x140] sm:$0xff]
    %v987 = vld [vmem:[#allocation9 + $0x148] sm:$0xff]
    %v988 = vld [vmem:[#allocation9 + $0x150] sm:$0xff]
    %v989 = vld [vmem:[#allocation9 + $0x158] sm:$0xff]
    %v990 = vld [vmem:[#allocation9 + $0x160] sm:$0xff]
    %v991 = vld [vmem:[#allocation9 + $0x168] sm:$0xff]
    %v992 = vld [vmem:[#allocation9 + $0x170] sm:$0xff]
    %v993 = vld [vmem:[#allocation9 + $0x178] sm:$0xff]
    %v994 = vld [vmem:[#allocation9 + $0x180] sm:$0xff]
    %v995 = vld [vmem:[#allocation9 + $0x188] sm:$0xff]
    %v996 = vld [vmem:[#allocation9 + $0x190] sm:$0xff]
    %v997 = vld [vmem:[#allocation9 + $0x198] sm:$0xff]
    %v998 = vld [vmem:[#allocation9 + $0x1a0] sm:$0xff]
    %v999 = vld [vmem:[#allocation9 + $0x1a8] sm:$0xff]
    %v1000 = vld [vmem:[#allocation9 + $0x1b0] sm:$0xff]
    %v1001 = vld [vmem:[#allocation9 + $0x1b8] sm:$0xff]
    %v1002 = vld [vmem:[#allocation9 + $0x1c0] sm:$0xff]
    %v1003 = vld [vmem:[#allocation9 + $0x1c8] sm:$0xff]
    %v1004 = vld [vmem:[#allocation9 + $0x1d0] sm:$0xff]
    %v1005 = vld [vmem:[#allocation9 + $0x1d8] sm:$0xff]
    %v1006 = vld [vmem:[#allocation9 + $0x1e0] sm:$0xff]
    %v1007 = vld [vmem:[#allocation9 + $0x1e8] sm:$0xff]
    %v1008 = vld [vmem:[#allocation9 + $0x1f0] sm:$0xff]
    %v1009 = vld [vmem:[#allocation9 + $0x1f8] sm:$0xff]
    %1010 = vmatprep.subr.mxu0 %v947
    %1011 = vmatpush1.msra.mxu0 %v946
    %1012 = vmatprep.subr.mxu0 %v951
    %1013 = vmatpush1.msra.mxu0 %v950
    %1014 = vmatprep.subr.mxu0 %v955
    %1015 = vmatpush1.msra.mxu0 %v954
    %1016 = vmatprep.subr.mxu0 %v959
    %1017 = vmatpush1.msra.mxu0 %v958
    %1018 = vmatprep.subr.mxu0 %v963
    %1019 = vmatpush1.msra.mxu0 %v962
    %1020 = vmatprep.subr.mxu0 %v967
    %1021 = vmatpush1.msra.mxu0 %v966
    %1022 = vmatprep.subr.mxu0 %v971
    %1023 = vmatpush1.msra.mxu0 %v970
    %1024 = vmatprep.subr.mxu0 %v975
    %1025 = vmatpush1.msra.mxu0 %v974
    %1026 = vmatprep.subr.mxu0 %v979
    %1027 = vmatpush1.msra.mxu0 %v978
    %1028 = vmatprep.subr.mxu0 %v983
    %1029 = vmatpush1.msra.mxu0 %v982
    %1030 = vmatprep.subr.mxu0 %v987
    %1031 = vmatpush1.msra.mxu0 %v986
    %1032 = vmatprep.subr.mxu0 %v991
    %1033 = vmatpush1.msra.mxu0 %v990
    %1034 = vmatprep.subr.mxu0 %v995
    %1035 = vmatpush1.msra.mxu0 %v994
    %1036 = vmatprep.subr.mxu0 %v999
    %1037 = vmatpush1.msra.mxu0 %v998
    %1038 = vmatprep.subr.mxu0 %v1003
    %1039 = vmatpush1.msra.mxu0 %v1002
    %1040 = vmatprep.subr.mxu0 %v1007
    %1041 = vmatpush1.msra.mxu0 %v1006
    %1042 = vmatprep.subr.mxu0 0.0
    %1043 = vmatpush1.msra.mxu0 0.0
    %1044 = vmatprep.subr.mxu0 0.0
    %1045 = vmatpush1.msra.mxu0 0.0
    %1046 = vmatprep.subr.mxu0 0.0
    %1047 = vmatpush1.msra.mxu0 0.0
    %1048 = vmatprep.subr.mxu0 0.0
    %1049 = vmatpush1.msra.mxu0 0.0
    %1050 = vmatprep.subr.mxu0 0.0
    %1051 = vmatpush1.msra.mxu0 0.0
    %1052 = vmatprep.subr.mxu0 0.0
    %1053 = vmatpush1.msra.mxu0 0.0
    %1054 = vmatprep.subr.mxu0 0.0
    %1055 = vmatpush1.msra.mxu0 0.0
    %1056 = vmatprep.subr.mxu0 0.0
    %1057 = vmatpush1.msra.mxu0 0.0
    %1058 = vmatprep.subr.mxu0 0.0
    %1059 = vmatpush1.msra.mxu0 0.0
    %1060 = vmatprep.subr.mxu0 0.0
    %1061 = vmatpush1.msra.mxu0 0.0
    %1062 = vmatprep.subr.mxu0 0.0
    %1063 = vmatpush1.msra.mxu0 0.0
    %1064 = vmatprep.subr.mxu0 0.0
    %1065 = vmatpush1.msra.mxu0 0.0
    %1066 = vmatprep.subr.mxu0 0.0
    %1067 = vmatpush1.msra.mxu0 0.0
    %1068 = vmatprep.subr.mxu0 0.0
    %1069 = vmatpush1.msra.mxu0 0.0
    %1070 = vmatprep.subr.mxu0 0.0
    %1071 = vmatpush1.msra.mxu0 0.0
    %1072 = vmatprep.subr.mxu0 0.0
    %1073 = vmatpush1.msra.mxu0 0.0
    %1074 = vmatprep.mubr.f32.mxu0 0.0
    %1075 = vmatmul.mubr.f32.gmra.mrb[0].mxu0 %v940
    %v1076 = vpop.f32.mrb[0].mxu0
    %v1077 = vadd.f32 0.0, %v1076
    %v1078 = vpop.f32.mrb[0].mxu0
    %v1079 = vadd.f32 0.0, %v1078
    %1080 = vdwg.mxu0
    %1081 = vmatprep.subr.mxu0 %v949
    %1082 = vmatpush1.msra.mxu0 %v948
    %1083 = vmatprep.subr.mxu0 %v953
    %1084 = vmatpush1.msra.mxu0 %v952
    %1085 = vmatprep.subr.mxu0 %v957
    %1086 = vmatpush1.msra.mxu0 %v956
    %1087 = vmatprep.subr.mxu0 %v961
    %1088 = vmatpush1.msra.mxu0 %v960
    %1089 = vmatprep.subr.mxu0 %v965
    %1090 = vmatpush1.msra.mxu0 %v964
    %1091 = vmatprep.subr.mxu0 %v969
    %1092 = vmatpush1.msra.mxu0 %v968
    %1093 = vmatprep.subr.mxu0 %v973
    %1094 = vmatpush1.msra.mxu0 %v972
    %1095 = vmatprep.subr.mxu0 %v977
    %1096 = vmatpush1.msra.mxu0 %v976
    %1097 = vmatprep.subr.mxu0 %v981
    %1098 = vmatpush1.msra.mxu0 %v980
    %1099 = vmatprep.subr.mxu0 %v985
    %1100 = vmatpush1.msra.mxu0 %v984
    %1101 = vmatprep.subr.mxu0 %v989
    %1102 = vmatpush1.msra.mxu0 %v988
    %1103 = vmatprep.subr.mxu0 %v993
    %1104 = vmatpush1.msra.mxu0 %v992
    %1105 = vmatprep.subr.mxu0 %v997
    %1106 = vmatpush1.msra.mxu0 %v996
    %1107 = vmatprep.subr.mxu0 %v1001
    %1108 = vmatpush1.msra.mxu0 %v1000
    %1109 = vmatprep.subr.mxu0 %v1005
    %1110 = vmatpush1.msra.mxu0 %v1004
    %1111 = vmatprep.subr.mxu0 %v1009
    %1112 = vmatpush1.msra.mxu0 %v1008
    %1113 = vmatprep.subr.mxu0 0.0
    %1114 = vmatpush1.msra.mxu0 0.0
    %1115 = vmatprep.subr.mxu0 0.0
    %1116 = vmatpush1.msra.mxu0 0.0
    %1117 = vmatprep.subr.mxu0 0.0
    %1118 = vmatpush1.msra.mxu0 0.0
    %1119 = vmatprep.subr.mxu0 0.0
    %1120 = vmatpush1.msra.mxu0 0.0
    %1121 = vmatprep.subr.mxu0 0.0
    %1122 = vmatpush1.msra.mxu0 0.0
    %1123 = vmatprep.subr.mxu0 0.0
    %1124 = vmatpush1.msra.mxu0 0.0
    %1125 = vmatprep.subr.mxu0 0.0
    %1126 = vmatpush1.msra.mxu0 0.0
    %1127 = vmatprep.subr.mxu0 0.0
    %1128 = vmatpush1.msra.mxu0 0.0
    %1129 = vmatprep.subr.mxu0 0.0
    %1130 = vmatpush1.msra.mxu0 0.0
    %1131 = vmatprep.subr.mxu0 0.0
    %1132 = vmatpush1.msra.mxu0 0.0
    %1133 = vmatprep.subr.mxu0 0.0
    %1134 = vmatpush1.msra.mxu0 0.0
    %1135 = vmatprep.subr.mxu0 0.0
    %1136 = vmatpush1.msra.mxu0 0.0
    %1137 = vmatprep.subr.mxu0 0.0
    %1138 = vmatpush1.msra.mxu0 0.0
    %1139 = vmatprep.subr.mxu0 0.0
    %1140 = vmatpush1.msra.mxu0 0.0
    %1141 = vmatprep.subr.mxu0 0.0
    %1142 = vmatpush1.msra.mxu0 0.0
    %1143 = vmatprep.subr.mxu0 0.0
    %1144 = vmatpush1.msra.mxu0 0.0
    %1145 = vmatprep.mubr.f32.mxu0 0.0
    %1146 = vmatmul.mubr.f32.gmra.mrb[0].mxu0 %v940
    %v1147 = vpop.f32.mrb[0].mxu0
    %v1148 = vadd.f32 0.0, %v1147
    %v1149 = vpop.f32.mrb[0].mxu0
    %v1150 = vadd.f32 0.0, %v1149
    %1151 = vdwg.mxu0
    %v1152 = vadd.f32 %v942, %v1077
    %v1153 = vadd.f32 %v943, %v1079
    %v1154 = vadd.f32 %v944, %v1148
    %v1155 = vadd.f32 %v945, %v1150
    %v1156 = vxor.u32 %v1152, 2147483648
    %v1157 = vmul.f32 %v1156, 1.442695
    %v1158 = vpow.pop %v1157
    %v1159 = vadd.f32 %v1158, 1.0
    %v1160 = vrcp.pop %v1159
    %v1161 = vmul.f32 1.0, %v1160
    %v1162 = vxor.u32 %v1153, 2147483648
    %v1163 = vmul.f32 %v1162, 1.442695
    %v1164 = vpow.pop %v1163
    %v1165 = vadd.f32 %v1164, 1.0
    %v1166 = vrcp.pop %v1165
    %v1167 = vmul.f32 1.0, %v1166
    %v1168 = vtanh.pop %v1154
    %v1169 = vxor.u32 %v1155, 2147483648
    %v1170 = vmul.f32 %v1169, 1.442695
    %v1171 = vpow.pop %v1170
    %v1172 = vadd.f32 %v1171, 1.0
    %v1173 = vrcp.pop %v1172
    %v1174 = vmul.f32 1.0, %v1173
    %v1175 = vmul.f32 %v1167, %v938
    %v1176 = vmul.f32 %v1161, %v1168
    %v1177 = vadd.f32 %v1175, %v1176
    %v1178 = vtanh.pop %v1177
    %v1179 = vmul.f32 %v1174, %v1178
    %1180 = vst [vmem:[#allocation2 + $0x10] sm:$0xff] %v1179
    %v1181 = vld [vmem:[#allocation3 + $0x60] sm:$0xff]
    %v1182 = vld [vmem:[#allocation3 + $0x68] sm:$0xff]
    %v1183 = vld [vmem:[#allocation3 + $0x70] sm:$0xff]
    %v1184 = vld [vmem:[#allocation3 + $0x78] sm:$0xff]
    %v1185 = vld [vmem:[#allocation9] sm:$0xff]
    %v1186 = vld [vmem:[#allocation9 + $0x8] sm:$0xff]
    %v1187 = vld [vmem:[#allocation9 + $0x10] sm:$0xff]
    %v1188 = vld [vmem:[#allocation9 + $0x18] sm:$0xff]
    %v1189 = vld [vmem:[#allocation9 + $0x20] sm:$0xff]
    %v1190 = vld [vmem:[#allocation9 + $0x28] sm:$0xff]
    %v1191 = vld [vmem:[#allocation9 + $0x30] sm:$0xff]
    %v1192 = vld [vmem:[#allocation9 + $0x38] sm:$0xff]
    %v1193 = vld [vmem:[#allocation9 + $0x40] sm:$0xff]
    %v1194 = vld [vmem:[#allocation9 + $0x48] sm:$0xff]
    %v1195 = vld [vmem:[#allocation9 + $0x50] sm:$0xff]
    %v1196 = vld [vmem:[#allocation9 + $0x58] sm:$0xff]
    %v1197 = vld [vmem:[#allocation9 + $0x60] sm:$0xff]
    %v1198 = vld [vmem:[#allocation9 + $0x68] sm:$0xff]
    %v1199 = vld [vmem:[#allocation9 + $0x70] sm:$0xff]
    %v1200 = vld [vmem:[#allocation9 + $0x78] sm:$0xff]
    %v1201 = vld [vmem:[#allocation9 + $0x80] sm:$0xff]
    %v1202 = vld [vmem:[#allocation9 + $0x88] sm:$0xff]
    %v1203 = vld [vmem:[#allocation9 + $0x90] sm:$0xff]
    %v1204 = vld [vmem:[#allocation9 + $0x98] sm:$0xff]
    %v1205 = vld [vmem:[#allocation9 + $0xa0] sm:$0xff]
    %v1206 = vld [vmem:[#allocation9 + $0xa8] sm:$0xff]
    %v1207 = vld [vmem:[#allocation9 + $0xb0] sm:$0xff]
    %v1208 = vld [vmem:[#allocation9 + $0xb8] sm:$0xff]
    %v1209 = vld [vmem:[#allocation9 + $0xc0] sm:$0xff]
    %v1210 = vld [vmem:[#allocation9 + $0xc8] sm:$0xff]
    %v1211 = vld [vmem:[#allocation9 + $0xd0] sm:$0xff]
    %v1212 = vld [vmem:[#allocation9 + $0xd8] sm:$0xff]
    %v1213 = vld [vmem:[#allocation9 + $0xe0] sm:$0xff]
    %v1214 = vld [vmem:[#allocation9 + $0xe8] sm:$0xff]
    %v1215 = vld [vmem:[#allocation9 + $0xf0] sm:$0xff]
    %v1216 = vld [vmem:[#allocation9 + $0xf8] sm:$0xff]
    %v1217 = vld [vmem:[#allocation9 + $0x100] sm:$0xff]
    %v1218 = vld [vmem:[#allocation9 + $0x108] sm:$0xff]
    %v1219 = vld [vmem:[#allocation9 + $0x110] sm:$0xff]
    %v1220 = vld [vmem:[#allocation9 + $0x118] sm:$0xff]
    %v1221 = vld [vmem:[#allocation9 + $0x120] sm:$0xff]
    %v1222 = vld [vmem:[#allocation9 + $0x128] sm:$0xff]
    %v1223 = vld [vmem:[#allocation9 + $0x130] sm:$0xff]
    %v1224 = vld [vmem:[#allocation9 + $0x138] sm:$0xff]
    %v1225 = vld [vmem:[#allocation9 + $0x140] sm:$0xff]
    %v1226 = vld [vmem:[#allocation9 + $0x148] sm:$0xff]
    %v1227 = vld [vmem:[#allocation9 + $0x150] sm:$0xff]
    %v1228 = vld [vmem:[#allocation9 + $0x158] sm:$0xff]
    %v1229 = vld [vmem:[#allocation9 + $0x160] sm:$0xff]
    %v1230 = vld [vmem:[#allocation9 + $0x168] sm:$0xff]
    %v1231 = vld [vmem:[#allocation9 + $0x170] sm:$0xff]
    %v1232 = vld [vmem:[#allocation9 + $0x178] sm:$0xff]
    %v1233 = vld [vmem:[#allocation9 + $0x180] sm:$0xff]
    %v1234 = vld [vmem:[#allocation9 + $0x188] sm:$0xff]
    %v1235 = vld [vmem:[#allocation9 + $0x190] sm:$0xff]
    %v1236 = vld [vmem:[#allocation9 + $0x198] sm:$0xff]
    %v1237 = vld [vmem:[#allocation9 + $0x1a0] sm:$0xff]
    %v1238 = vld [vmem:[#allocation9 + $0x1a8] sm:$0xff]
    %v1239 = vld [vmem:[#allocation9 + $0x1b0] sm:$0xff]
    %v1240 = vld [vmem:[#allocation9 + $0x1b8] sm:$0xff]
    %v1241 = vld [vmem:[#allocation9 + $0x1c0] sm:$0xff]
    %v1242 = vld [vmem:[#allocation9 + $0x1c8] sm:$0xff]
    %v1243 = vld [vmem:[#allocation9 + $0x1d0] sm:$0xff]
    %v1244 = vld [vmem:[#allocation9 + $0x1d8] sm:$0xff]
    %v1245 = vld [vmem:[#allocation9 + $0x1e0] sm:$0xff]
    %v1246 = vld [vmem:[#allocation9 + $0x1e8] sm:$0xff]
    %v1247 = vld [vmem:[#allocation9 + $0x1f0] sm:$0xff]
    %v1248 = vld [vmem:[#allocation9 + $0x1f8] sm:$0xff]
    %1249 = vmatprep.subr.mxu0 %v1186
    %1250 = vmatpush1.msra.mxu0 %v1185
    %1251 = vmatprep.subr.mxu0 %v1190
    %1252 = vmatpush1.msra.mxu0 %v1189
    %1253 = vmatprep.subr.mxu0 %v1194
    %1254 = vmatpush1.msra.mxu0 %v1193
    %1255 = vmatprep.subr.mxu0 %v1198
    %1256 = vmatpush1.msra.mxu0 %v1197
    %1257 = vmatprep.subr.mxu0 %v1202
    %1258 = vmatpush1.msra.mxu0 %v1201
    %1259 = vmatprep.subr.mxu0 %v1206
    %1260 = vmatpush1.msra.mxu0 %v1205
    %1261 = vmatprep.subr.mxu0 %v1210
    %1262 = vmatpush1.msra.mxu0 %v1209
    %1263 = vmatprep.subr.mxu0 %v1214
    %1264 = vmatpush1.msra.mxu0 %v1213
    %1265 = vmatprep.subr.mxu0 %v1218
    %1266 = vmatpush1.msra.mxu0 %v1217
    %1267 = vmatprep.subr.mxu0 %v1222
    %1268 = vmatpush1.msra.mxu0 %v1221
    %1269 = vmatprep.subr.mxu0 %v1226
    %1270 = vmatpush1.msra.mxu0 %v1225
    %1271 = vmatprep.subr.mxu0 %v1230
    %1272 = vmatpush1.msra.mxu0 %v1229
    %1273 = vmatprep.subr.mxu0 %v1234
    %1274 = vmatpush1.msra.mxu0 %v1233
    %1275 = vmatprep.subr.mxu0 %v1238
    %1276 = vmatpush1.msra.mxu0 %v1237
    %1277 = vmatprep.subr.mxu0 %v1242
    %1278 = vmatpush1.msra.mxu0 %v1241
    %1279 = vmatprep.subr.mxu0 %v1246
    %1280 = vmatpush1.msra.mxu0 %v1245
    %1281 = vmatprep.subr.mxu0 0.0
    %1282 = vmatpush1.msra.mxu0 0.0
    %1283 = vmatprep.subr.mxu0 0.0
    %1284 = vmatpush1.msra.mxu0 0.0
    %1285 = vmatprep.subr.mxu0 0.0
    %1286 = vmatpush1.msra.mxu0 0.0
    %1287 = vmatprep.subr.mxu0 0.0
    %1288 = vmatpush1.msra.mxu0 0.0
    %1289 = vmatprep.subr.mxu0 0.0
    %1290 = vmatpush1.msra.mxu0 0.0
    %1291 = vmatprep.subr.mxu0 0.0
    %1292 = vmatpush1.msra.mxu0 0.0
    %1293 = vmatprep.subr.mxu0 0.0
    %1294 = vmatpush1.msra.mxu0 0.0
    %1295 = vmatprep.subr.mxu0 0.0
    %1296 = vmatpush1.msra.mxu0 0.0
    %1297 = vmatprep.subr.mxu0 0.0
    %1298 = vmatpush1.msra.mxu0 0.0
    %1299 = vmatprep.subr.mxu0 0.0
    %1300 = vmatpush1.msra.mxu0 0.0
    %1301 = vmatprep.subr.mxu0 0.0
    %1302 = vmatpush1.msra.mxu0 0.0
    %1303 = vmatprep.subr.mxu0 0.0
    %1304 = vmatpush1.msra.mxu0 0.0
    %1305 = vmatprep.subr.mxu0 0.0
    %1306 = vmatpush1.msra.mxu0 0.0
    %1307 = vmatprep.subr.mxu0 0.0
    %1308 = vmatpush1.msra.mxu0 0.0
    %1309 = vmatprep.subr.mxu0 0.0
    %1310 = vmatpush1.msra.mxu0 0.0
    %1311 = vmatprep.subr.mxu0 0.0
    %1312 = vmatpush1.msra.mxu0 0.0
    %1313 = vmatprep.mubr.f32.mxu0 0.0
    %1314 = vmatmul.mubr.f32.gmra.mrb[0].mxu0 %v1179
    %v1315 = vpop.f32.mrb[0].mxu0
    %v1316 = vadd.f32 0.0, %v1315
    %v1317 = vpop.f32.mrb[0].mxu0
    %v1318 = vadd.f32 0.0, %v1317
    %1319 = vdwg.mxu0
    %1320 = vmatprep.subr.mxu0 %v1188
    %1321 = vmatpush1.msra.mxu0 %v1187
    %1322 = vmatprep.subr.mxu0 %v1192
    %1323 = vmatpush1.msra.mxu0 %v1191
    %1324 = vmatprep.subr.mxu0 %v1196
    %1325 = vmatpush1.msra.mxu0 %v1195
    %1326 = vmatprep.subr.mxu0 %v1200
    %1327 = vmatpush1.msra.mxu0 %v1199
    %1328 = vmatprep.subr.mxu0 %v1204
    %1329 = vmatpush1.msra.mxu0 %v1203
    %1330 = vmatprep.subr.mxu0 %v1208
    %1331 = vmatpush1.msra.mxu0 %v1207
    %1332 = vmatprep.subr.mxu0 %v1212
    %1333 = vmatpush1.msra.mxu0 %v1211
    %1334 = vmatprep.subr.mxu0 %v1216
    %1335 = vmatpush1.msra.mxu0 %v1215
    %1336 = vmatprep.subr.mxu0 %v1220
    %1337 = vmatpush1.msra.mxu0 %v1219
    %1338 = vmatprep.subr.mxu0 %v1224
    %1339 = vmatpush1.msra.mxu0 %v1223
    %1340 = vmatprep.subr.mxu0 %v1228
    %1341 = vmatpush1.msra.mxu0 %v1227
    %1342 = vmatprep.subr.mxu0 %v1232
    %1343 = vmatpush1.msra.mxu0 %v1231
    %1344 = vmatprep.subr.mxu0 %v1236
    %1345 = vmatpush1.msra.mxu0 %v1235
    %1346 = vmatprep.subr.mxu0 %v1240
    %1347 = vmatpush1.msra.mxu0 %v1239
    %1348 = vmatprep.subr.mxu0 %v1244
    %1349 = vmatpush1.msra.mxu0 %v1243
    %1350 = vmatprep.subr.mxu0 %v1248
    %1351 = vmatpush1.msra.mxu0 %v1247
    %1352 = vmatprep.subr.mxu0 0.0
    %1353 = vmatpush1.msra.mxu0 0.0
    %1354 = vmatprep.subr.mxu0 0.0
    %1355 = vmatpush1.msra.mxu0 0.0
    %1356 = vmatprep.subr.mxu0 0.0
    %1357 = vmatpush1.msra.mxu0 0.0
    %1358 = vmatprep.subr.mxu0 0.0
    %1359 = vmatpush1.msra.mxu0 0.0
    %1360 = vmatprep.subr.mxu0 0.0
    %1361 = vmatpush1.msra.mxu0 0.0
    %1362 = vmatprep.subr.mxu0 0.0
    %1363 = vmatpush1.msra.mxu0 0.0
    %1364 = vmatprep.subr.mxu0 0.0
    %1365 = vmatpush1.msra.mxu0 0.0
    %1366 = vmatprep.subr.mxu0 0.0
    %1367 = vmatpush1.msra.mxu0 0.0
    %1368 = vmatprep.subr.mxu0 0.0
    %1369 = vmatpush1.msra.mxu0 0.0
    %1370 = vmatprep.subr.mxu0 0.0
    %1371 = vmatpush1.msra.mxu0 0.0
    %1372 = vmatprep.subr.mxu0 0.0
    %1373 = vmatpush1.msra.mxu0 0.0
    %1374 = vmatprep.subr.mxu0 0.0
    %1375 = vmatpush1.msra.mxu0 0.0
    %1376 = vmatprep.subr.mxu0 0.0
    %1377 = vmatpush1.msra.mxu0 0.0
    %1378 = vmatprep.subr.mxu0 0.0
    %1379 = vmatpush1.msra.mxu0 0.0
    %1380 = vmatprep.subr.mxu0 0.0
    %1381 = vmatpush1.msra.mxu0 0.0
    %1382 = vmatprep.subr.mxu0 0.0
    %1383 = vmatpush1.msra.mxu0 0.0
    %1384 = vmatprep.mubr.f32.mxu0 0.0
    %1385 = vmatmul.mubr.f32.gmra.mrb[0].mxu0 %v1179
    %v1386 = vpop.f32.mrb[0].mxu0
    %v1387 = vadd.f32 0.0, %v1386
    %v1388 = vpop.f32.mrb[0].mxu0
    %v1389 = vadd.f32 0.0, %v1388
    %1390 = vdwg.mxu0
    %v1391 = vadd.f32 %v1181, %v1316
    %v1392 = vadd.f32 %v1182, %v1318
    %v1393 = vadd.f32 %v1183, %v1387
    %v1394 = vadd.f32 %v1184, %v1389
    %v1395 = vxor.u32 %v1391, 2147483648
    %v1396 = vmul.f32 %v1395, 1.442695
    %v1397 = vpow.pop %v1396
    %v1398 = vadd.f32 %v1397, 1.0
    %v1399 = vrcp.pop %v1398
    %v1400 = vmul.f32 1.0, %v1399
    %v1401 = vxor.u32 %v1392, 2147483648
    %v1402 = vmul.f32 %v1401, 1.442695
    %v1403 = vpow.pop %v1402
    %v1404 = vadd.f32 %v1403, 1.0
    %v1405 = vrcp.pop %v1404
    %v1406 = vmul.f32 1.0, %v1405
    %v1407 = vtanh.pop %v1393
    %v1408 = vxor.u32 %v1394, 2147483648
    %v1409 = vmul.f32 %v1408, 1.442695
    %v1410 = vpow.pop %v1409
    %v1411 = vadd.f32 %v1410, 1.0
    %v1412 = vrcp.pop %v1411
    %v1413 = vmul.f32 1.0, %v1412
    %v1414 = vmul.f32 %v1406, %v1177
    %v1415 = vmul.f32 %v1400, %v1407
    %v1416 = vadd.f32 %v1414, %v1415
    %v1417 = vtanh.pop %v1416
    %v1418 = vmul.f32 %v1413, %v1417
    %1419 = vst [vmem:[#allocation2 + $0x18] sm:$0xff] %v1418
    %v1420 = vld [vmem:[#allocation3 + $0x80] sm:$0xff]
    %v1421 = vld [vmem:[#allocation3 + $0x88] sm:$0xff]
    %v1422 = vld [vmem:[#allocation3 + $0x90] sm:$0xff]
    %v1423 = vld [vmem:[#allocation3 + $0x98] sm:$0xff]
    %v1424 = vld [vmem:[#allocation9] sm:$0xff]
    %v1425 = vld [vmem:[#allocation9 + $0x8] sm:$0xff]
    %v1426 = vld [vmem:[#allocation9 + $0x10] sm:$0xff]
    %v1427 = vld [vmem:[#allocation9 + $0x18] sm:$0xff]
    %v1428 = vld [vmem:[#allocation9 + $0x20] sm:$0xff]
    %v1429 = vld [vmem:[#allocation9 + $0x28] sm:$0xff]
    %v1430 = vld [vmem:[#allocation9 + $0x30] sm:$0xff]
    %v1431 = vld [vmem:[#allocation9 + $0x38] sm:$0xff]
    %v1432 = vld [vmem:[#allocation9 + $0x40] sm:$0xff]
    %v1433 = vld [vmem:[#allocation9 + $0x48] sm:$0xff]
    %v1434 = vld [vmem:[#allocation9 + $0x50] sm:$0xff]
    %v1435 = vld [vmem:[#allocation9 + $0x58] sm:$0xff]
    %v1436 = vld [vmem:[#allocation9 + $0x60] sm:$0xff]
    %v1437 = vld [vmem:[#allocation9 + $0x68] sm:$0xff]
    %v1438 = vld [vmem:[#allocation9 + $0x70] sm:$0xff]
    %v1439 = vld [vmem:[#allocation9 + $0x78] sm:$0xff]
    %v1440 = vld [vmem:[#allocation9 + $0x80] sm:$0xff]
    %v1441 = vld [vmem:[#allocation9 + $0x88] sm:$0xff]
    %v1442 = vld [vmem:[#allocation9 + $0x90] sm:$0xff]
    %v1443 = vld [vmem:[#allocation9 + $0x98] sm:$0xff]
    %v1444 = vld [vmem:[#allocation9 + $0xa0] sm:$0xff]
    %v1445 = vld [vmem:[#allocation9 + $0xa8] sm:$0xff]
    %v1446 = vld [vmem:[#allocation9 + $0xb0] sm:$0xff]
    %v1447 = vld [vmem:[#allocation9 + $0xb8] sm:$0xff]
    %v1448 = vld [vmem:[#allocation9 + $0xc0] sm:$0xff]
    %v1449 = vld [vmem:[#allocation9 + $0xc8] sm:$0xff]
    %v1450 = vld [vmem:[#allocation9 + $0xd0] sm:$0xff]
    %v1451 = vld [vmem:[#allocation9 + $0xd8] sm:$0xff]
    %v1452 = vld [vmem:[#allocation9 + $0xe0] sm:$0xff]
    %v1453 = vld [vmem:[#allocation9 + $0xe8] sm:$0xff]
    %v1454 = vld [vmem:[#allocation9 + $0xf0] sm:$0xff]
    %v1455 = vld [vmem:[#allocation9 + $0xf8] sm:$0xff]
    %v1456 = vld [vmem:[#allocation9 + $0x100] sm:$0xff]
    %v1457 = vld [vmem:[#allocation9 + $0x108] sm:$0xff]
    %v1458 = vld [vmem:[#allocation9 + $0x110] sm:$0xff]
    %v1459 = vld [vmem:[#allocation9 + $0x118] sm:$0xff]
    %v1460 = vld [vmem:[#allocation9 + $0x120] sm:$0xff]
    %v1461 = vld [vmem:[#allocation9 + $0x128] sm:$0xff]
    %v1462 = vld [vmem:[#allocation9 + $0x130] sm:$0xff]
    %v1463 = vld [vmem:[#allocation9 + $0x138] sm:$0xff]
    %v1464 = vld [vmem:[#allocation9 + $0x140] sm:$0xff]
    %v1465 = vld [vmem:[#allocation9 + $0x148] sm:$0xff]
    %v1466 = vld [vmem:[#allocation9 + $0x150] sm:$0xff]
    %v1467 = vld [vmem:[#allocation9 + $0x158] sm:$0xff]
    %v1468 = vld [vmem:[#allocation9 + $0x160] sm:$0xff]
    %v1469 = vld [vmem:[#allocation9 + $0x168] sm:$0xff]
    %v1470 = vld [vmem:[#allocation9 + $0x170] sm:$0xff]
    %v1471 = vld [vmem:[#allocation9 + $0x178] sm:$0xff]
    %v1472 = vld [vmem:[#allocation9 + $0x180] sm:$0xff]
    %v1473 = vld [vmem:[#allocation9 + $0x188] sm:$0xff]
    %v1474 = vld [vmem:[#allocation9 + $0x190] sm:$0xff]
    %v1475 = vld [vmem:[#allocation9 + $0x198] sm:$0xff]
    %v1476 = vld [vmem:[#allocation9 + $0x1a0] sm:$0xff]
    %v1477 = vld [vmem:[#allocation9 + $0x1a8] sm:$0xff]
    %v1478 = vld [vmem:[#allocation9 + $0x1b0] sm:$0xff]
    %v1479 = vld [vmem:[#allocation9 + $0x1b8] sm:$0xff]
    %v1480 = vld [vmem:[#allocation9 + $0x1c0] sm:$0xff]
    %v1481 = vld [vmem:[#allocation9 + $0x1c8] sm:$0xff]
    %v1482 = vld [vmem:[#allocation9 + $0x1d0] sm:$0xff]
    %v1483 = vld [vmem:[#allocation9 + $0x1d8] sm:$0xff]
    %v1484 = vld [vmem:[#allocation9 + $0x1e0] sm:$0xff]
    %v1485 = vld [vmem:[#allocation9 + $0x1e8] sm:$0xff]
    %v1486 = vld [vmem:[#allocation9 + $0x1f0] sm:$0xff]
    %v1487 = vld [vmem:[#allocation9 + $0x1f8] sm:$0xff]
    %1488 = vmatprep.subr.mxu0 %v1425
    %1489 = vmatpush1.msra.mxu0 %v1424
    %1490 = vmatprep.subr.mxu0 %v1429
    %1491 = vmatpush1.msra.mxu0 %v1428
    %1492 = vmatprep.subr.mxu0 %v1433
    %1493 = vmatpush1.msra.mxu0 %v1432
    %1494 = vmatprep.subr.mxu0 %v1437
    %1495 = vmatpush1.msra.mxu0 %v1436
    %1496 = vmatprep.subr.mxu0 %v1441
    %1497 = vmatpush1.msra.mxu0 %v1440
    %1498 = vmatprep.subr.mxu0 %v1445
    %1499 = vmatpush1.msra.mxu0 %v1444
    %1500 = vmatprep.subr.mxu0 %v1449
    %1501 = vmatpush1.msra.mxu0 %v1448
    %1502 = vmatprep.subr.mxu0 %v1453
    %1503 = vmatpush1.msra.mxu0 %v1452
    %1504 = vmatprep.subr.mxu0 %v1457
    %1505 = vmatpush1.msra.mxu0 %v1456
    %1506 = vmatprep.subr.mxu0 %v1461
    %1507 = vmatpush1.msra.mxu0 %v1460
    %1508 = vmatprep.subr.mxu0 %v1465
    %1509 = vmatpush1.msra.mxu0 %v1464
    %1510 = vmatprep.subr.mxu0 %v1469
    %1511 = vmatpush1.msra.mxu0 %v1468
    %1512 = vmatprep.subr.mxu0 %v1473
    %1513 = vmatpush1.msra.mxu0 %v1472
    %1514 = vmatprep.subr.mxu0 %v1477
    %1515 = vmatpush1.msra.mxu0 %v1476
    %1516 = vmatprep.subr.mxu0 %v1481
    %1517 = vmatpush1.msra.mxu0 %v1480
    %1518 = vmatprep.subr.mxu0 %v1485
    %1519 = vmatpush1.msra.mxu0 %v1484
    %1520 = vmatprep.subr.mxu0 0.0
    %1521 = vmatpush1.msra.mxu0 0.0
    %1522 = vmatprep.subr.mxu0 0.0
    %1523 = vmatpush1.msra.mxu0 0.0
    %1524 = vmatprep.subr.mxu0 0.0
    %1525 = vmatpush1.msra.mxu0 0.0
    %1526 = vmatprep.subr.mxu0 0.0
    %1527 = vmatpush1.msra.mxu0 0.0
    %1528 = vmatprep.subr.mxu0 0.0
    %1529 = vmatpush1.msra.mxu0 0.0
    %1530 = vmatprep.subr.mxu0 0.0
    %1531 = vmatpush1.msra.mxu0 0.0
    %1532 = vmatprep.subr.mxu0 0.0
    %1533 = vmatpush1.msra.mxu0 0.0
    %1534 = vmatprep.subr.mxu0 0.0
    %1535 = vmatpush1.msra.mxu0 0.0
    %1536 = vmatprep.subr.mxu0 0.0
    %1537 = vmatpush1.msra.mxu0 0.0
    %1538 = vmatprep.subr.mxu0 0.0
    %1539 = vmatpush1.msra.mxu0 0.0
    %1540 = vmatprep.subr.mxu0 0.0
    %1541 = vmatpush1.msra.mxu0 0.0
    %1542 = vmatprep.subr.mxu0 0.0
    %1543 = vmatpush1.msra.mxu0 0.0
    %1544 = vmatprep.subr.mxu0 0.0
    %1545 = vmatpush1.msra.mxu0 0.0
    %1546 = vmatprep.subr.mxu0 0.0
    %1547 = vmatpush1.msra.mxu0 0.0
    %1548 = vmatprep.subr.mxu0 0.0
    %1549 = vmatpush1.msra.mxu0 0.0
    %1550 = vmatprep.subr.mxu0 0.0
    %1551 = vmatpush1.msra.mxu0 0.0
    %1552 = vmatprep.mubr.f32.mxu0 0.0
    %1553 = vmatmul.mubr.f32.gmra.mrb[0].mxu0 %v1418
    %v1554 = vpop.f32.mrb[0].mxu0
    %v1555 = vadd.f32 0.0, %v1554
    %v1556 = vpop.f32.mrb[0].mxu0
    %v1557 = vadd.f32 0.0, %v1556
    %1558 = vdwg.mxu0
    %1559 = vmatprep.subr.mxu0 %v1427
    %1560 = vmatpush1.msra.mxu0 %v1426
    %1561 = vmatprep.subr.mxu0 %v1431
    %1562 = vmatpush1.msra.mxu0 %v1430
    %1563 = vmatprep.subr.mxu0 %v1435
    %1564 = vmatpush1.msra.mxu0 %v1434
    %1565 = vmatprep.subr.mxu0 %v1439
    %1566 = vmatpush1.msra.mxu0 %v1438
    %1567 = vmatprep.subr.mxu0 %v1443
    %1568 = vmatpush1.msra.mxu0 %v1442
    %1569 = vmatprep.subr.mxu0 %v1447
    %1570 = vmatpush1.msra.mxu0 %v1446
    %1571 = vmatprep.subr.mxu0 %v1451
    %1572 = vmatpush1.msra.mxu0 %v1450
    %1573 = vmatprep.subr.mxu0 %v1455
    %1574 = vmatpush1.msra.mxu0 %v1454
    %1575 = vmatprep.subr.mxu0 %v1459
    %1576 = vmatpush1.msra.mxu0 %v1458
    %1577 = vmatprep.subr.mxu0 %v1463
    %1578 = vmatpush1.msra.mxu0 %v1462
    %1579 = vmatprep.subr.mxu0 %v1467
    %1580 = vmatpush1.msra.mxu0 %v1466
    %1581 = vmatprep.subr.mxu0 %v1471
    %1582 = vmatpush1.msra.mxu0 %v1470
    %1583 = vmatprep.subr.mxu0 %v1475
    %1584 = vmatpush1.msra.mxu0 %v1474
    %1585 = vmatprep.subr.mxu0 %v1479
    %1586 = vmatpush1.msra.mxu0 %v1478
    %1587 = vmatprep.subr.mxu0 %v1483
    %1588 = vmatpush1.msra.mxu0 %v1482
    %1589 = vmatprep.subr.mxu0 %v1487
    %1590 = vmatpush1.msra.mxu0 %v1486
    %1591 = vmatprep.subr.mxu0 0.0
    %1592 = vmatpush1.msra.mxu0 0.0
    %1593 = vmatprep.subr.mxu0 0.0
    %1594 = vmatpush1.msra.mxu0 0.0
    %1595 = vmatprep.subr.mxu0 0.0
    %1596 = vmatpush1.msra.mxu0 0.0
    %1597 = vmatprep.subr.mxu0 0.0
    %1598 = vmatpush1.msra.mxu0 0.0
    %1599 = vmatprep.subr.mxu0 0.0
    %1600 = vmatpush1.msra.mxu0 0.0
    %1601 = vmatprep.subr.mxu0 0.0
    %1602 = vmatpush1.msra.mxu0 0.0
    %1603 = vmatprep.subr.mxu0 0.0
    %1604 = vmatpush1.msra.mxu0 0.0
    %1605 = vmatprep.subr.mxu0 0.0
    %1606 = vmatpush1.msra.mxu0 0.0
    %1607 = vmatprep.subr.mxu0 0.0
    %1608 = vmatpush1.msra.mxu0 0.0
    %1609 = vmatprep.subr.mxu0 0.0
    %1610 = vmatpush1.msra.mxu0 0.0
    %1611 = vmatprep.subr.mxu0 0.0
    %1612 = vmatpush1.msra.mxu0 0.0
    %1613 = vmatprep.subr.mxu0 0.0
    %1614 = vmatpush1.msra.mxu0 0.0
    %1615 = vmatprep.subr.mxu0 0.0
    %1616 = vmatpush1.msra.mxu0 0.0
    %1617 = vmatprep.subr.mxu0 0.0
    %1618 = vmatpush1.msra.mxu0 0.0
    %1619 = vmatprep.subr.mxu0 0.0
    %1620 = vmatpush1.msra.mxu0 0.0
    %1621 = vmatprep.subr.mxu0 0.0
    %1622 = vmatpush1.msra.mxu0 0.0
    %1623 = vmatprep.mubr.f32.mxu0 0.0
    %1624 = vmatmul.mubr.f32.gmra.mrb[0].mxu0 %v1418
    %v1625 = vpop.f32.mrb[0].mxu0
    %v1626 = vadd.f32 0.0, %v1625
    %v1627 = vpop.f32.mrb[0].mxu0
    %v1628 = vadd.f32 0.0, %v1627
    %1629 = vdwg.mxu0
    %v1630 = vadd.f32 %v1420, %v1555
    %v1631 = vadd.f32 %v1421, %v1557
    %v1632 = vadd.f32 %v1422, %v1626
    %v1633 = vadd.f32 %v1423, %v1628
    %v1634 = vxor.u32 %v1630, 2147483648
    %v1635 = vmul.f32 %v1634, 1.442695
    %v1636 = vpow.pop %v1635
    %v1637 = vadd.f32 %v1636, 1.0
    %v1638 = vrcp.pop %v1637
    %v1639 = vmul.f32 1.0, %v1638
    %v1640 = vxor.u32 %v1631, 2147483648
    %v1641 = vmul.f32 %v1640, 1.442695
    %v1642 = vpow.pop %v1641
    %v1643 = vadd.f32 %v1642, 1.0
    %v1644 = vrcp.pop %v1643
    %v1645 = vmul.f32 1.0, %v1644
    %v1646 = vtanh.pop %v1632
    %v1647 = vxor.u32 %v1633, 2147483648
    %v1648 = vmul.f32 %v1647, 1.442695
    %v1649 = vpow.pop %v1648
    %v1650 = vadd.f32 %v1649, 1.0
    %v1651 = vrcp.pop %v1650
    %v1652 = vmul.f32 1.0, %v1651
    %v1653 = vmul.f32 %v1645, %v1416
    %v1654 = vmul.f32 %v1639, %v1646
    %v1655 = vadd.f32 %v1653, %v1654
    %v1656 = vtanh.pop %v1655
    %v1657 = vmul.f32 %v1652, %v1656
    %1658 = vst [vmem:[#allocation2 + $0x20] sm:$0xff] %v1657
    %v1659 = vld [vmem:[#allocation3 + $0xa0] sm:$0xff]
    %v1660 = vld [vmem:[#allocation3 + $0xa8] sm:$0xff]
    %v1661 = vld [vmem:[#allocation3 + $0xb0] sm:$0xff]
    %v1662 = vld [vmem:[#allocation3 + $0xb8] sm:$0xff]
    %v1663 = vld [vmem:[#allocation9] sm:$0xff]
    %v1664 = vld [vmem:[#allocation9 + $0x8] sm:$0xff]
    %v1665 = vld [vmem:[#allocation9 + $0x10] sm:$0xff]
    %v1666 = vld [vmem:[#allocation9 + $0x18] sm:$0xff]
    %v1667 = vld [vmem:[#allocation9 + $0x20] sm:$0xff]
    %v1668 = vld [vmem:[#allocation9 + $0x28] sm:$0xff]
    %v1669 = vld [vmem:[#allocation9 + $0x30] sm:$0xff]
    %v1670 = vld [vmem:[#allocation9 + $0x38] sm:$0xff]
    %v1671 = vld [vmem:[#allocation9 + $0x40] sm:$0xff]
    %v1672 = vld [vmem:[#allocation9 + $0x48] sm:$0xff]
    %v1673 = vld [vmem:[#allocation9 + $0x50] sm:$0xff]
    %v1674 = vld [vmem:[#allocation9 + $0x58] sm:$0xff]
    %v1675 = vld [vmem:[#allocation9 + $0x60] sm:$0xff]
    %v1676 = vld [vmem:[#allocation9 + $0x68] sm:$0xff]
    %v1677 = vld [vmem:[#allocation9 + $0x70] sm:$0xff]
    %v1678 = vld [vmem:[#allocation9 + $0x78] sm:$0xff]
    %v1679 = vld [vmem:[#allocation9 + $0x80] sm:$0xff]
    %v1680 = vld [vmem:[#allocation9 + $0x88] sm:$0xff]
    %v1681 = vld [vmem:[#allocation9 + $0x90] sm:$0xff]
    %v1682 = vld [vmem:[#allocation9 + $0x98] sm:$0xff]
    %v1683 = vld [vmem:[#allocation9 + $0xa0] sm:$0xff]
    %v1684 = vld [vmem:[#allocation9 + $0xa8] sm:$0xff]
    %v1685 = vld [vmem:[#allocation9 + $0xb0] sm:$0xff]
    %v1686 = vld [vmem:[#allocation9 + $0xb8] sm:$0xff]
    %v1687 = vld [vmem:[#allocation9 + $0xc0] sm:$0xff]
    %v1688 = vld [vmem:[#allocation9 + $0xc8] sm:$0xff]
    %v1689 = vld [vmem:[#allocation9 + $0xd0] sm:$0xff]
    %v1690 = vld [vmem:[#allocation9 + $0xd8] sm:$0xff]
    %v1691 = vld [vmem:[#allocation9 + $0xe0] sm:$0xff]
    %v1692 = vld [vmem:[#allocation9 + $0xe8] sm:$0xff]
    %v1693 = vld [vmem:[#allocation9 + $0xf0] sm:$0xff]
    %v1694 = vld [vmem:[#allocation9 + $0xf8] sm:$0xff]
    %v1695 = vld [vmem:[#allocation9 + $0x100] sm:$0xff]
    %v1696 = vld [vmem:[#allocation9 + $0x108] sm:$0xff]
    %v1697 = vld [vmem:[#allocation9 + $0x110] sm:$0xff]
    %v1698 = vld [vmem:[#allocation9 + $0x118] sm:$0xff]
    %v1699 = vld [vmem:[#allocation9 + $0x120] sm:$0xff]
    %v1700 = vld [vmem:[#allocation9 + $0x128] sm:$0xff]
    %v1701 = vld [vmem:[#allocation9 + $0x130] sm:$0xff]
    %v1702 = vld [vmem:[#allocation9 + $0x138] sm:$0xff]
    %v1703 = vld [vmem:[#allocation9 + $0x140] sm:$0xff]
    %v1704 = vld [vmem:[#allocation9 + $0x148] sm:$0xff]
    %v1705 = vld [vmem:[#allocation9 + $0x150] sm:$0xff]
    %v1706 = vld [vmem:[#allocation9 + $0x158] sm:$0xff]
    %v1707 = vld [vmem:[#allocation9 + $0x160] sm:$0xff]
    %v1708 = vld [vmem:[#allocation9 + $0x168] sm:$0xff]
    %v1709 = vld [vmem:[#allocation9 + $0x170] sm:$0xff]
    %v1710 = vld [vmem:[#allocation9 + $0x178] sm:$0xff]
    %v1711 = vld [vmem:[#allocation9 + $0x180] sm:$0xff]
    %v1712 = vld [vmem:[#allocation9 + $0x188] sm:$0xff]
    %v1713 = vld [vmem:[#allocation9 + $0x190] sm:$0xff]
    %v1714 = vld [vmem:[#allocation9 + $0x198] sm:$0xff]
    %v1715 = vld [vmem:[#allocation9 + $0x1a0] sm:$0xff]
    %v1716 = vld [vmem:[#allocation9 + $0x1a8] sm:$0xff]
    %v1717 = vld [vmem:[#allocation9 + $0x1b0] sm:$0xff]
    %v1718 = vld [vmem:[#allocation9 + $0x1b8] sm:$0xff]
    %v1719 = vld [vmem:[#allocation9 + $0x1c0] sm:$0xff]
    %v1720 = vld [vmem:[#allocation9 + $0x1c8] sm:$0xff]
    %v1721 = vld [vmem:[#allocation9 + $0x1d0] sm:$0xff]
    %v1722 = vld [vmem:[#allocation9 + $0x1d8] sm:$0xff]
    %v1723 = vld [vmem:[#allocation9 + $0x1e0] sm:$0xff]
    %v1724 = vld [vmem:[#allocation9 + $0x1e8] sm:$0xff]
    %v1725 = vld [vmem:[#allocation9 + $0x1f0] sm:$0xff]
    %v1726 = vld [vmem:[#allocation9 + $0x1f8] sm:$0xff]
    %1727 = vmatprep.subr.mxu0 %v1664
    %1728 = vmatpush1.msra.mxu0 %v1663
    %1729 = vmatprep.subr.mxu0 %v1668
    %1730 = vmatpush1.msra.mxu0 %v1667
    %1731 = vmatprep.subr.mxu0 %v1672
    %1732 = vmatpush1.msra.mxu0 %v1671
    %1733 = vmatprep.subr.mxu0 %v1676
    %1734 = vmatpush1.msra.mxu0 %v1675
    %1735 = vmatprep.subr.mxu0 %v1680
    %1736 = vmatpush1.msra.mxu0 %v1679
    %1737 = vmatprep.subr.mxu0 %v1684
    %1738 = vmatpush1.msra.mxu0 %v1683
    %1739 = vmatprep.subr.mxu0 %v1688
    %1740 = vmatpush1.msra.mxu0 %v1687
    %1741 = vmatprep.subr.mxu0 %v1692
    %1742 = vmatpush1.msra.mxu0 %v1691
    %1743 = vmatprep.subr.mxu0 %v1696
    %1744 = vmatpush1.msra.mxu0 %v1695
    %1745 = vmatprep.subr.mxu0 %v1700
    %1746 = vmatpush1.msra.mxu0 %v1699
    %1747 = vmatprep.subr.mxu0 %v1704
    %1748 = vmatpush1.msra.mxu0 %v1703
    %1749 = vmatprep.subr.mxu0 %v1708
    %1750 = vmatpush1.msra.mxu0 %v1707
    %1751 = vmatprep.subr.mxu0 %v1712
    %1752 = vmatpush1.msra.mxu0 %v1711
    %1753 = vmatprep.subr.mxu0 %v1716
    %1754 = vmatpush1.msra.mxu0 %v1715
    %1755 = vmatprep.subr.mxu0 %v1720
    %1756 = vmatpush1.msra.mxu0 %v1719
    %1757 = vmatprep.subr.mxu0 %v1724
    %1758 = vmatpush1.msra.mxu0 %v1723
    %1759 = vmatprep.subr.mxu0 0.0
    %1760 = vmatpush1.msra.mxu0 0.0
    %1761 = vmatprep.subr.mxu0 0.0
    %1762 = vmatpush1.msra.mxu0 0.0
    %1763 = vmatprep.subr.mxu0 0.0
    %1764 = vmatpush1.msra.mxu0 0.0
    %1765 = vmatprep.subr.mxu0 0.0
    %1766 = vmatpush1.msra.mxu0 0.0
    %1767 = vmatprep.subr.mxu0 0.0
    %1768 = vmatpush1.msra.mxu0 0.0
    %1769 = vmatprep.subr.mxu0 0.0
    %1770 = vmatpush1.msra.mxu0 0.0
    %1771 = vmatprep.subr.mxu0 0.0
    %1772 = vmatpush1.msra.mxu0 0.0
    %1773 = vmatprep.subr.mxu0 0.0
    %1774 = vmatpush1.msra.mxu0 0.0
    %1775 = vmatprep.subr.mxu0 0.0
    %1776 = vmatpush1.msra.mxu0 0.0
    %1777 = vmatprep.subr.mxu0 0.0
    %1778 = vmatpush1.msra.mxu0 0.0
    %1779 = vmatprep.subr.mxu0 0.0
    %1780 = vmatpush1.msra.mxu0 0.0
    %1781 = vmatprep.subr.mxu0 0.0
    %1782 = vmatpush1.msra.mxu0 0.0
    %1783 = vmatprep.subr.mxu0 0.0
    %1784 = vmatpush1.msra.mxu0 0.0
    %1785 = vmatprep.subr.mxu0 0.0
    %1786 = vmatpush1.msra.mxu0 0.0
    %1787 = vmatprep.subr.mxu0 0.0
    %1788 = vmatpush1.msra.mxu0 0.0
    %1789 = vmatprep.subr.mxu0 0.0
    %1790 = vmatpush1.msra.mxu0 0.0
    %1791 = vmatprep.mubr.f32.mxu0 0.0
    %1792 = vmatmul.mubr.f32.gmra.mrb[0].mxu0 %v1657
    %v1793 = vpop.f32.mrb[0].mxu0
    %v1794 = vadd.f32 0.0, %v1793
    %v1795 = vpop.f32.mrb[0].mxu0
    %v1796 = vadd.f32 0.0, %v1795
    %1797 = vdwg.mxu0
    %1798 = vmatprep.subr.mxu0 %v1666
    %1799 = vmatpush1.msra.mxu0 %v1665
    %1800 = vmatprep.subr.mxu0 %v1670
    %1801 = vmatpush1.msra.mxu0 %v1669
    %1802 = vmatprep.subr.mxu0 %v1674
    %1803 = vmatpush1.msra.mxu0 %v1673
    %1804 = vmatprep.subr.mxu0 %v1678
    %1805 = vmatpush1.msra.mxu0 %v1677
    %1806 = vmatprep.subr.mxu0 %v1682
    %1807 = vmatpush1.msra.mxu0 %v1681
    %1808 = vmatprep.subr.mxu0 %v1686
    %1809 = vmatpush1.msra.mxu0 %v1685
    %1810 = vmatprep.subr.mxu0 %v1690
    %1811 = vmatpush1.msra.mxu0 %v1689
    %1812 = vmatprep.subr.mxu0 %v1694
    %1813 = vmatpush1.msra.mxu0 %v1693
    %1814 = vmatprep.subr.mxu0 %v1698
    %1815 = vmatpush1.msra.mxu0 %v1697
    %1816 = vmatprep.subr.mxu0 %v1702
    %1817 = vmatpush1.msra.mxu0 %v1701
    %1818 = vmatprep.subr.mxu0 %v1706
    %1819 = vmatpush1.msra.mxu0 %v1705
    %1820 = vmatprep.subr.mxu0 %v1710
    %1821 = vmatpush1.msra.mxu0 %v1709
    %1822 = vmatprep.subr.mxu0 %v1714
    %1823 = vmatpush1.msra.mxu0 %v1713
    %1824 = vmatprep.subr.mxu0 %v1718
    %1825 = vmatpush1.msra.mxu0 %v1717
    %1826 = vmatprep.subr.mxu0 %v1722
    %1827 = vmatpush1.msra.mxu0 %v1721
    %1828 = vmatprep.subr.mxu0 %v1726
    %1829 = vmatpush1.msra.mxu0 %v1725
    %1830 = vmatprep.subr.mxu0 0.0
    %1831 = vmatpush1.msra.mxu0 0.0
    %1832 = vmatprep.subr.mxu0 0.0
    %1833 = vmatpush1.msra.mxu0 0.0
    %1834 = vmatprep.subr.mxu0 0.0
    %1835 = vmatpush1.msra.mxu0 0.0
    %1836 = vmatprep.subr.mxu0 0.0
    %1837 = vmatpush1.msra.mxu0 0.0
    %1838 = vmatprep.subr.mxu0 0.0
    %1839 = vmatpush1.msra.mxu0 0.0
    %1840 = vmatprep.subr.mxu0 0.0
    %1841 = vmatpush1.msra.mxu0 0.0
    %1842 = vmatprep.subr.mxu0 0.0
    %1843 = vmatpush1.msra.mxu0 0.0
    %1844 = vmatprep.subr.mxu0 0.0
    %1845 = vmatpush1.msra.mxu0 0.0
    %1846 = vmatprep.subr.mxu0 0.0
    %1847 = vmatpush1.msra.mxu0 0.0
    %1848 = vmatprep.subr.mxu0 0.0
    %1849 = vmatpush1.msra.mxu0 0.0
    %1850 = vmatprep.subr.mxu0 0.0
    %1851 = vmatpush1.msra.mxu0 0.0
    %1852 = vmatprep.subr.mxu0 0.0
    %1853 = vmatpush1.msra.mxu0 0.0
    %1854 = vmatprep.subr.mxu0 0.0
    %1855 = vmatpush1.msra.mxu0 0.0
    %1856 = vmatprep.subr.mxu0 0.0
    %1857 = vmatpush1.msra.mxu0 0.0
    %1858 = vmatprep.subr.mxu0 0.0
    %1859 = vmatpush1.msra.mxu0 0.0
    %1860 = vmatprep.subr.mxu0 0.0
    %1861 = vmatpush1.msra.mxu0 0.0
    %1862 = vmatprep.mubr.f32.mxu0 0.0
    %1863 = vmatmul.mubr.f32.gmra.mrb[0].mxu0 %v1657
    %v1864 = vpop.f32.mrb[0].mxu0
    %v1865 = vadd.f32 0.0, %v1864
    %v1866 = vpop.f32.mrb[0].mxu0
    %v1867 = vadd.f32 0.0, %v1866
    %1868 = vdwg.mxu0
    %v1869 = vadd.f32 %v1659, %v1794
    %v1870 = vadd.f32 %v1660, %v1796
    %v1871 = vadd.f32 %v1661, %v1865
    %v1872 = vadd.f32 %v1662, %v1867
    %v1873 = vxor.u32 %v1869, 2147483648
    %v1874 = vmul.f32 %v1873, 1.442695
    %v1875 = vpow.pop %v1874
    %v1876 = vadd.f32 %v1875, 1.0
    %v1877 = vrcp.pop %v1876
    %v1878 = vmul.f32 1.0, %v1877
    %v1879 = vxor.u32 %v1870, 2147483648
    %v1880 = vmul.f32 %v1879, 1.442695
    %v1881 = vpow.pop %v1880
    %v1882 = vadd.f32 %v1881, 1.0
    %v1883 = vrcp.pop %v1882
    %v1884 = vmul.f32 1.0, %v1883
    %v1885 = vtanh.pop %v1871
    %v1886 = vxor.u32 %v1872, 2147483648
    %v1887 = vmul.f32 %v1886, 1.442695
    %v1888 = vpow.pop %v1887
    %v1889 = vadd.f32 %v1888, 1.0
    %v1890 = vrcp.pop %v1889
    %v1891 = vmul.f32 1.0, %v1890
    %v1892 = vmul.f32 %v1884, %v1655
    %v1893 = vmul.f32 %v1878, %v1885
    %v1894 = vadd.f32 %v1892, %v1893
    %v1895 = vtanh.pop %v1894
    %v1896 = vmul.f32 %v1891, %v1895
    %1897 = vst [vmem:[#allocation2 + $0x28] sm:$0xff] %v1896
    %v1898 = vld [vmem:[#allocation3 + $0xc0] sm:$0xff]
    %v1899 = vld [vmem:[#allocation3 + $0xc8] sm:$0xff]
    %v1900 = vld [vmem:[#allocation3 + $0xd0] sm:$0xff]
    %v1901 = vld [vmem:[#allocation3 + $0xd8] sm:$0xff]
    %v1902 = vld [vmem:[#allocation9] sm:$0xff]
    %v1903 = vld [vmem:[#allocation9 + $0x8] sm:$0xff]
    %v1904 = vld [vmem:[#allocation9 + $0x10] sm:$0xff]
    %v1905 = vld [vmem:[#allocation9 + $0x18] sm:$0xff]
    %v1906 = vld [vmem:[#allocation9 + $0x20] sm:$0xff]
    %v1907 = vld [vmem:[#allocation9 + $0x28] sm:$0xff]
    %v1908 = vld [vmem:[#allocation9 + $0x30] sm:$0xff]
    %v1909 = vld [vmem:[#allocation9 + $0x38] sm:$0xff]
    %v1910 = vld [vmem:[#allocation9 + $0x40] sm:$0xff]
    %v1911 = vld [vmem:[#allocation9 + $0x48] sm:$0xff]
    %v1912 = vld [vmem:[#allocation9 + $0x50] sm:$0xff]
    %v1913 = vld [vmem:[#allocation9 + $0x58] sm:$0xff]
    %v1914 = vld [vmem:[#allocation9 + $0x60] sm:$0xff]
    %v1915 = vld [vmem:[#allocation9 + $0x68] sm:$0xff]
    %v1916 = vld [vmem:[#allocation9 + $0x70] sm:$0xff]
    %v1917 = vld [vmem:[#allocation9 + $0x78] sm:$0xff]
    %v1918 = vld [vmem:[#allocation9 + $0x80] sm:$0xff]
    %v1919 = vld [vmem:[#allocation9 + $0x88] sm:$0xff]
    %v1920 = vld [vmem:[#allocation9 + $0x90] sm:$0xff]
    %v1921 = vld [vmem:[#allocation9 + $0x98] sm:$0xff]
    %v1922 = vld [vmem:[#allocation9 + $0xa0] sm:$0xff]
    %v1923 = vld [vmem:[#allocation9 + $0xa8] sm:$0xff]
    %v1924 = vld [vmem:[#allocation9 + $0xb0] sm:$0xff]
    %v1925 = vld [vmem:[#allocation9 + $0xb8] sm:$0xff]
    %v1926 = vld [vmem:[#allocation9 + $0xc0] sm:$0xff]
    %v1927 = vld [vmem:[#allocation9 + $0xc8] sm:$0xff]
    %v1928 = vld [vmem:[#allocation9 + $0xd0] sm:$0xff]
    %v1929 = vld [vmem:[#allocation9 + $0xd8] sm:$0xff]
    %v1930 = vld [vmem:[#allocation9 + $0xe0] sm:$0xff]
    %v1931 = vld [vmem:[#allocation9 + $0xe8] sm:$0xff]
    %v1932 = vld [vmem:[#allocation9 + $0xf0] sm:$0xff]
    %v1933 = vld [vmem:[#allocation9 + $0xf8] sm:$0xff]
    %v1934 = vld [vmem:[#allocation9 + $0x100] sm:$0xff]
    %v1935 = vld [vmem:[#allocation9 + $0x108] sm:$0xff]
    %v1936 = vld [vmem:[#allocation9 + $0x110] sm:$0xff]
    %v1937 = vld [vmem:[#allocation9 + $0x118] sm:$0xff]
    %v1938 = vld [vmem:[#allocation9 + $0x120] sm:$0xff]
    %v1939 = vld [vmem:[#allocation9 + $0x128] sm:$0xff]
    %v1940 = vld [vmem:[#allocation9 + $0x130] sm:$0xff]
    %v1941 = vld [vmem:[#allocation9 + $0x138] sm:$0xff]
    %v1942 = vld [vmem:[#allocation9 + $0x140] sm:$0xff]
    %v1943 = vld [vmem:[#allocation9 + $0x148] sm:$0xff]
    %v1944 = vld [vmem:[#allocation9 + $0x150] sm:$0xff]
    %v1945 = vld [vmem:[#allocation9 + $0x158] sm:$0xff]
    %v1946 = vld [vmem:[#allocation9 + $0x160] sm:$0xff]
    %v1947 = vld [vmem:[#allocation9 + $0x168] sm:$0xff]
    %v1948 = vld [vmem:[#allocation9 + $0x170] sm:$0xff]
    %v1949 = vld [vmem:[#allocation9 + $0x178] sm:$0xff]
    %v1950 = vld [vmem:[#allocation9 + $0x180] sm:$0xff]
    %v1951 = vld [vmem:[#allocation9 + $0x188] sm:$0xff]
    %v1952 = vld [vmem:[#allocation9 + $0x190] sm:$0xff]
    %v1953 = vld [vmem:[#allocation9 + $0x198] sm:$0xff]
    %v1954 = vld [vmem:[#allocation9 + $0x1a0] sm:$0xff]
    %v1955 = vld [vmem:[#allocation9 + $0x1a8] sm:$0xff]
    %v1956 = vld [vmem:[#allocation9 + $0x1b0] sm:$0xff]
    %v1957 = vld [vmem:[#allocation9 + $0x1b8] sm:$0xff]
    %v1958 = vld [vmem:[#allocation9 + $0x1c0] sm:$0xff]
    %v1959 = vld [vmem:[#allocation9 + $0x1c8] sm:$0xff]
    %v1960 = vld [vmem:[#allocation9 + $0x1d0] sm:$0xff]
    %v1961 = vld [vmem:[#allocation9 + $0x1d8] sm:$0xff]
    %v1962 = vld [vmem:[#allocation9 + $0x1e0] sm:$0xff]
    %v1963 = vld [vmem:[#allocation9 + $0x1e8] sm:$0xff]
    %v1964 = vld [vmem:[#allocation9 + $0x1f0] sm:$0xff]
    %v1965 = vld [vmem:[#allocation9 + $0x1f8] sm:$0xff]
    %1966 = vmatprep.subr.mxu0 %v1903
    %1967 = vmatpush1.msra.mxu0 %v1902
    %1968 = vmatprep.subr.mxu0 %v1907
    %1969 = vmatpush1.msra.mxu0 %v1906
    %1970 = vmatprep.subr.mxu0 %v1911
    %1971 = vmatpush1.msra.mxu0 %v1910
    %1972 = vmatprep.subr.mxu0 %v1915
    %1973 = vmatpush1.msra.mxu0 %v1914
    %1974 = vmatprep.subr.mxu0 %v1919
    %1975 = vmatpush1.msra.mxu0 %v1918
    %1976 = vmatprep.subr.mxu0 %v1923
    %1977 = vmatpush1.msra.mxu0 %v1922
    %1978 = vmatprep.subr.mxu0 %v1927
    %1979 = vmatpush1.msra.mxu0 %v1926
    %1980 = vmatprep.subr.mxu0 %v1931
    %1981 = vmatpush1.msra.mxu0 %v1930
    %1982 = vmatprep.subr.mxu0 %v1935
    %1983 = vmatpush1.msra.mxu0 %v1934
    %1984 = vmatprep.subr.mxu0 %v1939
    %1985 = vmatpush1.msra.mxu0 %v1938
    %1986 = vmatprep.subr.mxu0 %v1943
    %1987 = vmatpush1.msra.mxu0 %v1942
    %1988 = vmatprep.subr.mxu0 %v1947
    %1989 = vmatpush1.msra.mxu0 %v1946
    %1990 = vmatprep.subr.mxu0 %v1951
    %1991 = vmatpush1.msra.mxu0 %v1950
    %1992 = vmatprep.subr.mxu0 %v1955
    %1993 = vmatpush1.msra.mxu0 %v1954
    %1994 = vmatprep.subr.mxu0 %v1959
    %1995 = vmatpush1.msra.mxu0 %v1958
    %1996 = vmatprep.subr.mxu0 %v1963
    %1997 = vmatpush1.msra.mxu0 %v1962
    %1998 = vmatprep.subr.mxu0 0.0
    %1999 = vmatpush1.msra.mxu0 0.0
    %2000 = vmatprep.subr.mxu0 0.0
    %2001 = vmatpush1.msra.mxu0 0.0
    %2002 = vmatprep.subr.mxu0 0.0
    %2003 = vmatpush1.msra.mxu0 0.0
    %2004 = vmatprep.subr.mxu0 0.0
    %2005 = vmatpush1.msra.mxu0 0.0
    %2006 = vmatprep.subr.mxu0 0.0
    %2007 = vmatpush1.msra.mxu0 0.0
    %2008 = vmatprep.subr.mxu0 0.0
    %2009 = vmatpush1.msra.mxu0 0.0
    %2010 = vmatprep.subr.mxu0 0.0
    %2011 = vmatpush1.msra.mxu0 0.0
    %2012 = vmatprep.subr.mxu0 0.0
    %2013 = vmatpush1.msra.mxu0 0.0
    %2014 = vmatprep.subr.mxu0 0.0
    %2015 = vmatpush1.msra.mxu0 0.0
    %2016 = vmatprep.subr.mxu0 0.0
    %2017 = vmatpush1.msra.mxu0 0.0
    %2018 = vmatprep.subr.mxu0 0.0
    %2019 = vmatpush1.msra.mxu0 0.0
    %2020 = vmatprep.subr.mxu0 0.0
    %2021 = vmatpush1.msra.mxu0 0.0
    %2022 = vmatprep.subr.mxu0 0.0
    %2023 = vmatpush1.msra.mxu0 0.0
    %2024 = vmatprep.subr.mxu0 0.0
    %2025 = vmatpush1.msra.mxu0 0.0
    %2026 = vmatprep.subr.mxu0 0.0
    %2027 = vmatpush1.msra.mxu0 0.0
    %2028 = vmatprep.subr.mxu0 0.0
    %2029 = vmatpush1.msra.mxu0 0.0
    %2030 = vmatprep.mubr.f32.mxu0 0.0
    %2031 = vmatmul.mubr.f32.gmra.mrb[0].mxu0 %v1896
    %v2032 = vpop.f32.mrb[0].mxu0
    %v2033 = vadd.f32 0.0, %v2032
    %v2034 = vpop.f32.mrb[0].mxu0
    %v2035 = vadd.f32 0.0, %v2034
    %2036 = vdwg.mxu0
    %2037 = vmatprep.subr.mxu0 %v1905
    %2038 = vmatpush1.msra.mxu0 %v1904
    %2039 = vmatprep.subr.mxu0 %v1909
    %2040 = vmatpush1.msra.mxu0 %v1908
    %2041 = vmatprep.subr.mxu0 %v1913
    %2042 = vmatpush1.msra.mxu0 %v1912
    %2043 = vmatprep.subr.mxu0 %v1917
    %2044 = vmatpush1.msra.mxu0 %v1916
    %2045 = vmatprep.subr.mxu0 %v1921
    %2046 = vmatpush1.msra.mxu0 %v1920
    %2047 = vmatprep.subr.mxu0 %v1925
    %2048 = vmatpush1.msra.mxu0 %v1924
    %2049 = vmatprep.subr.mxu0 %v1929
    %2050 = vmatpush1.msra.mxu0 %v1928
    %2051 = vmatprep.subr.mxu0 %v1933
    %2052 = vmatpush1.msra.mxu0 %v1932
    %2053 = vmatprep.subr.mxu0 %v1937
    %2054 = vmatpush1.msra.mxu0 %v1936
    %2055 = vmatprep.subr.mxu0 %v1941
    %2056 = vmatpush1.msra.mxu0 %v1940
    %2057 = vmatprep.subr.mxu0 %v1945
    %2058 = vmatpush1.msra.mxu0 %v1944
    %2059 = vmatprep.subr.mxu0 %v1949
    %2060 = vmatpush1.msra.mxu0 %v1948
    %2061 = vmatprep.subr.mxu0 %v1953
    %2062 = vmatpush1.msra.mxu0 %v1952
    %2063 = vmatprep.subr.mxu0 %v1957
    %2064 = vmatpush1.msra.mxu0 %v1956
    %2065 = vmatprep.subr.mxu0 %v1961
    %2066 = vmatpush1.msra.mxu0 %v1960
    %2067 = vmatprep.subr.mxu0 %v1965
    %2068 = vmatpush1.msra.mxu0 %v1964
    %2069 = vmatprep.subr.mxu0 0.0
    %2070 = vmatpush1.msra.mxu0 0.0
    %2071 = vmatprep.subr.mxu0 0.0
    %2072 = vmatpush1.msra.mxu0 0.0
    %2073 = vmatprep.subr.mxu0 0.0
    %2074 = vmatpush1.msra.mxu0 0.0
    %2075 = vmatprep.subr.mxu0 0.0
    %2076 = vmatpush1.msra.mxu0 0.0
    %2077 = vmatprep.subr.mxu0 0.0
    %2078 = vmatpush1.msra.mxu0 0.0
    %2079 = vmatprep.subr.mxu0 0.0
    %2080 = vmatpush1.msra.mxu0 0.0
    %2081 = vmatprep.subr.mxu0 0.0
    %2082 = vmatpush1.msra.mxu0 0.0
    %2083 = vmatprep.subr.mxu0 0.0
    %2084 = vmatpush1.msra.mxu0 0.0
    %2085 = vmatprep.subr.mxu0 0.0
    %2086 = vmatpush1.msra.mxu0 0.0
    %2087 = vmatprep.subr.mxu0 0.0
    %2088 = vmatpush1.msra.mxu0 0.0
    %2089 = vmatprep.subr.mxu0 0.0
    %2090 = vmatpush1.msra.mxu0 0.0
    %2091 = vmatprep.subr.mxu0 0.0
    %2092 = vmatpush1.msra.mxu0 0.0
    %2093 = vmatprep.subr.mxu0 0.0
    %2094 = vmatpush1.msra.mxu0 0.0
    %2095 = vmatprep.subr.mxu0 0.0
    %2096 = vmatpush1.msra.mxu0 0.0
    %2097 = vmatprep.subr.mxu0 0.0
    %2098 = vmatpush1.msra.mxu0 0.0
    %2099 = vmatprep.subr.mxu0 0.0
    %2100 = vmatpush1.msra.mxu0 0.0
    %2101 = vmatprep.mubr.f32.mxu0 0.0
    %2102 = vmatmul.mubr.f32.gmra.mrb[0].mxu0 %v1896
    %v2103 = vpop.f32.mrb[0].mxu0
    %v2104 = vadd.f32 0.0, %v2103
    %v2105 = vpop.f32.mrb[0].mxu0
    %v2106 = vadd.f32 0.0, %v2105
    %2107 = vdwg.mxu0
    %v2108 = vadd.f32 %v1898, %v2033
    %v2109 = vadd.f32 %v1899, %v2035
    %v2110 = vadd.f32 %v1900, %v2104
    %v2111 = vadd.f32 %v1901, %v2106
    %v2112 = vxor.u32 %v2108, 2147483648
    %v2113 = vmul.f32 %v2112, 1.442695
    %v2114 = vpow.pop %v2113
    %v2115 = vadd.f32 %v2114, 1.0
    %v2116 = vrcp.pop %v2115
    %v2117 = vmul.f32 1.0, %v2116
    %v2118 = vxor.u32 %v2109, 2147483648
    %v2119 = vmul.f32 %v2118, 1.442695
    %v2120 = vpow.pop %v2119
    %v2121 = vadd.f32 %v2120, 1.0
    %v2122 = vrcp.pop %v2121
    %v2123 = vmul.f32 1.0, %v2122
    %v2124 = vtanh.pop %v2110
    %v2125 = vxor.u32 %v2111, 2147483648
    %v2126 = vmul.f32 %v2125, 1.442695
    %v2127 = vpow.pop %v2126
    %v2128 = vadd.f32 %v2127, 1.0
    %v2129 = vrcp.pop %v2128
    %v2130 = vmul.f32 1.0, %v2129
    %v2131 = vmul.f32 %v2123, %v1894
    %v2132 = vmul.f32 %v2117, %v2124
    %v2133 = vadd.f32 %v2131, %v2132
    %v2134 = vtanh.pop %v2133
    %v2135 = vmul.f32 %v2130, %v2134
    %2136 = vst [vmem:[#allocation2 + $0x30] sm:$0xff] %v2135
    %v2137 = vld [vmem:[#allocation3 + $0xe0] sm:$0xff]
    %v2138 = vld [vmem:[#allocation3 + $0xe8] sm:$0xff]
    %v2139 = vld [vmem:[#allocation3 + $0xf0] sm:$0xff]
    %v2140 = vld [vmem:[#allocation3 + $0xf8] sm:$0xff]
    %v2141 = vld [vmem:[#allocation9] sm:$0xff]
    %v2142 = vld [vmem:[#allocation9 + $0x8] sm:$0xff]
    %v2143 = vld [vmem:[#allocation9 + $0x10] sm:$0xff]
    %v2144 = vld [vmem:[#allocation9 + $0x18] sm:$0xff]
    %v2145 = vld [vmem:[#allocation9 + $0x20] sm:$0xff]
    %v2146 = vld [vmem:[#allocation9 + $0x28] sm:$0xff]
    %v2147 = vld [vmem:[#allocation9 + $0x30] sm:$0xff]
    %v2148 = vld [vmem:[#allocation9 + $0x38] sm:$0xff]
    %v2149 = vld [vmem:[#allocation9 + $0x40] sm:$0xff]
    %v2150 = vld [vmem:[#allocation9 + $0x48] sm:$0xff]
    %v2151 = vld [vmem:[#allocation9 + $0x50] sm:$0xff]
    %v2152 = vld [vmem:[#allocation9 + $0x58] sm:$0xff]
    %v2153 = vld [vmem:[#allocation9 + $0x60] sm:$0xff]
    %v2154 = vld [vmem:[#allocation9 + $0x68] sm:$0xff]
    %v2155 = vld [vmem:[#allocation9 + $0x70] sm:$0xff]
    %v2156 = vld [vmem:[#allocation9 + $0x78] sm:$0xff]
    %v2157 = vld [vmem:[#allocation9 + $0x80] sm:$0xff]
    %v2158 = vld [vmem:[#allocation9 + $0x88] sm:$0xff]
    %v2159 = vld [vmem:[#allocation9 + $0x90] sm:$0xff]
    %v2160 = vld [vmem:[#allocation9 + $0x98] sm:$0xff]
    %v2161 = vld [vmem:[#allocation9 + $0xa0] sm:$0xff]
    %v2162 = vld [vmem:[#allocation9 + $0xa8] sm:$0xff]
    %v2163 = vld [vmem:[#allocation9 + $0xb0] sm:$0xff]
    %v2164 = vld [vmem:[#allocation9 + $0xb8] sm:$0xff]
    %v2165 = vld [vmem:[#allocation9 + $0xc0] sm:$0xff]
    %v2166 = vld [vmem:[#allocation9 + $0xc8] sm:$0xff]
    %v2167 = vld [vmem:[#allocation9 + $0xd0] sm:$0xff]
    %v2168 = vld [vmem:[#allocation9 + $0xd8] sm:$0xff]
    %v2169 = vld [vmem:[#allocation9 + $0xe0] sm:$0xff]
    %v2170 = vld [vmem:[#allocation9 + $0xe8] sm:$0xff]
    %v2171 = vld [vmem:[#allocation9 + $0xf0] sm:$0xff]
    %v2172 = vld [vmem:[#allocation9 + $0xf8] sm:$0xff]
    %v2173 = vld [vmem:[#allocation9 + $0x100] sm:$0xff]
    %v2174 = vld [vmem:[#allocation9 + $0x108] sm:$0xff]
    %v2175 = vld [vmem:[#allocation9 + $0x110] sm:$0xff]
    %v2176 = vld [vmem:[#allocation9 + $0x118] sm:$0xff]
    %v2177 = vld [vmem:[#allocation9 + $0x120] sm:$0xff]
    %v2178 = vld [vmem:[#allocation9 + $0x128] sm:$0xff]
    %v2179 = vld [vmem:[#allocation9 + $0x130] sm:$0xff]
    %v2180 = vld [vmem:[#allocation9 + $0x138] sm:$0xff]
    %v2181 = vld [vmem:[#allocation9 + $0x140] sm:$0xff]
    %v2182 = vld [vmem:[#allocation9 + $0x148] sm:$0xff]
    %v2183 = vld [vmem:[#allocation9 + $0x150] sm:$0xff]
    %v2184 = vld [vmem:[#allocation9 + $0x158] sm:$0xff]
    %v2185 = vld [vmem:[#allocation9 + $0x160] sm:$0xff]
    %v2186 = vld [vmem:[#allocation9 + $0x168] sm:$0xff]
    %v2187 = vld [vmem:[#allocation9 + $0x170] sm:$0xff]
    %v2188 = vld [vmem:[#allocation9 + $0x178] sm:$0xff]
    %v2189 = vld [vmem:[#allocation9 + $0x180] sm:$0xff]
    %v2190 = vld [vmem:[#allocation9 + $0x188] sm:$0xff]
    %v2191 = vld [vmem:[#allocation9 + $0x190] sm:$0xff]
    %v2192 = vld [vmem:[#allocation9 + $0x198] sm:$0xff]
    %v2193 = vld [vmem:[#allocation9 + $0x1a0] sm:$0xff]
    %v2194 = vld [vmem:[#allocation9 + $0x1a8] sm:$0xff]
    %v2195 = vld [vmem:[#allocation9 + $0x1b0] sm:$0xff]
    %v2196 = vld [vmem:[#allocation9 + $0x1b8] sm:$0xff]
    %v2197 = vld [vmem:[#allocation9 + $0x1c0] sm:$0xff]
    %v2198 = vld [vmem:[#allocation9 + $0x1c8] sm:$0xff]
    %v2199 = vld [vmem:[#allocation9 + $0x1d0] sm:$0xff]
    %v2200 = vld [vmem:[#allocation9 + $0x1d8] sm:$0xff]
    %v2201 = vld [vmem:[#allocation9 + $0x1e0] sm:$0xff]
    %v2202 = vld [vmem:[#allocation9 + $0x1e8] sm:$0xff]
    %v2203 = vld [vmem:[#allocation9 + $0x1f0] sm:$0xff]
    %v2204 = vld [vmem:[#allocation9 + $0x1f8] sm:$0xff]
    %2205 = vmatprep.subr.mxu0 %v2142
    %2206 = vmatpush1.msra.mxu0 %v2141
    %2207 = vmatprep.subr.mxu0 %v2146
    %2208 = vmatpush1.msra.mxu0 %v2145
    %2209 = vmatprep.subr.mxu0 %v2150
    %2210 = vmatpush1.msra.mxu0 %v2149
    %2211 = vmatprep.subr.mxu0 %v2154
    %2212 = vmatpush1.msra.mxu0 %v2153
    %2213 = vmatprep.subr.mxu0 %v2158
    %2214 = vmatpush1.msra.mxu0 %v2157
    %2215 = vmatprep.subr.mxu0 %v2162
    %2216 = vmatpush1.msra.mxu0 %v2161
    %2217 = vmatprep.subr.mxu0 %v2166
    %2218 = vmatpush1.msra.mxu0 %v2165
    %2219 = vmatprep.subr.mxu0 %v2170
    %2220 = vmatpush1.msra.mxu0 %v2169
    %2221 = vmatprep.subr.mxu0 %v2174
    %2222 = vmatpush1.msra.mxu0 %v2173
    %2223 = vmatprep.subr.mxu0 %v2178
    %2224 = vmatpush1.msra.mxu0 %v2177
    %2225 = vmatprep.subr.mxu0 %v2182
    %2226 = vmatpush1.msra.mxu0 %v2181
    %2227 = vmatprep.subr.mxu0 %v2186
    %2228 = vmatpush1.msra.mxu0 %v2185
    %2229 = vmatprep.subr.mxu0 %v2190
    %2230 = vmatpush1.msra.mxu0 %v2189
    %2231 = vmatprep.subr.mxu0 %v2194
    %2232 = vmatpush1.msra.mxu0 %v2193
    %2233 = vmatprep.subr.mxu0 %v2198
    %2234 = vmatpush1.msra.mxu0 %v2197
    %2235 = vmatprep.subr.mxu0 %v2202
    %2236 = vmatpush1.msra.mxu0 %v2201
    %2237 = vmatprep.subr.mxu0 0.0
    %2238 = vmatpush1.msra.mxu0 0.0
    %2239 = vmatprep.subr.mxu0 0.0
    %2240 = vmatpush1.msra.mxu0 0.0
    %2241 = vmatprep.subr.mxu0 0.0
    %2242 = vmatpush1.msra.mxu0 0.0
    %2243 = vmatprep.subr.mxu0 0.0
    %2244 = vmatpush1.msra.mxu0 0.0
    %2245 = vmatprep.subr.mxu0 0.0
    %2246 = vmatpush1.msra.mxu0 0.0
    %2247 = vmatprep.subr.mxu0 0.0
    %2248 = vmatpush1.msra.mxu0 0.0
    %2249 = vmatprep.subr.mxu0 0.0
    %2250 = vmatpush1.msra.mxu0 0.0
    %2251 = vmatprep.subr.mxu0 0.0
    %2252 = vmatpush1.msra.mxu0 0.0
    %2253 = vmatprep.subr.mxu0 0.0
    %2254 = vmatpush1.msra.mxu0 0.0
    %2255 = vmatprep.subr.mxu0 0.0
    %2256 = vmatpush1.msra.mxu0 0.0
    %2257 = vmatprep.subr.mxu0 0.0
    %2258 = vmatpush1.msra.mxu0 0.0
    %2259 = vmatprep.subr.mxu0 0.0
    %2260 = vmatpush1.msra.mxu0 0.0
    %2261 = vmatprep.subr.mxu0 0.0
    %2262 = vmatpush1.msra.mxu0 0.0
    %2263 = vmatprep.subr.mxu0 0.0
    %2264 = vmatpush1.msra.mxu0 0.0
    %2265 = vmatprep.subr.mxu0 0.0
    %2266 = vmatpush1.msra.mxu0 0.0
    %2267 = vmatprep.subr.mxu0 0.0
    %2268 = vmatpush1.msra.mxu0 0.0
    %2269 = vmatprep.mubr.f32.mxu0 0.0
    %2270 = vmatmul.mubr.f32.gmra.mrb[0].mxu0 %v2135
    %v2271 = vpop.f32.mrb[0].mxu0
    %v2272 = vadd.f32 0.0, %v2271
    %v2273 = vpop.f32.mrb[0].mxu0
    %v2274 = vadd.f32 0.0, %v2273
    %2275 = vdwg.mxu0
    %2276 = vmatprep.subr.mxu0 %v2144
    %2277 = vmatpush1.msra.mxu0 %v2143
    %2278 = vmatprep.subr.mxu0 %v2148
    %2279 = vmatpush1.msra.mxu0 %v2147
    %2280 = vmatprep.subr.mxu0 %v2152
    %2281 = vmatpush1.msra.mxu0 %v2151
    %2282 = vmatprep.subr.mxu0 %v2156
    %2283 = vmatpush1.msra.mxu0 %v2155
    %2284 = vmatprep.subr.mxu0 %v2160
    %2285 = vmatpush1.msra.mxu0 %v2159
    %2286 = vmatprep.subr.mxu0 %v2164
    %2287 = vmatpush1.msra.mxu0 %v2163
    %2288 = vmatprep.subr.mxu0 %v2168
    %2289 = vmatpush1.msra.mxu0 %v2167
    %2290 = vmatprep.subr.mxu0 %v2172
    %2291 = vmatpush1.msra.mxu0 %v2171
    %2292 = vmatprep.subr.mxu0 %v2176
    %2293 = vmatpush1.msra.mxu0 %v2175
    %2294 = vmatprep.subr.mxu0 %v2180
    %2295 = vmatpush1.msra.mxu0 %v2179
    %2296 = vmatprep.subr.mxu0 %v2184
    %2297 = vmatpush1.msra.mxu0 %v2183
    %2298 = vmatprep.subr.mxu0 %v2188
    %2299 = vmatpush1.msra.mxu0 %v2187
    %2300 = vmatprep.subr.mxu0 %v2192
    %2301 = vmatpush1.msra.mxu0 %v2191
    %2302 = vmatprep.subr.mxu0 %v2196
    %2303 = vmatpush1.msra.mxu0 %v2195
    %2304 = vmatprep.subr.mxu0 %v2200
    %2305 = vmatpush1.msra.mxu0 %v2199
    %2306 = vmatprep.subr.mxu0 %v2204
    %2307 = vmatpush1.msra.mxu0 %v2203
    %2308 = vmatprep.subr.mxu0 0.0
    %2309 = vmatpush1.msra.mxu0 0.0
    %2310 = vmatprep.subr.mxu0 0.0
    %2311 = vmatpush1.msra.mxu0 0.0
    %2312 = vmatprep.subr.mxu0 0.0
    %2313 = vmatpush1.msra.mxu0 0.0
    %2314 = vmatprep.subr.mxu0 0.0
    %2315 = vmatpush1.msra.mxu0 0.0
    %2316 = vmatprep.subr.mxu0 0.0
    %2317 = vmatpush1.msra.mxu0 0.0
    %2318 = vmatprep.subr.mxu0 0.0
    %2319 = vmatpush1.msra.mxu0 0.0
    %2320 = vmatprep.subr.mxu0 0.0
    %2321 = vmatpush1.msra.mxu0 0.0
    %2322 = vmatprep.subr.mxu0 0.0
    %2323 = vmatpush1.msra.mxu0 0.0
    %2324 = vmatprep.subr.mxu0 0.0
    %2325 = vmatpush1.msra.mxu0 0.0
    %2326 = vmatprep.subr.mxu0 0.0
    %2327 = vmatpush1.msra.mxu0 0.0
    %2328 = vmatprep.subr.mxu0 0.0
    %2329 = vmatpush1.msra.mxu0 0.0
    %2330 = vmatprep.subr.mxu0 0.0
    %2331 = vmatpush1.msra.mxu0 0.0
    %2332 = vmatprep.subr.mxu0 0.0
    %2333 = vmatpush1.msra.mxu0 0.0
    %2334 = vmatprep.subr.mxu0 0.0
    %2335 = vmatpush1.msra.mxu0 0.0
    %2336 = vmatprep.subr.mxu0 0.0
    %2337 = vmatpush1.msra.mxu0 0.0
    %2338 = vmatprep.subr.mxu0 0.0
    %2339 = vmatpush1.msra.mxu0 0.0
    %2340 = vmatprep.mubr.f32.mxu0 0.0
    %2341 = vmatmul.mubr.f32.gmra.mrb[0].mxu0 %v2135
    %v2342 = vpop.f32.mrb[0].mxu0
    %v2343 = vadd.f32 0.0, %v2342
    %v2344 = vpop.f32.mrb[0].mxu0
    %v2345 = vadd.f32 0.0, %v2344
    %2346 = vdwg.mxu0
    %v2347 = vadd.f32 %v2137, %v2272
    %v2348 = vadd.f32 %v2138, %v2274
    %v2349 = vadd.f32 %v2139, %v2343
    %v2350 = vadd.f32 %v2140, %v2345
    %v2351 = vxor.u32 %v2347, 2147483648
    %v2352 = vmul.f32 %v2351, 1.442695
    %v2353 = vpow.pop %v2352
    %v2354 = vadd.f32 %v2353, 1.0
    %v2355 = vrcp.pop %v2354
    %v2356 = vmul.f32 1.0, %v2355
    %v2357 = vxor.u32 %v2348, 2147483648
    %v2358 = vmul.f32 %v2357, 1.442695
    %v2359 = vpow.pop %v2358
    %v2360 = vadd.f32 %v2359, 1.0
    %v2361 = vrcp.pop %v2360
    %v2362 = vmul.f32 1.0, %v2361
    %v2363 = vtanh.pop %v2349
    %v2364 = vxor.u32 %v2350, 2147483648
    %v2365 = vmul.f32 %v2364, 1.442695
    %v2366 = vpow.pop %v2365
    %v2367 = vadd.f32 %v2366, 1.0
    %v2368 = vrcp.pop %v2367
    %v2369 = vmul.f32 1.0, %v2368
    %v2370 = vmul.f32 %v2362, %v2133
    %v2371 = vmul.f32 %v2356, %v2363
    %v2372 = vadd.f32 %v2370, %v2371
    %v2373 = vtanh.pop %v2372
    %v2374 = vmul.f32 %v2369, %v2373
    %2375 = vst [vmem:[#allocation2 + $0x38] sm:$0xff] %v2374
    %v2376 = vld [vmem:[#allocation3 + $0x100] sm:$0xff]
    %v2377 = vld [vmem:[#allocation3 + $0x108] sm:$0xff]
    %v2378 = vld [vmem:[#allocation3 + $0x110] sm:$0xff]
    %v2379 = vld [vmem:[#allocation3 + $0x118] sm:$0xff]
    %v2380 = vld [vmem:[#allocation9] sm:$0xff]
    %v2381 = vld [vmem:[#allocation9 + $0x8] sm:$0xff]
    %v2382 = vld [vmem:[#allocation9 + $0x10] sm:$0xff]
    %v2383 = vld [vmem:[#allocation9 + $0x18] sm:$0xff]
    %v2384 = vld [vmem:[#allocation9 + $0x20] sm:$0xff]
    %v2385 = vld [vmem:[#allocation9 + $0x28] sm:$0xff]
    %v2386 = vld [vmem:[#allocation9 + $0x30] sm:$0xff]
    %v2387 = vld [vmem:[#allocation9 + $0x38] sm:$0xff]
    %v2388 = vld [vmem:[#allocation9 + $0x40] sm:$0xff]
    %v2389 = vld [vmem:[#allocation9 + $0x48] sm:$0xff]
    %v2390 = vld [vmem:[#allocation9 + $0x50] sm:$0xff]
    %v2391 = vld [vmem:[#allocation9 + $0x58] sm:$0xff]
    %v2392 = vld [vmem:[#allocation9 + $0x60] sm:$0xff]
    %v2393 = vld [vmem:[#allocation9 + $0x68] sm:$0xff]
    %v2394 = vld [vmem:[#allocation9 + $0x70] sm:$0xff]
    %v2395 = vld [vmem:[#allocation9 + $0x78] sm:$0xff]
    %v2396 = vld [vmem:[#allocation9 + $0x80] sm:$0xff]
    %v2397 = vld [vmem:[#allocation9 + $0x88] sm:$0xff]
    %v2398 = vld [vmem:[#allocation9 + $0x90] sm:$0xff]
    %v2399 = vld [vmem:[#allocation9 + $0x98] sm:$0xff]
    %v2400 = vld [vmem:[#allocation9 + $0xa0] sm:$0xff]
    %v2401 = vld [vmem:[#allocation9 + $0xa8] sm:$0xff]
    %v2402 = vld [vmem:[#allocation9 + $0xb0] sm:$0xff]
    %v2403 = vld [vmem:[#allocation9 + $0xb8] sm:$0xff]
    %v2404 = vld [vmem:[#allocation9 + $0xc0] sm:$0xff]
    %v2405 = vld [vmem:[#allocation9 + $0xc8] sm:$0xff]
    %v2406 = vld [vmem:[#allocation9 + $0xd0] sm:$0xff]
    %v2407 = vld [vmem:[#allocation9 + $0xd8] sm:$0xff]
    %v2408 = vld [vmem:[#allocation9 + $0xe0] sm:$0xff]
    %v2409 = vld [vmem:[#allocation9 + $0xe8] sm:$0xff]
    %v2410 = vld [vmem:[#allocation9 + $0xf0] sm:$0xff]
    %v2411 = vld [vmem:[#allocation9 + $0xf8] sm:$0xff]
    %v2412 = vld [vmem:[#allocation9 + $0x100] sm:$0xff]
    %v2413 = vld [vmem:[#allocation9 + $0x108] sm:$0xff]
    %v2414 = vld [vmem:[#allocation9 + $0x110] sm:$0xff]
    %v2415 = vld [vmem:[#allocation9 + $0x118] sm:$0xff]
    %v2416 = vld [vmem:[#allocation9 + $0x120] sm:$0xff]
    %v2417 = vld [vmem:[#allocation9 + $0x128] sm:$0xff]
    %v2418 = vld [vmem:[#allocation9 + $0x130] sm:$0xff]
    %v2419 = vld [vmem:[#allocation9 + $0x138] sm:$0xff]
    %v2420 = vld [vmem:[#allocation9 + $0x140] sm:$0xff]
    %v2421 = vld [vmem:[#allocation9 + $0x148] sm:$0xff]
    %v2422 = vld [vmem:[#allocation9 + $0x150] sm:$0xff]
    %v2423 = vld [vmem:[#allocation9 + $0x158] sm:$0xff]
    %v2424 = vld [vmem:[#allocation9 + $0x160] sm:$0xff]
    %v2425 = vld [vmem:[#allocation9 + $0x168] sm:$0xff]
    %v2426 = vld [vmem:[#allocation9 + $0x170] sm:$0xff]
    %v2427 = vld [vmem:[#allocation9 + $0x178] sm:$0xff]
    %v2428 = vld [vmem:[#allocation9 + $0x180] sm:$0xff]
    %v2429 = vld [vmem:[#allocation9 + $0x188] sm:$0xff]
    %v2430 = vld [vmem:[#allocation9 + $0x190] sm:$0xff]
    %v2431 = vld [vmem:[#allocation9 + $0x198] sm:$0xff]
    %v2432 = vld [vmem:[#allocation9 + $0x1a0] sm:$0xff]
    %v2433 = vld [vmem:[#allocation9 + $0x1a8] sm:$0xff]
    %v2434 = vld [vmem:[#allocation9 + $0x1b0] sm:$0xff]
    %v2435 = vld [vmem:[#allocation9 + $0x1b8] sm:$0xff]
    %v2436 = vld [vmem:[#allocation9 + $0x1c0] sm:$0xff]
    %v2437 = vld [vmem:[#allocation9 + $0x1c8] sm:$0xff]
    %v2438 = vld [vmem:[#allocation9 + $0x1d0] sm:$0xff]
    %v2439 = vld [vmem:[#allocation9 + $0x1d8] sm:$0xff]
    %v2440 = vld [vmem:[#allocation9 + $0x1e0] sm:$0xff]
    %v2441 = vld [vmem:[#allocation9 + $0x1e8] sm:$0xff]
    %v2442 = vld [vmem:[#allocation9 + $0x1f0] sm:$0xff]
    %v2443 = vld [vmem:[#allocation9 + $0x1f8] sm:$0xff]
    %2444 = vmatprep.subr.mxu0 %v2381
    %2445 = vmatpush1.msra.mxu0 %v2380
    %2446 = vmatprep.subr.mxu0 %v2385
    %2447 = vmatpush1.msra.mxu0 %v2384
    %2448 = vmatprep.subr.mxu0 %v2389
    %2449 = vmatpush1.msra.mxu0 %v2388
    %2450 = vmatprep.subr.mxu0 %v2393
    %2451 = vmatpush1.msra.mxu0 %v2392
    %2452 = vmatprep.subr.mxu0 %v2397
    %2453 = vmatpush1.msra.mxu0 %v2396
    %2454 = vmatprep.subr.mxu0 %v2401
    %2455 = vmatpush1.msra.mxu0 %v2400
    %2456 = vmatprep.subr.mxu0 %v2405
    %2457 = vmatpush1.msra.mxu0 %v2404
    %2458 = vmatprep.subr.mxu0 %v2409
    %2459 = vmatpush1.msra.mxu0 %v2408
    %2460 = vmatprep.subr.mxu0 %v2413
    %2461 = vmatpush1.msra.mxu0 %v2412
    %2462 = vmatprep.subr.mxu0 %v2417
    %2463 = vmatpush1.msra.mxu0 %v2416
    %2464 = vmatprep.subr.mxu0 %v2421
    %2465 = vmatpush1.msra.mxu0 %v2420
    %2466 = vmatprep.subr.mxu0 %v2425
    %2467 = vmatpush1.msra.mxu0 %v2424
    %2468 = vmatprep.subr.mxu0 %v2429
    %2469 = vmatpush1.msra.mxu0 %v2428
    %2470 = vmatprep.subr.mxu0 %v2433
    %2471 = vmatpush1.msra.mxu0 %v2432
    %2472 = vmatprep.subr.mxu0 %v2437
    %2473 = vmatpush1.msra.mxu0 %v2436
    %2474 = vmatprep.subr.mxu0 %v2441
    %2475 = vmatpush1.msra.mxu0 %v2440
    %2476 = vmatprep.subr.mxu0 0.0
    %2477 = vmatpush1.msra.mxu0 0.0
    %2478 = vmatprep.subr.mxu0 0.0
    %2479 = vmatpush1.msra.mxu0 0.0
    %2480 = vmatprep.subr.mxu0 0.0
    %2481 = vmatpush1.msra.mxu0 0.0
    %2482 = vmatprep.subr.mxu0 0.0
    %2483 = vmatpush1.msra.mxu0 0.0
    %2484 = vmatprep.subr.mxu0 0.0
    %2485 = vmatpush1.msra.mxu0 0.0
    %2486 = vmatprep.subr.mxu0 0.0
    %2487 = vmatpush1.msra.mxu0 0.0
    %2488 = vmatprep.subr.mxu0 0.0
    %2489 = vmatpush1.msra.mxu0 0.0
    %2490 = vmatprep.subr.mxu0 0.0
    %2491 = vmatpush1.msra.mxu0 0.0
    %2492 = vmatprep.subr.mxu0 0.0
    %2493 = vmatpush1.msra.mxu0 0.0
    %2494 = vmatprep.subr.mxu0 0.0
    %2495 = vmatpush1.msra.mxu0 0.0
    %2496 = vmatprep.subr.mxu0 0.0
    %2497 = vmatpush1.msra.mxu0 0.0
    %2498 = vmatprep.subr.mxu0 0.0
    %2499 = vmatpush1.msra.mxu0 0.0
    %2500 = vmatprep.subr.mxu0 0.0
    %2501 = vmatpush1.msra.mxu0 0.0
    %2502 = vmatprep.subr.mxu0 0.0
    %2503 = vmatpush1.msra.mxu0 0.0
    %2504 = vmatprep.subr.mxu0 0.0
    %2505 = vmatpush1.msra.mxu0 0.0
    %2506 = vmatprep.subr.mxu0 0.0
    %2507 = vmatpush1.msra.mxu0 0.0
    %2508 = vmatprep.mubr.f32.mxu0 0.0
    %2509 = vmatmul.mubr.f32.gmra.mrb[0].mxu0 %v2374
    %v2510 = vpop.f32.mrb[0].mxu0
    %v2511 = vadd.f32 0.0, %v2510
    %v2512 = vpop.f32.mrb[0].mxu0
    %v2513 = vadd.f32 0.0, %v2512
    %2514 = vdwg.mxu0
    %2515 = vmatprep.subr.mxu0 %v2383
    %2516 = vmatpush1.msra.mxu0 %v2382
    %2517 = vmatprep.subr.mxu0 %v2387
    %2518 = vmatpush1.msra.mxu0 %v2386
    %2519 = vmatprep.subr.mxu0 %v2391
    %2520 = vmatpush1.msra.mxu0 %v2390
    %2521 = vmatprep.subr.mxu0 %v2395
    %2522 = vmatpush1.msra.mxu0 %v2394
    %2523 = vmatprep.subr.mxu0 %v2399
    %2524 = vmatpush1.msra.mxu0 %v2398
    %2525 = vmatprep.subr.mxu0 %v2403
    %2526 = vmatpush1.msra.mxu0 %v2402
    %2527 = vmatprep.subr.mxu0 %v2407
    %2528 = vmatpush1.msra.mxu0 %v2406
    %2529 = vmatprep.subr.mxu0 %v2411
    %2530 = vmatpush1.msra.mxu0 %v2410
    %2531 = vmatprep.subr.mxu0 %v2415
    %2532 = vmatpush1.msra.mxu0 %v2414
    %2533 = vmatprep.subr.mxu0 %v2419
    %2534 = vmatpush1.msra.mxu0 %v2418
    %2535 = vmatprep.subr.mxu0 %v2423
    %2536 = vmatpush1.msra.mxu0 %v2422
    %2537 = vmatprep.subr.mxu0 %v2427
    %2538 = vmatpush1.msra.mxu0 %v2426
    %2539 = vmatprep.subr.mxu0 %v2431
    %2540 = vmatpush1.msra.mxu0 %v2430
    %2541 = vmatprep.subr.mxu0 %v2435
    %2542 = vmatpush1.msra.mxu0 %v2434
    %2543 = vmatprep.subr.mxu0 %v2439
    %2544 = vmatpush1.msra.mxu0 %v2438
    %2545 = vmatprep.subr.mxu0 %v2443
    %2546 = vmatpush1.msra.mxu0 %v2442
    %2547 = vmatprep.subr.mxu0 0.0
    %2548 = vmatpush1.msra.mxu0 0.0
    %2549 = vmatprep.subr.mxu0 0.0
    %2550 = vmatpush1.msra.mxu0 0.0
    %2551 = vmatprep.subr.mxu0 0.0
    %2552 = vmatpush1.msra.mxu0 0.0
    %2553 = vmatprep.subr.mxu0 0.0
    %2554 = vmatpush1.msra.mxu0 0.0
    %2555 = vmatprep.subr.mxu0 0.0
    %2556 = vmatpush1.msra.mxu0 0.0
    %2557 = vmatprep.subr.mxu0 0.0
    %2558 = vmatpush1.msra.mxu0 0.0
    %2559 = vmatprep.subr.mxu0 0.0
    %2560 = vmatpush1.msra.mxu0 0.0
    %2561 = vmatprep.subr.mxu0 0.0
    %2562 = vmatpush1.msra.mxu0 0.0
    %2563 = vmatprep.subr.mxu0 0.0
    %2564 = vmatpush1.msra.mxu0 0.0
    %2565 = vmatprep.subr.mxu0 0.0
    %2566 = vmatpush1.msra.mxu0 0.0
    %2567 = vmatprep.subr.mxu0 0.0
    %2568 = vmatpush1.msra.mxu0 0.0
    %2569 = vmatprep.subr.mxu0 0.0
    %2570 = vmatpush1.msra.mxu0 0.0
    %2571 = vmatprep.subr.mxu0 0.0
    %2572 = vmatpush1.msra.mxu0 0.0
    %2573 = vmatprep.subr.mxu0 0.0
    %2574 = vmatpush1.msra.mxu0 0.0
    %2575 = vmatprep.subr.mxu0 0.0
    %2576 = vmatpush1.msra.mxu0 0.0
    %2577 = vmatprep.subr.mxu0 0.0
    %2578 = vmatpush1.msra.mxu0 0.0
    %2579 = vmatprep.mubr.f32.mxu0 0.0
    %2580 = vmatmul.mubr.f32.gmra.mrb[0].mxu0 %v2374
    %v2581 = vpop.f32.mrb[0].mxu0
    %v2582 = vadd.f32 0.0, %v2581
    %v2583 = vpop.f32.mrb[0].mxu0
    %v2584 = vadd.f32 0.0, %v2583
    %2585 = vdwg.mxu0
    %v2586 = vadd.f32 %v2376, %v2511
    %v2587 = vadd.f32 %v2377, %v2513
    %v2588 = vadd.f32 %v2378, %v2582
    %v2589 = vadd.f32 %v2379, %v2584
    %v2590 = vxor.u32 %v2586, 2147483648
    %v2591 = vmul.f32 %v2590, 1.442695
    %v2592 = vpow.pop %v2591
    %v2593 = vadd.f32 %v2592, 1.0
    %v2594 = vrcp.pop %v2593
    %v2595 = vmul.f32 1.0, %v2594
    %v2596 = vxor.u32 %v2587, 2147483648
    %v2597 = vmul.f32 %v2596, 1.442695
    %v2598 = vpow.pop %v2597
    %v2599 = vadd.f32 %v2598, 1.0
    %v2600 = vrcp.pop %v2599
    %v2601 = vmul.f32 1.0, %v2600
    %v2602 = vtanh.pop %v2588
    %v2603 = vxor.u32 %v2589, 2147483648
    %v2604 = vmul.f32 %v2603, 1.442695
    %v2605 = vpow.pop %v2604
    %v2606 = vadd.f32 %v2605, 1.0
    %v2607 = vrcp.pop %v2606
    %v2608 = vmul.f32 1.0, %v2607
    %v2609 = vmul.f32 %v2601, %v2372
    %v2610 = vmul.f32 %v2595, %v2602
    %v2611 = vadd.f32 %v2609, %v2610
    %v2612 = vtanh.pop %v2611
    %v2613 = vmul.f32 %v2608, %v2612
    %2614 = vst [vmem:[#allocation2 + $0x40] sm:$0xff] %v2613
    %v2615 = vld [vmem:[#allocation2] sm:$0xff]
    %v2616 = vld [vmem:[#allocation2 + $0x8] sm:$0xff]
    %v2617 = vld [vmem:[#allocation2 + $0x10] sm:$0xff]
    %v2618 = vld [vmem:[#allocation2 + $0x18] sm:$0xff]
    %v2619 = vld [vmem:[#allocation2 + $0x20] sm:$0xff]
    %v2620 = vld [vmem:[#allocation2 + $0x28] sm:$0xff]
    %v2621 = vld [vmem:[#allocation2 + $0x30] sm:$0xff]
    %v2622 = vld [vmem:[#allocation2 + $0x38] sm:$0xff]
    %v2623 = vld [vmem:[#allocation2 + $0x40] sm:$0xff]
    %v2624 = vld [vmem:[#allocation10] sm:$0xff]
    %v2625 = vld [vmem:[#allocation10 + $0x8] sm:$0xff]
    %v2626 = vld [vmem:[#allocation10 + $0x10] sm:$0xff]
    %v2627 = vld [vmem:[#allocation10 + $0x18] sm:$0xff]
    %v2628 = vld [vmem:[#allocation10 + $0x20] sm:$0xff]
    %v2629 = vld [vmem:[#allocation10 + $0x28] sm:$0xff]
    %v2630 = vld [vmem:[#allocation10 + $0x30] sm:$0xff]
    %v2631 = vld [vmem:[#allocation10 + $0x38] sm:$0xff]
    %v2632 = vld [vmem:[#allocation10 + $0x40] sm:$0xff]
    %v2633 = vld [vmem:[#allocation10 + $0x48] sm:$0xff]
    %v2634 = vld [vmem:[#allocation10 + $0x50] sm:$0xff]
    %v2635 = vld [vmem:[#allocation10 + $0x58] sm:$0xff]
    %v2636 = vld [vmem:[#allocation10 + $0x60] sm:$0xff]
    %v2637 = vld [vmem:[#allocation10 + $0x68] sm:$0xff]
    %v2638 = vld [vmem:[#allocation10 + $0x70] sm:$0xff]
    %v2639 = vld [vmem:[#allocation10 + $0x78] sm:$0xff]
    %v2640 = vld [vmem:[#allocation10 + $0x80] sm:$0xff]
    %v2641 = vld [vmem:[#allocation10 + $0x88] sm:$0xff]
    %v2642 = vld [vmem:[#allocation10 + $0x90] sm:$0xff]
    %v2643 = vld [vmem:[#allocation10 + $0x98] sm:$0xff]
    %v2644 = vld [vmem:[#allocation10 + $0xa0] sm:$0xff]
    %v2645 = vld [vmem:[#allocation10 + $0xa8] sm:$0xff]
    %v2646 = vld [vmem:[#allocation10 + $0xb0] sm:$0xff]
    %v2647 = vld [vmem:[#allocation10 + $0xb8] sm:$0xff]
    %v2648 = vld [vmem:[#allocation10 + $0xc0] sm:$0xff]
    %v2649 = vld [vmem:[#allocation10 + $0xc8] sm:$0xff]
    %v2650 = vld [vmem:[#allocation10 + $0xd0] sm:$0xff]
    %v2651 = vld [vmem:[#allocation10 + $0xd8] sm:$0xff]
    %v2652 = vld [vmem:[#allocation10 + $0xe0] sm:$0xff]
    %v2653 = vld [vmem:[#allocation10 + $0xe8] sm:$0xff]
    %v2654 = vld [vmem:[#allocation10 + $0xf0] sm:$0xff]
    %v2655 = vld [vmem:[#allocation10 + $0xf8] sm:$0xff]
    %v2656 = vld [vmem:[#allocation10 + $0x100] sm:$0xff]
    %v2657 = vld [vmem:[#allocation10 + $0x108] sm:$0xff]
    %v2658 = vld [vmem:[#allocation10 + $0x110] sm:$0xff]
    %v2659 = vld [vmem:[#allocation10 + $0x118] sm:$0xff]
    %v2660 = vld [vmem:[#allocation10 + $0x120] sm:$0xff]
    %v2661 = vld [vmem:[#allocation10 + $0x128] sm:$0xff]
    %v2662 = vld [vmem:[#allocation10 + $0x130] sm:$0xff]
    %v2663 = vld [vmem:[#allocation10 + $0x138] sm:$0xff]
    %v2664 = vld [vmem:[#allocation10 + $0x140] sm:$0xff]
    %v2665 = vld [vmem:[#allocation10 + $0x148] sm:$0xff]
    %v2666 = vld [vmem:[#allocation10 + $0x150] sm:$0xff]
    %v2667 = vld [vmem:[#allocation10 + $0x158] sm:$0xff]
    %v2668 = vld [vmem:[#allocation10 + $0x160] sm:$0xff]
    %v2669 = vld [vmem:[#allocation10 + $0x168] sm:$0xff]
    %v2670 = vld [vmem:[#allocation10 + $0x170] sm:$0xff]
    %v2671 = vld [vmem:[#allocation10 + $0x178] sm:$0xff]
    %v2672 = vld [vmem:[#allocation10 + $0x180] sm:$0xff]
    %v2673 = vld [vmem:[#allocation10 + $0x188] sm:$0xff]
    %v2674 = vld [vmem:[#allocation10 + $0x190] sm:$0xff]
    %v2675 = vld [vmem:[#allocation10 + $0x198] sm:$0xff]
    %v2676 = vld [vmem:[#allocation10 + $0x1a0] sm:$0xff]
    %v2677 = vld [vmem:[#allocation10 + $0x1a8] sm:$0xff]
    %v2678 = vld [vmem:[#allocation10 + $0x1b0] sm:$0xff]
    %v2679 = vld [vmem:[#allocation10 + $0x1b8] sm:$0xff]
    %v2680 = vld [vmem:[#allocation10 + $0x1c0] sm:$0xff]
    %v2681 = vld [vmem:[#allocation10 + $0x1c8] sm:$0xff]
    %v2682 = vld [vmem:[#allocation10 + $0x1d0] sm:$0xff]
    %v2683 = vld [vmem:[#allocation10 + $0x1d8] sm:$0xff]
    %v2684 = vld [vmem:[#allocation10 + $0x1e0] sm:$0xff]
    %v2685 = vld [vmem:[#allocation10 + $0x1e8] sm:$0xff]
    %v2686 = vld [vmem:[#allocation10 + $0x1f0] sm:$0xff]
    %v2687 = vld [vmem:[#allocation10 + $0x1f8] sm:$0xff]
    %v2688 = vld [vmem:[%s6] sm:$0xf]
    %v2690 = vlaneseq
    %v2691 = vshrl.u32 %v2690, 7
    %v2692 = vsub.s32 0, %v2691
    %v2693 = vrot.slane %v2688, %v2692
    %v2694 = vlaneseq
    %v2695 = vshrl.u32 %v2694, 7
    %v2696 = vsub.s32 1, %v2695
    %v2697 = vrot.slane %v2688, %v2696
    %v2698 = vlaneseq
    %v2699 = vshrl.u32 %v2698, 7
    %v2700 = vsub.s32 2, %v2699
    %v2701 = vrot.slane %v2688, %v2700
    %v2702 = vlaneseq
    %v2703 = vshrl.u32 %v2702, 7
    %v2704 = vsub.s32 3, %v2703
    %v2705 = vrot.slane %v2688, %v2704
    %2710 = vmatprep.subr.mxu0 %v2625
    %2711 = vmatpush1.msra.mxu0 %v2624
    %2712 = vmatprep.subr.mxu0 %v2629
    %2713 = vmatpush1.msra.mxu0 %v2628
    %2714 = vmatprep.subr.mxu0 %v2633
    %2715 = vmatpush1.msra.mxu0 %v2632
    %2716 = vmatprep.subr.mxu0 %v2637
    %2717 = vmatpush1.msra.mxu0 %v2636
    %2718 = vmatprep.subr.mxu0 %v2641
    %2719 = vmatpush1.msra.mxu0 %v2640
    %2720 = vmatprep.subr.mxu0 %v2645
    %2721 = vmatpush1.msra.mxu0 %v2644
    %2722 = vmatprep.subr.mxu0 %v2649
    %2723 = vmatpush1.msra.mxu0 %v2648
    %2724 = vmatprep.subr.mxu0 %v2653
    %2725 = vmatpush1.msra.mxu0 %v2652
    %2726 = vmatprep.subr.mxu0 %v2657
    %2727 = vmatpush1.msra.mxu0 %v2656
    %2728 = vmatprep.subr.mxu0 %v2661
    %2729 = vmatpush1.msra.mxu0 %v2660
    %2730 = vmatprep.subr.mxu0 %v2665
    %2731 = vmatpush1.msra.mxu0 %v2664
    %2732 = vmatprep.subr.mxu0 %v2669
    %2733 = vmatpush1.msra.mxu0 %v2668
    %2734 = vmatprep.subr.mxu0 %v2673
    %2735 = vmatpush1.msra.mxu0 %v2672
    %2736 = vmatprep.subr.mxu0 %v2677
    %2737 = vmatpush1.msra.mxu0 %v2676
    %2738 = vmatprep.subr.mxu0 %v2681
    %2739 = vmatpush1.msra.mxu0 %v2680
    %2740 = vmatprep.subr.mxu0 %v2685
    %2741 = vmatpush1.msra.mxu0 %v2684
    %2742 = vmatprep.subr.mxu0 0.0
    %2743 = vmatpush1.msra.mxu0 0.0
    %2744 = vmatprep.subr.mxu0 0.0
    %2745 = vmatpush1.msra.mxu0 0.0
    %2746 = vmatprep.subr.mxu0 0.0
    %2747 = vmatpush1.msra.mxu0 0.0
    %2748 = vmatprep.subr.mxu0 0.0
    %2749 = vmatpush1.msra.mxu0 0.0
    %2750 = vmatprep.subr.mxu0 0.0
    %2751 = vmatpush1.msra.mxu0 0.0
    %2752 = vmatprep.subr.mxu0 0.0
    %2753 = vmatpush1.msra.mxu0 0.0
    %2754 = vmatprep.subr.mxu0 0.0
    %2755 = vmatpush1.msra.mxu0 0.0
    %2756 = vmatprep.subr.mxu0 0.0
    %2757 = vmatpush1.msra.mxu0 0.0
    %2758 = vmatprep.subr.mxu0 0.0
    %2759 = vmatpush1.msra.mxu0 0.0
    %2760 = vmatprep.subr.mxu0 0.0
    %2761 = vmatpush1.msra.mxu0 0.0
    %2762 = vmatprep.subr.mxu0 0.0
    %2763 = vmatpush1.msra.mxu0 0.0
    %2764 = vmatprep.subr.mxu0 0.0
    %2765 = vmatpush1.msra.mxu0 0.0
    %2766 = vmatprep.subr.mxu0 0.0
    %2767 = vmatpush1.msra.mxu0 0.0
    %2768 = vmatprep.subr.mxu0 0.0
    %2769 = vmatpush1.msra.mxu0 0.0
    %2770 = vmatprep.subr.mxu0 0.0
    %2771 = vmatpush1.msra.mxu0 0.0
    %2772 = vmatprep.subr.mxu0 0.0
    %2773 = vmatpush1.msra.mxu0 0.0
    %2774 = vmatprep.mubr.f32.mxu0 0.0
    %2775 = vmatmul.mubr.f32.gmra.mrb[0].mxu0 %v2615
    %v2776 = vpop.f32.mrb[0].mxu0
    %v2777 = vadd.f32 %v2693, %v2776
    %v2778 = vpop.f32.mrb[0].mxu0
    %v2779 = vadd.f32 %v2697, %v2778
    %2780 = vmatprep.mubr.f32.mxu0 0.0
    %2781 = vmatmul.mubr.f32.gmra.mrb[0].mxu0 %v2616
    %v2782 = vpop.f32.mrb[0].mxu0
    %v2783 = vadd.f32 %v2693, %v2782
    %v2784 = vpop.f32.mrb[0].mxu0
    %v2785 = vadd.f32 %v2697, %v2784
    %2786 = vmatprep.mubr.f32.mxu0 0.0
    %2787 = vmatmul.mubr.f32.gmra.mrb[0].mxu0 %v2617
    %v2788 = vpop.f32.mrb[0].mxu0
    %v2789 = vadd.f32 %v2693, %v2788
    %v2790 = vpop.f32.mrb[0].mxu0
    %v2791 = vadd.f32 %v2697, %v2790
    %2792 = vmatprep.mubr.f32.mxu0 0.0
    %2793 = vmatmul.mubr.f32.gmra.mrb[0].mxu0 %v2618
    %v2794 = vpop.f32.mrb[0].mxu0
    %v2795 = vadd.f32 %v2693, %v2794
    %v2796 = vpop.f32.mrb[0].mxu0
    %v2797 = vadd.f32 %v2697, %v2796
    %2798 = vmatprep.mubr.f32.mxu0 0.0
    %2799 = vmatmul.mubr.f32.gmra.mrb[0].mxu0 %v2619
    %v2800 = vpop.f32.mrb[0].mxu0
    %v2801 = vadd.f32 %v2693, %v2800
    %v2802 = vpop.f32.mrb[0].mxu0
    %v2803 = vadd.f32 %v2697, %v2802
    %2804 = vmatprep.mubr.f32.mxu0 0.0
    %2805 = vmatmul.mubr.f32.gmra.mrb[0].mxu0 %v2620
    %v2806 = vpop.f32.mrb[0].mxu0
    %v2807 = vadd.f32 %v2693, %v2806
    %v2808 = vpop.f32.mrb[0].mxu0
    %v2809 = vadd.f32 %v2697, %v2808
    %2810 = vmatprep.mubr.f32.mxu0 0.0
    %2811 = vmatmul.mubr.f32.gmra.mrb[0].mxu0 %v2621
    %v2812 = vpop.f32.mrb[0].mxu0
    %v2813 = vadd.f32 %v2693, %v2812
    %v2814 = vpop.f32.mrb[0].mxu0
    %v2815 = vadd.f32 %v2697, %v2814
    %2816 = vmatprep.mubr.f32.mxu0 0.0
    %2817 = vmatmul.mubr.f32.gmra.mrb[0].mxu0 %v2622
    %v2818 = vpop.f32.mrb[0].mxu0
    %v2819 = vadd.f32 %v2693, %v2818
    %v2820 = vpop.f32.mrb[0].mxu0
    %v2821 = vadd.f32 %v2697, %v2820
    %2822 = vmatprep.mubr.f32.mxu0 0.0
    %2823 = vmatmul.mubr.f32.gmra.mrb[0].mxu0 %v2623
    %v2824 = vpop.f32.mrb[0].mxu0
    %v2825 = vadd.f32 %v2693, %v2824
    %v2826 = vpop.f32.mrb[0].mxu0
    %v2827 = vadd.f32 %v2697, %v2826
    %2828 = vdwg.mxu0
    %2829 = vmatprep.subr.mxu0 %v2627
    %2830 = vmatpush1.msra.mxu0 %v2626
    %2831 = vmatprep.subr.mxu0 %v2631
    %2832 = vmatpush1.msra.mxu0 %v2630
    %2833 = vmatprep.subr.mxu0 %v2635
    %2834 = vmatpush1.msra.mxu0 %v2634
    %2835 = vmatprep.subr.mxu0 %v2639
    %2836 = vmatpush1.msra.mxu0 %v2638
    %2837 = vmatprep.subr.mxu0 %v2643
    %2838 = vmatpush1.msra.mxu0 %v2642
    %2839 = vmatprep.subr.mxu0 %v2647
    %2840 = vmatpush1.msra.mxu0 %v2646
    %2841 = vmatprep.subr.mxu0 %v2651
    %2842 = vmatpush1.msra.mxu0 %v2650
    %2843 = vmatprep.subr.mxu0 %v2655
    %2844 = vmatpush1.msra.mxu0 %v2654
    %2845 = vmatprep.subr.mxu0 %v2659
    %2846 = vmatpush1.msra.mxu0 %v2658
    %2847 = vmatprep.subr.mxu0 %v2663
    %2848 = vmatpush1.msra.mxu0 %v2662
    %2849 = vmatprep.subr.mxu0 %v2667
    %2850 = vmatpush1.msra.mxu0 %v2666
    %2851 = vmatprep.subr.mxu0 %v2671
    %2852 = vmatpush1.msra.mxu0 %v2670
    %2853 = vmatprep.subr.mxu0 %v2675
    %2854 = vmatpush1.msra.mxu0 %v2674
    %2855 = vmatprep.subr.mxu0 %v2679
    %2856 = vmatpush1.msra.mxu0 %v2678
    %2857 = vmatprep.subr.mxu0 %v2683
    %2858 = vmatpush1.msra.mxu0 %v2682
    %2859 = vmatprep.subr.mxu0 %v2687
    %2860 = vmatpush1.msra.mxu0 %v2686
    %2861 = vmatprep.subr.mxu0 0.0
    %2862 = vmatpush1.msra.mxu0 0.0
    %2863 = vmatprep.subr.mxu0 0.0
    %2864 = vmatpush1.msra.mxu0 0.0
    %2865 = vmatprep.subr.mxu0 0.0
    %2866 = vmatpush1.msra.mxu0 0.0
    %2867 = vmatprep.subr.mxu0 0.0
    %2868 = vmatpush1.msra.mxu0 0.0
    %2869 = vmatprep.subr.mxu0 0.0
    %2870 = vmatpush1.msra.mxu0 0.0
    %2871 = vmatprep.subr.mxu0 0.0
    %2872 = vmatpush1.msra.mxu0 0.0
    %2873 = vmatprep.subr.mxu0 0.0
    %2874 = vmatpush1.msra.mxu0 0.0
    %2875 = vmatprep.subr.mxu0 0.0
    %2876 = vmatpush1.msra.mxu0 0.0
    %2877 = vmatprep.subr.mxu0 0.0
    %2878 = vmatpush1.msra.mxu0 0.0
    %2879 = vmatprep.subr.mxu0 0.0
    %2880 = vmatpush1.msra.mxu0 0.0
    %2881 = vmatprep.subr.mxu0 0.0
    %2882 = vmatpush1.msra.mxu0 0.0
    %2883 = vmatprep.subr.mxu0 0.0
    %2884 = vmatpush1.msra.mxu0 0.0
    %2885 = vmatprep.subr.mxu0 0.0
    %2886 = vmatpush1.msra.mxu0 0.0
    %2887 = vmatprep.subr.mxu0 0.0
    %2888 = vmatpush1.msra.mxu0 0.0
    %2889 = vmatprep.subr.mxu0 0.0
    %2890 = vmatpush1.msra.mxu0 0.0
    %2891 = vmatprep.subr.mxu0 0.0
    %2892 = vmatpush1.msra.mxu0 0.0
    %2893 = vmatprep.mubr.f32.mxu0 0.0
    %2894 = vmatmul.mubr.f32.gmra.mrb[0].mxu0 %v2615
    %v2895 = vpop.f32.mrb[0].mxu0
    %v2896 = vadd.f32 %v2701, %v2895
    %v2897 = vpop.f32.mrb[0].mxu0
    %v2898 = vadd.f32 %v2705, %v2897
    %2899 = vmatprep.mubr.f32.mxu0 0.0
    %2900 = vmatmul.mubr.f32.gmra.mrb[0].mxu0 %v2616
    %v2901 = vpop.f32.mrb[0].mxu0
    %v2902 = vadd.f32 %v2701, %v2901
    %v2903 = vpop.f32.mrb[0].mxu0
    %v2904 = vadd.f32 %v2705, %v2903
    %2905 = vmatprep.mubr.f32.mxu0 0.0
    %2906 = vmatmul.mubr.f32.gmra.mrb[0].mxu0 %v2617
    %v2907 = vpop.f32.mrb[0].mxu0
    %v2908 = vadd.f32 %v2701, %v2907
    %v2909 = vpop.f32.mrb[0].mxu0
    %v2910 = vadd.f32 %v2705, %v2909
    %2911 = vmatprep.mubr.f32.mxu0 0.0
    %2912 = vmatmul.mubr.f32.gmra.mrb[0].mxu0 %v2618
    %v2913 = vpop.f32.mrb[0].mxu0
    %v2914 = vadd.f32 %v2701, %v2913
    %v2915 = vpop.f32.mrb[0].mxu0
    %v2916 = vadd.f32 %v2705, %v2915
    %2917 = vmatprep.mubr.f32.mxu0 0.0
    %2918 = vmatmul.mubr.f32.gmra.mrb[0].mxu0 %v2619
    %v2919 = vpop.f32.mrb[0].mxu0
    %v2920 = vadd.f32 %v2701, %v2919
    %v2921 = vpop.f32.mrb[0].mxu0
    %v2922 = vadd.f32 %v2705, %v2921
    %2923 = vmatprep.mubr.f32.mxu0 0.0
    %2924 = vmatmul.mubr.f32.gmra.mrb[0].mxu0 %v2620
    %v2925 = vpop.f32.mrb[0].mxu0
    %v2926 = vadd.f32 %v2701, %v2925
    %v2927 = vpop.f32.mrb[0].mxu0
    %v2928 = vadd.f32 %v2705, %v2927
    %2929 = vmatprep.mubr.f32.mxu0 0.0
    %2930 = vmatmul.mubr.f32.gmra.mrb[0].mxu0 %v2621
    %v2931 = vpop.f32.mrb[0].mxu0
    %v2932 = vadd.f32 %v2701, %v2931
    %v2933 = vpop.f32.mrb[0].mxu0
    %v2934 = vadd.f32 %v2705, %v2933
    %2935 = vmatprep.mubr.f32.mxu0 0.0
    %2936 = vmatmul.mubr.f32.gmra.mrb[0].mxu0 %v2622
    %v2937 = vpop.f32.mrb[0].mxu0
    %v2938 = vadd.f32 %v2701, %v2937
    %v2939 = vpop.f32.mrb[0].mxu0
    %v2940 = vadd.f32 %v2705, %v2939
    %2941 = vmatprep.mubr.f32.mxu0 0.0
    %2942 = vmatmul.mubr.f32.gmra.mrb[0].mxu0 %v2623
    %v2943 = vpop.f32.mrb[0].mxu0
    %v2944 = vadd.f32 %v2701, %v2943
    %v2945 = vpop.f32.mrb[0].mxu0
    %v2946 = vadd.f32 %v2705, %v2945
    %2947 = vdwg.mxu0
    %2948 = vst [vmem:[#allocation3] sm:$0xff] %v2777
    %2949 = vst [vmem:[#allocation3 + $0x8] sm:$0xff] %v2779
    %2950 = vst [vmem:[#allocation3 + $0x10] sm:$0xff] %v2896
    %2951 = vst [vmem:[#allocation3 + $0x18] sm:$0xff] %v2898
    %2952 = vst [vmem:[#allocation3 + $0x20] sm:$0xff] %v2783
    %2953 = vst [vmem:[#allocation3 + $0x28] sm:$0xff] %v2785
    %2954 = vst [vmem:[#allocation3 + $0x30] sm:$0xff] %v2902
    %2955 = vst [vmem:[#allocation3 + $0x38] sm:$0xff] %v2904
    %2956 = vst [vmem:[#allocation3 + $0x40] sm:$0xff] %v2789
    %2957 = vst [vmem:[#allocation3 + $0x48] sm:$0xff] %v2791
    %2958 = vst [vmem:[#allocation3 + $0x50] sm:$0xff] %v2908
    %2959 = vst [vmem:[#allocation3 + $0x58] sm:$0xff] %v2910
    %2960 = vst [vmem:[#allocation3 + $0x60] sm:$0xff] %v2795
    %2961 = vst [vmem:[#allocation3 + $0x68] sm:$0xff] %v2797
    %2962 = vst [vmem:[#allocation3 + $0x70] sm:$0xff] %v2914
    %2963 = vst [vmem:[#allocation3 + $0x78] sm:$0xff] %v2916
    %2964 = vst [vmem:[#allocation3 + $0x80] sm:$0xff] %v2801
    %2965 = vst [vmem:[#allocation3 + $0x88] sm:$0xff] %v2803
    %2966 = vst [vmem:[#allocation3 + $0x90] sm:$0xff] %v2920
    %2967 = vst [vmem:[#allocation3 + $0x98] sm:$0xff] %v2922
    %2968 = vst [vmem:[#allocation3 + $0xa0] sm:$0xff] %v2807
    %2969 = vst [vmem:[#allocation3 + $0xa8] sm:$0xff] %v2809
    %2970 = vst [vmem:[#allocation3 + $0xb0] sm:$0xff] %v2926
    %2971 = vst [vmem:[#allocation3 + $0xb8] sm:$0xff] %v2928
    %2972 = vst [vmem:[#allocation3 + $0xc0] sm:$0xff] %v2813
    %2973 = vst [vmem:[#allocation3 + $0xc8] sm:$0xff] %v2815
    %2974 = vst [vmem:[#allocation3 + $0xd0] sm:$0xff] %v2932
    %2975 = vst [vmem:[#allocation3 + $0xd8] sm:$0xff] %v2934
    %2976 = vst [vmem:[#allocation3 + $0xe0] sm:$0xff] %v2819
    %2977 = vst [vmem:[#allocation3 + $0xe8] sm:$0xff] %v2821
    %2978 = vst [vmem:[#allocation3 + $0xf0] sm:$0xff] %v2938
    %2979 = vst [vmem:[#allocation3 + $0xf8] sm:$0xff] %v2940
    %2980 = vst [vmem:[#allocation3 + $0x100] sm:$0xff] %v2825
    %2981 = vst [vmem:[#allocation3 + $0x108] sm:$0xff] %v2827
    %2982 = vst [vmem:[#allocation3 + $0x110] sm:$0xff] %v2944
    %2983 = vst [vmem:[#allocation3 + $0x118] sm:$0xff] %v2946
    %v2984 = vld [vmem:[#allocation3] sm:$0xff]
    %v2985 = vld [vmem:[#allocation3 + $0x8] sm:$0xff]
    %v2986 = vld [vmem:[#allocation3 + $0x10] sm:$0xff]
    %v2987 = vld [vmem:[#allocation3 + $0x18] sm:$0xff]
    %v2988 = vld [vmem:[#allocation12] sm:$0xff]
    %v2989 = vld [vmem:[#allocation12 + $0x8] sm:$0xff]
    %v2990 = vld [vmem:[#allocation12 + $0x10] sm:$0xff]
    %v2991 = vld [vmem:[#allocation12 + $0x18] sm:$0xff]
    %v2992 = vld [vmem:[#allocation12 + $0x20] sm:$0xff]
    %v2993 = vld [vmem:[#allocation12 + $0x28] sm:$0xff]
    %v2994 = vld [vmem:[#allocation12 + $0x30] sm:$0xff]
    %v2995 = vld [vmem:[#allocation12 + $0x38] sm:$0xff]
    %v2996 = vld [vmem:[#allocation12 + $0x40] sm:$0xff]
    %v2997 = vld [vmem:[#allocation12 + $0x48] sm:$0xff]
    %v2998 = vld [vmem:[#allocation12 + $0x50] sm:$0xff]
    %v2999 = vld [vmem:[#allocation12 + $0x58] sm:$0xff]
    %v3000 = vld [vmem:[#allocation12 + $0x60] sm:$0xff]
    %v3001 = vld [vmem:[#allocation12 + $0x68] sm:$0xff]
    %v3002 = vld [vmem:[#allocation12 + $0x70] sm:$0xff]
    %v3003 = vld [vmem:[#allocation12 + $0x78] sm:$0xff]
    %v3004 = vld [vmem:[#allocation12 + $0x80] sm:$0xff]
    %v3005 = vld [vmem:[#allocation12 + $0x88] sm:$0xff]
    %v3006 = vld [vmem:[#allocation12 + $0x90] sm:$0xff]
    %v3007 = vld [vmem:[#allocation12 + $0x98] sm:$0xff]
    %v3008 = vld [vmem:[#allocation12 + $0xa0] sm:$0xff]
    %v3009 = vld [vmem:[#allocation12 + $0xa8] sm:$0xff]
    %v3010 = vld [vmem:[#allocation12 + $0xb0] sm:$0xff]
    %v3011 = vld [vmem:[#allocation12 + $0xb8] sm:$0xff]
    %v3012 = vld [vmem:[#allocation12 + $0xc0] sm:$0xff]
    %v3013 = vld [vmem:[#allocation12 + $0xc8] sm:$0xff]
    %v3014 = vld [vmem:[#allocation12 + $0xd0] sm:$0xff]
    %v3015 = vld [vmem:[#allocation12 + $0xd8] sm:$0xff]
    %v3016 = vld [vmem:[#allocation12 + $0xe0] sm:$0xff]
    %v3017 = vld [vmem:[#allocation12 + $0xe8] sm:$0xff]
    %v3018 = vld [vmem:[#allocation12 + $0xf0] sm:$0xff]
    %v3019 = vld [vmem:[#allocation12 + $0xf8] sm:$0xff]
    %v3020 = vld [vmem:[#allocation12 + $0x100] sm:$0xff]
    %v3021 = vld [vmem:[#allocation12 + $0x108] sm:$0xff]
    %v3022 = vld [vmem:[#allocation12 + $0x110] sm:$0xff]
    %v3023 = vld [vmem:[#allocation12 + $0x118] sm:$0xff]
    %v3024 = vld [vmem:[#allocation12 + $0x120] sm:$0xff]
    %v3025 = vld [vmem:[#allocation12 + $0x128] sm:$0xff]
    %v3026 = vld [vmem:[#allocation12 + $0x130] sm:$0xff]
    %v3027 = vld [vmem:[#allocation12 + $0x138] sm:$0xff]
    %v3028 = vld [vmem:[#allocation12 + $0x140] sm:$0xff]
    %v3029 = vld [vmem:[#allocation12 + $0x148] sm:$0xff]
    %v3030 = vld [vmem:[#allocation12 + $0x150] sm:$0xff]
    %v3031 = vld [vmem:[#allocation12 + $0x158] sm:$0xff]
    %v3032 = vld [vmem:[#allocation12 + $0x160] sm:$0xff]
    %v3033 = vld [vmem:[#allocation12 + $0x168] sm:$0xff]
    %v3034 = vld [vmem:[#allocation12 + $0x170] sm:$0xff]
    %v3035 = vld [vmem:[#allocation12 + $0x178] sm:$0xff]
    %v3036 = vld [vmem:[#allocation12 + $0x180] sm:$0xff]
    %v3037 = vld [vmem:[#allocation12 + $0x188] sm:$0xff]
    %v3038 = vld [vmem:[#allocation12 + $0x190] sm:$0xff]
    %v3039 = vld [vmem:[#allocation12 + $0x198] sm:$0xff]
    %v3040 = vld [vmem:[#allocation12 + $0x1a0] sm:$0xff]
    %v3041 = vld [vmem:[#allocation12 + $0x1a8] sm:$0xff]
    %v3042 = vld [vmem:[#allocation12 + $0x1b0] sm:$0xff]
    %v3043 = vld [vmem:[#allocation12 + $0x1b8] sm:$0xff]
    %v3044 = vld [vmem:[#allocation12 + $0x1c0] sm:$0xff]
    %v3045 = vld [vmem:[#allocation12 + $0x1c8] sm:$0xff]
    %v3046 = vld [vmem:[#allocation12 + $0x1d0] sm:$0xff]
    %v3047 = vld [vmem:[#allocation12 + $0x1d8] sm:$0xff]
    %v3048 = vld [vmem:[#allocation12 + $0x1e0] sm:$0xff]
    %v3049 = vld [vmem:[#allocation12 + $0x1e8] sm:$0xff]
    %v3050 = vld [vmem:[#allocation12 + $0x1f0] sm:$0xff]
    %v3051 = vld [vmem:[#allocation12 + $0x1f8] sm:$0xff]
    %3052 = vmatprep.subr.mxu0 %v2989
    %3053 = vmatpush1.msra.mxu0 %v2988
    %3054 = vmatprep.subr.mxu0 %v2993
    %3055 = vmatpush1.msra.mxu0 %v2992
    %3056 = vmatprep.subr.mxu0 %v2997
    %3057 = vmatpush1.msra.mxu0 %v2996
    %3058 = vmatprep.subr.mxu0 %v3001
    %3059 = vmatpush1.msra.mxu0 %v3000
    %3060 = vmatprep.subr.mxu0 %v3005
    %3061 = vmatpush1.msra.mxu0 %v3004
    %3062 = vmatprep.subr.mxu0 %v3009
    %3063 = vmatpush1.msra.mxu0 %v3008
    %3064 = vmatprep.subr.mxu0 %v3013
    %3065 = vmatpush1.msra.mxu0 %v3012
    %3066 = vmatprep.subr.mxu0 %v3017
    %3067 = vmatpush1.msra.mxu0 %v3016
    %3068 = vmatprep.subr.mxu0 %v3021
    %3069 = vmatpush1.msra.mxu0 %v3020
    %3070 = vmatprep.subr.mxu0 %v3025
    %3071 = vmatpush1.msra.mxu0 %v3024
    %3072 = vmatprep.subr.mxu0 %v3029
    %3073 = vmatpush1.msra.mxu0 %v3028
    %3074 = vmatprep.subr.mxu0 %v3033
    %3075 = vmatpush1.msra.mxu0 %v3032
    %3076 = vmatprep.subr.mxu0 %v3037
    %3077 = vmatpush1.msra.mxu0 %v3036
    %3078 = vmatprep.subr.mxu0 %v3041
    %3079 = vmatpush1.msra.mxu0 %v3040
    %3080 = vmatprep.subr.mxu0 %v3045
    %3081 = vmatpush1.msra.mxu0 %v3044
    %3082 = vmatprep.subr.mxu0 %v3049
    %3083 = vmatpush1.msra.mxu0 %v3048
    %3084 = vmatprep.subr.mxu0 0.0
    %3085 = vmatpush1.msra.mxu0 0.0
    %3086 = vmatprep.subr.mxu0 0.0
    %3087 = vmatpush1.msra.mxu0 0.0
    %3088 = vmatprep.subr.mxu0 0.0
    %3089 = vmatpush1.msra.mxu0 0.0
    %3090 = vmatprep.subr.mxu0 0.0
    %3091 = vmatpush1.msra.mxu0 0.0
    %3092 = vmatprep.subr.mxu0 0.0
    %3093 = vmatpush1.msra.mxu0 0.0
    %3094 = vmatprep.subr.mxu0 0.0
    %3095 = vmatpush1.msra.mxu0 0.0
    %3096 = vmatprep.subr.mxu0 0.0
    %3097 = vmatpush1.msra.mxu0 0.0
    %3098 = vmatprep.subr.mxu0 0.0
    %3099 = vmatpush1.msra.mxu0 0.0
    %3100 = vmatprep.subr.mxu0 0.0
    %3101 = vmatpush1.msra.mxu0 0.0
    %3102 = vmatprep.subr.mxu0 0.0
    %3103 = vmatpush1.msra.mxu0 0.0
    %3104 = vmatprep.subr.mxu0 0.0
    %3105 = vmatpush1.msra.mxu0 0.0
    %3106 = vmatprep.subr.mxu0 0.0
    %3107 = vmatpush1.msra.mxu0 0.0
    %3108 = vmatprep.subr.mxu0 0.0
    %3109 = vmatpush1.msra.mxu0 0.0
    %3110 = vmatprep.subr.mxu0 0.0
    %3111 = vmatpush1.msra.mxu0 0.0
    %3112 = vmatprep.subr.mxu0 0.0
    %3113 = vmatpush1.msra.mxu0 0.0
    %3114 = vmatprep.subr.mxu0 0.0
    %3115 = vmatpush1.msra.mxu0 0.0
    %3116 = vmatprep.mubr.f32.mxu0 0.0
    %3117 = vmatmul.mubr.f32.gmra.mrb[0].mxu0 0.0
    %v3118 = vpop.f32.mrb[0].mxu0
    %v3119 = vadd.f32 0.0, %v3118
    %v3120 = vpop.f32.mrb[0].mxu0
    %v3121 = vadd.f32 0.0, %v3120
    %3122 = vdwg.mxu0
    %3123 = vmatprep.subr.mxu0 %v2991
    %3124 = vmatpush1.msra.mxu0 %v2990
    %3125 = vmatprep.subr.mxu0 %v2995
    %3126 = vmatpush1.msra.mxu0 %v2994
    %3127 = vmatprep.subr.mxu0 %v2999
    %3128 = vmatpush1.msra.mxu0 %v2998
    %3129 = vmatprep.subr.mxu0 %v3003
    %3130 = vmatpush1.msra.mxu0 %v3002
    %3131 = vmatprep.subr.mxu0 %v3007
    %3132 = vmatpush1.msra.mxu0 %v3006
    %3133 = vmatprep.subr.mxu0 %v3011
    %3134 = vmatpush1.msra.mxu0 %v3010
    %3135 = vmatprep.subr.mxu0 %v3015
    %3136 = vmatpush1.msra.mxu0 %v3014
    %3137 = vmatprep.subr.mxu0 %v3019
    %3138 = vmatpush1.msra.mxu0 %v3018
    %3139 = vmatprep.subr.mxu0 %v3023
    %3140 = vmatpush1.msra.mxu0 %v3022
    %3141 = vmatprep.subr.mxu0 %v3027
    %3142 = vmatpush1.msra.mxu0 %v3026
    %3143 = vmatprep.subr.mxu0 %v3031
    %3144 = vmatpush1.msra.mxu0 %v3030
    %3145 = vmatprep.subr.mxu0 %v3035
    %3146 = vmatpush1.msra.mxu0 %v3034
    %3147 = vmatprep.subr.mxu0 %v3039
    %3148 = vmatpush1.msra.mxu0 %v3038
    %3149 = vmatprep.subr.mxu0 %v3043
    %3150 = vmatpush1.msra.mxu0 %v3042
    %3151 = vmatprep.subr.mxu0 %v3047
    %3152 = vmatpush1.msra.mxu0 %v3046
    %3153 = vmatprep.subr.mxu0 %v3051
    %3154 = vmatpush1.msra.mxu0 %v3050
    %3155 = vmatprep.subr.mxu0 0.0
    %3156 = vmatpush1.msra.mxu0 0.0
    %3157 = vmatprep.subr.mxu0 0.0
    %3158 = vmatpush1.msra.mxu0 0.0
    %3159 = vmatprep.subr.mxu0 0.0
    %3160 = vmatpush1.msra.mxu0 0.0
    %3161 = vmatprep.subr.mxu0 0.0
    %3162 = vmatpush1.msra.mxu0 0.0
    %3163 = vmatprep.subr.mxu0 0.0
    %3164 = vmatpush1.msra.mxu0 0.0
    %3165 = vmatprep.subr.mxu0 0.0
    %3166 = vmatpush1.msra.mxu0 0.0
    %3167 = vmatprep.subr.mxu0 0.0
    %3168 = vmatpush1.msra.mxu0 0.0
    %3169 = vmatprep.subr.mxu0 0.0
    %3170 = vmatpush1.msra.mxu0 0.0
    %3171 = vmatprep.subr.mxu0 0.0
    %3172 = vmatpush1.msra.mxu0 0.0
    %3173 = vmatprep.subr.mxu0 0.0
    %3174 = vmatpush1.msra.mxu0 0.0
    %3175 = vmatprep.subr.mxu0 0.0
    %3176 = vmatpush1.msra.mxu0 0.0
    %3177 = vmatprep.subr.mxu0 0.0
    %3178 = vmatpush1.msra.mxu0 0.0
    %3179 = vmatprep.subr.mxu0 0.0
    %3180 = vmatpush1.msra.mxu0 0.0
    %3181 = vmatprep.subr.mxu0 0.0
    %3182 = vmatpush1.msra.mxu0 0.0
    %3183 = vmatprep.subr.mxu0 0.0
    %3184 = vmatpush1.msra.mxu0 0.0
    %3185 = vmatprep.subr.mxu0 0.0
    %3186 = vmatpush1.msra.mxu0 0.0
    %3187 = vmatprep.mubr.f32.mxu0 0.0
    %3188 = vmatmul.mubr.f32.gmra.mrb[0].mxu0 0.0
    %v3189 = vpop.f32.mrb[0].mxu0
    %v3190 = vadd.f32 0.0, %v3189
    %v3191 = vpop.f32.mrb[0].mxu0
    %v3192 = vadd.f32 0.0, %v3191
    %3193 = vdwg.mxu0
    %v3194 = vadd.f32 %v2984, %v3119
    %v3195 = vadd.f32 %v2985, %v3121
    %v3196 = vadd.f32 %v2986, %v3190
    %v3197 = vadd.f32 %v2987, %v3192
    %v3198 = vxor.u32 %v3194, 2147483648
    %v3199 = vmul.f32 %v3198, 1.442695
    %v3200 = vpow.pop %v3199
    %v3201 = vadd.f32 %v3200, 1.0
    %v3202 = vrcp.pop %v3201
    %v3203 = vmul.f32 1.0, %v3202
    %v3204 = vxor.u32 %v3195, 2147483648
    %v3205 = vmul.f32 %v3204, 1.442695
    %v3206 = vpow.pop %v3205
    %v3207 = vadd.f32 %v3206, 1.0
    %v3208 = vrcp.pop %v3207
    %v3209 = vmul.f32 1.0, %v3208
    %v3210 = vtanh.pop %v3196
    %v3211 = vxor.u32 %v3197, 2147483648
    %v3212 = vmul.f32 %v3211, 1.442695
    %v3213 = vpow.pop %v3212
    %v3214 = vadd.f32 %v3213, 1.0
    %v3215 = vrcp.pop %v3214
    %v3216 = vmul.f32 1.0, %v3215
    %v3217 = vmul.f32 %v3209, 0.0
    %v3218 = vmul.f32 %v3203, %v3210
    %v3219 = vadd.f32 %v3217, %v3218
    %v3220 = vtanh.pop %v3219
    %v3221 = vmul.f32 %v3216, %v3220
    %3222 = vst [vmem:[#allocation2] sm:$0xff] %v3221
    %v3223 = vld [vmem:[#allocation3 + $0x20] sm:$0xff]
    %v3224 = vld [vmem:[#allocation3 + $0x28] sm:$0xff]
    %v3225 = vld [vmem:[#allocation3 + $0x30] sm:$0xff]
    %v3226 = vld [vmem:[#allocation3 + $0x38] sm:$0xff]
    %v3227 = vld [vmem:[#allocation12] sm:$0xff]
    %v3228 = vld [vmem:[#allocation12 + $0x8] sm:$0xff]
    %v3229 = vld [vmem:[#allocation12 + $0x10] sm:$0xff]
    %v3230 = vld [vmem:[#allocation12 + $0x18] sm:$0xff]
    %v3231 = vld [vmem:[#allocation12 + $0x20] sm:$0xff]
    %v3232 = vld [vmem:[#allocation12 + $0x28] sm:$0xff]
    %v3233 = vld [vmem:[#allocation12 + $0x30] sm:$0xff]
    %v3234 = vld [vmem:[#allocation12 + $0x38] sm:$0xff]
    %v3235 = vld [vmem:[#allocation12 + $0x40] sm:$0xff]
    %v3236 = vld [vmem:[#allocation12 + $0x48] sm:$0xff]
    %v3237 = vld [vmem:[#allocation12 + $0x50] sm:$0xff]
    %v3238 = vld [vmem:[#allocation12 + $0x58] sm:$0xff]
    %v3239 = vld [vmem:[#allocation12 + $0x60] sm:$0xff]
    %v3240 = vld [vmem:[#allocation12 + $0x68] sm:$0xff]
    %v3241 = vld [vmem:[#allocation12 + $0x70] sm:$0xff]
    %v3242 = vld [vmem:[#allocation12 + $0x78] sm:$0xff]
    %v3243 = vld [vmem:[#allocation12 + $0x80] sm:$0xff]
    %v3244 = vld [vmem:[#allocation12 + $0x88] sm:$0xff]
    %v3245 = vld [vmem:[#allocation12 + $0x90] sm:$0xff]
    %v3246 = vld [vmem:[#allocation12 + $0x98] sm:$0xff]
    %v3247 = vld [vmem:[#allocation12 + $0xa0] sm:$0xff]
    %v3248 = vld [vmem:[#allocation12 + $0xa8] sm:$0xff]
    %v3249 = vld [vmem:[#allocation12 + $0xb0] sm:$0xff]
    %v3250 = vld [vmem:[#allocation12 + $0xb8] sm:$0xff]
    %v3251 = vld [vmem:[#allocation12 + $0xc0] sm:$0xff]
    %v3252 = vld [vmem:[#allocation12 + $0xc8] sm:$0xff]
    %v3253 = vld [vmem:[#allocation12 + $0xd0] sm:$0xff]
    %v3254 = vld [vmem:[#allocation12 + $0xd8] sm:$0xff]
    %v3255 = vld [vmem:[#allocation12 + $0xe0] sm:$0xff]
    %v3256 = vld [vmem:[#allocation12 + $0xe8] sm:$0xff]
    %v3257 = vld [vmem:[#allocation12 + $0xf0] sm:$0xff]
    %v3258 = vld [vmem:[#allocation12 + $0xf8] sm:$0xff]
    %v3259 = vld [vmem:[#allocation12 + $0x100] sm:$0xff]
    %v3260 = vld [vmem:[#allocation12 + $0x108] sm:$0xff]
    %v3261 = vld [vmem:[#allocation12 + $0x110] sm:$0xff]
    %v3262 = vld [vmem:[#allocation12 + $0x118] sm:$0xff]
    %v3263 = vld [vmem:[#allocation12 + $0x120] sm:$0xff]
    %v3264 = vld [vmem:[#allocation12 + $0x128] sm:$0xff]
    %v3265 = vld [vmem:[#allocation12 + $0x130] sm:$0xff]
    %v3266 = vld [vmem:[#allocation12 + $0x138] sm:$0xff]
    %v3267 = vld [vmem:[#allocation12 + $0x140] sm:$0xff]
    %v3268 = vld [vmem:[#allocation12 + $0x148] sm:$0xff]
    %v3269 = vld [vmem:[#allocation12 + $0x150] sm:$0xff]
    %v3270 = vld [vmem:[#allocation12 + $0x158] sm:$0xff]
    %v3271 = vld [vmem:[#allocation12 + $0x160] sm:$0xff]
    %v3272 = vld [vmem:[#allocation12 + $0x168] sm:$0xff]
    %v3273 = vld [vmem:[#allocation12 + $0x170] sm:$0xff]
    %v3274 = vld [vmem:[#allocation12 + $0x178] sm:$0xff]
    %v3275 = vld [vmem:[#allocation12 + $0x180] sm:$0xff]
    %v3276 = vld [vmem:[#allocation12 + $0x188] sm:$0xff]
    %v3277 = vld [vmem:[#allocation12 + $0x190] sm:$0xff]
    %v3278 = vld [vmem:[#allocation12 + $0x198] sm:$0xff]
    %v3279 = vld [vmem:[#allocation12 + $0x1a0] sm:$0xff]
    %v3280 = vld [vmem:[#allocation12 + $0x1a8] sm:$0xff]
    %v3281 = vld [vmem:[#allocation12 + $0x1b0] sm:$0xff]
    %v3282 = vld [vmem:[#allocation12 + $0x1b8] sm:$0xff]
    %v3283 = vld [vmem:[#allocation12 + $0x1c0] sm:$0xff]
    %v3284 = vld [vmem:[#allocation12 + $0x1c8] sm:$0xff]
    %v3285 = vld [vmem:[#allocation12 + $0x1d0] sm:$0xff]
    %v3286 = vld [vmem:[#allocation12 + $0x1d8] sm:$0xff]
    %v3287 = vld [vmem:[#allocation12 + $0x1e0] sm:$0xff]
    %v3288 = vld [vmem:[#allocation12 + $0x1e8] sm:$0xff]
    %v3289 = vld [vmem:[#allocation12 + $0x1f0] sm:$0xff]
    %v3290 = vld [vmem:[#allocation12 + $0x1f8] sm:$0xff]
    %3291 = vmatprep.subr.mxu0 %v3228
    %3292 = vmatpush1.msra.mxu0 %v3227
    %3293 = vmatprep.subr.mxu0 %v3232
    %3294 = vmatpush1.msra.mxu0 %v3231
    %3295 = vmatprep.subr.mxu0 %v3236
    %3296 = vmatpush1.msra.mxu0 %v3235
    %3297 = vmatprep.subr.mxu0 %v3240
    %3298 = vmatpush1.msra.mxu0 %v3239
    %3299 = vmatprep.subr.mxu0 %v3244
    %3300 = vmatpush1.msra.mxu0 %v3243
    %3301 = vmatprep.subr.mxu0 %v3248
    %3302 = vmatpush1.msra.mxu0 %v3247
    %3303 = vmatprep.subr.mxu0 %v3252
    %3304 = vmatpush1.msra.mxu0 %v3251
    %3305 = vmatprep.subr.mxu0 %v3256
    %3306 = vmatpush1.msra.mxu0 %v3255
    %3307 = vmatprep.subr.mxu0 %v3260
    %3308 = vmatpush1.msra.mxu0 %v3259
    %3309 = vmatprep.subr.mxu0 %v3264
    %3310 = vmatpush1.msra.mxu0 %v3263
    %3311 = vmatprep.subr.mxu0 %v3268
    %3312 = vmatpush1.msra.mxu0 %v3267
    %3313 = vmatprep.subr.mxu0 %v3272
    %3314 = vmatpush1.msra.mxu0 %v3271
    %3315 = vmatprep.subr.mxu0 %v3276
    %3316 = vmatpush1.msra.mxu0 %v3275
    %3317 = vmatprep.subr.mxu0 %v3280
    %3318 = vmatpush1.msra.mxu0 %v3279
    %3319 = vmatprep.subr.mxu0 %v3284
    %3320 = vmatpush1.msra.mxu0 %v3283
    %3321 = vmatprep.subr.mxu0 %v3288
    %3322 = vmatpush1.msra.mxu0 %v3287
    %3323 = vmatprep.subr.mxu0 0.0
    %3324 = vmatpush1.msra.mxu0 0.0
    %3325 = vmatprep.subr.mxu0 0.0
    %3326 = vmatpush1.msra.mxu0 0.0
    %3327 = vmatprep.subr.mxu0 0.0
    %3328 = vmatpush1.msra.mxu0 0.0
    %3329 = vmatprep.subr.mxu0 0.0
    %3330 = vmatpush1.msra.mxu0 0.0
    %3331 = vmatprep.subr.mxu0 0.0
    %3332 = vmatpush1.msra.mxu0 0.0
    %3333 = vmatprep.subr.mxu0 0.0
    %3334 = vmatpush1.msra.mxu0 0.0
    %3335 = vmatprep.subr.mxu0 0.0
    %3336 = vmatpush1.msra.mxu0 0.0
    %3337 = vmatprep.subr.mxu0 0.0
    %3338 = vmatpush1.msra.mxu0 0.0
    %3339 = vmatprep.subr.mxu0 0.0
    %3340 = vmatpush1.msra.mxu0 0.0
    %3341 = vmatprep.subr.mxu0 0.0
    %3342 = vmatpush1.msra.mxu0 0.0
    %3343 = vmatprep.subr.mxu0 0.0
    %3344 = vmatpush1.msra.mxu0 0.0
    %3345 = vmatprep.subr.mxu0 0.0
    %3346 = vmatpush1.msra.mxu0 0.0
    %3347 = vmatprep.subr.mxu0 0.0
    %3348 = vmatpush1.msra.mxu0 0.0
    %3349 = vmatprep.subr.mxu0 0.0
    %3350 = vmatpush1.msra.mxu0 0.0
    %3351 = vmatprep.subr.mxu0 0.0
    %3352 = vmatpush1.msra.mxu0 0.0
    %3353 = vmatprep.subr.mxu0 0.0
    %3354 = vmatpush1.msra.mxu0 0.0
    %3355 = vmatprep.mubr.f32.mxu0 0.0
    %3356 = vmatmul.mubr.f32.gmra.mrb[0].mxu0 %v3221
    %v3357 = vpop.f32.mrb[0].mxu0
    %v3358 = vadd.f32 0.0, %v3357
    %v3359 = vpop.f32.mrb[0].mxu0
    %v3360 = vadd.f32 0.0, %v3359
    %3361 = vdwg.mxu0
    %3362 = vmatprep.subr.mxu0 %v3230
    %3363 = vmatpush1.msra.mxu0 %v3229
    %3364 = vmatprep.subr.mxu0 %v3234
    %3365 = vmatpush1.msra.mxu0 %v3233
    %3366 = vmatprep.subr.mxu0 %v3238
    %3367 = vmatpush1.msra.mxu0 %v3237
    %3368 = vmatprep.subr.mxu0 %v3242
    %3369 = vmatpush1.msra.mxu0 %v3241
    %3370 = vmatprep.subr.mxu0 %v3246
    %3371 = vmatpush1.msra.mxu0 %v3245
    %3372 = vmatprep.subr.mxu0 %v3250
    %3373 = vmatpush1.msra.mxu0 %v3249
    %3374 = vmatprep.subr.mxu0 %v3254
    %3375 = vmatpush1.msra.mxu0 %v3253
    %3376 = vmatprep.subr.mxu0 %v3258
    %3377 = vmatpush1.msra.mxu0 %v3257
    %3378 = vmatprep.subr.mxu0 %v3262
    %3379 = vmatpush1.msra.mxu0 %v3261
    %3380 = vmatprep.subr.mxu0 %v3266
    %3381 = vmatpush1.msra.mxu0 %v3265
    %3382 = vmatprep.subr.mxu0 %v3270
    %3383 = vmatpush1.msra.mxu0 %v3269
    %3384 = vmatprep.subr.mxu0 %v3274
    %3385 = vmatpush1.msra.mxu0 %v3273
    %3386 = vmatprep.subr.mxu0 %v3278
    %3387 = vmatpush1.msra.mxu0 %v3277
    %3388 = vmatprep.subr.mxu0 %v3282
    %3389 = vmatpush1.msra.mxu0 %v3281
    %3390 = vmatprep.subr.mxu0 %v3286
    %3391 = vmatpush1.msra.mxu0 %v3285
    %3392 = vmatprep.subr.mxu0 %v3290
    %3393 = vmatpush1.msra.mxu0 %v3289
    %3394 = vmatprep.subr.mxu0 0.0
    %3395 = vmatpush1.msra.mxu0 0.0
    %3396 = vmatprep.subr.mxu0 0.0
    %3397 = vmatpush1.msra.mxu0 0.0
    %3398 = vmatprep.subr.mxu0 0.0
    %3399 = vmatpush1.msra.mxu0 0.0
    %3400 = vmatprep.subr.mxu0 0.0
    %3401 = vmatpush1.msra.mxu0 0.0
    %3402 = vmatprep.subr.mxu0 0.0
    %3403 = vmatpush1.msra.mxu0 0.0
    %3404 = vmatprep.subr.mxu0 0.0
    %3405 = vmatpush1.msra.mxu0 0.0
    %3406 = vmatprep.subr.mxu0 0.0
    %3407 = vmatpush1.msra.mxu0 0.0
    %3408 = vmatprep.subr.mxu0 0.0
    %3409 = vmatpush1.msra.mxu0 0.0
    %3410 = vmatprep.subr.mxu0 0.0
    %3411 = vmatpush1.msra.mxu0 0.0
    %3412 = vmatprep.subr.mxu0 0.0
    %3413 = vmatpush1.msra.mxu0 0.0
    %3414 = vmatprep.subr.mxu0 0.0
    %3415 = vmatpush1.msra.mxu0 0.0
    %3416 = vmatprep.subr.mxu0 0.0
    %3417 = vmatpush1.msra.mxu0 0.0
    %3418 = vmatprep.subr.mxu0 0.0
    %3419 = vmatpush1.msra.mxu0 0.0
    %3420 = vmatprep.subr.mxu0 0.0
    %3421 = vmatpush1.msra.mxu0 0.0
    %3422 = vmatprep.subr.mxu0 0.0
    %3423 = vmatpush1.msra.mxu0 0.0
    %3424 = vmatprep.subr.mxu0 0.0
    %3425 = vmatpush1.msra.mxu0 0.0
    %3426 = vmatprep.mubr.f32.mxu0 0.0
    %3427 = vmatmul.mubr.f32.gmra.mrb[0].mxu0 %v3221
    %v3428 = vpop.f32.mrb[0].mxu0
    %v3429 = vadd.f32 0.0, %v3428
    %v3430 = vpop.f32.mrb[0].mxu0
    %v3431 = vadd.f32 0.0, %v3430
    %3432 = vdwg.mxu0
    %v3433 = vadd.f32 %v3223, %v3358
    %v3434 = vadd.f32 %v3224, %v3360
    %v3435 = vadd.f32 %v3225, %v3429
    %v3436 = vadd.f32 %v3226, %v3431
    %v3437 = vxor.u32 %v3433, 2147483648
    %v3438 = vmul.f32 %v3437, 1.442695
    %v3439 = vpow.pop %v3438
    %v3440 = vadd.f32 %v3439, 1.0
    %v3441 = vrcp.pop %v3440
    %v3442 = vmul.f32 1.0, %v3441
    %v3443 = vxor.u32 %v3434, 2147483648
    %v3444 = vmul.f32 %v3443, 1.442695
    %v3445 = vpow.pop %v3444
    %v3446 = vadd.f32 %v3445, 1.0
    %v3447 = vrcp.pop %v3446
    %v3448 = vmul.f32 1.0, %v3447
    %v3449 = vtanh.pop %v3435
    %v3450 = vxor.u32 %v3436, 2147483648
    %v3451 = vmul.f32 %v3450, 1.442695
    %v3452 = vpow.pop %v3451
    %v3453 = vadd.f32 %v3452, 1.0
    %v3454 = vrcp.pop %v3453
    %v3455 = vmul.f32 1.0, %v3454
    %v3456 = vmul.f32 %v3448, %v3219
    %v3457 = vmul.f32 %v3442, %v3449
    %v3458 = vadd.f32 %v3456, %v3457
    %v3459 = vtanh.pop %v3458
    %v3460 = vmul.f32 %v3455, %v3459
    %3461 = vst [vmem:[#allocation2 + $0x8] sm:$0xff] %v3460
    %v3462 = vld [vmem:[#allocation3 + $0x40] sm:$0xff]
    %v3463 = vld [vmem:[#allocation3 + $0x48] sm:$0xff]
    %v3464 = vld [vmem:[#allocation3 + $0x50] sm:$0xff]
    %v3465 = vld [vmem:[#allocation3 + $0x58] sm:$0xff]
    %v3466 = vld [vmem:[#allocation12] sm:$0xff]
    %v3467 = vld [vmem:[#allocation12 + $0x8] sm:$0xff]
    %v3468 = vld [vmem:[#allocation12 + $0x10] sm:$0xff]
    %v3469 = vld [vmem:[#allocation12 + $0x18] sm:$0xff]
    %v3470 = vld [vmem:[#allocation12 + $0x20] sm:$0xff]
    %v3471 = vld [vmem:[#allocation12 + $0x28] sm:$0xff]
    %v3472 = vld [vmem:[#allocation12 + $0x30] sm:$0xff]
    %v3473 = vld [vmem:[#allocation12 + $0x38] sm:$0xff]
    %v3474 = vld [vmem:[#allocation12 + $0x40] sm:$0xff]
    %v3475 = vld [vmem:[#allocation12 + $0x48] sm:$0xff]
    %v3476 = vld [vmem:[#allocation12 + $0x50] sm:$0xff]
    %v3477 = vld [vmem:[#allocation12 + $0x58] sm:$0xff]
    %v3478 = vld [vmem:[#allocation12 + $0x60] sm:$0xff]
    %v3479 = vld [vmem:[#allocation12 + $0x68] sm:$0xff]
    %v3480 = vld [vmem:[#allocation12 + $0x70] sm:$0xff]
    %v3481 = vld [vmem:[#allocation12 + $0x78] sm:$0xff]
    %v3482 = vld [vmem:[#allocation12 + $0x80] sm:$0xff]
    %v3483 = vld [vmem:[#allocation12 + $0x88] sm:$0xff]
    %v3484 = vld [vmem:[#allocation12 + $0x90] sm:$0xff]
    %v3485 = vld [vmem:[#allocation12 + $0x98] sm:$0xff]
    %v3486 = vld [vmem:[#allocation12 + $0xa0] sm:$0xff]
    %v3487 = vld [vmem:[#allocation12 + $0xa8] sm:$0xff]
    %v3488 = vld [vmem:[#allocation12 + $0xb0] sm:$0xff]
    %v3489 = vld [vmem:[#allocation12 + $0xb8] sm:$0xff]
    %v3490 = vld [vmem:[#allocation12 + $0xc0] sm:$0xff]
    %v3491 = vld [vmem:[#allocation12 + $0xc8] sm:$0xff]
    %v3492 = vld [vmem:[#allocation12 + $0xd0] sm:$0xff]
    %v3493 = vld [vmem:[#allocation12 + $0xd8] sm:$0xff]
    %v3494 = vld [vmem:[#allocation12 + $0xe0] sm:$0xff]
    %v3495 = vld [vmem:[#allocation12 + $0xe8] sm:$0xff]
    %v3496 = vld [vmem:[#allocation12 + $0xf0] sm:$0xff]
    %v3497 = vld [vmem:[#allocation12 + $0xf8] sm:$0xff]
    %v3498 = vld [vmem:[#allocation12 + $0x100] sm:$0xff]
    %v3499 = vld [vmem:[#allocation12 + $0x108] sm:$0xff]
    %v3500 = vld [vmem:[#allocation12 + $0x110] sm:$0xff]
    %v3501 = vld [vmem:[#allocation12 + $0x118] sm:$0xff]
    %v3502 = vld [vmem:[#allocation12 + $0x120] sm:$0xff]
    %v3503 = vld [vmem:[#allocation12 + $0x128] sm:$0xff]
    %v3504 = vld [vmem:[#allocation12 + $0x130] sm:$0xff]
    %v3505 = vld [vmem:[#allocation12 + $0x138] sm:$0xff]
    %v3506 = vld [vmem:[#allocation12 + $0x140] sm:$0xff]
    %v3507 = vld [vmem:[#allocation12 + $0x148] sm:$0xff]
    %v3508 = vld [vmem:[#allocation12 + $0x150] sm:$0xff]
    %v3509 = vld [vmem:[#allocation12 + $0x158] sm:$0xff]
    %v3510 = vld [vmem:[#allocation12 + $0x160] sm:$0xff]
    %v3511 = vld [vmem:[#allocation12 + $0x168] sm:$0xff]
    %v3512 = vld [vmem:[#allocation12 + $0x170] sm:$0xff]
    %v3513 = vld [vmem:[#allocation12 + $0x178] sm:$0xff]
    %v3514 = vld [vmem:[#allocation12 + $0x180] sm:$0xff]
    %v3515 = vld [vmem:[#allocation12 + $0x188] sm:$0xff]
    %v3516 = vld [vmem:[#allocation12 + $0x190] sm:$0xff]
    %v3517 = vld [vmem:[#allocation12 + $0x198] sm:$0xff]
    %v3518 = vld [vmem:[#allocation12 + $0x1a0] sm:$0xff]
    %v3519 = vld [vmem:[#allocation12 + $0x1a8] sm:$0xff]
    %v3520 = vld [vmem:[#allocation12 + $0x1b0] sm:$0xff]
    %v3521 = vld [vmem:[#allocation12 + $0x1b8] sm:$0xff]
    %v3522 = vld [vmem:[#allocation12 + $0x1c0] sm:$0xff]
    %v3523 = vld [vmem:[#allocation12 + $0x1c8] sm:$0xff]
    %v3524 = vld [vmem:[#allocation12 + $0x1d0] sm:$0xff]
    %v3525 = vld [vmem:[#allocation12 + $0x1d8] sm:$0xff]
    %v3526 = vld [vmem:[#allocation12 + $0x1e0] sm:$0xff]
    %v3527 = vld [vmem:[#allocation12 + $0x1e8] sm:$0xff]
    %v3528 = vld [vmem:[#allocation12 + $0x1f0] sm:$0xff]
    %v3529 = vld [vmem:[#allocation12 + $0x1f8] sm:$0xff]
    %3530 = vmatprep.subr.mxu0 %v3467
    %3531 = vmatpush1.msra.mxu0 %v3466
    %3532 = vmatprep.subr.mxu0 %v3471
    %3533 = vmatpush1.msra.mxu0 %v3470
    %3534 = vmatprep.subr.mxu0 %v3475
    %3535 = vmatpush1.msra.mxu0 %v3474
    %3536 = vmatprep.subr.mxu0 %v3479
    %3537 = vmatpush1.msra.mxu0 %v3478
    %3538 = vmatprep.subr.mxu0 %v3483
    %3539 = vmatpush1.msra.mxu0 %v3482
    %3540 = vmatprep.subr.mxu0 %v3487
    %3541 = vmatpush1.msra.mxu0 %v3486
    %3542 = vmatprep.subr.mxu0 %v3491
    %3543 = vmatpush1.msra.mxu0 %v3490
    %3544 = vmatprep.subr.mxu0 %v3495
    %3545 = vmatpush1.msra.mxu0 %v3494
    %3546 = vmatprep.subr.mxu0 %v3499
    %3547 = vmatpush1.msra.mxu0 %v3498
    %3548 = vmatprep.subr.mxu0 %v3503
    %3549 = vmatpush1.msra.mxu0 %v3502
    %3550 = vmatprep.subr.mxu0 %v3507
    %3551 = vmatpush1.msra.mxu0 %v3506
    %3552 = vmatprep.subr.mxu0 %v3511
    %3553 = vmatpush1.msra.mxu0 %v3510
    %3554 = vmatprep.subr.mxu0 %v3515
    %3555 = vmatpush1.msra.mxu0 %v3514
    %3556 = vmatprep.subr.mxu0 %v3519
    %3557 = vmatpush1.msra.mxu0 %v3518
    %3558 = vmatprep.subr.mxu0 %v3523
    %3559 = vmatpush1.msra.mxu0 %v3522
    %3560 = vmatprep.subr.mxu0 %v3527
    %3561 = vmatpush1.msra.mxu0 %v3526
    %3562 = vmatprep.subr.mxu0 0.0
    %3563 = vmatpush1.msra.mxu0 0.0
    %3564 = vmatprep.subr.mxu0 0.0
    %3565 = vmatpush1.msra.mxu0 0.0
    %3566 = vmatprep.subr.mxu0 0.0
    %3567 = vmatpush1.msra.mxu0 0.0
    %3568 = vmatprep.subr.mxu0 0.0
    %3569 = vmatpush1.msra.mxu0 0.0
    %3570 = vmatprep.subr.mxu0 0.0
    %3571 = vmatpush1.msra.mxu0 0.0
    %3572 = vmatprep.subr.mxu0 0.0
    %3573 = vmatpush1.msra.mxu0 0.0
    %3574 = vmatprep.subr.mxu0 0.0
    %3575 = vmatpush1.msra.mxu0 0.0
    %3576 = vmatprep.subr.mxu0 0.0
    %3577 = vmatpush1.msra.mxu0 0.0
    %3578 = vmatprep.subr.mxu0 0.0
    %3579 = vmatpush1.msra.mxu0 0.0
    %3580 = vmatprep.subr.mxu0 0.0
    %3581 = vmatpush1.msra.mxu0 0.0
    %3582 = vmatprep.subr.mxu0 0.0
    %3583 = vmatpush1.msra.mxu0 0.0
    %3584 = vmatprep.subr.mxu0 0.0
    %3585 = vmatpush1.msra.mxu0 0.0
    %3586 = vmatprep.subr.mxu0 0.0
    %3587 = vmatpush1.msra.mxu0 0.0
    %3588 = vmatprep.subr.mxu0 0.0
    %3589 = vmatpush1.msra.mxu0 0.0
    %3590 = vmatprep.subr.mxu0 0.0
    %3591 = vmatpush1.msra.mxu0 0.0
    %3592 = vmatprep.subr.mxu0 0.0
    %3593 = vmatpush1.msra.mxu0 0.0
    %3594 = vmatprep.mubr.f32.mxu0 0.0
    %3595 = vmatmul.mubr.f32.gmra.mrb[0].mxu0 %v3460
    %v3596 = vpop.f32.mrb[0].mxu0
    %v3597 = vadd.f32 0.0, %v3596
    %v3598 = vpop.f32.mrb[0].mxu0
    %v3599 = vadd.f32 0.0, %v3598
    %3600 = vdwg.mxu0
    %3601 = vmatprep.subr.mxu0 %v3469
    %3602 = vmatpush1.msra.mxu0 %v3468
    %3603 = vmatprep.subr.mxu0 %v3473
    %3604 = vmatpush1.msra.mxu0 %v3472
    %3605 = vmatprep.subr.mxu0 %v3477
    %3606 = vmatpush1.msra.mxu0 %v3476
    %3607 = vmatprep.subr.mxu0 %v3481
    %3608 = vmatpush1.msra.mxu0 %v3480
    %3609 = vmatprep.subr.mxu0 %v3485
    %3610 = vmatpush1.msra.mxu0 %v3484
    %3611 = vmatprep.subr.mxu0 %v3489
    %3612 = vmatpush1.msra.mxu0 %v3488
    %3613 = vmatprep.subr.mxu0 %v3493
    %3614 = vmatpush1.msra.mxu0 %v3492
    %3615 = vmatprep.subr.mxu0 %v3497
    %3616 = vmatpush1.msra.mxu0 %v3496
    %3617 = vmatprep.subr.mxu0 %v3501
    %3618 = vmatpush1.msra.mxu0 %v3500
    %3619 = vmatprep.subr.mxu0 %v3505
    %3620 = vmatpush1.msra.mxu0 %v3504
    %3621 = vmatprep.subr.mxu0 %v3509
    %3622 = vmatpush1.msra.mxu0 %v3508
    %3623 = vmatprep.subr.mxu0 %v3513
    %3624 = vmatpush1.msra.mxu0 %v3512
    %3625 = vmatprep.subr.mxu0 %v3517
    %3626 = vmatpush1.msra.mxu0 %v3516
    %3627 = vmatprep.subr.mxu0 %v3521
    %3628 = vmatpush1.msra.mxu0 %v3520
    %3629 = vmatprep.subr.mxu0 %v3525
    %3630 = vmatpush1.msra.mxu0 %v3524
    %3631 = vmatprep.subr.mxu0 %v3529
    %3632 = vmatpush1.msra.mxu0 %v3528
    %3633 = vmatprep.subr.mxu0 0.0
    %3634 = vmatpush1.msra.mxu0 0.0
    %3635 = vmatprep.subr.mxu0 0.0
    %3636 = vmatpush1.msra.mxu0 0.0
    %3637 = vmatprep.subr.mxu0 0.0
    %3638 = vmatpush1.msra.mxu0 0.0
    %3639 = vmatprep.subr.mxu0 0.0
    %3640 = vmatpush1.msra.mxu0 0.0
    %3641 = vmatprep.subr.mxu0 0.0
    %3642 = vmatpush1.msra.mxu0 0.0
    %3643 = vmatprep.subr.mxu0 0.0
    %3644 = vmatpush1.msra.mxu0 0.0
    %3645 = vmatprep.subr.mxu0 0.0
    %3646 = vmatpush1.msra.mxu0 0.0
    %3647 = vmatprep.subr.mxu0 0.0
    %3648 = vmatpush1.msra.mxu0 0.0
    %3649 = vmatprep.subr.mxu0 0.0
    %3650 = vmatpush1.msra.mxu0 0.0
    %3651 = vmatprep.subr.mxu0 0.0
    %3652 = vmatpush1.msra.mxu0 0.0
    %3653 = vmatprep.subr.mxu0 0.0
    %3654 = vmatpush1.msra.mxu0 0.0
    %3655 = vmatprep.subr.mxu0 0.0
    %3656 = vmatpush1.msra.mxu0 0.0
    %3657 = vmatprep.subr.mxu0 0.0
    %3658 = vmatpush1.msra.mxu0 0.0
    %3659 = vmatprep.subr.mxu0 0.0
    %3660 = vmatpush1.msra.mxu0 0.0
    %3661 = vmatprep.subr.mxu0 0.0
    %3662 = vmatpush1.msra.mxu0 0.0
    %3663 = vmatprep.subr.mxu0 0.0
    %3664 = vmatpush1.msra.mxu0 0.0
    %3665 = vmatprep.mubr.f32.mxu0 0.0
    %3666 = vmatmul.mubr.f32.gmra.mrb[0].mxu0 %v3460
    %v3667 = vpop.f32.mrb[0].mxu0
    %v3668 = vadd.f32 0.0, %v3667
    %v3669 = vpop.f32.mrb[0].mxu0
    %v3670 = vadd.f32 0.0, %v3669
    %3671 = vdwg.mxu0
    %v3672 = vadd.f32 %v3462, %v3597
    %v3673 = vadd.f32 %v3463, %v3599
    %v3674 = vadd.f32 %v3464, %v3668
    %v3675 = vadd.f32 %v3465, %v3670
    %v3676 = vxor.u32 %v3672, 2147483648
    %v3677 = vmul.f32 %v3676, 1.442695
    %v3678 = vpow.pop %v3677
    %v3679 = vadd.f32 %v3678, 1.0
    %v3680 = vrcp.pop %v3679
    %v3681 = vmul.f32 1.0, %v3680
    %v3682 = vxor.u32 %v3673, 2147483648
    %v3683 = vmul.f32 %v3682, 1.442695
    %v3684 = vpow.pop %v3683
    %v3685 = vadd.f32 %v3684, 1.0
    %v3686 = vrcp.pop %v3685
    %v3687 = vmul.f32 1.0, %v3686
    %v3688 = vtanh.pop %v3674
    %v3689 = vxor.u32 %v3675, 2147483648
    %v3690 = vmul.f32 %v3689, 1.442695
    %v3691 = vpow.pop %v3690
    %v3692 = vadd.f32 %v3691, 1.0
    %v3693 = vrcp.pop %v3692
    %v3694 = vmul.f32 1.0, %v3693
    %v3695 = vmul.f32 %v3687, %v3458
    %v3696 = vmul.f32 %v3681, %v3688
    %v3697 = vadd.f32 %v3695, %v3696
    %v3698 = vtanh.pop %v3697
    %v3699 = vmul.f32 %v3694, %v3698
    %3700 = vst [vmem:[#allocation2 + $0x10] sm:$0xff] %v3699
    %v3701 = vld [vmem:[#allocation3 + $0x60] sm:$0xff]
    %v3702 = vld [vmem:[#allocation3 + $0x68] sm:$0xff]
    %v3703 = vld [vmem:[#allocation3 + $0x70] sm:$0xff]
    %v3704 = vld [vmem:[#allocation3 + $0x78] sm:$0xff]
    %v3705 = vld [vmem:[#allocation12] sm:$0xff]
    %v3706 = vld [vmem:[#allocation12 + $0x8] sm:$0xff]
    %v3707 = vld [vmem:[#allocation12 + $0x10] sm:$0xff]
    %v3708 = vld [vmem:[#allocation12 + $0x18] sm:$0xff]
    %v3709 = vld [vmem:[#allocation12 + $0x20] sm:$0xff]
    %v3710 = vld [vmem:[#allocation12 + $0x28] sm:$0xff]
    %v3711 = vld [vmem:[#allocation12 + $0x30] sm:$0xff]
    %v3712 = vld [vmem:[#allocation12 + $0x38] sm:$0xff]
    %v3713 = vld [vmem:[#allocation12 + $0x40] sm:$0xff]
    %v3714 = vld [vmem:[#allocation12 + $0x48] sm:$0xff]
    %v3715 = vld [vmem:[#allocation12 + $0x50] sm:$0xff]
    %v3716 = vld [vmem:[#allocation12 + $0x58] sm:$0xff]
    %v3717 = vld [vmem:[#allocation12 + $0x60] sm:$0xff]
    %v3718 = vld [vmem:[#allocation12 + $0x68] sm:$0xff]
    %v3719 = vld [vmem:[#allocation12 + $0x70] sm:$0xff]
    %v3720 = vld [vmem:[#allocation12 + $0x78] sm:$0xff]
    %v3721 = vld [vmem:[#allocation12 + $0x80] sm:$0xff]
    %v3722 = vld [vmem:[#allocation12 + $0x88] sm:$0xff]
    %v3723 = vld [vmem:[#allocation12 + $0x90] sm:$0xff]
    %v3724 = vld [vmem:[#allocation12 + $0x98] sm:$0xff]
    %v3725 = vld [vmem:[#allocation12 + $0xa0] sm:$0xff]
    %v3726 = vld [vmem:[#allocation12 + $0xa8] sm:$0xff]
    %v3727 = vld [vmem:[#allocation12 + $0xb0] sm:$0xff]
    %v3728 = vld [vmem:[#allocation12 + $0xb8] sm:$0xff]
    %v3729 = vld [vmem:[#allocation12 + $0xc0] sm:$0xff]
    %v3730 = vld [vmem:[#allocation12 + $0xc8] sm:$0xff]
    %v3731 = vld [vmem:[#allocation12 + $0xd0] sm:$0xff]
    %v3732 = vld [vmem:[#allocation12 + $0xd8] sm:$0xff]
    %v3733 = vld [vmem:[#allocation12 + $0xe0] sm:$0xff]
    %v3734 = vld [vmem:[#allocation12 + $0xe8] sm:$0xff]
    %v3735 = vld [vmem:[#allocation12 + $0xf0] sm:$0xff]
    %v3736 = vld [vmem:[#allocation12 + $0xf8] sm:$0xff]
    %v3737 = vld [vmem:[#allocation12 + $0x100] sm:$0xff]
    %v3738 = vld [vmem:[#allocation12 + $0x108] sm:$0xff]
    %v3739 = vld [vmem:[#allocation12 + $0x110] sm:$0xff]
    %v3740 = vld [vmem:[#allocation12 + $0x118] sm:$0xff]
    %v3741 = vld [vmem:[#allocation12 + $0x120] sm:$0xff]
    %v3742 = vld [vmem:[#allocation12 + $0x128] sm:$0xff]
    %v3743 = vld [vmem:[#allocation12 + $0x130] sm:$0xff]
    %v3744 = vld [vmem:[#allocation12 + $0x138] sm:$0xff]
    %v3745 = vld [vmem:[#allocation12 + $0x140] sm:$0xff]
    %v3746 = vld [vmem:[#allocation12 + $0x148] sm:$0xff]
    %v3747 = vld [vmem:[#allocation12 + $0x150] sm:$0xff]
    %v3748 = vld [vmem:[#allocation12 + $0x158] sm:$0xff]
    %v3749 = vld [vmem:[#allocation12 + $0x160] sm:$0xff]
    %v3750 = vld [vmem:[#allocation12 + $0x168] sm:$0xff]
    %v3751 = vld [vmem:[#allocation12 + $0x170] sm:$0xff]
    %v3752 = vld [vmem:[#allocation12 + $0x178] sm:$0xff]
    %v3753 = vld [vmem:[#allocation12 + $0x180] sm:$0xff]
    %v3754 = vld [vmem:[#allocation12 + $0x188] sm:$0xff]
    %v3755 = vld [vmem:[#allocation12 + $0x190] sm:$0xff]
    %v3756 = vld [vmem:[#allocation12 + $0x198] sm:$0xff]
    %v3757 = vld [vmem:[#allocation12 + $0x1a0] sm:$0xff]
    %v3758 = vld [vmem:[#allocation12 + $0x1a8] sm:$0xff]
    %v3759 = vld [vmem:[#allocation12 + $0x1b0] sm:$0xff]
    %v3760 = vld [vmem:[#allocation12 + $0x1b8] sm:$0xff]
    %v3761 = vld [vmem:[#allocation12 + $0x1c0] sm:$0xff]
    %v3762 = vld [vmem:[#allocation12 + $0x1c8] sm:$0xff]
    %v3763 = vld [vmem:[#allocation12 + $0x1d0] sm:$0xff]
    %v3764 = vld [vmem:[#allocation12 + $0x1d8] sm:$0xff]
    %v3765 = vld [vmem:[#allocation12 + $0x1e0] sm:$0xff]
    %v3766 = vld [vmem:[#allocation12 + $0x1e8] sm:$0xff]
    %v3767 = vld [vmem:[#allocation12 + $0x1f0] sm:$0xff]
    %v3768 = vld [vmem:[#allocation12 + $0x1f8] sm:$0xff]
    %3769 = vmatprep.subr.mxu0 %v3706
    %3770 = vmatpush1.msra.mxu0 %v3705
    %3771 = vmatprep.subr.mxu0 %v3710
    %3772 = vmatpush1.msra.mxu0 %v3709
    %3773 = vmatprep.subr.mxu0 %v3714
    %3774 = vmatpush1.msra.mxu0 %v3713
    %3775 = vmatprep.subr.mxu0 %v3718
    %3776 = vmatpush1.msra.mxu0 %v3717
    %3777 = vmatprep.subr.mxu0 %v3722
    %3778 = vmatpush1.msra.mxu0 %v3721
    %3779 = vmatprep.subr.mxu0 %v3726
    %3780 = vmatpush1.msra.mxu0 %v3725
    %3781 = vmatprep.subr.mxu0 %v3730
    %3782 = vmatpush1.msra.mxu0 %v3729
    %3783 = vmatprep.subr.mxu0 %v3734
    %3784 = vmatpush1.msra.mxu0 %v3733
    %3785 = vmatprep.subr.mxu0 %v3738
    %3786 = vmatpush1.msra.mxu0 %v3737
    %3787 = vmatprep.subr.mxu0 %v3742
    %3788 = vmatpush1.msra.mxu0 %v3741
    %3789 = vmatprep.subr.mxu0 %v3746
    %3790 = vmatpush1.msra.mxu0 %v3745
    %3791 = vmatprep.subr.mxu0 %v3750
    %3792 = vmatpush1.msra.mxu0 %v3749
    %3793 = vmatprep.subr.mxu0 %v3754
    %3794 = vmatpush1.msra.mxu0 %v3753
    %3795 = vmatprep.subr.mxu0 %v3758
    %3796 = vmatpush1.msra.mxu0 %v3757
    %3797 = vmatprep.subr.mxu0 %v3762
    %3798 = vmatpush1.msra.mxu0 %v3761
    %3799 = vmatprep.subr.mxu0 %v3766
    %3800 = vmatpush1.msra.mxu0 %v3765
    %3801 = vmatprep.subr.mxu0 0.0
    %3802 = vmatpush1.msra.mxu0 0.0
    %3803 = vmatprep.subr.mxu0 0.0
    %3804 = vmatpush1.msra.mxu0 0.0
    %3805 = vmatprep.subr.mxu0 0.0
    %3806 = vmatpush1.msra.mxu0 0.0
    %3807 = vmatprep.subr.mxu0 0.0
    %3808 = vmatpush1.msra.mxu0 0.0
    %3809 = vmatprep.subr.mxu0 0.0
    %3810 = vmatpush1.msra.mxu0 0.0
    %3811 = vmatprep.subr.mxu0 0.0
    %3812 = vmatpush1.msra.mxu0 0.0
    %3813 = vmatprep.subr.mxu0 0.0
    %3814 = vmatpush1.msra.mxu0 0.0
    %3815 = vmatprep.subr.mxu0 0.0
    %3816 = vmatpush1.msra.mxu0 0.0
    %3817 = vmatprep.subr.mxu0 0.0
    %3818 = vmatpush1.msra.mxu0 0.0
    %3819 = vmatprep.subr.mxu0 0.0
    %3820 = vmatpush1.msra.mxu0 0.0
    %3821 = vmatprep.subr.mxu0 0.0
    %3822 = vmatpush1.msra.mxu0 0.0
    %3823 = vmatprep.subr.mxu0 0.0
    %3824 = vmatpush1.msra.mxu0 0.0
    %3825 = vmatprep.subr.mxu0 0.0
    %3826 = vmatpush1.msra.mxu0 0.0
    %3827 = vmatprep.subr.mxu0 0.0
    %3828 = vmatpush1.msra.mxu0 0.0
    %3829 = vmatprep.subr.mxu0 0.0
    %3830 = vmatpush1.msra.mxu0 0.0
    %3831 = vmatprep.subr.mxu0 0.0
    %3832 = vmatpush1.msra.mxu0 0.0
    %3833 = vmatprep.mubr.f32.mxu0 0.0
    %3834 = vmatmul.mubr.f32.gmra.mrb[0].mxu0 %v3699
    %v3835 = vpop.f32.mrb[0].mxu0
    %v3836 = vadd.f32 0.0, %v3835
    %v3837 = vpop.f32.mrb[0].mxu0
    %v3838 = vadd.f32 0.0, %v3837
    %3839 = vdwg.mxu0
    %3840 = vmatprep.subr.mxu0 %v3708
    %3841 = vmatpush1.msra.mxu0 %v3707
    %3842 = vmatprep.subr.mxu0 %v3712
    %3843 = vmatpush1.msra.mxu0 %v3711
    %3844 = vmatprep.subr.mxu0 %v3716
    %3845 = vmatpush1.msra.mxu0 %v3715
    %3846 = vmatprep.subr.mxu0 %v3720
    %3847 = vmatpush1.msra.mxu0 %v3719
    %3848 = vmatprep.subr.mxu0 %v3724
    %3849 = vmatpush1.msra.mxu0 %v3723
    %3850 = vmatprep.subr.mxu0 %v3728
    %3851 = vmatpush1.msra.mxu0 %v3727
    %3852 = vmatprep.subr.mxu0 %v3732
    %3853 = vmatpush1.msra.mxu0 %v3731
    %3854 = vmatprep.subr.mxu0 %v3736
    %3855 = vmatpush1.msra.mxu0 %v3735
    %3856 = vmatprep.subr.mxu0 %v3740
    %3857 = vmatpush1.msra.mxu0 %v3739
    %3858 = vmatprep.subr.mxu0 %v3744
    %3859 = vmatpush1.msra.mxu0 %v3743
    %3860 = vmatprep.subr.mxu0 %v3748
    %3861 = vmatpush1.msra.mxu0 %v3747
    %3862 = vmatprep.subr.mxu0 %v3752
    %3863 = vmatpush1.msra.mxu0 %v3751
    %3864 = vmatprep.subr.mxu0 %v3756
    %3865 = vmatpush1.msra.mxu0 %v3755
    %3866 = vmatprep.subr.mxu0 %v3760
    %3867 = vmatpush1.msra.mxu0 %v3759
    %3868 = vmatprep.subr.mxu0 %v3764
    %3869 = vmatpush1.msra.mxu0 %v3763
    %3870 = vmatprep.subr.mxu0 %v3768
    %3871 = vmatpush1.msra.mxu0 %v3767
    %3872 = vmatprep.subr.mxu0 0.0
    %3873 = vmatpush1.msra.mxu0 0.0
    %3874 = vmatprep.subr.mxu0 0.0
    %3875 = vmatpush1.msra.mxu0 0.0
    %3876 = vmatprep.subr.mxu0 0.0
    %3877 = vmatpush1.msra.mxu0 0.0
    %3878 = vmatprep.subr.mxu0 0.0
    %3879 = vmatpush1.msra.mxu0 0.0
    %3880 = vmatprep.subr.mxu0 0.0
    %3881 = vmatpush1.msra.mxu0 0.0
    %3882 = vmatprep.subr.mxu0 0.0
    %3883 = vmatpush1.msra.mxu0 0.0
    %3884 = vmatprep.subr.mxu0 0.0
    %3885 = vmatpush1.msra.mxu0 0.0
    %3886 = vmatprep.subr.mxu0 0.0
    %3887 = vmatpush1.msra.mxu0 0.0
    %3888 = vmatprep.subr.mxu0 0.0
    %3889 = vmatpush1.msra.mxu0 0.0
    %3890 = vmatprep.subr.mxu0 0.0
    %3891 = vmatpush1.msra.mxu0 0.0
    %3892 = vmatprep.subr.mxu0 0.0
    %3893 = vmatpush1.msra.mxu0 0.0
    %3894 = vmatprep.subr.mxu0 0.0
    %3895 = vmatpush1.msra.mxu0 0.0
    %3896 = vmatprep.subr.mxu0 0.0
    %3897 = vmatpush1.msra.mxu0 0.0
    %3898 = vmatprep.subr.mxu0 0.0
    %3899 = vmatpush1.msra.mxu0 0.0
    %3900 = vmatprep.subr.mxu0 0.0
    %3901 = vmatpush1.msra.mxu0 0.0
    %3902 = vmatprep.subr.mxu0 0.0
    %3903 = vmatpush1.msra.mxu0 0.0
    %3904 = vmatprep.mubr.f32.mxu0 0.0
    %3905 = vmatmul.mubr.f32.gmra.mrb[0].mxu0 %v3699
    %v3906 = vpop.f32.mrb[0].mxu0
    %v3907 = vadd.f32 0.0, %v3906
    %v3908 = vpop.f32.mrb[0].mxu0
    %v3909 = vadd.f32 0.0, %v3908
    %3910 = vdwg.mxu0
    %v3911 = vadd.f32 %v3701, %v3836
    %v3912 = vadd.f32 %v3702, %v3838
    %v3913 = vadd.f32 %v3703, %v3907
    %v3914 = vadd.f32 %v3704, %v3909
    %v3915 = vxor.u32 %v3911, 2147483648
    %v3916 = vmul.f32 %v3915, 1.442695
    %v3917 = vpow.pop %v3916
    %v3918 = vadd.f32 %v3917, 1.0
    %v3919 = vrcp.pop %v3918
    %v3920 = vmul.f32 1.0, %v3919
    %v3921 = vxor.u32 %v3912, 2147483648
    %v3922 = vmul.f32 %v3921, 1.442695
    %v3923 = vpow.pop %v3922
    %v3924 = vadd.f32 %v3923, 1.0
    %v3925 = vrcp.pop %v3924
    %v3926 = vmul.f32 1.0, %v3925
    %v3927 = vtanh.pop %v3913
    %v3928 = vxor.u32 %v3914, 2147483648
    %v3929 = vmul.f32 %v3928, 1.442695
    %v3930 = vpow.pop %v3929
    %v3931 = vadd.f32 %v3930, 1.0
    %v3932 = vrcp.pop %v3931
    %v3933 = vmul.f32 1.0, %v3932
    %v3934 = vmul.f32 %v3926, %v3697
    %v3935 = vmul.f32 %v3920, %v3927
    %v3936 = vadd.f32 %v3934, %v3935
    %v3937 = vtanh.pop %v3936
    %v3938 = vmul.f32 %v3933, %v3937
    %3939 = vst [vmem:[#allocation2 + $0x18] sm:$0xff] %v3938
    %v3940 = vld [vmem:[#allocation3 + $0x80] sm:$0xff]
    %v3941 = vld [vmem:[#allocation3 + $0x88] sm:$0xff]
    %v3942 = vld [vmem:[#allocation3 + $0x90] sm:$0xff]
    %v3943 = vld [vmem:[#allocation3 + $0x98] sm:$0xff]
    %v3944 = vld [vmem:[#allocation12] sm:$0xff]
    %v3945 = vld [vmem:[#allocation12 + $0x8] sm:$0xff]
    %v3946 = vld [vmem:[#allocation12 + $0x10] sm:$0xff]
    %v3947 = vld [vmem:[#allocation12 + $0x18] sm:$0xff]
    %v3948 = vld [vmem:[#allocation12 + $0x20] sm:$0xff]
    %v3949 = vld [vmem:[#allocation12 + $0x28] sm:$0xff]
    %v3950 = vld [vmem:[#allocation12 + $0x30] sm:$0xff]
    %v3951 = vld [vmem:[#allocation12 + $0x38] sm:$0xff]
    %v3952 = vld [vmem:[#allocation12 + $0x40] sm:$0xff]
    %v3953 = vld [vmem:[#allocation12 + $0x48] sm:$0xff]
    %v3954 = vld [vmem:[#allocation12 + $0x50] sm:$0xff]
    %v3955 = vld [vmem:[#allocation12 + $0x58] sm:$0xff]
    %v3956 = vld [vmem:[#allocation12 + $0x60] sm:$0xff]
    %v3957 = vld [vmem:[#allocation12 + $0x68] sm:$0xff]
    %v3958 = vld [vmem:[#allocation12 + $0x70] sm:$0xff]
    %v3959 = vld [vmem:[#allocation12 + $0x78] sm:$0xff]
    %v3960 = vld [vmem:[#allocation12 + $0x80] sm:$0xff]
    %v3961 = vld [vmem:[#allocation12 + $0x88] sm:$0xff]
    %v3962 = vld [vmem:[#allocation12 + $0x90] sm:$0xff]
    %v3963 = vld [vmem:[#allocation12 + $0x98] sm:$0xff]
    %v3964 = vld [vmem:[#allocation12 + $0xa0] sm:$0xff]
    %v3965 = vld [vmem:[#allocation12 + $0xa8] sm:$0xff]
    %v3966 = vld [vmem:[#allocation12 + $0xb0] sm:$0xff]
    %v3967 = vld [vmem:[#allocation12 + $0xb8] sm:$0xff]
    %v3968 = vld [vmem:[#allocation12 + $0xc0] sm:$0xff]
    %v3969 = vld [vmem:[#allocation12 + $0xc8] sm:$0xff]
    %v3970 = vld [vmem:[#allocation12 + $0xd0] sm:$0xff]
    %v3971 = vld [vmem:[#allocation12 + $0xd8] sm:$0xff]
    %v3972 = vld [vmem:[#allocation12 + $0xe0] sm:$0xff]
    %v3973 = vld [vmem:[#allocation12 + $0xe8] sm:$0xff]
    %v3974 = vld [vmem:[#allocation12 + $0xf0] sm:$0xff]
    %v3975 = vld [vmem:[#allocation12 + $0xf8] sm:$0xff]
    %v3976 = vld [vmem:[#allocation12 + $0x100] sm:$0xff]
    %v3977 = vld [vmem:[#allocation12 + $0x108] sm:$0xff]
    %v3978 = vld [vmem:[#allocation12 + $0x110] sm:$0xff]
    %v3979 = vld [vmem:[#allocation12 + $0x118] sm:$0xff]
    %v3980 = vld [vmem:[#allocation12 + $0x120] sm:$0xff]
    %v3981 = vld [vmem:[#allocation12 + $0x128] sm:$0xff]
    %v3982 = vld [vmem:[#allocation12 + $0x130] sm:$0xff]
    %v3983 = vld [vmem:[#allocation12 + $0x138] sm:$0xff]
    %v3984 = vld [vmem:[#allocation12 + $0x140] sm:$0xff]
    %v3985 = vld [vmem:[#allocation12 + $0x148] sm:$0xff]
    %v3986 = vld [vmem:[#allocation12 + $0x150] sm:$0xff]
    %v3987 = vld [vmem:[#allocation12 + $0x158] sm:$0xff]
    %v3988 = vld [vmem:[#allocation12 + $0x160] sm:$0xff]
    %v3989 = vld [vmem:[#allocation12 + $0x168] sm:$0xff]
    %v3990 = vld [vmem:[#allocation12 + $0x170] sm:$0xff]
    %v3991 = vld [vmem:[#allocation12 + $0x178] sm:$0xff]
    %v3992 = vld [vmem:[#allocation12 + $0x180] sm:$0xff]
    %v3993 = vld [vmem:[#allocation12 + $0x188] sm:$0xff]
    %v3994 = vld [vmem:[#allocation12 + $0x190] sm:$0xff]
    %v3995 = vld [vmem:[#allocation12 + $0x198] sm:$0xff]
    %v3996 = vld [vmem:[#allocation12 + $0x1a0] sm:$0xff]
    %v3997 = vld [vmem:[#allocation12 + $0x1a8] sm:$0xff]
    %v3998 = vld [vmem:[#allocation12 + $0x1b0] sm:$0xff]
    %v3999 = vld [vmem:[#allocation12 + $0x1b8] sm:$0xff]
    %v4000 = vld [vmem:[#allocation12 + $0x1c0] sm:$0xff]
    %v4001 = vld [vmem:[#allocation12 + $0x1c8] sm:$0xff]
    %v4002 = vld [vmem:[#allocation12 + $0x1d0] sm:$0xff]
    %v4003 = vld [vmem:[#allocation12 + $0x1d8] sm:$0xff]
    %v4004 = vld [vmem:[#allocation12 + $0x1e0] sm:$0xff]
    %v4005 = vld [vmem:[#allocation12 + $0x1e8] sm:$0xff]
    %v4006 = vld [vmem:[#allocation12 + $0x1f0] sm:$0xff]
    %v4007 = vld [vmem:[#allocation12 + $0x1f8] sm:$0xff]
    %4008 = vmatprep.subr.mxu0 %v3945
    %4009 = vmatpush1.msra.mxu0 %v3944
    %4010 = vmatprep.subr.mxu0 %v3949
    %4011 = vmatpush1.msra.mxu0 %v3948
    %4012 = vmatprep.subr.mxu0 %v3953
    %4013 = vmatpush1.msra.mxu0 %v3952
    %4014 = vmatprep.subr.mxu0 %v3957
    %4015 = vmatpush1.msra.mxu0 %v3956
    %4016 = vmatprep.subr.mxu0 %v3961
    %4017 = vmatpush1.msra.mxu0 %v3960
    %4018 = vmatprep.subr.mxu0 %v3965
    %4019 = vmatpush1.msra.mxu0 %v3964
    %4020 = vmatprep.subr.mxu0 %v3969
    %4021 = vmatpush1.msra.mxu0 %v3968
    %4022 = vmatprep.subr.mxu0 %v3973
    %4023 = vmatpush1.msra.mxu0 %v3972
    %4024 = vmatprep.subr.mxu0 %v3977
    %4025 = vmatpush1.msra.mxu0 %v3976
    %4026 = vmatprep.subr.mxu0 %v3981
    %4027 = vmatpush1.msra.mxu0 %v3980
    %4028 = vmatprep.subr.mxu0 %v3985
    %4029 = vmatpush1.msra.mxu0 %v3984
    %4030 = vmatprep.subr.mxu0 %v3989
    %4031 = vmatpush1.msra.mxu0 %v3988
    %4032 = vmatprep.subr.mxu0 %v3993
    %4033 = vmatpush1.msra.mxu0 %v3992
    %4034 = vmatprep.subr.mxu0 %v3997
    %4035 = vmatpush1.msra.mxu0 %v3996
    %4036 = vmatprep.subr.mxu0 %v4001
    %4037 = vmatpush1.msra.mxu0 %v4000
    %4038 = vmatprep.subr.mxu0 %v4005
    %4039 = vmatpush1.msra.mxu0 %v4004
    %4040 = vmatprep.subr.mxu0 0.0
    %4041 = vmatpush1.msra.mxu0 0.0
    %4042 = vmatprep.subr.mxu0 0.0
    %4043 = vmatpush1.msra.mxu0 0.0
    %4044 = vmatprep.subr.mxu0 0.0
    %4045 = vmatpush1.msra.mxu0 0.0
    %4046 = vmatprep.subr.mxu0 0.0
    %4047 = vmatpush1.msra.mxu0 0.0
    %4048 = vmatprep.subr.mxu0 0.0
    %4049 = vmatpush1.msra.mxu0 0.0
    %4050 = vmatprep.subr.mxu0 0.0
    %4051 = vmatpush1.msra.mxu0 0.0
    %4052 = vmatprep.subr.mxu0 0.0
    %4053 = vmatpush1.msra.mxu0 0.0
    %4054 = vmatprep.subr.mxu0 0.0
    %4055 = vmatpush1.msra.mxu0 0.0
    %4056 = vmatprep.subr.mxu0 0.0
    %4057 = vmatpush1.msra.mxu0 0.0
    %4058 = vmatprep.subr.mxu0 0.0
    %4059 = vmatpush1.msra.mxu0 0.0
    %4060 = vmatprep.subr.mxu0 0.0
    %4061 = vmatpush1.msra.mxu0 0.0
    %4062 = vmatprep.subr.mxu0 0.0
    %4063 = vmatpush1.msra.mxu0 0.0
    %4064 = vmatprep.subr.mxu0 0.0
    %4065 = vmatpush1.msra.mxu0 0.0
    %4066 = vmatprep.subr.mxu0 0.0
    %4067 = vmatpush1.msra.mxu0 0.0
    %4068 = vmatprep.subr.mxu0 0.0
    %4069 = vmatpush1.msra.mxu0 0.0
    %4070 = vmatprep.subr.mxu0 0.0
    %4071 = vmatpush1.msra.mxu0 0.0
    %4072 = vmatprep.mubr.f32.mxu0 0.0
    %4073 = vmatmul.mubr.f32.gmra.mrb[0].mxu0 %v3938
    %v4074 = vpop.f32.mrb[0].mxu0
    %v4075 = vadd.f32 0.0, %v4074
    %v4076 = vpop.f32.mrb[0].mxu0
    %v4077 = vadd.f32 0.0, %v4076
    %4078 = vdwg.mxu0
    %4079 = vmatprep.subr.mxu0 %v3947
    %4080 = vmatpush1.msra.mxu0 %v3946
    %4081 = vmatprep.subr.mxu0 %v3951
    %4082 = vmatpush1.msra.mxu0 %v3950
    %4083 = vmatprep.subr.mxu0 %v3955
    %4084 = vmatpush1.msra.mxu0 %v3954
    %4085 = vmatprep.subr.mxu0 %v3959
    %4086 = vmatpush1.msra.mxu0 %v3958
    %4087 = vmatprep.subr.mxu0 %v3963
    %4088 = vmatpush1.msra.mxu0 %v3962
    %4089 = vmatprep.subr.mxu0 %v3967
    %4090 = vmatpush1.msra.mxu0 %v3966
    %4091 = vmatprep.subr.mxu0 %v3971
    %4092 = vmatpush1.msra.mxu0 %v3970
    %4093 = vmatprep.subr.mxu0 %v3975
    %4094 = vmatpush1.msra.mxu0 %v3974
    %4095 = vmatprep.subr.mxu0 %v3979
    %4096 = vmatpush1.msra.mxu0 %v3978
    %4097 = vmatprep.subr.mxu0 %v3983
    %4098 = vmatpush1.msra.mxu0 %v3982
    %4099 = vmatprep.subr.mxu0 %v3987
    %4100 = vmatpush1.msra.mxu0 %v3986
    %4101 = vmatprep.subr.mxu0 %v3991
    %4102 = vmatpush1.msra.mxu0 %v3990
    %4103 = vmatprep.subr.mxu0 %v3995
    %4104 = vmatpush1.msra.mxu0 %v3994
    %4105 = vmatprep.subr.mxu0 %v3999
    %4106 = vmatpush1.msra.mxu0 %v3998
    %4107 = vmatprep.subr.mxu0 %v4003
    %4108 = vmatpush1.msra.mxu0 %v4002
    %4109 = vmatprep.subr.mxu0 %v4007
    %4110 = vmatpush1.msra.mxu0 %v4006
    %4111 = vmatprep.subr.mxu0 0.0
    %4112 = vmatpush1.msra.mxu0 0.0
    %4113 = vmatprep.subr.mxu0 0.0
    %4114 = vmatpush1.msra.mxu0 0.0
    %4115 = vmatprep.subr.mxu0 0.0
    %4116 = vmatpush1.msra.mxu0 0.0
    %4117 = vmatprep.subr.mxu0 0.0
    %4118 = vmatpush1.msra.mxu0 0.0
    %4119 = vmatprep.subr.mxu0 0.0
    %4120 = vmatpush1.msra.mxu0 0.0
    %4121 = vmatprep.subr.mxu0 0.0
    %4122 = vmatpush1.msra.mxu0 0.0
    %4123 = vmatprep.subr.mxu0 0.0
    %4124 = vmatpush1.msra.mxu0 0.0
    %4125 = vmatprep.subr.mxu0 0.0
    %4126 = vmatpush1.msra.mxu0 0.0
    %4127 = vmatprep.subr.mxu0 0.0
    %4128 = vmatpush1.msra.mxu0 0.0
    %4129 = vmatprep.subr.mxu0 0.0
    %4130 = vmatpush1.msra.mxu0 0.0
    %4131 = vmatprep.subr.mxu0 0.0
    %4132 = vmatpush1.msra.mxu0 0.0
    %4133 = vmatprep.subr.mxu0 0.0
    %4134 = vmatpush1.msra.mxu0 0.0
    %4135 = vmatprep.subr.mxu0 0.0
    %4136 = vmatpush1.msra.mxu0 0.0
    %4137 = vmatprep.subr.mxu0 0.0
    %4138 = vmatpush1.msra.mxu0 0.0
    %4139 = vmatprep.subr.mxu0 0.0
    %4140 = vmatpush1.msra.mxu0 0.0
    %4141 = vmatprep.subr.mxu0 0.0
    %4142 = vmatpush1.msra.mxu0 0.0
    %4143 = vmatprep.mubr.f32.mxu0 0.0
    %4144 = vmatmul.mubr.f32.gmra.mrb[0].mxu0 %v3938
    %v4145 = vpop.f32.mrb[0].mxu0
    %v4146 = vadd.f32 0.0, %v4145
    %v4147 = vpop.f32.mrb[0].mxu0
    %v4148 = vadd.f32 0.0, %v4147
    %4149 = vdwg.mxu0
    %v4150 = vadd.f32 %v3940, %v4075
    %v4151 = vadd.f32 %v3941, %v4077
    %v4152 = vadd.f32 %v3942, %v4146
    %v4153 = vadd.f32 %v3943, %v4148
    %v4154 = vxor.u32 %v4150, 2147483648
    %v4155 = vmul.f32 %v4154, 1.442695
    %v4156 = vpow.pop %v4155
    %v4157 = vadd.f32 %v4156, 1.0
    %v4158 = vrcp.pop %v4157
    %v4159 = vmul.f32 1.0, %v4158
    %v4160 = vxor.u32 %v4151, 2147483648
    %v4161 = vmul.f32 %v4160, 1.442695
    %v4162 = vpow.pop %v4161
    %v4163 = vadd.f32 %v4162, 1.0
    %v4164 = vrcp.pop %v4163
    %v4165 = vmul.f32 1.0, %v4164
    %v4166 = vtanh.pop %v4152
    %v4167 = vxor.u32 %v4153, 2147483648
    %v4168 = vmul.f32 %v4167, 1.442695
    %v4169 = vpow.pop %v4168
    %v4170 = vadd.f32 %v4169, 1.0
    %v4171 = vrcp.pop %v4170
    %v4172 = vmul.f32 1.0, %v4171
    %v4173 = vmul.f32 %v4165, %v3936
    %v4174 = vmul.f32 %v4159, %v4166
    %v4175 = vadd.f32 %v4173, %v4174
    %v4176 = vtanh.pop %v4175
    %v4177 = vmul.f32 %v4172, %v4176
    %4178 = vst [vmem:[#allocation2 + $0x20] sm:$0xff] %v4177
    %v4179 = vld [vmem:[#allocation3 + $0xa0] sm:$0xff]
    %v4180 = vld [vmem:[#allocation3 + $0xa8] sm:$0xff]
    %v4181 = vld [vmem:[#allocation3 + $0xb0] sm:$0xff]
    %v4182 = vld [vmem:[#allocation3 + $0xb8] sm:$0xff]
    %v4183 = vld [vmem:[#allocation12] sm:$0xff]
    %v4184 = vld [vmem:[#allocation12 + $0x8] sm:$0xff]
    %v4185 = vld [vmem:[#allocation12 + $0x10] sm:$0xff]
    %v4186 = vld [vmem:[#allocation12 + $0x18] sm:$0xff]
    %v4187 = vld [vmem:[#allocation12 + $0x20] sm:$0xff]
    %v4188 = vld [vmem:[#allocation12 + $0x28] sm:$0xff]
    %v4189 = vld [vmem:[#allocation12 + $0x30] sm:$0xff]
    %v4190 = vld [vmem:[#allocation12 + $0x38] sm:$0xff]
    %v4191 = vld [vmem:[#allocation12 + $0x40] sm:$0xff]
    %v4192 = vld [vmem:[#allocation12 + $0x48] sm:$0xff]
    %v4193 = vld [vmem:[#allocation12 + $0x50] sm:$0xff]
    %v4194 = vld [vmem:[#allocation12 + $0x58] sm:$0xff]
    %v4195 = vld [vmem:[#allocation12 + $0x60] sm:$0xff]
    %v4196 = vld [vmem:[#allocation12 + $0x68] sm:$0xff]
    %v4197 = vld [vmem:[#allocation12 + $0x70] sm:$0xff]
    %v4198 = vld [vmem:[#allocation12 + $0x78] sm:$0xff]
    %v4199 = vld [vmem:[#allocation12 + $0x80] sm:$0xff]
    %v4200 = vld [vmem:[#allocation12 + $0x88] sm:$0xff]
    %v4201 = vld [vmem:[#allocation12 + $0x90] sm:$0xff]
    %v4202 = vld [vmem:[#allocation12 + $0x98] sm:$0xff]
    %v4203 = vld [vmem:[#allocation12 + $0xa0] sm:$0xff]
    %v4204 = vld [vmem:[#allocation12 + $0xa8] sm:$0xff]
    %v4205 = vld [vmem:[#allocation12 + $0xb0] sm:$0xff]
    %v4206 = vld [vmem:[#allocation12 + $0xb8] sm:$0xff]
    %v4207 = vld [vmem:[#allocation12 + $0xc0] sm:$0xff]
    %v4208 = vld [vmem:[#allocation12 + $0xc8] sm:$0xff]
    %v4209 = vld [vmem:[#allocation12 + $0xd0] sm:$0xff]
    %v4210 = vld [vmem:[#allocation12 + $0xd8] sm:$0xff]
    %v4211 = vld [vmem:[#allocation12 + $0xe0] sm:$0xff]
    %v4212 = vld [vmem:[#allocation12 + $0xe8] sm:$0xff]
    %v4213 = vld [vmem:[#allocation12 + $0xf0] sm:$0xff]
    %v4214 = vld [vmem:[#allocation12 + $0xf8] sm:$0xff]
    %v4215 = vld [vmem:[#allocation12 + $0x100] sm:$0xff]
    %v4216 = vld [vmem:[#allocation12 + $0x108] sm:$0xff]
    %v4217 = vld [vmem:[#allocation12 + $0x110] sm:$0xff]
    %v4218 = vld [vmem:[#allocation12 + $0x118] sm:$0xff]
    %v4219 = vld [vmem:[#allocation12 + $0x120] sm:$0xff]
    %v4220 = vld [vmem:[#allocation12 + $0x128] sm:$0xff]
    %v4221 = vld [vmem:[#allocation12 + $0x130] sm:$0xff]
    %v4222 = vld [vmem:[#allocation12 + $0x138] sm:$0xff]
    %v4223 = vld [vmem:[#allocation12 + $0x140] sm:$0xff]
    %v4224 = vld [vmem:[#allocation12 + $0x148] sm:$0xff]
    %v4225 = vld [vmem:[#allocation12 + $0x150] sm:$0xff]
    %v4226 = vld [vmem:[#allocation12 + $0x158] sm:$0xff]
    %v4227 = vld [vmem:[#allocation12 + $0x160] sm:$0xff]
    %v4228 = vld [vmem:[#allocation12 + $0x168] sm:$0xff]
    %v4229 = vld [vmem:[#allocation12 + $0x170] sm:$0xff]
    %v4230 = vld [vmem:[#allocation12 + $0x178] sm:$0xff]
    %v4231 = vld [vmem:[#allocation12 + $0x180] sm:$0xff]
    %v4232 = vld [vmem:[#allocation12 + $0x188] sm:$0xff]
    %v4233 = vld [vmem:[#allocation12 + $0x190] sm:$0xff]
    %v4234 = vld [vmem:[#allocation12 + $0x198] sm:$0xff]
    %v4235 = vld [vmem:[#allocation12 + $0x1a0] sm:$0xff]
    %v4236 = vld [vmem:[#allocation12 + $0x1a8] sm:$0xff]
    %v4237 = vld [vmem:[#allocation12 + $0x1b0] sm:$0xff]
    %v4238 = vld [vmem:[#allocation12 + $0x1b8] sm:$0xff]
    %v4239 = vld [vmem:[#allocation12 + $0x1c0] sm:$0xff]
    %v4240 = vld [vmem:[#allocation12 + $0x1c8] sm:$0xff]
    %v4241 = vld [vmem:[#allocation12 + $0x1d0] sm:$0xff]
    %v4242 = vld [vmem:[#allocation12 + $0x1d8] sm:$0xff]
    %v4243 = vld [vmem:[#allocation12 + $0x1e0] sm:$0xff]
    %v4244 = vld [vmem:[#allocation12 + $0x1e8] sm:$0xff]
    %v4245 = vld [vmem:[#allocation12 + $0x1f0] sm:$0xff]
    %v4246 = vld [vmem:[#allocation12 + $0x1f8] sm:$0xff]
    %4247 = vmatprep.subr.mxu0 %v4184
    %4248 = vmatpush1.msra.mxu0 %v4183
    %4249 = vmatprep.subr.mxu0 %v4188
    %4250 = vmatpush1.msra.mxu0 %v4187
    %4251 = vmatprep.subr.mxu0 %v4192
    %4252 = vmatpush1.msra.mxu0 %v4191
    %4253 = vmatprep.subr.mxu0 %v4196
    %4254 = vmatpush1.msra.mxu0 %v4195
    %4255 = vmatprep.subr.mxu0 %v4200
    %4256 = vmatpush1.msra.mxu0 %v4199
    %4257 = vmatprep.subr.mxu0 %v4204
    %4258 = vmatpush1.msra.mxu0 %v4203
    %4259 = vmatprep.subr.mxu0 %v4208
    %4260 = vmatpush1.msra.mxu0 %v4207
    %4261 = vmatprep.subr.mxu0 %v4212
    %4262 = vmatpush1.msra.mxu0 %v4211
    %4263 = vmatprep.subr.mxu0 %v4216
    %4264 = vmatpush1.msra.mxu0 %v4215
    %4265 = vmatprep.subr.mxu0 %v4220
    %4266 = vmatpush1.msra.mxu0 %v4219
    %4267 = vmatprep.subr.mxu0 %v4224
    %4268 = vmatpush1.msra.mxu0 %v4223
    %4269 = vmatprep.subr.mxu0 %v4228
    %4270 = vmatpush1.msra.mxu0 %v4227
    %4271 = vmatprep.subr.mxu0 %v4232
    %4272 = vmatpush1.msra.mxu0 %v4231
    %4273 = vmatprep.subr.mxu0 %v4236
    %4274 = vmatpush1.msra.mxu0 %v4235
    %4275 = vmatprep.subr.mxu0 %v4240
    %4276 = vmatpush1.msra.mxu0 %v4239
    %4277 = vmatprep.subr.mxu0 %v4244
    %4278 = vmatpush1.msra.mxu0 %v4243
    %4279 = vmatprep.subr.mxu0 0.0
    %4280 = vmatpush1.msra.mxu0 0.0
    %4281 = vmatprep.subr.mxu0 0.0
    %4282 = vmatpush1.msra.mxu0 0.0
    %4283 = vmatprep.subr.mxu0 0.0
    %4284 = vmatpush1.msra.mxu0 0.0
    %4285 = vmatprep.subr.mxu0 0.0
    %4286 = vmatpush1.msra.mxu0 0.0
    %4287 = vmatprep.subr.mxu0 0.0
    %4288 = vmatpush1.msra.mxu0 0.0
    %4289 = vmatprep.subr.mxu0 0.0
    %4290 = vmatpush1.msra.mxu0 0.0
    %4291 = vmatprep.subr.mxu0 0.0
    %4292 = vmatpush1.msra.mxu0 0.0
    %4293 = vmatprep.subr.mxu0 0.0
    %4294 = vmatpush1.msra.mxu0 0.0
    %4295 = vmatprep.subr.mxu0 0.0
    %4296 = vmatpush1.msra.mxu0 0.0
    %4297 = vmatprep.subr.mxu0 0.0
    %4298 = vmatpush1.msra.mxu0 0.0
    %4299 = vmatprep.subr.mxu0 0.0
    %4300 = vmatpush1.msra.mxu0 0.0
    %4301 = vmatprep.subr.mxu0 0.0
    %4302 = vmatpush1.msra.mxu0 0.0
    %4303 = vmatprep.subr.mxu0 0.0
    %4304 = vmatpush1.msra.mxu0 0.0
    %4305 = vmatprep.subr.mxu0 0.0
    %4306 = vmatpush1.msra.mxu0 0.0
    %4307 = vmatprep.subr.mxu0 0.0
    %4308 = vmatpush1.msra.mxu0 0.0
    %4309 = vmatprep.subr.mxu0 0.0
    %4310 = vmatpush1.msra.mxu0 0.0
    %4311 = vmatprep.mubr.f32.mxu0 0.0
    %4312 = vmatmul.mubr.f32.gmra.mrb[0].mxu0 %v4177
    %v4313 = vpop.f32.mrb[0].mxu0
    %v4314 = vadd.f32 0.0, %v4313
    %v4315 = vpop.f32.mrb[0].mxu0
    %v4316 = vadd.f32 0.0, %v4315
    %4317 = vdwg.mxu0
    %4318 = vmatprep.subr.mxu0 %v4186
    %4319 = vmatpush1.msra.mxu0 %v4185
    %4320 = vmatprep.subr.mxu0 %v4190
    %4321 = vmatpush1.msra.mxu0 %v4189
    %4322 = vmatprep.subr.mxu0 %v4194
    %4323 = vmatpush1.msra.mxu0 %v4193
    %4324 = vmatprep.subr.mxu0 %v4198
    %4325 = vmatpush1.msra.mxu0 %v4197
    %4326 = vmatprep.subr.mxu0 %v4202
    %4327 = vmatpush1.msra.mxu0 %v4201
    %4328 = vmatprep.subr.mxu0 %v4206
    %4329 = vmatpush1.msra.mxu0 %v4205
    %4330 = vmatprep.subr.mxu0 %v4210
    %4331 = vmatpush1.msra.mxu0 %v4209
    %4332 = vmatprep.subr.mxu0 %v4214
    %4333 = vmatpush1.msra.mxu0 %v4213
    %4334 = vmatprep.subr.mxu0 %v4218
    %4335 = vmatpush1.msra.mxu0 %v4217
    %4336 = vmatprep.subr.mxu0 %v4222
    %4337 = vmatpush1.msra.mxu0 %v4221
    %4338 = vmatprep.subr.mxu0 %v4226
    %4339 = vmatpush1.msra.mxu0 %v4225
    %4340 = vmatprep.subr.mxu0 %v4230
    %4341 = vmatpush1.msra.mxu0 %v4229
    %4342 = vmatprep.subr.mxu0 %v4234
    %4343 = vmatpush1.msra.mxu0 %v4233
    %4344 = vmatprep.subr.mxu0 %v4238
    %4345 = vmatpush1.msra.mxu0 %v4237
    %4346 = vmatprep.subr.mxu0 %v4242
    %4347 = vmatpush1.msra.mxu0 %v4241
    %4348 = vmatprep.subr.mxu0 %v4246
    %4349 = vmatpush1.msra.mxu0 %v4245
    %4350 = vmatprep.subr.mxu0 0.0
    %4351 = vmatpush1.msra.mxu0 0.0
    %4352 = vmatprep.subr.mxu0 0.0
    %4353 = vmatpush1.msra.mxu0 0.0
    %4354 = vmatprep.subr.mxu0 0.0
    %4355 = vmatpush1.msra.mxu0 0.0
    %4356 = vmatprep.subr.mxu0 0.0
    %4357 = vmatpush1.msra.mxu0 0.0
    %4358 = vmatprep.subr.mxu0 0.0
    %4359 = vmatpush1.msra.mxu0 0.0
    %4360 = vmatprep.subr.mxu0 0.0
    %4361 = vmatpush1.msra.mxu0 0.0
    %4362 = vmatprep.subr.mxu0 0.0
    %4363 = vmatpush1.msra.mxu0 0.0
    %4364 = vmatprep.subr.mxu0 0.0
    %4365 = vmatpush1.msra.mxu0 0.0
    %4366 = vmatprep.subr.mxu0 0.0
    %4367 = vmatpush1.msra.mxu0 0.0
    %4368 = vmatprep.subr.mxu0 0.0
    %4369 = vmatpush1.msra.mxu0 0.0
    %4370 = vmatprep.subr.mxu0 0.0
    %4371 = vmatpush1.msra.mxu0 0.0
    %4372 = vmatprep.subr.mxu0 0.0
    %4373 = vmatpush1.msra.mxu0 0.0
    %4374 = vmatprep.subr.mxu0 0.0
    %4375 = vmatpush1.msra.mxu0 0.0
    %4376 = vmatprep.subr.mxu0 0.0
    %4377 = vmatpush1.msra.mxu0 0.0
    %4378 = vmatprep.subr.mxu0 0.0
    %4379 = vmatpush1.msra.mxu0 0.0
    %4380 = vmatprep.subr.mxu0 0.0
    %4381 = vmatpush1.msra.mxu0 0.0
    %4382 = vmatprep.mubr.f32.mxu0 0.0
    %4383 = vmatmul.mubr.f32.gmra.mrb[0].mxu0 %v4177
    %v4384 = vpop.f32.mrb[0].mxu0
    %v4385 = vadd.f32 0.0, %v4384
    %v4386 = vpop.f32.mrb[0].mxu0
    %v4387 = vadd.f32 0.0, %v4386
    %4388 = vdwg.mxu0
    %v4389 = vadd.f32 %v4179, %v4314
    %v4390 = vadd.f32 %v4180, %v4316
    %v4391 = vadd.f32 %v4181, %v4385
    %v4392 = vadd.f32 %v4182, %v4387
    %v4393 = vxor.u32 %v4389, 2147483648
    %v4394 = vmul.f32 %v4393, 1.442695
    %v4395 = vpow.pop %v4394
    %v4396 = vadd.f32 %v4395, 1.0
    %v4397 = vrcp.pop %v4396
    %v4398 = vmul.f32 1.0, %v4397
    %v4399 = vxor.u32 %v4390, 2147483648
    %v4400 = vmul.f32 %v4399, 1.442695
    %v4401 = vpow.pop %v4400
    %v4402 = vadd.f32 %v4401, 1.0
    %v4403 = vrcp.pop %v4402
    %v4404 = vmul.f32 1.0, %v4403
    %v4405 = vtanh.pop %v4391
    %v4406 = vxor.u32 %v4392, 2147483648
    %v4407 = vmul.f32 %v4406, 1.442695
    %v4408 = vpow.pop %v4407
    %v4409 = vadd.f32 %v4408, 1.0
    %v4410 = vrcp.pop %v4409
    %v4411 = vmul.f32 1.0, %v4410
    %v4412 = vmul.f32 %v4404, %v4175
    %v4413 = vmul.f32 %v4398, %v4405
    %v4414 = vadd.f32 %v4412, %v4413
    %v4415 = vtanh.pop %v4414
    %v4416 = vmul.f32 %v4411, %v4415
    %4417 = vst [vmem:[#allocation2 + $0x28] sm:$0xff] %v4416
    %v4418 = vld [vmem:[#allocation3 + $0xc0] sm:$0xff]
    %v4419 = vld [vmem:[#allocation3 + $0xc8] sm:$0xff]
    %v4420 = vld [vmem:[#allocation3 + $0xd0] sm:$0xff]
    %v4421 = vld [vmem:[#allocation3 + $0xd8] sm:$0xff]
    %v4422 = vld [vmem:[#allocation12] sm:$0xff]
    %v4423 = vld [vmem:[#allocation12 + $0x8] sm:$0xff]
    %v4424 = vld [vmem:[#allocation12 + $0x10] sm:$0xff]
    %v4425 = vld [vmem:[#allocation12 + $0x18] sm:$0xff]
    %v4426 = vld [vmem:[#allocation12 + $0x20] sm:$0xff]
    %v4427 = vld [vmem:[#allocation12 + $0x28] sm:$0xff]
    %v4428 = vld [vmem:[#allocation12 + $0x30] sm:$0xff]
    %v4429 = vld [vmem:[#allocation12 + $0x38] sm:$0xff]
    %v4430 = vld [vmem:[#allocation12 + $0x40] sm:$0xff]
    %v4431 = vld [vmem:[#allocation12 + $0x48] sm:$0xff]
    %v4432 = vld [vmem:[#allocation12 + $0x50] sm:$0xff]
    %v4433 = vld [vmem:[#allocation12 + $0x58] sm:$0xff]
    %v4434 = vld [vmem:[#allocation12 + $0x60] sm:$0xff]
    %v4435 = vld [vmem:[#allocation12 + $0x68] sm:$0xff]
    %v4436 = vld [vmem:[#allocation12 + $0x70] sm:$0xff]
    %v4437 = vld [vmem:[#allocation12 + $0x78] sm:$0xff]
    %v4438 = vld [vmem:[#allocation12 + $0x80] sm:$0xff]
    %v4439 = vld [vmem:[#allocation12 + $0x88] sm:$0xff]
    %v4440 = vld [vmem:[#allocation12 + $0x90] sm:$0xff]
    %v4441 = vld [vmem:[#allocation12 + $0x98] sm:$0xff]
    %v4442 = vld [vmem:[#allocation12 + $0xa0] sm:$0xff]
    %v4443 = vld [vmem:[#allocation12 + $0xa8] sm:$0xff]
    %v4444 = vld [vmem:[#allocation12 + $0xb0] sm:$0xff]
    %v4445 = vld [vmem:[#allocation12 + $0xb8] sm:$0xff]
    %v4446 = vld [vmem:[#allocation12 + $0xc0] sm:$0xff]
    %v4447 = vld [vmem:[#allocation12 + $0xc8] sm:$0xff]
    %v4448 = vld [vmem:[#allocation12 + $0xd0] sm:$0xff]
    %v4449 = vld [vmem:[#allocation12 + $0xd8] sm:$0xff]
    %v4450 = vld [vmem:[#allocation12 + $0xe0] sm:$0xff]
    %v4451 = vld [vmem:[#allocation12 + $0xe8] sm:$0xff]
    %v4452 = vld [vmem:[#allocation12 + $0xf0] sm:$0xff]
    %v4453 = vld [vmem:[#allocation12 + $0xf8] sm:$0xff]
    %v4454 = vld [vmem:[#allocation12 + $0x100] sm:$0xff]
    %v4455 = vld [vmem:[#allocation12 + $0x108] sm:$0xff]
    %v4456 = vld [vmem:[#allocation12 + $0x110] sm:$0xff]
    %v4457 = vld [vmem:[#allocation12 + $0x118] sm:$0xff]
    %v4458 = vld [vmem:[#allocation12 + $0x120] sm:$0xff]
    %v4459 = vld [vmem:[#allocation12 + $0x128] sm:$0xff]
    %v4460 = vld [vmem:[#allocation12 + $0x130] sm:$0xff]
    %v4461 = vld [vmem:[#allocation12 + $0x138] sm:$0xff]
    %v4462 = vld [vmem:[#allocation12 + $0x140] sm:$0xff]
    %v4463 = vld [vmem:[#allocation12 + $0x148] sm:$0xff]
    %v4464 = vld [vmem:[#allocation12 + $0x150] sm:$0xff]
    %v4465 = vld [vmem:[#allocation12 + $0x158] sm:$0xff]
    %v4466 = vld [vmem:[#allocation12 + $0x160] sm:$0xff]
    %v4467 = vld [vmem:[#allocation12 + $0x168] sm:$0xff]
    %v4468 = vld [vmem:[#allocation12 + $0x170] sm:$0xff]
    %v4469 = vld [vmem:[#allocation12 + $0x178] sm:$0xff]
    %v4470 = vld [vmem:[#allocation12 + $0x180] sm:$0xff]
    %v4471 = vld [vmem:[#allocation12 + $0x188] sm:$0xff]
    %v4472 = vld [vmem:[#allocation12 + $0x190] sm:$0xff]
    %v4473 = vld [vmem:[#allocation12 + $0x198] sm:$0xff]
    %v4474 = vld [vmem:[#allocation12 + $0x1a0] sm:$0xff]
    %v4475 = vld [vmem:[#allocation12 + $0x1a8] sm:$0xff]
    %v4476 = vld [vmem:[#allocation12 + $0x1b0] sm:$0xff]
    %v4477 = vld [vmem:[#allocation12 + $0x1b8] sm:$0xff]
    %v4478 = vld [vmem:[#allocation12 + $0x1c0] sm:$0xff]
    %v4479 = vld [vmem:[#allocation12 + $0x1c8] sm:$0xff]
    %v4480 = vld [vmem:[#allocation12 + $0x1d0] sm:$0xff]
    %v4481 = vld [vmem:[#allocation12 + $0x1d8] sm:$0xff]
    %v4482 = vld [vmem:[#allocation12 + $0x1e0] sm:$0xff]
    %v4483 = vld [vmem:[#allocation12 + $0x1e8] sm:$0xff]
    %v4484 = vld [vmem:[#allocation12 + $0x1f0] sm:$0xff]
    %v4485 = vld [vmem:[#allocation12 + $0x1f8] sm:$0xff]
    %4486 = vmatprep.subr.mxu0 %v4423
    %4487 = vmatpush1.msra.mxu0 %v4422
    %4488 = vmatprep.subr.mxu0 %v4427
    %4489 = vmatpush1.msra.mxu0 %v4426
    %4490 = vmatprep.subr.mxu0 %v4431
    %4491 = vmatpush1.msra.mxu0 %v4430
    %4492 = vmatprep.subr.mxu0 %v4435
    %4493 = vmatpush1.msra.mxu0 %v4434
    %4494 = vmatprep.subr.mxu0 %v4439
    %4495 = vmatpush1.msra.mxu0 %v4438
    %4496 = vmatprep.subr.mxu0 %v4443
    %4497 = vmatpush1.msra.mxu0 %v4442
    %4498 = vmatprep.subr.mxu0 %v4447
    %4499 = vmatpush1.msra.mxu0 %v4446
    %4500 = vmatprep.subr.mxu0 %v4451
    %4501 = vmatpush1.msra.mxu0 %v4450
    %4502 = vmatprep.subr.mxu0 %v4455
    %4503 = vmatpush1.msra.mxu0 %v4454
    %4504 = vmatprep.subr.mxu0 %v4459
    %4505 = vmatpush1.msra.mxu0 %v4458
    %4506 = vmatprep.subr.mxu0 %v4463
    %4507 = vmatpush1.msra.mxu0 %v4462
    %4508 = vmatprep.subr.mxu0 %v4467
    %4509 = vmatpush1.msra.mxu0 %v4466
    %4510 = vmatprep.subr.mxu0 %v4471
    %4511 = vmatpush1.msra.mxu0 %v4470
    %4512 = vmatprep.subr.mxu0 %v4475
    %4513 = vmatpush1.msra.mxu0 %v4474
    %4514 = vmatprep.subr.mxu0 %v4479
    %4515 = vmatpush1.msra.mxu0 %v4478
    %4516 = vmatprep.subr.mxu0 %v4483
    %4517 = vmatpush1.msra.mxu0 %v4482
    %4518 = vmatprep.subr.mxu0 0.0
    %4519 = vmatpush1.msra.mxu0 0.0
    %4520 = vmatprep.subr.mxu0 0.0
    %4521 = vmatpush1.msra.mxu0 0.0
    %4522 = vmatprep.subr.mxu0 0.0
    %4523 = vmatpush1.msra.mxu0 0.0
    %4524 = vmatprep.subr.mxu0 0.0
    %4525 = vmatpush1.msra.mxu0 0.0
    %4526 = vmatprep.subr.mxu0 0.0
    %4527 = vmatpush1.msra.mxu0 0.0
    %4528 = vmatprep.subr.mxu0 0.0
    %4529 = vmatpush1.msra.mxu0 0.0
    %4530 = vmatprep.subr.mxu0 0.0
    %4531 = vmatpush1.msra.mxu0 0.0
    %4532 = vmatprep.subr.mxu0 0.0
    %4533 = vmatpush1.msra.mxu0 0.0
    %4534 = vmatprep.subr.mxu0 0.0
    %4535 = vmatpush1.msra.mxu0 0.0
    %4536 = vmatprep.subr.mxu0 0.0
    %4537 = vmatpush1.msra.mxu0 0.0
    %4538 = vmatprep.subr.mxu0 0.0
    %4539 = vmatpush1.msra.mxu0 0.0
    %4540 = vmatprep.subr.mxu0 0.0
    %4541 = vmatpush1.msra.mxu0 0.0
    %4542 = vmatprep.subr.mxu0 0.0
    %4543 = vmatpush1.msra.mxu0 0.0
    %4544 = vmatprep.subr.mxu0 0.0
    %4545 = vmatpush1.msra.mxu0 0.0
    %4546 = vmatprep.subr.mxu0 0.0
    %4547 = vmatpush1.msra.mxu0 0.0
    %4548 = vmatprep.subr.mxu0 0.0
    %4549 = vmatpush1.msra.mxu0 0.0
    %4550 = vmatprep.mubr.f32.mxu0 0.0
    %4551 = vmatmul.mubr.f32.gmra.mrb[0].mxu0 %v4416
    %v4552 = vpop.f32.mrb[0].mxu0
    %v4553 = vadd.f32 0.0, %v4552
    %v4554 = vpop.f32.mrb[0].mxu0
    %v4555 = vadd.f32 0.0, %v4554
    %4556 = vdwg.mxu0
    %4557 = vmatprep.subr.mxu0 %v4425
    %4558 = vmatpush1.msra.mxu0 %v4424
    %4559 = vmatprep.subr.mxu0 %v4429
    %4560 = vmatpush1.msra.mxu0 %v4428
    %4561 = vmatprep.subr.mxu0 %v4433
    %4562 = vmatpush1.msra.mxu0 %v4432
    %4563 = vmatprep.subr.mxu0 %v4437
    %4564 = vmatpush1.msra.mxu0 %v4436
    %4565 = vmatprep.subr.mxu0 %v4441
    %4566 = vmatpush1.msra.mxu0 %v4440
    %4567 = vmatprep.subr.mxu0 %v4445
    %4568 = vmatpush1.msra.mxu0 %v4444
    %4569 = vmatprep.subr.mxu0 %v4449
    %4570 = vmatpush1.msra.mxu0 %v4448
    %4571 = vmatprep.subr.mxu0 %v4453
    %4572 = vmatpush1.msra.mxu0 %v4452
    %4573 = vmatprep.subr.mxu0 %v4457
    %4574 = vmatpush1.msra.mxu0 %v4456
    %4575 = vmatprep.subr.mxu0 %v4461
    %4576 = vmatpush1.msra.mxu0 %v4460
    %4577 = vmatprep.subr.mxu0 %v4465
    %4578 = vmatpush1.msra.mxu0 %v4464
    %4579 = vmatprep.subr.mxu0 %v4469
    %4580 = vmatpush1.msra.mxu0 %v4468
    %4581 = vmatprep.subr.mxu0 %v4473
    %4582 = vmatpush1.msra.mxu0 %v4472
    %4583 = vmatprep.subr.mxu0 %v4477
    %4584 = vmatpush1.msra.mxu0 %v4476
    %4585 = vmatprep.subr.mxu0 %v4481
    %4586 = vmatpush1.msra.mxu0 %v4480
    %4587 = vmatprep.subr.mxu0 %v4485
    %4588 = vmatpush1.msra.mxu0 %v4484
    %4589 = vmatprep.subr.mxu0 0.0
    %4590 = vmatpush1.msra.mxu0 0.0
    %4591 = vmatprep.subr.mxu0 0.0
    %4592 = vmatpush1.msra.mxu0 0.0
    %4593 = vmatprep.subr.mxu0 0.0
    %4594 = vmatpush1.msra.mxu0 0.0
    %4595 = vmatprep.subr.mxu0 0.0
    %4596 = vmatpush1.msra.mxu0 0.0
    %4597 = vmatprep.subr.mxu0 0.0
    %4598 = vmatpush1.msra.mxu0 0.0
    %4599 = vmatprep.subr.mxu0 0.0
    %4600 = vmatpush1.msra.mxu0 0.0
    %4601 = vmatprep.subr.mxu0 0.0
    %4602 = vmatpush1.msra.mxu0 0.0
    %4603 = vmatprep.subr.mxu0 0.0
    %4604 = vmatpush1.msra.mxu0 0.0
    %4605 = vmatprep.subr.mxu0 0.0
    %4606 = vmatpush1.msra.mxu0 0.0
    %4607 = vmatprep.subr.mxu0 0.0
    %4608 = vmatpush1.msra.mxu0 0.0
    %4609 = vmatprep.subr.mxu0 0.0
    %4610 = vmatpush1.msra.mxu0 0.0
    %4611 = vmatprep.subr.mxu0 0.0
    %4612 = vmatpush1.msra.mxu0 0.0
    %4613 = vmatprep.subr.mxu0 0.0
    %4614 = vmatpush1.msra.mxu0 0.0
    %4615 = vmatprep.subr.mxu0 0.0
    %4616 = vmatpush1.msra.mxu0 0.0
    %4617 = vmatprep.subr.mxu0 0.0
    %4618 = vmatpush1.msra.mxu0 0.0
    %4619 = vmatprep.subr.mxu0 0.0
    %4620 = vmatpush1.msra.mxu0 0.0
    %4621 = vmatprep.mubr.f32.mxu0 0.0
    %4622 = vmatmul.mubr.f32.gmra.mrb[0].mxu0 %v4416
    %v4623 = vpop.f32.mrb[0].mxu0
    %v4624 = vadd.f32 0.0, %v4623
    %v4625 = vpop.f32.mrb[0].mxu0
    %v4626 = vadd.f32 0.0, %v4625
    %4627 = vdwg.mxu0
    %v4628 = vadd.f32 %v4418, %v4553
    %v4629 = vadd.f32 %v4419, %v4555
    %v4630 = vadd.f32 %v4420, %v4624
    %v4631 = vadd.f32 %v4421, %v4626
    %v4632 = vxor.u32 %v4628, 2147483648
    %v4633 = vmul.f32 %v4632, 1.442695
    %v4634 = vpow.pop %v4633
    %v4635 = vadd.f32 %v4634, 1.0
    %v4636 = vrcp.pop %v4635
    %v4637 = vmul.f32 1.0, %v4636
    %v4638 = vxor.u32 %v4629, 2147483648
    %v4639 = vmul.f32 %v4638, 1.442695
    %v4640 = vpow.pop %v4639
    %v4641 = vadd.f32 %v4640, 1.0
    %v4642 = vrcp.pop %v4641
    %v4643 = vmul.f32 1.0, %v4642
    %v4644 = vtanh.pop %v4630
    %v4645 = vxor.u32 %v4631, 2147483648
    %v4646 = vmul.f32 %v4645, 1.442695
    %v4647 = vpow.pop %v4646
    %v4648 = vadd.f32 %v4647, 1.0
    %v4649 = vrcp.pop %v4648
    %v4650 = vmul.f32 1.0, %v4649
    %v4651 = vmul.f32 %v4643, %v4414
    %v4652 = vmul.f32 %v4637, %v4644
    %v4653 = vadd.f32 %v4651, %v4652
    %v4654 = vtanh.pop %v4653
    %v4655 = vmul.f32 %v4650, %v4654
    %4656 = vst [vmem:[#allocation2 + $0x30] sm:$0xff] %v4655
    %v4657 = vld [vmem:[#allocation3 + $0xe0] sm:$0xff]
    %v4658 = vld [vmem:[#allocation3 + $0xe8] sm:$0xff]
    %v4659 = vld [vmem:[#allocation3 + $0xf0] sm:$0xff]
    %v4660 = vld [vmem:[#allocation3 + $0xf8] sm:$0xff]
    %v4661 = vld [vmem:[#allocation12] sm:$0xff]
    %v4662 = vld [vmem:[#allocation12 + $0x8] sm:$0xff]
    %v4663 = vld [vmem:[#allocation12 + $0x10] sm:$0xff]
    %v4664 = vld [vmem:[#allocation12 + $0x18] sm:$0xff]
    %v4665 = vld [vmem:[#allocation12 + $0x20] sm:$0xff]
    %v4666 = vld [vmem:[#allocation12 + $0x28] sm:$0xff]
    %v4667 = vld [vmem:[#allocation12 + $0x30] sm:$0xff]
    %v4668 = vld [vmem:[#allocation12 + $0x38] sm:$0xff]
    %v4669 = vld [vmem:[#allocation12 + $0x40] sm:$0xff]
    %v4670 = vld [vmem:[#allocation12 + $0x48] sm:$0xff]
    %v4671 = vld [vmem:[#allocation12 + $0x50] sm:$0xff]
    %v4672 = vld [vmem:[#allocation12 + $0x58] sm:$0xff]
    %v4673 = vld [vmem:[#allocation12 + $0x60] sm:$0xff]
    %v4674 = vld [vmem:[#allocation12 + $0x68] sm:$0xff]
    %v4675 = vld [vmem:[#allocation12 + $0x70] sm:$0xff]
    %v4676 = vld [vmem:[#allocation12 + $0x78] sm:$0xff]
    %v4677 = vld [vmem:[#allocation12 + $0x80] sm:$0xff]
    %v4678 = vld [vmem:[#allocation12 + $0x88] sm:$0xff]
    %v4679 = vld [vmem:[#allocation12 + $0x90] sm:$0xff]
    %v4680 = vld [vmem:[#allocation12 + $0x98] sm:$0xff]
    %v4681 = vld [vmem:[#allocation12 + $0xa0] sm:$0xff]
    %v4682 = vld [vmem:[#allocation12 + $0xa8] sm:$0xff]
    %v4683 = vld [vmem:[#allocation12 + $0xb0] sm:$0xff]
    %v4684 = vld [vmem:[#allocation12 + $0xb8] sm:$0xff]
    %v4685 = vld [vmem:[#allocation12 + $0xc0] sm:$0xff]
    %v4686 = vld [vmem:[#allocation12 + $0xc8] sm:$0xff]
    %v4687 = vld [vmem:[#allocation12 + $0xd0] sm:$0xff]
    %v4688 = vld [vmem:[#allocation12 + $0xd8] sm:$0xff]
    %v4689 = vld [vmem:[#allocation12 + $0xe0] sm:$0xff]
    %v4690 = vld [vmem:[#allocation12 + $0xe8] sm:$0xff]
    %v4691 = vld [vmem:[#allocation12 + $0xf0] sm:$0xff]
    %v4692 = vld [vmem:[#allocation12 + $0xf8] sm:$0xff]
    %v4693 = vld [vmem:[#allocation12 + $0x100] sm:$0xff]
    %v4694 = vld [vmem:[#allocation12 + $0x108] sm:$0xff]
    %v4695 = vld [vmem:[#allocation12 + $0x110] sm:$0xff]
    %v4696 = vld [vmem:[#allocation12 + $0x118] sm:$0xff]
    %v4697 = vld [vmem:[#allocation12 + $0x120] sm:$0xff]
    %v4698 = vld [vmem:[#allocation12 + $0x128] sm:$0xff]
    %v4699 = vld [vmem:[#allocation12 + $0x130] sm:$0xff]
    %v4700 = vld [vmem:[#allocation12 + $0x138] sm:$0xff]
    %v4701 = vld [vmem:[#allocation12 + $0x140] sm:$0xff]
    %v4702 = vld [vmem:[#allocation12 + $0x148] sm:$0xff]
    %v4703 = vld [vmem:[#allocation12 + $0x150] sm:$0xff]
    %v4704 = vld [vmem:[#allocation12 + $0x158] sm:$0xff]
    %v4705 = vld [vmem:[#allocation12 + $0x160] sm:$0xff]
    %v4706 = vld [vmem:[#allocation12 + $0x168] sm:$0xff]
    %v4707 = vld [vmem:[#allocation12 + $0x170] sm:$0xff]
    %v4708 = vld [vmem:[#allocation12 + $0x178] sm:$0xff]
    %v4709 = vld [vmem:[#allocation12 + $0x180] sm:$0xff]
    %v4710 = vld [vmem:[#allocation12 + $0x188] sm:$0xff]
    %v4711 = vld [vmem:[#allocation12 + $0x190] sm:$0xff]
    %v4712 = vld [vmem:[#allocation12 + $0x198] sm:$0xff]
    %v4713 = vld [vmem:[#allocation12 + $0x1a0] sm:$0xff]
    %v4714 = vld [vmem:[#allocation12 + $0x1a8] sm:$0xff]
    %v4715 = vld [vmem:[#allocation12 + $0x1b0] sm:$0xff]
    %v4716 = vld [vmem:[#allocation12 + $0x1b8] sm:$0xff]
    %v4717 = vld [vmem:[#allocation12 + $0x1c0] sm:$0xff]
    %v4718 = vld [vmem:[#allocation12 + $0x1c8] sm:$0xff]
    %v4719 = vld [vmem:[#allocation12 + $0x1d0] sm:$0xff]
    %v4720 = vld [vmem:[#allocation12 + $0x1d8] sm:$0xff]
    %v4721 = vld [vmem:[#allocation12 + $0x1e0] sm:$0xff]
    %v4722 = vld [vmem:[#allocation12 + $0x1e8] sm:$0xff]
    %v4723 = vld [vmem:[#allocation12 + $0x1f0] sm:$0xff]
    %v4724 = vld [vmem:[#allocation12 + $0x1f8] sm:$0xff]
    %4725 = vmatprep.subr.mxu0 %v4662
    %4726 = vmatpush1.msra.mxu0 %v4661
    %4727 = vmatprep.subr.mxu0 %v4666
    %4728 = vmatpush1.msra.mxu0 %v4665
    %4729 = vmatprep.subr.mxu0 %v4670
    %4730 = vmatpush1.msra.mxu0 %v4669
    %4731 = vmatprep.subr.mxu0 %v4674
    %4732 = vmatpush1.msra.mxu0 %v4673
    %4733 = vmatprep.subr.mxu0 %v4678
    %4734 = vmatpush1.msra.mxu0 %v4677
    %4735 = vmatprep.subr.mxu0 %v4682
    %4736 = vmatpush1.msra.mxu0 %v4681
    %4737 = vmatprep.subr.mxu0 %v4686
    %4738 = vmatpush1.msra.mxu0 %v4685
    %4739 = vmatprep.subr.mxu0 %v4690
    %4740 = vmatpush1.msra.mxu0 %v4689
    %4741 = vmatprep.subr.mxu0 %v4694
    %4742 = vmatpush1.msra.mxu0 %v4693
    %4743 = vmatprep.subr.mxu0 %v4698
    %4744 = vmatpush1.msra.mxu0 %v4697
    %4745 = vmatprep.subr.mxu0 %v4702
    %4746 = vmatpush1.msra.mxu0 %v4701
    %4747 = vmatprep.subr.mxu0 %v4706
    %4748 = vmatpush1.msra.mxu0 %v4705
    %4749 = vmatprep.subr.mxu0 %v4710
    %4750 = vmatpush1.msra.mxu0 %v4709
    %4751 = vmatprep.subr.mxu0 %v4714
    %4752 = vmatpush1.msra.mxu0 %v4713
    %4753 = vmatprep.subr.mxu0 %v4718
    %4754 = vmatpush1.msra.mxu0 %v4717
    %4755 = vmatprep.subr.mxu0 %v4722
    %4756 = vmatpush1.msra.mxu0 %v4721
    %4757 = vmatprep.subr.mxu0 0.0
    %4758 = vmatpush1.msra.mxu0 0.0
    %4759 = vmatprep.subr.mxu0 0.0
    %4760 = vmatpush1.msra.mxu0 0.0
    %4761 = vmatprep.subr.mxu0 0.0
    %4762 = vmatpush1.msra.mxu0 0.0
    %4763 = vmatprep.subr.mxu0 0.0
    %4764 = vmatpush1.msra.mxu0 0.0
    %4765 = vmatprep.subr.mxu0 0.0
    %4766 = vmatpush1.msra.mxu0 0.0
    %4767 = vmatprep.subr.mxu0 0.0
    %4768 = vmatpush1.msra.mxu0 0.0
    %4769 = vmatprep.subr.mxu0 0.0
    %4770 = vmatpush1.msra.mxu0 0.0
    %4771 = vmatprep.subr.mxu0 0.0
    %4772 = vmatpush1.msra.mxu0 0.0
    %4773 = vmatprep.subr.mxu0 0.0
    %4774 = vmatpush1.msra.mxu0 0.0
    %4775 = vmatprep.subr.mxu0 0.0
    %4776 = vmatpush1.msra.mxu0 0.0
    %4777 = vmatprep.subr.mxu0 0.0
    %4778 = vmatpush1.msra.mxu0 0.0
    %4779 = vmatprep.subr.mxu0 0.0
    %4780 = vmatpush1.msra.mxu0 0.0
    %4781 = vmatprep.subr.mxu0 0.0
    %4782 = vmatpush1.msra.mxu0 0.0
    %4783 = vmatprep.subr.mxu0 0.0
    %4784 = vmatpush1.msra.mxu0 0.0
    %4785 = vmatprep.subr.mxu0 0.0
    %4786 = vmatpush1.msra.mxu0 0.0
    %4787 = vmatprep.subr.mxu0 0.0
    %4788 = vmatpush1.msra.mxu0 0.0
    %4789 = vmatprep.mubr.f32.mxu0 0.0
    %4790 = vmatmul.mubr.f32.gmra.mrb[0].mxu0 %v4655
    %v4791 = vpop.f32.mrb[0].mxu0
    %v4792 = vadd.f32 0.0, %v4791
    %v4793 = vpop.f32.mrb[0].mxu0
    %v4794 = vadd.f32 0.0, %v4793
    %4795 = vdwg.mxu0
    %4796 = vmatprep.subr.mxu0 %v4664
    %4797 = vmatpush1.msra.mxu0 %v4663
    %4798 = vmatprep.subr.mxu0 %v4668
    %4799 = vmatpush1.msra.mxu0 %v4667
    %4800 = vmatprep.subr.mxu0 %v4672
    %4801 = vmatpush1.msra.mxu0 %v4671
    %4802 = vmatprep.subr.mxu0 %v4676
    %4803 = vmatpush1.msra.mxu0 %v4675
    %4804 = vmatprep.subr.mxu0 %v4680
    %4805 = vmatpush1.msra.mxu0 %v4679
    %4806 = vmatprep.subr.mxu0 %v4684
    %4807 = vmatpush1.msra.mxu0 %v4683
    %4808 = vmatprep.subr.mxu0 %v4688
    %4809 = vmatpush1.msra.mxu0 %v4687
    %4810 = vmatprep.subr.mxu0 %v4692
    %4811 = vmatpush1.msra.mxu0 %v4691
    %4812 = vmatprep.subr.mxu0 %v4696
    %4813 = vmatpush1.msra.mxu0 %v4695
    %4814 = vmatprep.subr.mxu0 %v4700
    %4815 = vmatpush1.msra.mxu0 %v4699
    %4816 = vmatprep.subr.mxu0 %v4704
    %4817 = vmatpush1.msra.mxu0 %v4703
    %4818 = vmatprep.subr.mxu0 %v4708
    %4819 = vmatpush1.msra.mxu0 %v4707
    %4820 = vmatprep.subr.mxu0 %v4712
    %4821 = vmatpush1.msra.mxu0 %v4711
    %4822 = vmatprep.subr.mxu0 %v4716
    %4823 = vmatpush1.msra.mxu0 %v4715
    %4824 = vmatprep.subr.mxu0 %v4720
    %4825 = vmatpush1.msra.mxu0 %v4719
    %4826 = vmatprep.subr.mxu0 %v4724
    %4827 = vmatpush1.msra.mxu0 %v4723
    %4828 = vmatprep.subr.mxu0 0.0
    %4829 = vmatpush1.msra.mxu0 0.0
    %4830 = vmatprep.subr.mxu0 0.0
    %4831 = vmatpush1.msra.mxu0 0.0
    %4832 = vmatprep.subr.mxu0 0.0
    %4833 = vmatpush1.msra.mxu0 0.0
    %4834 = vmatprep.subr.mxu0 0.0
    %4835 = vmatpush1.msra.mxu0 0.0
    %4836 = vmatprep.subr.mxu0 0.0
    %4837 = vmatpush1.msra.mxu0 0.0
    %4838 = vmatprep.subr.mxu0 0.0
    %4839 = vmatpush1.msra.mxu0 0.0
    %4840 = vmatprep.subr.mxu0 0.0
    %4841 = vmatpush1.msra.mxu0 0.0
    %4842 = vmatprep.subr.mxu0 0.0
    %4843 = vmatpush1.msra.mxu0 0.0
    %4844 = vmatprep.subr.mxu0 0.0
    %4845 = vmatpush1.msra.mxu0 0.0
    %4846 = vmatprep.subr.mxu0 0.0
    %4847 = vmatpush1.msra.mxu0 0.0
    %4848 = vmatprep.subr.mxu0 0.0
    %4849 = vmatpush1.msra.mxu0 0.0
    %4850 = vmatprep.subr.mxu0 0.0
    %4851 = vmatpush1.msra.mxu0 0.0
    %4852 = vmatprep.subr.mxu0 0.0
    %4853 = vmatpush1.msra.mxu0 0.0
    %4854 = vmatprep.subr.mxu0 0.0
    %4855 = vmatpush1.msra.mxu0 0.0
    %4856 = vmatprep.subr.mxu0 0.0
    %4857 = vmatpush1.msra.mxu0 0.0
    %4858 = vmatprep.subr.mxu0 0.0
    %4859 = vmatpush1.msra.mxu0 0.0
    %4860 = vmatprep.mubr.f32.mxu0 0.0
    %4861 = vmatmul.mubr.f32.gmra.mrb[0].mxu0 %v4655
    %v4862 = vpop.f32.mrb[0].mxu0
    %v4863 = vadd.f32 0.0, %v4862
    %v4864 = vpop.f32.mrb[0].mxu0
    %v4865 = vadd.f32 0.0, %v4864
    %4866 = vdwg.mxu0
    %v4867 = vadd.f32 %v4657, %v4792
    %v4868 = vadd.f32 %v4658, %v4794
    %v4869 = vadd.f32 %v4659, %v4863
    %v4870 = vadd.f32 %v4660, %v4865
    %v4871 = vxor.u32 %v4867, 2147483648
    %v4872 = vmul.f32 %v4871, 1.442695
    %v4873 = vpow.pop %v4872
    %v4874 = vadd.f32 %v4873, 1.0
    %v4875 = vrcp.pop %v4874
    %v4876 = vmul.f32 1.0, %v4875
    %v4877 = vxor.u32 %v4868, 2147483648
    %v4878 = vmul.f32 %v4877, 1.442695
    %v4879 = vpow.pop %v4878
    %v4880 = vadd.f32 %v4879, 1.0
    %v4881 = vrcp.pop %v4880
    %v4882 = vmul.f32 1.0, %v4881
    %v4883 = vtanh.pop %v4869
    %v4884 = vxor.u32 %v4870, 2147483648
    %v4885 = vmul.f32 %v4884, 1.442695
    %v4886 = vpow.pop %v4885
    %v4887 = vadd.f32 %v4886, 1.0
    %v4888 = vrcp.pop %v4887
    %v4889 = vmul.f32 1.0, %v4888
    %v4890 = vmul.f32 %v4882, %v4653
    %v4891 = vmul.f32 %v4876, %v4883
    %v4892 = vadd.f32 %v4890, %v4891
    %v4893 = vtanh.pop %v4892
    %v4894 = vmul.f32 %v4889, %v4893
    %4895 = vst [vmem:[#allocation2 + $0x38] sm:$0xff] %v4894
    %v4896 = vld [vmem:[#allocation3 + $0x100] sm:$0xff]
    %v4897 = vld [vmem:[#allocation3 + $0x108] sm:$0xff]
    %v4898 = vld [vmem:[#allocation3 + $0x110] sm:$0xff]
    %v4899 = vld [vmem:[#allocation3 + $0x118] sm:$0xff]
    %v4900 = vld [vmem:[#allocation12] sm:$0xff]
    %v4901 = vld [vmem:[#allocation12 + $0x8] sm:$0xff]
    %v4902 = vld [vmem:[#allocation12 + $0x10] sm:$0xff]
    %v4903 = vld [vmem:[#allocation12 + $0x18] sm:$0xff]
    %v4904 = vld [vmem:[#allocation12 + $0x20] sm:$0xff]
    %v4905 = vld [vmem:[#allocation12 + $0x28] sm:$0xff]
    %v4906 = vld [vmem:[#allocation12 + $0x30] sm:$0xff]
    %v4907 = vld [vmem:[#allocation12 + $0x38] sm:$0xff]
    %v4908 = vld [vmem:[#allocation12 + $0x40] sm:$0xff]
    %v4909 = vld [vmem:[#allocation12 + $0x48] sm:$0xff]
    %v4910 = vld [vmem:[#allocation12 + $0x50] sm:$0xff]
    %v4911 = vld [vmem:[#allocation12 + $0x58] sm:$0xff]
    %v4912 = vld [vmem:[#allocation12 + $0x60] sm:$0xff]
    %v4913 = vld [vmem:[#allocation12 + $0x68] sm:$0xff]
    %v4914 = vld [vmem:[#allocation12 + $0x70] sm:$0xff]
    %v4915 = vld [vmem:[#allocation12 + $0x78] sm:$0xff]
    %v4916 = vld [vmem:[#allocation12 + $0x80] sm:$0xff]
    %v4917 = vld [vmem:[#allocation12 + $0x88] sm:$0xff]
    %v4918 = vld [vmem:[#allocation12 + $0x90] sm:$0xff]
    %v4919 = vld [vmem:[#allocation12 + $0x98] sm:$0xff]
    %v4920 = vld [vmem:[#allocation12 + $0xa0] sm:$0xff]
    %v4921 = vld [vmem:[#allocation12 + $0xa8] sm:$0xff]
    %v4922 = vld [vmem:[#allocation12 + $0xb0] sm:$0xff]
    %v4923 = vld [vmem:[#allocation12 + $0xb8] sm:$0xff]
    %v4924 = vld [vmem:[#allocation12 + $0xc0] sm:$0xff]
    %v4925 = vld [vmem:[#allocation12 + $0xc8] sm:$0xff]
    %v4926 = vld [vmem:[#allocation12 + $0xd0] sm:$0xff]
    %v4927 = vld [vmem:[#allocation12 + $0xd8] sm:$0xff]
    %v4928 = vld [vmem:[#allocation12 + $0xe0] sm:$0xff]
    %v4929 = vld [vmem:[#allocation12 + $0xe8] sm:$0xff]
    %v4930 = vld [vmem:[#allocation12 + $0xf0] sm:$0xff]
    %v4931 = vld [vmem:[#allocation12 + $0xf8] sm:$0xff]
    %v4932 = vld [vmem:[#allocation12 + $0x100] sm:$0xff]
    %v4933 = vld [vmem:[#allocation12 + $0x108] sm:$0xff]
    %v4934 = vld [vmem:[#allocation12 + $0x110] sm:$0xff]
    %v4935 = vld [vmem:[#allocation12 + $0x118] sm:$0xff]
    %v4936 = vld [vmem:[#allocation12 + $0x120] sm:$0xff]
    %v4937 = vld [vmem:[#allocation12 + $0x128] sm:$0xff]
    %v4938 = vld [vmem:[#allocation12 + $0x130] sm:$0xff]
    %v4939 = vld [vmem:[#allocation12 + $0x138] sm:$0xff]
    %v4940 = vld [vmem:[#allocation12 + $0x140] sm:$0xff]
    %v4941 = vld [vmem:[#allocation12 + $0x148] sm:$0xff]
    %v4942 = vld [vmem:[#allocation12 + $0x150] sm:$0xff]
    %v4943 = vld [vmem:[#allocation12 + $0x158] sm:$0xff]
    %v4944 = vld [vmem:[#allocation12 + $0x160] sm:$0xff]
    %v4945 = vld [vmem:[#allocation12 + $0x168] sm:$0xff]
    %v4946 = vld [vmem:[#allocation12 + $0x170] sm:$0xff]
    %v4947 = vld [vmem:[#allocation12 + $0x178] sm:$0xff]
    %v4948 = vld [vmem:[#allocation12 + $0x180] sm:$0xff]
    %v4949 = vld [vmem:[#allocation12 + $0x188] sm:$0xff]
    %v4950 = vld [vmem:[#allocation12 + $0x190] sm:$0xff]
    %v4951 = vld [vmem:[#allocation12 + $0x198] sm:$0xff]
    %v4952 = vld [vmem:[#allocation12 + $0x1a0] sm:$0xff]
    %v4953 = vld [vmem:[#allocation12 + $0x1a8] sm:$0xff]
    %v4954 = vld [vmem:[#allocation12 + $0x1b0] sm:$0xff]
    %v4955 = vld [vmem:[#allocation12 + $0x1b8] sm:$0xff]
    %v4956 = vld [vmem:[#allocation12 + $0x1c0] sm:$0xff]
    %v4957 = vld [vmem:[#allocation12 + $0x1c8] sm:$0xff]
    %v4958 = vld [vmem:[#allocation12 + $0x1d0] sm:$0xff]
    %v4959 = vld [vmem:[#allocation12 + $0x1d8] sm:$0xff]
    %v4960 = vld [vmem:[#allocation12 + $0x1e0] sm:$0xff]
    %v4961 = vld [vmem:[#allocation12 + $0x1e8] sm:$0xff]
    %v4962 = vld [vmem:[#allocation12 + $0x1f0] sm:$0xff]
    %v4963 = vld [vmem:[#allocation12 + $0x1f8] sm:$0xff]
    %4964 = vmatprep.subr.mxu0 %v4901
    %4965 = vmatpush1.msra.mxu0 %v4900
    %4966 = vmatprep.subr.mxu0 %v4905
    %4967 = vmatpush1.msra.mxu0 %v4904
    %4968 = vmatprep.subr.mxu0 %v4909
    %4969 = vmatpush1.msra.mxu0 %v4908
    %4970 = vmatprep.subr.mxu0 %v4913
    %4971 = vmatpush1.msra.mxu0 %v4912
    %4972 = vmatprep.subr.mxu0 %v4917
    %4973 = vmatpush1.msra.mxu0 %v4916
    %4974 = vmatprep.subr.mxu0 %v4921
    %4975 = vmatpush1.msra.mxu0 %v4920
    %4976 = vmatprep.subr.mxu0 %v4925
    %4977 = vmatpush1.msra.mxu0 %v4924
    %4978 = vmatprep.subr.mxu0 %v4929
    %4979 = vmatpush1.msra.mxu0 %v4928
    %4980 = vmatprep.subr.mxu0 %v4933
    %4981 = vmatpush1.msra.mxu0 %v4932
    %4982 = vmatprep.subr.mxu0 %v4937
    %4983 = vmatpush1.msra.mxu0 %v4936
    %4984 = vmatprep.subr.mxu0 %v4941
    %4985 = vmatpush1.msra.mxu0 %v4940
    %4986 = vmatprep.subr.mxu0 %v4945
    %4987 = vmatpush1.msra.mxu0 %v4944
    %4988 = vmatprep.subr.mxu0 %v4949
    %4989 = vmatpush1.msra.mxu0 %v4948
    %4990 = vmatprep.subr.mxu0 %v4953
    %4991 = vmatpush1.msra.mxu0 %v4952
    %4992 = vmatprep.subr.mxu0 %v4957
    %4993 = vmatpush1.msra.mxu0 %v4956
    %4994 = vmatprep.subr.mxu0 %v4961
    %4995 = vmatpush1.msra.mxu0 %v4960
    %4996 = vmatprep.subr.mxu0 0.0
    %4997 = vmatpush1.msra.mxu0 0.0
    %4998 = vmatprep.subr.mxu0 0.0
    %4999 = vmatpush1.msra.mxu0 0.0
    %5000 = vmatprep.subr.mxu0 0.0
    %5001 = vmatpush1.msra.mxu0 0.0
    %5002 = vmatprep.subr.mxu0 0.0
    %5003 = vmatpush1.msra.mxu0 0.0
    %5004 = vmatprep.subr.mxu0 0.0
    %5005 = vmatpush1.msra.mxu0 0.0
    %5006 = vmatprep.subr.mxu0 0.0
    %5007 = vmatpush1.msra.mxu0 0.0
    %5008 = vmatprep.subr.mxu0 0.0
    %5009 = vmatpush1.msra.mxu0 0.0
    %5010 = vmatprep.subr.mxu0 0.0
    %5011 = vmatpush1.msra.mxu0 0.0
    %5012 = vmatprep.subr.mxu0 0.0
    %5013 = vmatpush1.msra.mxu0 0.0
    %5014 = vmatprep.subr.mxu0 0.0
    %5015 = vmatpush1.msra.mxu0 0.0
    %5016 = vmatprep.subr.mxu0 0.0
    %5017 = vmatpush1.msra.mxu0 0.0
    %5018 = vmatprep.subr.mxu0 0.0
    %5019 = vmatpush1.msra.mxu0 0.0
    %5020 = vmatprep.subr.mxu0 0.0
    %5021 = vmatpush1.msra.mxu0 0.0
    %5022 = vmatprep.subr.mxu0 0.0
    %5023 = vmatpush1.msra.mxu0 0.0
    %5024 = vmatprep.subr.mxu0 0.0
    %5025 = vmatpush1.msra.mxu0 0.0
    %5026 = vmatprep.subr.mxu0 0.0
    %5027 = vmatpush1.msra.mxu0 0.0
    %5028 = vmatprep.mubr.f32.mxu0 0.0
    %5029 = vmatmul.mubr.f32.gmra.mrb[0].mxu0 %v4894
    %v5030 = vpop.f32.mrb[0].mxu0
    %v5031 = vadd.f32 0.0, %v5030
    %v5032 = vpop.f32.mrb[0].mxu0
    %v5033 = vadd.f32 0.0, %v5032
    %5034 = vdwg.mxu0
    %5035 = vmatprep.subr.mxu0 %v4903
    %5036 = vmatpush1.msra.mxu0 %v4902
    %5037 = vmatprep.subr.mxu0 %v4907
    %5038 = vmatpush1.msra.mxu0 %v4906
    %5039 = vmatprep.subr.mxu0 %v4911
    %5040 = vmatpush1.msra.mxu0 %v4910
    %5041 = vmatprep.subr.mxu0 %v4915
    %5042 = vmatpush1.msra.mxu0 %v4914
    %5043 = vmatprep.subr.mxu0 %v4919
    %5044 = vmatpush1.msra.mxu0 %v4918
    %5045 = vmatprep.subr.mxu0 %v4923
    %5046 = vmatpush1.msra.mxu0 %v4922
    %5047 = vmatprep.subr.mxu0 %v4927
    %5048 = vmatpush1.msra.mxu0 %v4926
    %5049 = vmatprep.subr.mxu0 %v4931
    %5050 = vmatpush1.msra.mxu0 %v4930
    %5051 = vmatprep.subr.mxu0 %v4935
    %5052 = vmatpush1.msra.mxu0 %v4934
    %5053 = vmatprep.subr.mxu0 %v4939
    %5054 = vmatpush1.msra.mxu0 %v4938
    %5055 = vmatprep.subr.mxu0 %v4943
    %5056 = vmatpush1.msra.mxu0 %v4942
    %5057 = vmatprep.subr.mxu0 %v4947
    %5058 = vmatpush1.msra.mxu0 %v4946
    %5059 = vmatprep.subr.mxu0 %v4951
    %5060 = vmatpush1.msra.mxu0 %v4950
    %5061 = vmatprep.subr.mxu0 %v4955
    %5062 = vmatpush1.msra.mxu0 %v4954
    %5063 = vmatprep.subr.mxu0 %v4959
    %5064 = vmatpush1.msra.mxu0 %v4958
    %5065 = vmatprep.subr.mxu0 %v4963
    %5066 = vmatpush1.msra.mxu0 %v4962
    %5067 = vmatprep.subr.mxu0 0.0
    %5068 = vmatpush1.msra.mxu0 0.0
    %5069 = vmatprep.subr.mxu0 0.0
    %5070 = vmatpush1.msra.mxu0 0.0
    %5071 = vmatprep.subr.mxu0 0.0
    %5072 = vmatpush1.msra.mxu0 0.0
    %5073 = vmatprep.subr.mxu0 0.0
    %5074 = vmatpush1.msra.mxu0 0.0
    %5075 = vmatprep.subr.mxu0 0.0
    %5076 = vmatpush1.msra.mxu0 0.0
    %5077 = vmatprep.subr.mxu0 0.0
    %5078 = vmatpush1.msra.mxu0 0.0
    %5079 = vmatprep.subr.mxu0 0.0
    %5080 = vmatpush1.msra.mxu0 0.0
    %5081 = vmatprep.subr.mxu0 0.0
    %5082 = vmatpush1.msra.mxu0 0.0
    %5083 = vmatprep.subr.mxu0 0.0
    %5084 = vmatpush1.msra.mxu0 0.0
    %5085 = vmatprep.subr.mxu0 0.0
    %5086 = vmatpush1.msra.mxu0 0.0
    %5087 = vmatprep.subr.mxu0 0.0
    %5088 = vmatpush1.msra.mxu0 0.0
    %5089 = vmatprep.subr.mxu0 0.0
    %5090 = vmatpush1.msra.mxu0 0.0
    %5091 = vmatprep.subr.mxu0 0.0
    %5092 = vmatpush1.msra.mxu0 0.0
    %5093 = vmatprep.subr.mxu0 0.0
    %5094 = vmatpush1.msra.mxu0 0.0
    %5095 = vmatprep.subr.mxu0 0.0
    %5096 = vmatpush1.msra.mxu0 0.0
    %5097 = vmatprep.subr.mxu0 0.0
    %5098 = vmatpush1.msra.mxu0 0.0
    %5099 = vmatprep.mubr.f32.mxu0 0.0
    %5100 = vmatmul.mubr.f32.gmra.mrb[0].mxu0 %v4894
    %v5101 = vpop.f32.mrb[0].mxu0
    %v5102 = vadd.f32 0.0, %v5101
    %v5103 = vpop.f32.mrb[0].mxu0
    %v5104 = vadd.f32 0.0, %v5103
    %5105 = vdwg.mxu0
    %v5106 = vadd.f32 %v4896, %v5031
    %v5107 = vadd.f32 %v4897, %v5033
    %v5108 = vadd.f32 %v4898, %v5102
    %v5109 = vadd.f32 %v4899, %v5104
    %v5110 = vxor.u32 %v5106, 2147483648
    %v5111 = vmul.f32 %v5110, 1.442695
    %v5112 = vpow.pop %v5111
    %v5113 = vadd.f32 %v5112, 1.0
    %v5114 = vrcp.pop %v5113
    %v5115 = vmul.f32 1.0, %v5114
    %v5116 = vxor.u32 %v5107, 2147483648
    %v5117 = vmul.f32 %v5116, 1.442695
    %v5118 = vpow.pop %v5117
    %v5119 = vadd.f32 %v5118, 1.0
    %v5120 = vrcp.pop %v5119
    %v5121 = vmul.f32 1.0, %v5120
    %v5122 = vtanh.pop %v5108
    %v5123 = vxor.u32 %v5109, 2147483648
    %v5124 = vmul.f32 %v5123, 1.442695
    %v5125 = vpow.pop %v5124
    %v5126 = vadd.f32 %v5125, 1.0
    %v5127 = vrcp.pop %v5126
    %v5128 = vmul.f32 1.0, %v5127
    %v5129 = vmul.f32 %v5121, %v4892
    %v5130 = vmul.f32 %v5115, %v5122
    %v5131 = vadd.f32 %v5129, %v5130
    %v5132 = vtanh.pop %v5131
    %v5133 = vmul.f32 %v5128, %v5132
    %5134 = vst [vmem:[#allocation2 + $0x40] sm:$0xff] %v5133
    %v5135 = vld [vmem:[#allocation2] sm:$0xff]
    %v5136 = vld [vmem:[#allocation2 + $0x8] sm:$0xff]
    %v5137 = vld [vmem:[#allocation2 + $0x10] sm:$0xff]
    %v5138 = vld [vmem:[#allocation2 + $0x18] sm:$0xff]
    %v5139 = vld [vmem:[#allocation2 + $0x20] sm:$0xff]
    %v5140 = vld [vmem:[#allocation2 + $0x28] sm:$0xff]
    %v5141 = vld [vmem:[#allocation2 + $0x30] sm:$0xff]
    %v5142 = vld [vmem:[#allocation2 + $0x38] sm:$0xff]
    %v5143 = vld [vmem:[#allocation2 + $0x40] sm:$0xff]
    %v5144 = vld [vmem:[#allocation13] sm:$0xff]
    %v5145 = vld [vmem:[#allocation13 + $0x8] sm:$0xff]
    %v5146 = vld [vmem:[#allocation13 + $0x10] sm:$0xff]
    %v5147 = vld [vmem:[#allocation13 + $0x18] sm:$0xff]
    %v5148 = vld [vmem:[#allocation13 + $0x20] sm:$0xff]
    %v5149 = vld [vmem:[#allocation13 + $0x28] sm:$0xff]
    %v5150 = vld [vmem:[#allocation13 + $0x30] sm:$0xff]
    %v5151 = vld [vmem:[#allocation13 + $0x38] sm:$0xff]
    %v5152 = vld [vmem:[#allocation13 + $0x40] sm:$0xff]
    %v5153 = vld [vmem:[#allocation13 + $0x48] sm:$0xff]
    %v5154 = vld [vmem:[#allocation13 + $0x50] sm:$0xff]
    %v5155 = vld [vmem:[#allocation13 + $0x58] sm:$0xff]
    %v5156 = vld [vmem:[#allocation13 + $0x60] sm:$0xff]
    %v5157 = vld [vmem:[#allocation13 + $0x68] sm:$0xff]
    %v5158 = vld [vmem:[#allocation13 + $0x70] sm:$0xff]
    %v5159 = vld [vmem:[#allocation13 + $0x78] sm:$0xff]
    %v5160 = vld [vmem:[%s8] sm:$0x1]
    %v5162 = vlaneseq
    %v5163 = vshrl.u32 %v5162, 7
    %v5164 = vsub.s32 0, %v5163
    %v5165 = vrot.slane %v5160, %v5164
    %5167 = vmatprep.subr.mxu0 0.0
    %5168 = vmatpush1.msra.mxu0 %v5144
    %5169 = vmatprep.subr.mxu0 0.0
    %5170 = vmatpush1.msra.mxu0 %v5145
    %5171 = vmatprep.subr.mxu0 0.0
    %5172 = vmatpush1.msra.mxu0 %v5146
    %5173 = vmatprep.subr.mxu0 0.0
    %5174 = vmatpush1.msra.mxu0 %v5147
    %5175 = vmatprep.subr.mxu0 0.0
    %5176 = vmatpush1.msra.mxu0 %v5148
    %5177 = vmatprep.subr.mxu0 0.0
    %5178 = vmatpush1.msra.mxu0 %v5149
    %5179 = vmatprep.subr.mxu0 0.0
    %5180 = vmatpush1.msra.mxu0 %v5150
    %5181 = vmatprep.subr.mxu0 0.0
    %5182 = vmatpush1.msra.mxu0 %v5151
    %5183 = vmatprep.subr.mxu0 0.0
    %5184 = vmatpush1.msra.mxu0 %v5152
    %5185 = vmatprep.subr.mxu0 0.0
    %5186 = vmatpush1.msra.mxu0 %v5153
    %5187 = vmatprep.subr.mxu0 0.0
    %5188 = vmatpush1.msra.mxu0 %v5154
    %5189 = vmatprep.subr.mxu0 0.0
    %5190 = vmatpush1.msra.mxu0 %v5155
    %5191 = vmatprep.subr.mxu0 0.0
    %5192 = vmatpush1.msra.mxu0 %v5156
    %5193 = vmatprep.subr.mxu0 0.0
    %5194 = vmatpush1.msra.mxu0 %v5157
    %5195 = vmatprep.subr.mxu0 0.0
    %5196 = vmatpush1.msra.mxu0 %v5158
    %5197 = vmatprep.subr.mxu0 0.0
    %5198 = vmatpush1.msra.mxu0 %v5159
    %5199 = vmatprep.subr.mxu0 0.0
    %5200 = vmatpush1.msra.mxu0 0.0
    %5201 = vmatprep.subr.mxu0 0.0
    %5202 = vmatpush1.msra.mxu0 0.0
    %5203 = vmatprep.subr.mxu0 0.0
    %5204 = vmatpush1.msra.mxu0 0.0
    %5205 = vmatprep.subr.mxu0 0.0
    %5206 = vmatpush1.msra.mxu0 0.0
    %5207 = vmatprep.subr.mxu0 0.0
    %5208 = vmatpush1.msra.mxu0 0.0
    %5209 = vmatprep.subr.mxu0 0.0
    %5210 = vmatpush1.msra.mxu0 0.0
    %5211 = vmatprep.subr.mxu0 0.0
    %5212 = vmatpush1.msra.mxu0 0.0
    %5213 = vmatprep.subr.mxu0 0.0
    %5214 = vmatpush1.msra.mxu0 0.0
    %5215 = vmatprep.subr.mxu0 0.0
    %5216 = vmatpush1.msra.mxu0 0.0
    %5217 = vmatprep.subr.mxu0 0.0
    %5218 = vmatpush1.msra.mxu0 0.0
    %5219 = vmatprep.subr.mxu0 0.0
    %5220 = vmatpush1.msra.mxu0 0.0
    %5221 = vmatprep.subr.mxu0 0.0
    %5222 = vmatpush1.msra.mxu0 0.0
    %5223 = vmatprep.subr.mxu0 0.0
    %5224 = vmatpush1.msra.mxu0 0.0
    %5225 = vmatprep.subr.mxu0 0.0
    %5226 = vmatpush1.msra.mxu0 0.0
    %5227 = vmatprep.subr.mxu0 0.0
    %5228 = vmatpush1.msra.mxu0 0.0
    %5229 = vmatprep.subr.mxu0 0.0
    %5230 = vmatpush1.msra.mxu0 0.0
    %5231 = vmatprep.mubr.f32.mxu0 0.0
    %5232 = vmatmul.mubr.f32.gmra.mrb[0].mxu0 %v5135
    %v5233 = vpop.f32.mrb[0].mxu0
    %v5234 = vadd.f32 %v5165, %v5233
    %v5235 = vpop.f32.mrb[0].mxu0
    %5236 = vmatprep.mubr.f32.mxu0 0.0
    %5237 = vmatmul.mubr.f32.gmra.mrb[0].mxu0 %v5136
    %v5238 = vpop.f32.mrb[0].mxu0
    %v5239 = vadd.f32 %v5165, %v5238
    %v5240 = vpop.f32.mrb[0].mxu0
    %5241 = vmatprep.mubr.f32.mxu0 0.0
    %5242 = vmatmul.mubr.f32.gmra.mrb[0].mxu0 %v5137
    %v5243 = vpop.f32.mrb[0].mxu0
    %v5244 = vadd.f32 %v5165, %v5243
    %v5245 = vpop.f32.mrb[0].mxu0
    %5246 = vmatprep.mubr.f32.mxu0 0.0
    %5247 = vmatmul.mubr.f32.gmra.mrb[0].mxu0 %v5138
    %v5248 = vpop.f32.mrb[0].mxu0
    %v5249 = vadd.f32 %v5165, %v5248
    %v5250 = vpop.f32.mrb[0].mxu0
    %5251 = vmatprep.mubr.f32.mxu0 0.0
    %5252 = vmatmul.mubr.f32.gmra.mrb[0].mxu0 %v5139
    %v5253 = vpop.f32.mrb[0].mxu0
    %v5254 = vadd.f32 %v5165, %v5253
    %v5255 = vpop.f32.mrb[0].mxu0
    %5256 = vmatprep.mubr.f32.mxu0 0.0
    %5257 = vmatmul.mubr.f32.gmra.mrb[0].mxu0 %v5140
    %v5258 = vpop.f32.mrb[0].mxu0
    %v5259 = vadd.f32 %v5165, %v5258
    %v5260 = vpop.f32.mrb[0].mxu0
    %5261 = vmatprep.mubr.f32.mxu0 0.0
    %5262 = vmatmul.mubr.f32.gmra.mrb[0].mxu0 %v5141
    %v5263 = vpop.f32.mrb[0].mxu0
    %v5264 = vadd.f32 %v5165, %v5263
    %v5265 = vpop.f32.mrb[0].mxu0
    %5266 = vmatprep.mubr.f32.mxu0 0.0
    %5267 = vmatmul.mubr.f32.gmra.mrb[0].mxu0 %v5142
    %v5268 = vpop.f32.mrb[0].mxu0
    %v5269 = vadd.f32 %v5165, %v5268
    %v5270 = vpop.f32.mrb[0].mxu0
    %5271 = vmatprep.mubr.f32.mxu0 0.0
    %5272 = vmatmul.mubr.f32.gmra.mrb[0].mxu0 %v5143
    %v5273 = vpop.f32.mrb[0].mxu0
    %v5274 = vadd.f32 %v5165, %v5273
    %v5275 = vpop.f32.mrb[0].mxu0
    %5276 = vdwg.mxu0
    %5277 = vst [vmem:[#allocation15] sm:$0xff] %v5234
    %5278 = vst [vmem:[#allocation15 + $0x8] sm:$0xff] %v5239
    %5279 = vst [vmem:[#allocation15 + $0x10] sm:$0xff] %v5244
    %5280 = vst [vmem:[#allocation15 + $0x18] sm:$0xff] %v5249
    %5281 = vst [vmem:[#allocation15 + $0x20] sm:$0xff] %v5254
    %5282 = vst [vmem:[#allocation15 + $0x28] sm:$0xff] %v5259
    %5283 = vst [vmem:[#allocation15 + $0x30] sm:$0xff] %v5264
    %5284 = vst [vmem:[#allocation15 + $0x38] sm:$0xff] %v5269
    %5285 = vst [vmem:[#allocation15 + $0x40] sm:$0xff] %v5274
    // Predicated region
    $region62: #{tpu_custom_call.1} parent=1 // pred_check
      _
    $region63: #{tpu_custom_call.1} parent=1 // pred_check_branch
      %5287 = sbr.rel (0) target = $region65
    $region64: #{tpu_custom_call.1} parent=1 // pred_region
      %s5289 = ssub.s32 1152, 1152
      %5290 = vsyncadd [#allocation6], %s5289
      %s5291 = sshll.u32 [#allocation15], 4
      %s5292 = int_to_ptr.vmem [resolvable:$true] %s5291
      %5297 = dma.vmem_to_hbm [thread:$0]  %s5292, 1152, %s9, [#allocation6], 128, 128, 8
    $region65: #{tpu_custom_call.1} parent=1 // pred_fallthru
      _
    // Predicated region
    $region66: #{tpu_custom_call.1} parent=1 // pred_check
      _
    $region67: #{tpu_custom_call.1} parent=1 // pred_check_branch
      %5299 = sbr.rel (0) target = $region69
    $region68: #{tpu_custom_call.1} parent=1 // pred_region
      %5300 = dma.done [#allocation6], 1152
    $region69: #{tpu_custom_call.1} parent=1 // pred_fallthru
      _
    %5301 = vsyncpa [#allocation5], 1
    %5302 = vsyncpa [#allocation8], 1
    %5303 = vsyncpa [#allocation11], 1
    %5304 = vsyncpa [#allocation14], 1
    %5305 = vsyncpa [#allocation6], 1

</llo_original>
